<compile_context>
chip_gen: v5e
topology: v5e:2x2
jax: 0.10.0
libtpu: 0.0.40
codegen_flags: <defaults>
</compile_context>

<pallas_src>
import functools

import jax
import jax.numpy as jnp
import numpy as np
from jax.experimental import pallas as pl
from jax.experimental.pallas import tpu as pltpu

# ---- module constants (fixed by the PyTorch source) ----
d_k = 64
d_v = 64
n_heads = 8
d_embedding = 512
d_ff = 2048
LN_EPS = 1e-5  # torch.nn.LayerNorm default

HEADS_PER_BLOCK = 2              # 2 heads x 64 = 128 lanes per attention block


def _pick_tile(dim, candidates):
    """Largest candidate tile that divides `dim`, else the full dim."""
    for t in candidates:
        if dim % t == 0:
            return t
    return dim


def _layernorm(z, g, b):
    mu = jnp.mean(z, axis=-1, keepdims=True)
    var = jnp.mean(jnp.square(z - mu), axis=-1, keepdims=True)
    return (z - mu) * jax.lax.rsqrt(var + jnp.float32(LN_EPS)) * g + b


# --------------------------------------------------------------------------
# Kernel 1: tiled linear  y = x @ w + b  (optionally ReLU)
# --------------------------------------------------------------------------
def _linear_kernel(x_ref, w_ref, b_ref, o_ref, *, relu):
    y = jnp.dot(x_ref[...], w_ref[...], preferred_element_type=jnp.float32)
    y = y + b_ref[...]
    if relu:
        y = jnp.maximum(y, 0.0)
    o_ref[...] = y.astype(o_ref.dtype)


def linear(x, w, b, relu=False):
    """y = x @ w + b, tiled over (M, N); full K kept resident."""
    M, K = x.shape
    N = w.shape[1]
    tm = _pick_tile(M, (512, 256, 128, 64, 32, 16, 8))
    tn = _pick_tile(N, (512, 256, 128))
    return pl.pallas_call(
        functools.partial(_linear_kernel, relu=relu),
        out_shape=jax.ShapeDtypeStruct((M, N), jnp.float32),
        grid=(M // tm, N // tn),
        in_specs=[
            pl.BlockSpec((tm, K), lambda i, j: (i, 0)),
            pl.BlockSpec((K, tn), lambda i, j: (0, j)),
            pl.BlockSpec((1, tn), lambda i, j: (0, j)),
        ],
        out_specs=pl.BlockSpec((tm, tn), lambda i, j: (i, j)),
        compiler_params=pltpu.CompilerParams(
            dimension_semantics=("parallel", "parallel")),
    )(x, w, b.reshape(1, N))


# --------------------------------------------------------------------------
# Kernel 2: attention, 2 heads per grid step, (B, S, H*64) layout throughout
# --------------------------------------------------------------------------
def _attention_kernel(q_ref, k_ref, v_ref, m_ref, o_ref):
    # q/k/v blocks: (1, S, HEADS_PER_BLOCK*64) -> two heads packed in 128 lanes
    scale = jnp.float32(1.0 / np.sqrt(d_k))
    q = q_ref[0] * scale          # fold 1/sqrt(d_k) into Q
    k = k_ref[0]
    v = v_ref[0]
    masked = m_ref[0] != 0        # (S, S); nonzero == masked position
    parts = []
    hb = q.shape[-1] // d_k
    for h in range(hb):
        lo = h * d_k
        qh = q[:, lo:lo + d_k]
        kh = k[:, lo:lo + d_k]
        vh = v[:, lo:lo + d_v]
        s = jnp.dot(qh, kh.T, preferred_element_type=jnp.float32)
        s = jnp.where(masked, jnp.float32(-1e9), s)
        mx = jnp.max(s, axis=-1, keepdims=True)
        e = jnp.exp(s - mx)
        denom = jnp.sum(e, axis=-1, keepdims=True)
        w = e * pl.reciprocal(denom, approx=True)   # EUP divide, frees VPU
        parts.append(jnp.dot(w, vh, preferred_element_type=jnp.float32))
    o_ref[0] = jnp.concatenate(parts, axis=-1)      # single 128-lane-dense store


def mha_attention(qkv, attn_mask):
    """qkv: (B, S, 3*H*64) f32 (Q|K|V concatenated); mask: (B, S, S) int32.

    Returns context in (B, S, H*64) layout -- ready for the W_O matmul with no
    transpose.  Head selection is done entirely via BlockSpec lane indexing.
    """
    B, S, _ = qkv.shape
    hb_blocks = n_heads // HEADS_PER_BLOCK           # 128-lane blocks per Q/K/V
    lane = HEADS_PER_BLOCK * d_k                     # 128
    return pl.pallas_call(
        _attention_kernel,
        out_shape=jax.ShapeDtypeStruct((B, S, n_heads * d_v), jnp.float32),
        grid=(B, hb_blocks),
        in_specs=[
            pl.BlockSpec((1, S, lane), lambda b, h: (b, 0, h)),
            pl.BlockSpec((1, S, lane), lambda b, h: (b, 0, h + hb_blocks)),
            pl.BlockSpec((1, S, lane), lambda b, h: (b, 0, h + 2 * hb_blocks)),
            pl.BlockSpec((1, S, S), lambda b, h: (b, 0, 0)),
        ],
        out_specs=pl.BlockSpec((1, S, lane), lambda b, h: (b, 0, h)),
        compiler_params=pltpu.CompilerParams(
            dimension_semantics=("parallel", "parallel")),
    )(qkv, qkv, qkv, attn_mask)


# --------------------------------------------------------------------------
# Kernel 3: matmul + bias + residual + two fused LayerNorms (epilogue fusion)
#   a   = LN_1(x @ w + b + res)
#   out = LN_2(res + a)
# Used for:  W_O projection -> LN_mha -> LN(norm1)   and
#            W_ff2 projection -> LN_ffn -> LN(norm2)
# --------------------------------------------------------------------------
def _matmul_res_double_ln_kernel(x_ref, w_ref, b_ref, res_ref,
                                 g1_ref, bb1_ref, g2_ref, bb2_ref, o_ref):
    proj = jnp.dot(x_ref[...], w_ref[...], preferred_element_type=jnp.float32)
    proj = proj + b_ref[...]
    res = res_ref[...]
    a = _layernorm(proj + res, g1_ref[...], bb1_ref[...])
    o_ref[...] = _layernorm(res + a, g2_ref[...], bb2_ref[...])


def matmul_residual_double_ln(x, w, b, res, g1, b1, g2, b2):
    M, K = x.shape
    N = w.shape[1]                     # = d_embedding; kept whole (LN over D)
    tm = _pick_tile(M, (512, 256, 128, 64, 32, 16, 8))
    vec = lambda a: a.reshape(1, N)
    return pl.pallas_call(
        _matmul_res_double_ln_kernel,
        out_shape=jax.ShapeDtypeStruct((M, N), jnp.float32),
        grid=(M // tm,),
        in_specs=[
            pl.BlockSpec((tm, K), lambda i: (i, 0)),
            pl.BlockSpec((K, N), lambda i: (0, 0)),
            pl.BlockSpec((1, N), lambda i: (0, 0)),
            pl.BlockSpec((tm, N), lambda i: (i, 0)),
            pl.BlockSpec((1, N), lambda i: (0, 0)),
            pl.BlockSpec((1, N), lambda i: (0, 0)),
            pl.BlockSpec((1, N), lambda i: (0, 0)),
            pl.BlockSpec((1, N), lambda i: (0, 0)),
        ],
        out_specs=pl.BlockSpec((tm, N), lambda i: (i, 0)),
        compiler_params=pltpu.CompilerParams(
            dimension_semantics=("parallel",)),
    )(x, w, vec(b), res, vec(g1), vec(b1), vec(g2), vec(b2))


# --------------------------------------------------------------------------
# DecoderLayer forward
# --------------------------------------------------------------------------
def decoder_layer(dec_inputs, attn_mask, p):
    B, S, D = dec_inputs.shape
    x2 = dec_inputs.reshape(B * S, D)

    # --- MultiHeadAttention: fused QKV projection (one matmul, x read once) ---
    w_qkv = jnp.concatenate([p["W_Q"], p["W_K"], p["W_V"]], axis=1)   # (512,1536)
    b_qkv = jnp.concatenate([p["b_Q"], p["b_K"], p["b_V"]], axis=0)   # (1536,)
    qkv = linear(x2, w_qkv, b_qkv).reshape(B, S, 3 * n_heads * d_k)

    # Attention in (B, S, H*64) layout; heads picked via BlockSpec lane index.
    ctx = mha_attention(qkv, attn_mask)                  # (B, S, H*d_v)
    ctx2 = ctx.reshape(B * S, n_heads * d_v)

    # W_O proj + bias + residual + LN_mha, then norm1 -- all fused:
    #   attn_output = LN_mha(ctx @ W_O + b_O + dec_inputs)
    #   norm1_out   = LN1(dec_inputs + attn_output)
    norm1_out2 = matmul_residual_double_ln(
        ctx2, p["W_O"], p["b_O"], x2,
        p["ln_mha_g"], p["ln_mha_b"], p["ln1_g"], p["ln1_b"])

    # --- PoswiseFeedForwardNet (1x1 convs == matmuls) ---
    h = linear(norm1_out2, p["W_ff1"], p["b_ff1"], relu=True)          # (B*S, d_ff)

    # W_ff2 proj + bias + residual + LN_ffn, then norm2 -- all fused:
    #   ff_output   = LN_ffn(h @ W_ff2 + b_ff2 + norm1_out)
    #   dec_outputs = LN2(norm1_out + ff_output)
    dec_out2 = matmul_residual_double_ln(
        h, p["W_ff2"], p["b_ff2"], norm1_out2,
        p["ln_ffn_g"], p["ln_ffn_b"], p["ln2_g"], p["ln2_b"])

    return dec_out2.reshape(B, S, D)


# --------------------------------------------------------------------------
# Pure-JAX reference (mirrors the PyTorch forward exactly) for verification
# --------------------------------------------------------------------------
def decoder_layer_ref(dec_inputs, attn_mask, p):
    def ln(z, g, b):
        mu = jnp.mean(z, axis=-1, keepdims=True)
        var = jnp.mean(jnp.square(z - mu), axis=-1, keepdims=True)
        return (z - mu) / jnp.sqrt(var + LN_EPS) * g + b

    B, S, D = dec_inputs.shape
    q = (dec_inputs @ p["W_Q"] + p["b_Q"]).reshape(B, S, n_heads, d_k).transpose(0, 2, 1, 3)
    k = (dec_inputs @ p["W_K"] + p["b_K"]).reshape(B, S, n_heads, d_k).transpose(0, 2, 1, 3)
    v = (dec_inputs @ p["W_V"] + p["b_V"]).reshape(B, S, n_heads, d_v).transpose(0, 2, 1, 3)
    scores = jnp.einsum("bhqd,bhkd->bhqk", q, k) / np.sqrt(d_k)
    scores = jnp.where(attn_mask[:, None, :, :] != 0, -1e9, scores)
    w = jax.nn.softmax(scores, axis=-1)
    ctx = jnp.einsum("bhqk,bhkd->bhqd", w, v).transpose(0, 2, 1, 3).reshape(B, S, n_heads * d_v)
    attn_out = ln(ctx @ p["W_O"] + p["b_O"] + dec_inputs, p["ln_mha_g"], p["ln_mha_b"])
    norm1 = ln(dec_inputs + attn_out, p["ln1_g"], p["ln1_b"])
    h = jnp.maximum(norm1 @ p["W_ff1"] + p["b_ff1"], 0.0)
    f = h @ p["W_ff2"] + p["b_ff2"]
    ff = ln(f + norm1, p["ln_ffn_g"], p["ln_ffn_b"])
    return ln(norm1 + ff, p["ln2_g"], p["ln2_b"])


# --------------------------------------------------------------------------
def init_params(key):
    ks = jax.random.split(key, 12)
    s = 0.02

    def w(k, shape):
        return jax.random.normal(k, shape, dtype=jnp.float32) * s

    return {
        "W_Q": w(ks[0], (d_embedding, n_heads * d_k)),
        "b_Q": w(ks[1], (n_heads * d_k,)),
        "W_K": w(ks[2], (d_embedding, n_heads * d_k)),
        "b_K": w(ks[3], (n_heads * d_k,)),
        "W_V": w(ks[4], (d_embedding, n_heads * d_v)),
        "b_V": w(ks[5], (n_heads * d_v,)),
        "W_O": w(ks[6], (n_heads * d_v, d_embedding)),
        "b_O": w(ks[7], (d_embedding,)),
        "W_ff1": w(ks[8], (d_embedding, d_ff)),
        "b_ff1": w(ks[9], (d_ff,)),
        "W_ff2": w(ks[10], (d_ff, d_embedding)),
        "b_ff2": w(ks[11], (d_embedding,)),
        "ln_mha_g": jnp.ones((d_embedding,), jnp.float32),
        "ln_mha_b": jnp.zeros((d_embedding,), jnp.float32),
        "ln_ffn_g": jnp.ones((d_embedding,), jnp.float32),
        "ln_ffn_b": jnp.zeros((d_embedding,), jnp.float32),
        "ln1_g": jnp.ones((d_embedding,), jnp.float32),
        "ln1_b": jnp.zeros((d_embedding,), jnp.float32),
        "ln2_g": jnp.ones((d_embedding,), jnp.float32),
        "ln2_b": jnp.zeros((d_embedding,), jnp.float32),
    }


if __name__ == "__main__":
    B, S = 2, 16  # small batch / seq; d_embedding etc. fixed by the module

    key = jax.random.PRNGKey(0)
    k_x, k_p = jax.random.split(key)
    dec_inputs = jax.random.normal(k_x, (B, S, d_embedding), dtype=jnp.float32)
    params = init_params(k_p)

    # Causal (subsequent) mask, nonzero == masked position.
    causal = jnp.triu(jnp.ones((S, S), jnp.int32), k=1)
    attn_mask = jnp.broadcast_to(causal, (B, S, S))

    out = jax.jit(decoder_layer)(dec_inputs, attn_mask, params)
    out = jax.block_until_ready(out)

    ref = decoder_layer_ref(dec_inputs, attn_mask, params)
    # Tolerance slightly relaxed vs. pure-f32 (approx EUP reciprocal in softmax).
    np.testing.assert_allclose(np.asarray(out), np.asarray(ref), atol=2e-3, rtol=2e-3)

    print("KERNEL_OK")
</pallas_src>

<mosaic_0001>
module attributes {stable_mosaic.version = 11 : i64} {
  func.func @_linear_kernel(%arg0: i32, %arg1: i32, %arg2: memref<32x512xf32, #tpu.memory_space<vmem>>, %arg3: memref<512x512xf32, #tpu.memory_space<vmem>>, %arg4: memref<1x512xf32, #tpu.memory_space<vmem>>, %arg5: memref<32x512xf32, #tpu.memory_space<vmem>>) attributes {dimension_semantics = [#tpu.dimension_semantics<parallel>, #tpu.dimension_semantics<parallel>], iteration_bounds = array<i64: 1, 3>, scalar_prefetch = 0 : i64, scratch_operands = 0 : i64, tpu.core_type = #tpu.core_type<tc>, window_params = [{transform_indices = @transform_0, window_bounds = array<i64: 32, 512>}, {transform_indices = @transform_1, window_bounds = array<i64: 512, 512>}, {transform_indices = @transform_2, window_bounds = array<i64: 1, 512>}, {transform_indices = @transform_3, window_bounds = array<i64: 32, 512>}]} {
    %c0 = arith.constant 0 : index
    %c0_0 = arith.constant 0 : index
    %0 = vector.load %arg2[%c0, %c0_0] : memref<32x512xf32, #tpu.memory_space<vmem>>, vector<32x512xf32>
    %c0_1 = arith.constant 0 : index
    %c0_2 = arith.constant 0 : index
    %1 = vector.load %arg3[%c0_1, %c0_2] : memref<512x512xf32, #tpu.memory_space<vmem>>, vector<512x512xf32>
    %cst = arith.constant dense<0.000000e+00> : vector<32x512xf32>
    %2 = tpu.matmul %0, %1, %cst {dimension_numbers = #tpu.dot_dimension_numbers<[1], [0], [0], [1], [0, 0, 1, 1], [], []>} : vector<32x512xf32>, vector<512x512xf32>, vector<32x512xf32> -> vector<32x512xf32>
    %c0_3 = arith.constant 0 : index
    %c0_4 = arith.constant 0 : index
    %3 = vector.load %arg4[%c0_3, %c0_4] : memref<1x512xf32, #tpu.memory_space<vmem>>, vector<1x512xf32>
    %4 = vector.broadcast %3 : vector<1x512xf32> to vector<32x512xf32>
    %5 = arith.addf %2, %4 : vector<32x512xf32>
    %c0_5 = arith.constant 0 : index
    %c0_6 = arith.constant 0 : index
    %6 = vector.load %arg5[%c0_5, %c0_6] : memref<32x512xf32, #tpu.memory_space<vmem>>, vector<32x512xf32>
    tpu.vector_store %arg5[%c0_5, %c0_6], %5 {strides = array<i32>} : memref<32x512xf32, #tpu.memory_space<vmem>>, vector<32x512xf32>,
    return
  }
  func.func @transform_0(%arg0: i32, %arg1: i32) -> (i32, i32) {
    %c0_i32 = arith.constant 0 : i32
    %c0_i32_0 = arith.constant 0 : i32
    return %arg0, %c0_i32 : i32, i32
  }
  func.func @transform_1(%arg0: i32, %arg1: i32) -> (i32, i32) {
    %c0_i32 = arith.constant 0 : i32
    %c0_i32_0 = arith.constant 0 : i32
    return %c0_i32, %arg1 : i32, i32
  }
  func.func @transform_2(%arg0: i32, %arg1: i32) -> (i32, i32) {
    %c0_i32 = arith.constant 0 : i32
    %c0_i32_0 = arith.constant 0 : i32
    return %c0_i32, %arg1 : i32, i32
  }
  func.func @transform_3(%arg0: i32, %arg1: i32) -> (i32, i32) {
    %c0_i32 = arith.constant 0 : i32
    return %arg0, %arg1 : i32, i32
  }
}

module attributes {stable_mosaic.version = 11 : i64} {
  func.func @_matmul_res_double_ln_kernel(%arg0: i32, %arg1: memref<32x512xf32, #tpu.memory_space<vmem>>, %arg2: memref<512x512xf32, #tpu.memory_space<vmem>>, %arg3: memref<1x512xf32, #tpu.memory_space<vmem>>, %arg4: memref<32x512xf32, #tpu.memory_space<vmem>>, %arg5: memref<1x512xf32, #tpu.memory_space<vmem>>, %arg6: memref<1x512xf32, #tpu.memory_space<vmem>>, %arg7: memref<1x512xf32, #tpu.memory_space<vmem>>, %arg8: memref<1x512xf32, #tpu.memory_space<vmem>>, %arg9: memref<32x512xf32, #tpu.memory_space<vmem>>) attributes {dimension_semantics = [#tpu.dimension_semantics<parallel>], iteration_bounds = array<i64: 1>, scalar_prefetch = 0 : i64, scratch_operands = 0 : i64, tpu.core_type = #tpu.core_type<tc>, window_params = [{transform_indices = @transform_0, window_bounds = array<i64: 32, 512>}, {pipeline_mode = #tpu.pipeline_mode<synchronous>, transform_indices = @transform_1, window_bounds = array<i64: 512, 512>}, {pipeline_mode = #tpu.pipeline_mode<synchronous>, transform_indices = @transform_2, window_bounds = array<i64: 1, 512>}, {transform_indices = @transform_3, window_bounds = array<i64: 32, 512>}, {pipeline_mode = #tpu.pipeline_mode<synchronous>, transform_indices = @transform_4, window_bounds = array<i64: 1, 512>}, {pipeline_mode = #tpu.pipeline_mode<synchronous>, transform_indices = @transform_5, window_bounds = array<i64: 1, 512>}, {pipeline_mode = #tpu.pipeline_mode<synchronous>, transform_indices = @transform_6, window_bounds = array<i64: 1, 512>}, {pipeline_mode = #tpu.pipeline_mode<synchronous>, transform_indices = @transform_7, window_bounds = array<i64: 1, 512>}, {transform_indices = @transform_8, window_bounds = array<i64: 32, 512>}]} {
    %c0 = arith.constant 0 : index
    %c0_0 = arith.constant 0 : index
    %0 = vector.load %arg1[%c0, %c0_0] : memref<32x512xf32, #tpu.memory_space<vmem>>, vector<32x512xf32>
    %c0_1 = arith.constant 0 : index
    %c0_2 = arith.constant 0 : index
    %1 = vector.load %arg2[%c0_1, %c0_2] : memref<512x512xf32, #tpu.memory_space<vmem>>, vector<512x512xf32>
    %cst = arith.constant dense<0.000000e+00> : vector<32x512xf32>
    %2 = tpu.matmul %0, %1, %cst {dimension_numbers = #tpu.dot_dimension_numbers<[1], [0], [0], [1], [0, 0, 1, 1], [], []>} : vector<32x512xf32>, vector<512x512xf32>, vector<32x512xf32> -> vector<32x512xf32>
    %c0_3 = arith.constant 0 : index
    %c0_4 = arith.constant 0 : index
    %3 = vector.load %arg3[%c0_3, %c0_4] : memref<1x512xf32, #tpu.memory_space<vmem>>, vector<1x512xf32>
    %4 = vector.broadcast %3 : vector<1x512xf32> to vector<32x512xf32>
    %5 = arith.addf %2, %4 : vector<32x512xf32>
    %c0_5 = arith.constant 0 : index
    %c0_6 = arith.constant 0 : index
    %6 = vector.load %arg4[%c0_5, %c0_6] : memref<32x512xf32, #tpu.memory_space<vmem>>, vector<32x512xf32>
    %7 = arith.addf %5, %6 : vector<32x512xf32>
    %c0_7 = arith.constant 0 : index
    %c0_8 = arith.constant 0 : index
    %8 = vector.load %arg5[%c0_7, %c0_8] : memref<1x512xf32, #tpu.memory_space<vmem>>, vector<1x512xf32>
    %c0_9 = arith.constant 0 : index
    %c0_10 = arith.constant 0 : index
    %9 = vector.load %arg6[%c0_9, %c0_10] : memref<1x512xf32, #tpu.memory_space<vmem>>, vector<1x512xf32>
    %cst_11 = arith.constant dense<0.000000e+00> : vector<32xf32>
    %10 = vector.multi_reduction <add>, %7, %cst_11 [1] : vector<32x512xf32> to vector<32xf32>
    %11 = vector.shape_cast %10 : vector<32xf32> to vector<32x1xf32>
    %cst_12 = arith.constant 5.120000e+02 : f32
    %12 = vector.broadcast %cst_12 : f32 to vector<32x1xf32>
    %13 = arith.divf %11, %12 : vector<32x1xf32>
    %14 = vector.broadcast %13 : vector<32x1xf32> to vector<32x512xf32>
    %15 = arith.subf %7, %14 : vector<32x512xf32>
    %16 = arith.mulf %15, %15 : vector<32x512xf32>
    %cst_13 = arith.constant dense<0.000000e+00> : vector<32xf32>
    %17 = vector.multi_reduction <add>, %16, %cst_13 [1] : vector<32x512xf32> to vector<32xf32>
    %18 = vector.shape_cast %17 : vector<32xf32> to vector<32x1xf32>
    %cst_14 = arith.constant 5.120000e+02 : f32
    %19 = vector.broadcast %cst_14 : f32 to vector<32x1xf32>
    %20 = arith.divf %18, %19 : vector<32x1xf32>
    %21 = vector.broadcast %13 : vector<32x1xf32> to vector<32x512xf32>
    %22 = arith.subf %7, %21 : vector<32x512xf32>
    %cst_15 = arith.constant 9.99999974E-6 : f32
    %23 = vector.broadcast %cst_15 : f32 to vector<32x1xf32>
    %24 = arith.addf %20, %23 : vector<32x1xf32>
    %25 = math.rsqrt %24 : vector<32x1xf32>
    %26 = vector.broadcast %25 : vector<32x1xf32> to vector<32x512xf32>
    %27 = arith.mulf %22, %26 : vector<32x512xf32>
    %28 = vector.broadcast %8 : vector<1x512xf32> to vector<32x512xf32>
    %29 = arith.mulf %27, %28 : vector<32x512xf32>
    %30 = vector.broadcast %9 : vector<1x512xf32> to vector<32x512xf32>
    %31 = arith.addf %29, %30 : vector<32x512xf32>
    %32 = arith.addf %6, %31 : vector<32x512xf32>
    %c0_16 = arith.constant 0 : index
    %c0_17 = arith.constant 0 : index
    %33 = vector.load %arg7[%c0_16, %c0_17] : memref<1x512xf32, #tpu.memory_space<vmem>>, vector<1x512xf32>
    %c0_18 = arith.constant 0 : index
    %c0_19 = arith.constant 0 : index
    %34 = vector.load %arg8[%c0_18, %c0_19] : memref<1x512xf32, #tpu.memory_space<vmem>>, vector<1x512xf32>
    %cst_20 = arith.constant dense<0.000000e+00> : vector<32xf32>
    %35 = vector.multi_reduction <add>, %32, %cst_20 [1] : vector<32x512xf32> to vector<32xf32>
    %36 = vector.shape_cast %35 : vector<32xf32> to vector<32x1xf32>
    %cst_21 = arith.constant 5.120000e+02 : f32
    %37 = vector.broadcast %cst_21 : f32 to vector<32x1xf32>
    %38 = arith.divf %36, %37 : vector<32x1xf32>
    %39 = vector.broadcast %38 : vector<32x1xf32> to vector<32x512xf32>
    %40 = arith.subf %32, %39 : vector<32x512xf32>
    %41 = arith.mulf %40, %40 : vector<32x512xf32>
    %cst_22 = arith.constant dense<0.000000e+00> : vector<32xf32>
    %42 = vector.multi_reduction <add>, %41, %cst_22 [1] : vector<32x512xf32> to vector<32xf32>
    %43 = vector.shape_cast %42 : vector<32xf32> to vector<32x1xf32>
    %cst_23 = arith.constant 5.120000e+02 : f32
    %44 = vector.broadcast %cst_23 : f32 to vector<32x1xf32>
    %45 = arith.divf %43, %44 : vector<32x1xf32>
    %46 = vector.broadcast %38 : vector<32x1xf32> to vector<32x512xf32>
    %47 = arith.subf %32, %46 : vector<32x512xf32>
    %cst_24 = arith.constant 9.99999974E-6 : f32
    %48 = vector.broadcast %cst_24 : f32 to vector<32x1xf32>
    %49 = arith.addf %45, %48 : vector<32x1xf32>
    %50 = math.rsqrt %49 : vector<32x1xf32>
    %51 = vector.broadcast %50 : vector<32x1xf32> to vector<32x512xf32>
    %52 = arith.mulf %47, %51 : vector<32x512xf32>
    %53 = vector.broadcast %33 : vector<1x512xf32> to vector<32x512xf32>
    %54 = arith.mulf %52, %53 : vector<32x512xf32>
    %55 = vector.broadcast %34 : vector<1x512xf32> to vector<32x512xf32>
    %56 = arith.addf %54, %55 : vector<32x512xf32>
    %c0_25 = arith.constant 0 : index
    %c0_26 = arith.constant 0 : index
    %57 = vector.load %arg9[%c0_25, %c0_26] : memref<32x512xf32, #tpu.memory_space<vmem>>, vector<32x512xf32>
    tpu.vector_store %arg9[%c0_25, %c0_26], %56 {strides = array<i32>} : memref<32x512xf32, #tpu.memory_space<vmem>>, vector<32x512xf32>,
    return
  }
  func.func @transform_0(%arg0: i32) -> (i32, i32) {
    %c0_i32 = arith.constant 0 : i32
    %c0_i32_0 = arith.constant 0 : i32
    return %arg0, %c0_i32 : i32, i32
  }
  func.func @transform_1(%arg0: i32) -> (i32, i32) {
    %c0_i32 = arith.constant 0 : i32
    %c0_i32_0 = arith.constant 0 : i32
    %c0_i32_1 = arith.constant 0 : i32
    return %c0_i32, %c0_i32_0 : i32, i32
  }
  func.func @transform_2(%arg0: i32) -> (i32, i32) {
    %c0_i32 = arith.constant 0 : i32
    %c0_i32_0 = arith.constant 0 : i32
    %c0_i32_1 = arith.constant 0 : i32
    return %c0_i32, %c0_i32_0 : i32, i32
  }
  func.func @transform_3(%arg0: i32) -> (i32, i32) {
    %c0_i32 = arith.constant 0 : i32
    %c0_i32_0 = arith.constant 0 : i32
    return %arg0, %c0_i32 : i32, i32
  }
  func.func @transform_4(%arg0: i32) -> (i32, i32) {
    %c0_i32 = arith.constant 0 : i32
    %c0_i32_0 = arith.constant 0 : i32
    %c0_i32_1 = arith.constant 0 : i32
    return %c0_i32, %c0_i32_0 : i32, i32
  }
  func.func @transform_5(%arg0: i32) -> (i32, i32) {
    %c0_i32 = arith.constant 0 : i32
    %c0_i32_0 = arith.constant 0 : i32
    %c0_i32_1 = arith.constant 0 : i32
    return %c0_i32, %c0_i32_0 : i32, i32
  }
  func.func @transform_6(%arg0: i32) -> (i32, i32) {
    %c0_i32 = arith.constant 0 : i32
    %c0_i32_0 = arith.constant 0 : i32
    %c0_i32_1 = arith.constant 0 : i32
    return %c0_i32, %c0_i32_0 : i32, i32
  }
  func.func @transform_7(%arg0: i32) -> (i32, i32) {
    %c0_i32 = arith.constant 0 : i32
    %c0_i32_0 = arith.constant 0 : i32
    %c0_i32_1 = arith.constant 0 : i32
    return %c0_i32, %c0_i32_0 : i32, i32
  }
  func.func @transform_8(%arg0: i32) -> (i32, i32) {
    %c0_i32 = arith.constant 0 : i32
    %c0_i32_0 = arith.constant 0 : i32
    return %arg0, %c0_i32 : i32, i32
  }
}

module attributes {stable_mosaic.version = 11 : i64} {
  func.func @_attention_kernel(%arg0: i32, %arg1: i32, %arg2: memref<1x16x128xf32, #tpu.memory_space<vmem>>, %arg3: memref<1x16x128xf32, #tpu.memory_space<vmem>>, %arg4: memref<1x16x128xf32, #tpu.memory_space<vmem>>, %arg5: memref<1x16x16xi32, #tpu.memory_space<vmem>>, %arg6: memref<1x16x128xf32, #tpu.memory_space<vmem>>) attributes {dimension_semantics = [#tpu.dimension_semantics<parallel>, #tpu.dimension_semantics<parallel>], iteration_bounds = array<i64: 2, 4>, scalar_prefetch = 0 : i64, scratch_operands = 0 : i64, tpu.core_type = #tpu.core_type<tc>, window_params = [{transform_indices = @transform_0, window_bounds = array<i64: 1, 16, 128>}, {transform_indices = @transform_1, window_bounds = array<i64: 1, 16, 128>}, {transform_indices = @transform_2, window_bounds = array<i64: 1, 16, 128>}, {transform_indices = @transform_3, window_bounds = array<i64: 1, 16, 16>}, {transform_indices = @transform_4, window_bounds = array<i64: 1, 16, 128>}]} {
    %c0 = arith.constant 0 : index
    %c0_0 = arith.constant 0 : index
    %c0_1 = arith.constant 0 : index
    %0 = vector.load %arg2[%c0, %c0_0, %c0_1] : memref<1x16x128xf32, #tpu.memory_space<vmem>>, vector<1x16x128xf32>
    %1 = vector.shape_cast %0 : vector<1x16x128xf32> to vector<16x128xf32>
    %cst = arith.constant 1.250000e-01 : f32
    %2 = vector.broadcast %cst : f32 to vector<16x128xf32>
    %3 = arith.mulf %1, %2 : vector<16x128xf32>
    %c0_2 = arith.constant 0 : index
    %c0_3 = arith.constant 0 : index
    %c0_4 = arith.constant 0 : index
    %4 = vector.load %arg3[%c0_2, %c0_3, %c0_4] : memref<1x16x128xf32, #tpu.memory_space<vmem>>, vector<1x16x128xf32>
    %5 = vector.shape_cast %4 : vector<1x16x128xf32> to vector<16x128xf32>
    %c0_5 = arith.constant 0 : index
    %c0_6 = arith.constant 0 : index
    %c0_7 = arith.constant 0 : index
    %6 = vector.load %arg4[%c0_5, %c0_6, %c0_7] : memref<1x16x128xf32, #tpu.memory_space<vmem>>, vector<1x16x128xf32>
    %7 = vector.shape_cast %6 : vector<1x16x128xf32> to vector<16x128xf32>
    %c0_8 = arith.constant 0 : index
    %c0_9 = arith.constant 0 : index
    %c0_10 = arith.constant 0 : index
    %8 = vector.load %arg5[%c0_8, %c0_9, %c0_10] : memref<1x16x16xi32, #tpu.memory_space<vmem>>, vector<1x16x16xi32>
    %9 = vector.shape_cast %8 : vector<1x16x16xi32> to vector<16x16xi32>
    %c0_i32 = arith.constant 0 : i32
    %10 = vector.broadcast %c0_i32 : i32 to vector<16x16xi32>
    %11 = arith.cmpi ne, %9, %10 : vector<16x16xi32>
    %12 = vector.extract_strided_slice %3 {offsets = [0, 0], sizes = [16, 64], strides = [1, 1]} : vector<16x128xf32> to vector<16x64xf32>
    %13 = vector.extract_strided_slice %5 {offsets = [0, 0], sizes = [16, 64], strides = [1, 1]} : vector<16x128xf32> to vector<16x64xf32>
    %14 = vector.extract_strided_slice %7 {offsets = [0, 0], sizes = [16, 64], strides = [1, 1]} : vector<16x128xf32> to vector<16x64xf32>
    %15 = tpu.transpose %13, [1, 0] : vector<16x64xf32> -> vector<64x16xf32>
    %cst_11 = arith.constant dense<0.000000e+00> : vector<16x16xf32>
    %16 = tpu.matmul %12, %15, %cst_11 {dimension_numbers = #tpu.dot_dimension_numbers<[1], [0], [0], [1], [0, 0, 1, 1], [], []>} : vector<16x64xf32>, vector<64x16xf32>, vector<16x16xf32> -> vector<16x16xf32>
    %cst_12 = arith.constant -1.000000e+09 : f32
    %17 = vector.broadcast %cst_12 : f32 to vector<16x16xf32>
    %18 = arith.select %11, %17, %16 : vector<16x16xi1>, vector<16x16xf32>
    %cst_13 = arith.constant dense<0xFF800000> : vector<16xf32>
    %19 = vector.multi_reduction <maximumf>, %18, %cst_13 [1] : vector<16x16xf32> to vector<16xf32>
    %20 = vector.shape_cast %19 : vector<16xf32> to vector<16x1xf32>
    %21 = vector.broadcast %20 : vector<16x1xf32> to vector<16x16xf32>
    %22 = arith.subf %18, %21 : vector<16x16xf32>
    %23 = math.exp %22 : vector<16x16xf32>
    %cst_14 = arith.constant dense<0.000000e+00> : vector<16xf32>
    %24 = vector.multi_reduction <add>, %23, %cst_14 [1] : vector<16x16xf32> to vector<16xf32>
    %25 = vector.shape_cast %24 : vector<16xf32> to vector<16x1xf32>
    %26 = tpu.reciprocal %25 {approx = true} : vector<16x1xf32> -> vector<16x1xf32>
    %27 = vector.broadcast %26 : vector<16x1xf32> to vector<16x16xf32>
    %28 = arith.mulf %23, %27 : vector<16x16xf32>
    %cst_15 = arith.constant dense<0.000000e+00> : vector<16x64xf32>
    %29 = tpu.matmul %28, %14, %cst_15 {dimension_numbers = #tpu.dot_dimension_numbers<[1], [0], [0], [1], [0, 0, 1, 1], [], []>} : vector<16x16xf32>, vector<16x64xf32>, vector<16x64xf32> -> vector<16x64xf32>
    %30 = vector.extract_strided_slice %3 {offsets = [0, 64], sizes = [16, 64], strides = [1, 1]} : vector<16x128xf32> to vector<16x64xf32>
    %31 = vector.extract_strided_slice %5 {offsets = [0, 64], sizes = [16, 64], strides = [1, 1]} : vector<16x128xf32> to vector<16x64xf32>
    %32 = vector.extract_strided_slice %7 {offsets = [0, 64], sizes = [16, 64], strides = [1, 1]} : vector<16x128xf32> to vector<16x64xf32>
    %33 = tpu.transpose %31, [1, 0] : vector<16x64xf32> -> vector<64x16xf32>
    %cst_16 = arith.constant dense<0.000000e+00> : vector<16x16xf32>
    %34 = tpu.matmul %30, %33, %cst_16 {dimension_numbers = #tpu.dot_dimension_numbers<[1], [0], [0], [1], [0, 0, 1, 1], [], []>} : vector<16x64xf32>, vector<64x16xf32>, vector<16x16xf32> -> vector<16x16xf32>
    %cst_17 = arith.constant -1.000000e+09 : f32
    %35 = vector.broadcast %cst_17 : f32 to vector<16x16xf32>
    %36 = arith.select %11, %35, %34 : vector<16x16xi1>, vector<16x16xf32>
    %cst_18 = arith.constant dense<0xFF800000> : vector<16xf32>
    %37 = vector.multi_reduction <maximumf>, %36, %cst_18 [1] : vector<16x16xf32> to vector<16xf32>
    %38 = vector.shape_cast %37 : vector<16xf32> to vector<16x1xf32>
    %39 = vector.broadcast %38 : vector<16x1xf32> to vector<16x16xf32>
    %40 = arith.subf %36, %39 : vector<16x16xf32>
    %41 = math.exp %40 : vector<16x16xf32>
    %cst_19 = arith.constant dense<0.000000e+00> : vector<16xf32>
    %42 = vector.multi_reduction <add>, %41, %cst_19 [1] : vector<16x16xf32> to vector<16xf32>
    %43 = vector.shape_cast %42 : vector<16xf32> to vector<16x1xf32>
    %44 = tpu.reciprocal %43 {approx = true} : vector<16x1xf32> -> vector<16x1xf32>
    %45 = vector.broadcast %44 : vector<16x1xf32> to vector<16x16xf32>
    %46 = arith.mulf %41, %45 : vector<16x16xf32>
    %cst_20 = arith.constant dense<0.000000e+00> : vector<16x64xf32>
    %47 = tpu.matmul %46, %32, %cst_20 {dimension_numbers = #tpu.dot_dimension_numbers<[1], [0], [0], [1], [0, 0, 1, 1], [], []>} : vector<16x16xf32>, vector<16x64xf32>, vector<16x64xf32> -> vector<16x64xf32>
    %48 = tpu.concatenate %29, %47 in 1 : vector<16x64xf32>, vector<16x64xf32> -> vector<16x128xf32>
    %c0_21 = arith.constant 0 : index
    %c0_22 = arith.constant 0 : index
    %c0_23 = arith.constant 0 : index
    %49 = vector.load %arg6[%c0_21, %c0_22, %c0_23] : memref<1x16x128xf32, #tpu.memory_space<vmem>>, vector<1x16x128xf32>
    %50 = vector.shape_cast %49 : vector<1x16x128xf32> to vector<16x128xf32>
    %51 = vector.shape_cast %48 : vector<16x128xf32> to vector<1x16x128xf32>
    tpu.vector_store %arg6[%c0_21, %c0_22, %c0_23], %51 {strides = array<i32>} : memref<1x16x128xf32, #tpu.memory_space<vmem>>, vector<1x16x128xf32>,
    return
  }
  func.func @transform_0(%arg0: i32, %arg1: i32) -> (i32, i32, i32) {
    %c0_i32 = arith.constant 0 : i32
    %c0_i32_0 = arith.constant 0 : i32
    return %arg0, %c0_i32, %arg1 : i32, i32, i32
  }
  func.func @transform_1(%arg0: i32, %arg1: i32) -> (i32, i32, i32) {
    %c4_i32 = arith.constant 4 : i32
    %0 = arith.addi %arg1, %c4_i32 : i32
    %c0_i32 = arith.constant 0 : i32
    %c0_i32_0 = arith.constant 0 : i32
    return %arg0, %c0_i32, %0 : i32, i32, i32
  }
  func.func @transform_2(%arg0: i32, %arg1: i32) -> (i32, i32, i32) {
    %c8_i32 = arith.constant 8 : i32
    %0 = arith.addi %arg1, %c8_i32 : i32
    %c0_i32 = arith.constant 0 : i32
    %c0_i32_0 = arith.constant 0 : i32
    return %arg0, %c0_i32, %0 : i32, i32, i32
  }
  func.func @transform_3(%arg0: i32, %arg1: i32) -> (i32, i32, i32) {
    %c0_i32 = arith.constant 0 : i32
    %c0_i32_0 = arith.constant 0 : i32
    %c0_i32_1 = arith.constant 0 : i32
    return %arg0, %c0_i32, %c0_i32_0 : i32, i32, i32
  }
  func.func @transform_4(%arg0: i32, %arg1: i32) -> (i32, i32, i32) {
    %c0_i32 = arith.constant 0 : i32
    %c0_i32_0 = arith.constant 0 : i32
    return %arg0, %c0_i32, %arg1 : i32, i32, i32
  }
}

module attributes {stable_mosaic.version = 11 : i64} {
  func.func @_linear_kernel(%arg0: i32, %arg1: i32, %arg2: memref<32x512xf32, #tpu.memory_space<vmem>>, %arg3: memref<512x512xf32, #tpu.memory_space<vmem>>, %arg4: memref<1x512xf32, #tpu.memory_space<vmem>>, %arg5: memref<32x512xf32, #tpu.memory_space<vmem>>) attributes {dimension_semantics = [#tpu.dimension_semantics<parallel>, #tpu.dimension_semantics<parallel>], iteration_bounds = array<i64: 1, 4>, scalar_prefetch = 0 : i64, scratch_operands = 0 : i64, tpu.core_type = #tpu.core_type<tc>, window_params = [{transform_indices = @transform_0, window_bounds = array<i64: 32, 512>}, {transform_indices = @transform_1, window_bounds = array<i64: 512, 512>}, {transform_indices = @transform_2, window_bounds = array<i64: 1, 512>}, {transform_indices = @transform_3, window_bounds = array<i64: 32, 512>}]} {
    %c0 = arith.constant 0 : index
    %c0_0 = arith.constant 0 : index
    %0 = vector.load %arg2[%c0, %c0_0] : memref<32x512xf32, #tpu.memory_space<vmem>>, vector<32x512xf32>
    %c0_1 = arith.constant 0 : index
    %c0_2 = arith.constant 0 : index
    %1 = vector.load %arg3[%c0_1, %c0_2] : memref<512x512xf32, #tpu.memory_space<vmem>>, vector<512x512xf32>
    %cst = arith.constant dense<0.000000e+00> : vector<32x512xf32>
    %2 = tpu.matmul %0, %1, %cst {dimension_numbers = #tpu.dot_dimension_numbers<[1], [0], [0], [1], [0, 0, 1, 1], [], []>} : vector<32x512xf32>, vector<512x512xf32>, vector<32x512xf32> -> vector<32x512xf32>
    %c0_3 = arith.constant 0 : index
    %c0_4 = arith.constant 0 : index
    %3 = vector.load %arg4[%c0_3, %c0_4] : memref<1x512xf32, #tpu.memory_space<vmem>>, vector<1x512xf32>
    %4 = vector.broadcast %3 : vector<1x512xf32> to vector<32x512xf32>
    %5 = arith.addf %2, %4 : vector<32x512xf32>
    %cst_5 = arith.constant 0.000000e+00 : f32
    %6 = vector.broadcast %cst_5 : f32 to vector<32x512xf32>
    %7 = arith.maximumf %5, %6 : vector<32x512xf32>
    %c0_6 = arith.constant 0 : index
    %c0_7 = arith.constant 0 : index
    %8 = vector.load %arg5[%c0_6, %c0_7] : memref<32x512xf32, #tpu.memory_space<vmem>>, vector<32x512xf32>
    tpu.vector_store %arg5[%c0_6, %c0_7], %7 {strides = array<i32>} : memref<32x512xf32, #tpu.memory_space<vmem>>, vector<32x512xf32>,
    return
  }
  func.func @transform_0(%arg0: i32, %arg1: i32) -> (i32, i32) {
    %c0_i32 = arith.constant 0 : i32
    %c0_i32_0 = arith.constant 0 : i32
    return %arg0, %c0_i32 : i32, i32
  }
  func.func @transform_1(%arg0: i32, %arg1: i32) -> (i32, i32) {
    %c0_i32 = arith.constant 0 : i32
    %c0_i32_0 = arith.constant 0 : i32
    return %c0_i32, %arg1 : i32, i32
  }
  func.func @transform_2(%arg0: i32, %arg1: i32) -> (i32, i32) {
    %c0_i32 = arith.constant 0 : i32
    %c0_i32_0 = arith.constant 0 : i32
    return %c0_i32, %arg1 : i32, i32
  }
  func.func @transform_3(%arg0: i32, %arg1: i32) -> (i32, i32) {
    %c0_i32 = arith.constant 0 : i32
    return %arg0, %arg1 : i32, i32
  }
}

module attributes {stable_mosaic.version = 11 : i64} {
  func.func @_matmul_res_double_ln_kernel(%arg0: i32, %arg1: memref<32x2048xf32, #tpu.memory_space<vmem>>, %arg2: memref<2048x512xf32, #tpu.memory_space<vmem>>, %arg3: memref<1x512xf32, #tpu.memory_space<vmem>>, %arg4: memref<32x512xf32, #tpu.memory_space<vmem>>, %arg5: memref<1x512xf32, #tpu.memory_space<vmem>>, %arg6: memref<1x512xf32, #tpu.memory_space<vmem>>, %arg7: memref<1x512xf32, #tpu.memory_space<vmem>>, %arg8: memref<1x512xf32, #tpu.memory_space<vmem>>, %arg9: memref<32x512xf32, #tpu.memory_space<vmem>>) attributes {dimension_semantics = [#tpu.dimension_semantics<parallel>], iteration_bounds = array<i64: 1>, scalar_prefetch = 0 : i64, scratch_operands = 0 : i64, tpu.core_type = #tpu.core_type<tc>, window_params = [{transform_indices = @transform_0, window_bounds = array<i64: 32, 2048>}, {pipeline_mode = #tpu.pipeline_mode<synchronous>, transform_indices = @transform_1, window_bounds = array<i64: 2048, 512>}, {pipeline_mode = #tpu.pipeline_mode<synchronous>, transform_indices = @transform_2, window_bounds = array<i64: 1, 512>}, {transform_indices = @transform_3, window_bounds = array<i64: 32, 512>}, {pipeline_mode = #tpu.pipeline_mode<synchronous>, transform_indices = @transform_4, window_bounds = array<i64: 1, 512>}, {pipeline_mode = #tpu.pipeline_mode<synchronous>, transform_indices = @transform_5, window_bounds = array<i64: 1, 512>}, {pipeline_mode = #tpu.pipeline_mode<synchronous>, transform_indices = @transform_6, window_bounds = array<i64: 1, 512>}, {pipeline_mode = #tpu.pipeline_mode<synchronous>, transform_indices = @transform_7, window_bounds = array<i64: 1, 512>}, {transform_indices = @transform_8, window_bounds = array<i64: 32, 512>}]} {
    %c0 = arith.constant 0 : index
    %c0_0 = arith.constant 0 : index
    %0 = vector.load %arg1[%c0, %c0_0] : memref<32x2048xf32, #tpu.memory_space<vmem>>, vector<32x2048xf32>
    %c0_1 = arith.constant 0 : index
    %c0_2 = arith.constant 0 : index
    %1 = vector.load %arg2[%c0_1, %c0_2] : memref<2048x512xf32, #tpu.memory_space<vmem>>, vector<2048x512xf32>
    %cst = arith.constant dense<0.000000e+00> : vector<32x512xf32>
    %2 = tpu.matmul %0, %1, %cst {dimension_numbers = #tpu.dot_dimension_numbers<[1], [0], [0], [1], [0, 0, 1, 1], [], []>} : vector<32x2048xf32>, vector<2048x512xf32>, vector<32x512xf32> -> vector<32x512xf32>
    %c0_3 = arith.constant 0 : index
    %c0_4 = arith.constant 0 : index
    %3 = vector.load %arg3[%c0_3, %c0_4] : memref<1x512xf32, #tpu.memory_space<vmem>>, vector<1x512xf32>
    %4 = vector.broadcast %3 : vector<1x512xf32> to vector<32x512xf32>
    %5 = arith.addf %2, %4 : vector<32x512xf32>
    %c0_5 = arith.constant 0 : index
    %c0_6 = arith.constant 0 : index
    %6 = vector.load %arg4[%c0_5, %c0_6] : memref<32x512xf32, #tpu.memory_space<vmem>>, vector<32x512xf32>
    %7 = arith.addf %5, %6 : vector<32x512xf32>
    %c0_7 = arith.constant 0 : index
    %c0_8 = arith.constant 0 : index
    %8 = vector.load %arg5[%c0_7, %c0_8] : memref<1x512xf32, #tpu.memory_space<vmem>>, vector<1x512xf32>
    %c0_9 = arith.constant 0 : index
    %c0_10 = arith.constant 0 : index
    %9 = vector.load %arg6[%c0_9, %c0_10] : memref<1x512xf32, #tpu.memory_space<vmem>>, vector<1x512xf32>
    %cst_11 = arith.constant dense<0.000000e+00> : vector<32xf32>
    %10 = vector.multi_reduction <add>, %7, %cst_11 [1] : vector<32x512xf32> to vector<32xf32>
    %11 = vector.shape_cast %10 : vector<32xf32> to vector<32x1xf32>
    %cst_12 = arith.constant 5.120000e+02 : f32
    %12 = vector.broadcast %cst_12 : f32 to vector<32x1xf32>
    %13 = arith.divf %11, %12 : vector<32x1xf32>
    %14 = vector.broadcast %13 : vector<32x1xf32> to vector<32x512xf32>
    %15 = arith.subf %7, %14 : vector<32x512xf32>
    %16 = arith.mulf %15, %15 : vector<32x512xf32>
    %cst_13 = arith.constant dense<0.000000e+00> : vector<32xf32>
    %17 = vector.multi_reduction <add>, %16, %cst_13 [1] : vector<32x512xf32> to vector<32xf32>
    %18 = vector.shape_cast %17 : vector<32xf32> to vector<32x1xf32>
    %cst_14 = arith.constant 5.120000e+02 : f32
    %19 = vector.broadcast %cst_14 : f32 to vector<32x1xf32>
    %20 = arith.divf %18, %19 : vector<32x1xf32>
    %21 = vector.broadcast %13 : vector<32x1xf32> to vector<32x512xf32>
    %22 = arith.subf %7, %21 : vector<32x512xf32>
    %cst_15 = arith.constant 9.99999974E-6 : f32
    %23 = vector.broadcast %cst_15 : f32 to vector<32x1xf32>
    %24 = arith.addf %20, %23 : vector<32x1xf32>
    %25 = math.rsqrt %24 : vector<32x1xf32>
    %26 = vector.broadcast %25 : vector<32x1xf32> to vector<32x512xf32>
    %27 = arith.mulf %22, %26 : vector<32x512xf32>
    %28 = vector.broadcast %8 : vector<1x512xf32> to vector<32x512xf32>
    %29 = arith.mulf %27, %28 : vector<32x512xf32>
    %30 = vector.broadcast %9 : vector<1x512xf32> to vector<32x512xf32>
    %31 = arith.addf %29, %30 : vector<32x512xf32>
    %32 = arith.addf %6, %31 : vector<32x512xf32>
    %c0_16 = arith.constant 0 : index
    %c0_17 = arith.constant 0 : index
    %33 = vector.load %arg7[%c0_16, %c0_17] : memref<1x512xf32, #tpu.memory_space<vmem>>, vector<1x512xf32>
    %c0_18 = arith.constant 0 : index
    %c0_19 = arith.constant 0 : index
    %34 = vector.load %arg8[%c0_18, %c0_19] : memref<1x512xf32, #tpu.memory_space<vmem>>, vector<1x512xf32>
    %cst_20 = arith.constant dense<0.000000e+00> : vector<32xf32>
    %35 = vector.multi_reduction <add>, %32, %cst_20 [1] : vector<32x512xf32> to vector<32xf32>
    %36 = vector.shape_cast %35 : vector<32xf32> to vector<32x1xf32>
    %cst_21 = arith.constant 5.120000e+02 : f32
    %37 = vector.broadcast %cst_21 : f32 to vector<32x1xf32>
    %38 = arith.divf %36, %37 : vector<32x1xf32>
    %39 = vector.broadcast %38 : vector<32x1xf32> to vector<32x512xf32>
    %40 = arith.subf %32, %39 : vector<32x512xf32>
    %41 = arith.mulf %40, %40 : vector<32x512xf32>
    %cst_22 = arith.constant dense<0.000000e+00> : vector<32xf32>
    %42 = vector.multi_reduction <add>, %41, %cst_22 [1] : vector<32x512xf32> to vector<32xf32>
    %43 = vector.shape_cast %42 : vector<32xf32> to vector<32x1xf32>
    %cst_23 = arith.constant 5.120000e+02 : f32
    %44 = vector.broadcast %cst_23 : f32 to vector<32x1xf32>
    %45 = arith.divf %43, %44 : vector<32x1xf32>
    %46 = vector.broadcast %38 : vector<32x1xf32> to vector<32x512xf32>
    %47 = arith.subf %32, %46 : vector<32x512xf32>
    %cst_24 = arith.constant 9.99999974E-6 : f32
    %48 = vector.broadcast %cst_24 : f32 to vector<32x1xf32>
    %49 = arith.addf %45, %48 : vector<32x1xf32>
    %50 = math.rsqrt %49 : vector<32x1xf32>
    %51 = vector.broadcast %50 : vector<32x1xf32> to vector<32x512xf32>
    %52 = arith.mulf %47, %51 : vector<32x512xf32>
    %53 = vector.broadcast %33 : vector<1x512xf32> to vector<32x512xf32>
    %54 = arith.mulf %52, %53 : vector<32x512xf32>
    %55 = vector.broadcast %34 : vector<1x512xf32> to vector<32x512xf32>
    %56 = arith.addf %54, %55 : vector<32x512xf32>
    %c0_25 = arith.constant 0 : index
    %c0_26 = arith.constant 0 : index
    %57 = vector.load %arg9[%c0_25, %c0_26] : memref<32x512xf32, #tpu.memory_space<vmem>>, vector<32x512xf32>
    tpu.vector_store %arg9[%c0_25, %c0_26], %56 {strides = array<i32>} : memref<32x512xf32, #tpu.memory_space<vmem>>, vector<32x512xf32>,
    return
  }
  func.func @transform_0(%arg0: i32) -> (i32, i32) {
    %c0_i32 = arith.constant 0 : i32
    %c0_i32_0 = arith.constant 0 : i32
    return %arg0, %c0_i32 : i32, i32
  }
  func.func @transform_1(%arg0: i32) -> (i32, i32) {
    %c0_i32 = arith.constant 0 : i32
    %c0_i32_0 = arith.constant 0 : i32
    %c0_i32_1 = arith.constant 0 : i32
    return %c0_i32, %c0_i32_0 : i32, i32
  }
  func.func @transform_2(%arg0: i32) -> (i32, i32) {
    %c0_i32 = arith.constant 0 : i32
    %c0_i32_0 = arith.constant 0 : i32
    %c0_i32_1 = arith.constant 0 : i32
    return %c0_i32, %c0_i32_0 : i32, i32
  }
  func.func @transform_3(%arg0: i32) -> (i32, i32) {
    %c0_i32 = arith.constant 0 : i32
    %c0_i32_0 = arith.constant 0 : i32
    return %arg0, %c0_i32 : i32, i32
  }
  func.func @transform_4(%arg0: i32) -> (i32, i32) {
    %c0_i32 = arith.constant 0 : i32
    %c0_i32_0 = arith.constant 0 : i32
    %c0_i32_1 = arith.constant 0 : i32
    return %c0_i32, %c0_i32_0 : i32, i32
  }
  func.func @transform_5(%arg0: i32) -> (i32, i32) {
    %c0_i32 = arith.constant 0 : i32
    %c0_i32_0 = arith.constant 0 : i32
    %c0_i32_1 = arith.constant 0 : i32
    return %c0_i32, %c0_i32_0 : i32, i32
  }
  func.func @transform_6(%arg0: i32) -> (i32, i32) {
    %c0_i32 = arith.constant 0 : i32
    %c0_i32_0 = arith.constant 0 : i32
    %c0_i32_1 = arith.constant 0 : i32
    return %c0_i32, %c0_i32_0 : i32, i32
  }
  func.func @transform_7(%arg0: i32) -> (i32, i32) {
    %c0_i32 = arith.constant 0 : i32
    %c0_i32_0 = arith.constant 0 : i32
    %c0_i32_1 = arith.constant 0 : i32
    return %c0_i32, %c0_i32_0 : i32, i32
  }
  func.func @transform_8(%arg0: i32) -> (i32, i32) {
    %c0_i32 = arith.constant 0 : i32
    %c0_i32_0 = arith.constant 0 : i32
    return %arg0, %c0_i32 : i32, i32
  }
}

</mosaic_0001>

<llo_original>
// kernel: decoder_layer.6
$region0: #{decoder_layer.6}
  #allocation0 [shape = 'u32[]', space=smem, size = 0x4, offset = 0x4, fixed_abs, tag = 'smem constant byte address 0x4 - core index']
  #allocation1 [shape = 'u32[72,128]{1,0:T(1,128)}', space=vmem, size = 0x9000, scoped, tag = 'internal scratch']
  %s0 = inlined_call_operand.vmem [shape: f32[2,16,1536], index: 0, kind: input, shape index: {}, may-alias: {0,1,2}]
  %s1 = inlined_call_operand.vmem [shape: f32[2,16,1536], index: 1, kind: input, shape index: {}, may-alias: {0,1,2}]
  %s2 = inlined_call_operand.vmem [shape: f32[2,16,1536], index: 2, kind: input, shape index: {}, may-alias: {0,1,2}]
  %s3 = inlined_call_operand.vmem [shape: s32[2,16,16], index: 3, kind: input, shape index: {}]
  %s4 = inlined_call_operand.vmem [shape: f32[2,16,512], index: 4, kind: output, shape index: {}]
  %s5 = sld [smem:[#allocation0]]
  $region197: #{decoder_layer.6} parent=0
    _
  %s7 = ssub.s32 1, %s5
  %s8 = scalar_select 0, %s7, %s5
  $region1: #{decoder_layer.6} parent=0
    #allocation2 [shape = 'u8[16384]{0}', space=vmem, size = 0x4000, scoped, tag = 'input window, operand 0']
    #allocation3 [shape = 'u8[16384]{0}', space=vmem, size = 0x4000, scoped, tag = 'input window, operand 1']
    #allocation4 [shape = 'u8[16384]{0}', space=vmem, size = 0x4000, scoped, tag = 'input window, operand 2']
    #allocation5 [shape = 'u8[16384]{0}', space=vmem, size = 0x4000, scoped, tag = 'output window, operand 0']
    loop: start=0, step=1, limit=10
    $region2: #{decoder_layer.6} parent=1 // loop_pre_header
      _
    $region3: #{decoder_layer.6} parent=1 // loop_header
      %s10 = sphi 0, %s14
      %p11 = scmp.ge.s32.totalorder %s10, 10
      %s17 = sphi 0, %s29
      %s18 = sphi 0, %s25
      %s19 = sphi 0, %s17
      %s20 = sphi 0, %s18
      %s21 = sphi 0, %s19
      %s22 = sphi 0, %s20
      %s34 = sphi 0, %s36
      %s37 = sphi 0, %s34
      %s38 = sphi 0, %s37
      %s54 = sphi 0, %s38
      %s64 = sphi 0, %s66
      %s67 = sphi 0, %s64
      %s68 = sphi 0, %s67
      %s84 = sphi 0, %s68
      %s94 = sphi 0, %s96
      %s97 = sphi 0, %s94
      %s98 = sphi 0, %s97
      %s114 = sphi 0, %s98
      %s120 = sphi 0, %s122
      %s123 = sphi 0, %s120
      %s124 = sphi 0, %s123
      %s140 = sphi 0, %s124
      %s148 = sphi 0, %s150
      %s151 = sphi 0, %s148
      %s152 = sphi 0, %s151
      %s168 = sphi 0, %s152
    $region4: #{decoder_layer.6} parent=1 // loop_header_branch
      %13 = sbr.rel (%p11) target = $region8
    $region5: #{decoder_layer.6} parent=1 // loop_body
      %s15 = ssub.s32 %s10, 1
      %s16 = ssub.s32 %s10, 2
      %s23 = sadd.s32 1, %s18
      %p24 = scmp.ge.s32.totalorder %s23, 4
      %s25 = scalar_select %p24, 0, %s23
      %s26 = sadd.s32 1, %s17
      %s27 = scalar_select %p24, %s26, %s17
      %p28 = scmp.ge.s32.totalorder %s27, 2
      %s29 = scalar_select %p28, 0, %s27
      %s30 = ssub.s32 %s17, %s29
      %s31 = ssub.s32 %s18, %s25
      %s32 = sor.u32 %s30, %s31
      %p33 = scmp.eq.s32.totalorder %s32, 0
      %s35 = sadd.s32 %s34, 1
      %s36 = scalar_select %p33, %s34, %s35
      %p39 = pneg %p33
      %p40 = scmp.eq.s32.totalorder %s10, 7
      %p41 = por %p39, %p40
      %p42 = scmp.ne.s32.totalorder %s34, %s37
      %p43 = scmp.eq.s32.totalorder %s10, 0
      %p44 = por %p42, %p43
      %p45 = scmp.ne.s32.totalorder %s34, %s37
      %p46 = scmp.eq.s32.totalorder %s15, 7
      %p47 = por %p45, %p46
      %p48 = scmp.ne.s32.totalorder %s37, %s38
      %p49 = scmp.eq.s32.totalorder %s15, 0
      %p50 = por %p48, %p49
      %p51 = scmp.ne.s32.totalorder %s37, %s38
      %p52 = scmp.eq.s32.totalorder %s16, 7
      %p53 = por %p51, %p52
      %p55 = scmp.ne.s32.totalorder %s38, %s54
      %p56 = scmp.eq.s32.totalorder %s16, 0
      %p57 = por %p55, %p56
      %s58 = sadd.s32 %s18, 4
      %s59 = sadd.s32 %s25, 4
      %s60 = ssub.s32 %s17, %s29
      %s61 = ssub.s32 %s58, %s59
      %s62 = sor.u32 %s60, %s61
      %p63 = scmp.eq.s32.totalorder %s62, 0
      %s65 = sadd.s32 %s64, 1
      %s66 = scalar_select %p63, %s64, %s65
      %p69 = pneg %p63
      %p70 = scmp.eq.s32.totalorder %s10, 7
      %p71 = por %p69, %p70
      %p72 = scmp.ne.s32.totalorder %s64, %s67
      %p73 = scmp.eq.s32.totalorder %s10, 0
      %p74 = por %p72, %p73
      %p75 = scmp.ne.s32.totalorder %s64, %s67
      %p76 = scmp.eq.s32.totalorder %s15, 7
      %p77 = por %p75, %p76
      %p78 = scmp.ne.s32.totalorder %s67, %s68
      %p79 = scmp.eq.s32.totalorder %s15, 0
      %p80 = por %p78, %p79
      %p81 = scmp.ne.s32.totalorder %s67, %s68
      %p82 = scmp.eq.s32.totalorder %s16, 7
      %p83 = por %p81, %p82
      %p85 = scmp.ne.s32.totalorder %s68, %s84
      %p86 = scmp.eq.s32.totalorder %s16, 0
      %p87 = por %p85, %p86
      %s88 = sadd.s32 %s18, 8
      %s89 = sadd.s32 %s25, 8
      %s90 = ssub.s32 %s17, %s29
      %s91 = ssub.s32 %s88, %s89
      %s92 = sor.u32 %s90, %s91
      %p93 = scmp.eq.s32.totalorder %s92, 0
      %s95 = sadd.s32 %s94, 1
      %s96 = scalar_select %p93, %s94, %s95
      %p99 = pneg %p93
      %p100 = scmp.eq.s32.totalorder %s10, 7
      %p101 = por %p99, %p100
      %p102 = scmp.ne.s32.totalorder %s94, %s97
      %p103 = scmp.eq.s32.totalorder %s10, 0
      %p104 = por %p102, %p103
      %p105 = scmp.ne.s32.totalorder %s94, %s97
      %p106 = scmp.eq.s32.totalorder %s15, 7
      %p107 = por %p105, %p106
      %p108 = scmp.ne.s32.totalorder %s97, %s98
      %p109 = scmp.eq.s32.totalorder %s15, 0
      %p110 = por %p108, %p109
      %p111 = scmp.ne.s32.totalorder %s97, %s98
      %p112 = scmp.eq.s32.totalorder %s16, 7
      %p113 = por %p111, %p112
      %p115 = scmp.ne.s32.totalorder %s98, %s114
      %p116 = scmp.eq.s32.totalorder %s16, 0
      %p117 = por %p115, %p116
      %s118 = ssub.s32 %s17, %s29
      %p119 = scmp.eq.s32.totalorder %s118, 0
      %s121 = sadd.s32 %s120, 1
      %s122 = scalar_select %p119, %s120, %s121
      %p125 = pneg %p119
      %p126 = scmp.eq.s32.totalorder %s10, 7
      %p127 = por %p125, %p126
      %p128 = scmp.ne.s32.totalorder %s120, %s123
      %p129 = scmp.eq.s32.totalorder %s10, 0
      %p130 = por %p128, %p129
      %p131 = scmp.ne.s32.totalorder %s120, %s123
      %p132 = scmp.eq.s32.totalorder %s15, 7
      %p133 = por %p131, %p132
      %p134 = scmp.ne.s32.totalorder %s123, %s124
      %p135 = scmp.eq.s32.totalorder %s15, 0
      %p136 = por %p134, %p135
      %p137 = scmp.ne.s32.totalorder %s123, %s124
      %p138 = scmp.eq.s32.totalorder %s16, 7
      %p139 = por %p137, %p138
      %p141 = scmp.ne.s32.totalorder %s124, %s140
      %p142 = scmp.eq.s32.totalorder %s16, 0
      %p143 = por %p141, %p142
      %s144 = ssub.s32 %s17, %s29
      %s145 = ssub.s32 %s18, %s25
      %s146 = sor.u32 %s144, %s145
      %p147 = scmp.eq.s32.totalorder %s146, 0
      %s149 = sadd.s32 %s148, 1
      %s150 = scalar_select %p147, %s148, %s149
      %p153 = pneg %p147
      %p154 = scmp.eq.s32.totalorder %s10, 7
      %p155 = por %p153, %p154
      %p156 = scmp.ne.s32.totalorder %s148, %s151
      %p157 = scmp.eq.s32.totalorder %s10, 0
      %p158 = por %p156, %p157
      %p159 = scmp.ne.s32.totalorder %s148, %s151
      %p160 = scmp.eq.s32.totalorder %s15, 7
      %p161 = por %p159, %p160
      %p162 = scmp.ne.s32.totalorder %s151, %s152
      %p163 = scmp.eq.s32.totalorder %s15, 0
      %p164 = por %p162, %p163
      %p165 = scmp.ne.s32.totalorder %s151, %s152
      %p166 = scmp.eq.s32.totalorder %s16, 7
      %p167 = por %p165, %p166
      %p169 = scmp.ne.s32.totalorder %s152, %s168
      %p170 = scmp.eq.s32.totalorder %s16, 0
      %p171 = por %p169, %p170
      %p172 = scmp.le.s32.totalorder 1, %s10
      %p173 = scmp.lt.s32.totalorder %s10, 9
      %p174 = pnand %p172, %p173
      %p175 = pneg %p174
      // Predicated region
      $region9: #{decoder_layer.6} parent=5 // pred_check
        _
      $region10: #{decoder_layer.6} parent=5 // pred_check_branch
        %177 = sbr.rel (%p174) target = $region12
      $region11: #{decoder_layer.6} parent=5 // pred_region
        %s178 = ssub.s32 %s10, 1
      $region12: #{decoder_layer.6} parent=5 // pred_fallthru
        _
      %p179 = scmp.lt.s32.totalorder %s10, 8
      // Predicated region
      $region13: #{decoder_layer.6} parent=5 // pred_check
        %p180 = pneg %p179
      $region14: #{decoder_layer.6} parent=5 // pred_check_branch
        %182 = sbr.rel (%p180) target = $region16
      $region15: #{decoder_layer.6} parent=5 // pred_region
        // Predicated region
        $region17: #{decoder_layer.6} parent=15 // pred_check
          %p183 = pneg %p44
        $region18: #{decoder_layer.6} parent=15 // pred_check_branch
          %185 = sbr.rel (%p183) target = $region20
        $region19: #{decoder_layer.6} parent=15 // pred_region
          %s186 = sand.u32 %s34, 1
          %s187 = sand.u32 %s34, 1
          %s188 = smul.addr %s187, 16
          %s189 = scalar_lea.vmem [#allocation2], %s188
          %s190 = smul.addr %s17, 24
          %s191 = sadd.s32 %s18, %s190
          %s192 = smul.addr %s191, 8
          %s193 = scalar_lea.vmem %s0, %s192
          // Predicated region
          $region21: #{decoder_layer.6} parent=19 // pred_check
            _
          $region22: #{decoder_layer.6} parent=19 // pred_check_branch
            %195 = sbr.rel (0) target = $region24
          $region23: #{decoder_layer.6} parent=19 // pred_region
            // Predicated region
            $region25: #{decoder_layer.6} parent=23 // pred_check
              _
            $region26: #{decoder_layer.6} parent=23 // pred_check_branch
              %197 = sbr.rel (0) target = $region28
            $region27: #{decoder_layer.6} parent=23 // pred_region
              // Predicated region
              $region40: #{decoder_layer.6} parent=27 // pred_check
                _
              $region41: #{decoder_layer.6} parent=27 // pred_check_branch
                %215 = sbr.rel (0) target = $region43
              $region42: #{decoder_layer.6} parent=27 // pred_region
                loop: start=0, step=1, limit=1
                $region44: #{decoder_layer.6} parent=42 // loop_pre_header
                  _
                $region45: #{decoder_layer.6} parent=42 // loop_header
                  %s217 = sphi 0, %s221
                  %p218 = scmp.ge.s32.totalorder %s217, 1
                  %s222 = sphi %s193, %s193
                  %s223 = sphi %s189, %s189
                $region46: #{decoder_layer.6} parent=42 // loop_header_branch
                  %220 = sbr.rel (%p218) target = $region50
                $region47: #{decoder_layer.6} parent=42 // loop_body
                  %v224 = vld [vmem:[%s222] sm:$0xff]
                  %225 = vst [vmem:[%s223] sm:$0xff] %v224
                  %v226 = vld [vmem:[%s222 + $0x60] sm:$0xff]
                  %227 = vst [vmem:[%s223 + $0x8] sm:$0xff] %v226
                $region48: #{decoder_layer.6} parent=42 // loop_footer
                  %s221 = sadd.s32 1, %s217
                $region49: #{decoder_layer.6} parent=42 // loop_footer_branch
                  %216 = sbr.rel target = $region45
                $region50: #{decoder_layer.6} parent=42 // loop_exit
                  _
              $region43: #{decoder_layer.6} parent=27 // pred_fallthru
                _
              // Predicated region
              $region51: #{decoder_layer.6} parent=27 // pred_check
                _
              $region52: #{decoder_layer.6} parent=27 // pred_check_branch
                %229 = sbr.rel target = $region54
              $region53: #{decoder_layer.6} parent=27 // pred_region
                _
              $region54: #{decoder_layer.6} parent=27 // pred_fallthru
                _
            $region28: #{decoder_layer.6} parent=23 // pred_fallthru
              _
            // Predicated region
            $region29: #{decoder_layer.6} parent=23 // pred_check
              _
            $region30: #{decoder_layer.6} parent=23 // pred_check_branch
              %199 = sbr.rel target = $region32
            $region31: #{decoder_layer.6} parent=23 // pred_region
              %s201 = ssub.s32 256, 1
              loop: start=0, step=1, limit=1
              $region33: #{decoder_layer.6} parent=31 // loop_pre_header
                _
              $region34: #{decoder_layer.6} parent=31 // loop_header
                %s203 = sphi 0, %s207
                %p204 = scmp.ge.s32.totalorder %s203, 1
                %s208 = sphi %s193, %s193
                %s209 = sphi %s189, %s189
              $region35: #{decoder_layer.6} parent=31 // loop_header_branch
                %206 = sbr.rel (%p204) target = $region39
              $region36: #{decoder_layer.6} parent=31 // loop_body
                %v210 = vld [vmem:[%s208] sm:%s201]
                %211 = vst [vmem:[%s209] sm:%s201] %v210
                %v212 = vld [vmem:[%s208 + $0x60] sm:%s201]
                %213 = vst [vmem:[%s209 + $0x8] sm:%s201] %v212
              $region37: #{decoder_layer.6} parent=31 // loop_footer
                %s207 = sadd.s32 1, %s203
              $region38: #{decoder_layer.6} parent=31 // loop_footer_branch
                %202 = sbr.rel target = $region34
              $region39: #{decoder_layer.6} parent=31 // loop_exit
                _
            $region32: #{decoder_layer.6} parent=23 // pred_fallthru
              _
          $region24: #{decoder_layer.6} parent=19 // pred_fallthru
            _
          %230 = vnop
        $region20: #{decoder_layer.6} parent=15 // pred_fallthru
          _
        // Predicated region
        $region55: #{decoder_layer.6} parent=15 // pred_check
          %p231 = pneg %p74
        $region56: #{decoder_layer.6} parent=15 // pred_check_branch
          %233 = sbr.rel (%p231) target = $region58
        $region57: #{decoder_layer.6} parent=15 // pred_region
          %s234 = sand.u32 %s64, 1
          %s235 = sand.u32 %s64, 1
          %s236 = smul.addr %s235, 16
          %s237 = scalar_lea.vmem [#allocation3], %s236
          %s238 = sadd.s32 %s18, 4
          %s239 = smul.addr %s17, 24
          %s240 = sadd.s32 %s238, %s239
          %s241 = smul.addr %s240, 8
          %s242 = scalar_lea.vmem %s1, %s241
          // Predicated region
          $region59: #{decoder_layer.6} parent=57 // pred_check
            _
          $region60: #{decoder_layer.6} parent=57 // pred_check_branch
            %244 = sbr.rel (0) target = $region62
          $region61: #{decoder_layer.6} parent=57 // pred_region
            // Predicated region
            $region63: #{decoder_layer.6} parent=61 // pred_check
              _
            $region64: #{decoder_layer.6} parent=61 // pred_check_branch
              %246 = sbr.rel (0) target = $region66
            $region65: #{decoder_layer.6} parent=61 // pred_region
              // Predicated region
              $region78: #{decoder_layer.6} parent=65 // pred_check
                _
              $region79: #{decoder_layer.6} parent=65 // pred_check_branch
                %264 = sbr.rel (0) target = $region81
              $region80: #{decoder_layer.6} parent=65 // pred_region
                loop: start=0, step=1, limit=1
                $region82: #{decoder_layer.6} parent=80 // loop_pre_header
                  _
                $region83: #{decoder_layer.6} parent=80 // loop_header
                  %s266 = sphi 0, %s270
                  %p267 = scmp.ge.s32.totalorder %s266, 1
                  %s271 = sphi %s242, %s242
                  %s272 = sphi %s237, %s237
                $region84: #{decoder_layer.6} parent=80 // loop_header_branch
                  %269 = sbr.rel (%p267) target = $region88
                $region85: #{decoder_layer.6} parent=80 // loop_body
                  %v273 = vld [vmem:[%s271] sm:$0xff]
                  %274 = vst [vmem:[%s272] sm:$0xff] %v273
                  %v275 = vld [vmem:[%s271 + $0x60] sm:$0xff]
                  %276 = vst [vmem:[%s272 + $0x8] sm:$0xff] %v275
                $region86: #{decoder_layer.6} parent=80 // loop_footer
                  %s270 = sadd.s32 1, %s266
                $region87: #{decoder_layer.6} parent=80 // loop_footer_branch
                  %265 = sbr.rel target = $region83
                $region88: #{decoder_layer.6} parent=80 // loop_exit
                  _
              $region81: #{decoder_layer.6} parent=65 // pred_fallthru
                _
              // Predicated region
              $region89: #{decoder_layer.6} parent=65 // pred_check
                _
              $region90: #{decoder_layer.6} parent=65 // pred_check_branch
                %278 = sbr.rel target = $region92
              $region91: #{decoder_layer.6} parent=65 // pred_region
                _
              $region92: #{decoder_layer.6} parent=65 // pred_fallthru
                _
            $region66: #{decoder_layer.6} parent=61 // pred_fallthru
              _
            // Predicated region
            $region67: #{decoder_layer.6} parent=61 // pred_check
              _
            $region68: #{decoder_layer.6} parent=61 // pred_check_branch
              %248 = sbr.rel target = $region70
            $region69: #{decoder_layer.6} parent=61 // pred_region
              %s250 = ssub.s32 256, 1
              loop: start=0, step=1, limit=1
              $region71: #{decoder_layer.6} parent=69 // loop_pre_header
                _
              $region72: #{decoder_layer.6} parent=69 // loop_header
                %s252 = sphi 0, %s256
                %p253 = scmp.ge.s32.totalorder %s252, 1
                %s257 = sphi %s242, %s242
                %s258 = sphi %s237, %s237
              $region73: #{decoder_layer.6} parent=69 // loop_header_branch
                %255 = sbr.rel (%p253) target = $region77
              $region74: #{decoder_layer.6} parent=69 // loop_body
                %v259 = vld [vmem:[%s257] sm:%s250]
                %260 = vst [vmem:[%s258] sm:%s250] %v259
                %v261 = vld [vmem:[%s257 + $0x60] sm:%s250]
                %262 = vst [vmem:[%s258 + $0x8] sm:%s250] %v261
              $region75: #{decoder_layer.6} parent=69 // loop_footer
                %s256 = sadd.s32 1, %s252
              $region76: #{decoder_layer.6} parent=69 // loop_footer_branch
                %251 = sbr.rel target = $region72
              $region77: #{decoder_layer.6} parent=69 // loop_exit
                _
            $region70: #{decoder_layer.6} parent=61 // pred_fallthru
              _
          $region62: #{decoder_layer.6} parent=57 // pred_fallthru
            _
          %279 = vnop
        $region58: #{decoder_layer.6} parent=15 // pred_fallthru
          _
        // Predicated region
        $region93: #{decoder_layer.6} parent=15 // pred_check
          %p280 = pneg %p104
        $region94: #{decoder_layer.6} parent=15 // pred_check_branch
          %282 = sbr.rel (%p280) target = $region96
        $region95: #{decoder_layer.6} parent=15 // pred_region
          %s283 = sand.u32 %s94, 1
          %s284 = sand.u32 %s94, 1
          %s285 = smul.addr %s284, 16
          %s286 = scalar_lea.vmem [#allocation4], %s285
          %s287 = sadd.s32 %s18, 8
          %s288 = smul.addr %s17, 24
          %s289 = sadd.s32 %s287, %s288
          %s290 = smul.addr %s289, 8
          %s291 = scalar_lea.vmem %s2, %s290
          // Predicated region
          $region97: #{decoder_layer.6} parent=95 // pred_check
            _
          $region98: #{decoder_layer.6} parent=95 // pred_check_branch
            %293 = sbr.rel (0) target = $region100
          $region99: #{decoder_layer.6} parent=95 // pred_region
            // Predicated region
            $region101: #{decoder_layer.6} parent=99 // pred_check
              _
            $region102: #{decoder_layer.6} parent=99 // pred_check_branch
              %295 = sbr.rel (0) target = $region104
            $region103: #{decoder_layer.6} parent=99 // pred_region
              // Predicated region
              $region116: #{decoder_layer.6} parent=103 // pred_check
                _
              $region117: #{decoder_layer.6} parent=103 // pred_check_branch
                %313 = sbr.rel (0) target = $region119
              $region118: #{decoder_layer.6} parent=103 // pred_region
                loop: start=0, step=1, limit=1
                $region120: #{decoder_layer.6} parent=118 // loop_pre_header
                  _
                $region121: #{decoder_layer.6} parent=118 // loop_header
                  %s315 = sphi 0, %s319
                  %p316 = scmp.ge.s32.totalorder %s315, 1
                  %s320 = sphi %s291, %s291
                  %s321 = sphi %s286, %s286
                $region122: #{decoder_layer.6} parent=118 // loop_header_branch
                  %318 = sbr.rel (%p316) target = $region126
                $region123: #{decoder_layer.6} parent=118 // loop_body
                  %v322 = vld [vmem:[%s320] sm:$0xff]
                  %323 = vst [vmem:[%s321] sm:$0xff] %v322
                  %v324 = vld [vmem:[%s320 + $0x60] sm:$0xff]
                  %325 = vst [vmem:[%s321 + $0x8] sm:$0xff] %v324
                $region124: #{decoder_layer.6} parent=118 // loop_footer
                  %s319 = sadd.s32 1, %s315
                $region125: #{decoder_layer.6} parent=118 // loop_footer_branch
                  %314 = sbr.rel target = $region121
                $region126: #{decoder_layer.6} parent=118 // loop_exit
                  _
              $region119: #{decoder_layer.6} parent=103 // pred_fallthru
                _
              // Predicated region
              $region127: #{decoder_layer.6} parent=103 // pred_check
                _
              $region128: #{decoder_layer.6} parent=103 // pred_check_branch
                %327 = sbr.rel target = $region130
              $region129: #{decoder_layer.6} parent=103 // pred_region
                _
              $region130: #{decoder_layer.6} parent=103 // pred_fallthru
                _
            $region104: #{decoder_layer.6} parent=99 // pred_fallthru
              _
            // Predicated region
            $region105: #{decoder_layer.6} parent=99 // pred_check
              _
            $region106: #{decoder_layer.6} parent=99 // pred_check_branch
              %297 = sbr.rel target = $region108
            $region107: #{decoder_layer.6} parent=99 // pred_region
              %s299 = ssub.s32 256, 1
              loop: start=0, step=1, limit=1
              $region109: #{decoder_layer.6} parent=107 // loop_pre_header
                _
              $region110: #{decoder_layer.6} parent=107 // loop_header
                %s301 = sphi 0, %s305
                %p302 = scmp.ge.s32.totalorder %s301, 1
                %s306 = sphi %s291, %s291
                %s307 = sphi %s286, %s286
              $region111: #{decoder_layer.6} parent=107 // loop_header_branch
                %304 = sbr.rel (%p302) target = $region115
              $region112: #{decoder_layer.6} parent=107 // loop_body
                %v308 = vld [vmem:[%s306] sm:%s299]
                %309 = vst [vmem:[%s307] sm:%s299] %v308
                %v310 = vld [vmem:[%s306 + $0x60] sm:%s299]
                %311 = vst [vmem:[%s307 + $0x8] sm:%s299] %v310
              $region113: #{decoder_layer.6} parent=107 // loop_footer
                %s305 = sadd.s32 1, %s301
              $region114: #{decoder_layer.6} parent=107 // loop_footer_branch
                %300 = sbr.rel target = $region110
              $region115: #{decoder_layer.6} parent=107 // loop_exit
                _
            $region108: #{decoder_layer.6} parent=99 // pred_fallthru
              _
          $region100: #{decoder_layer.6} parent=95 // pred_fallthru
            _
          %328 = vnop
        $region96: #{decoder_layer.6} parent=15 // pred_fallthru
          _
        // Predicated region
        $region131: #{decoder_layer.6} parent=15 // pred_check
          %p329 = pneg %p130
        $region132: #{decoder_layer.6} parent=15 // pred_check_branch
          %331 = sbr.rel (%p329) target = $region134
        $region133: #{decoder_layer.6} parent=15 // pred_region
          %p332 = scmp.lt.s32.totalorder %s17, 1
          %s333 = scalar_select %p332, %s17, 1
          %s334 = smul.addr %s333, 2
          %s335 = smul.addr %s334, 8
          %s336 = scalar_lea.vmem %s3, %s335
        $region134: #{decoder_layer.6} parent=15 // pred_fallthru
          _
      $region16: #{decoder_layer.6} parent=5 // pred_fallthru
        _
      %p337 = scmp.le.s32.totalorder 1, %s10
      %p338 = scmp.lt.s32.totalorder %s10, 9
      %p339 = pnand %p337, %p338
      %p340 = pneg %p339
      // Predicated region
      $region135: #{decoder_layer.6} parent=5 // pred_check
        _
      $region136: #{decoder_layer.6} parent=5 // pred_check_branch
        %342 = sbr.rel (%p339) target = $region138
      $region137: #{decoder_layer.6} parent=5 // pred_region
        %s343 = ssub.s32 %s10, 1
        %s344 = sand.u32 %s37, 1
        %s345 = sand.u32 %s37, 1
        %s346 = smul.addr %s345, 16
        %s347 = scalar_lea.vmem [#allocation2], %s346
        // Predicated region
        $region139: #{decoder_layer.6} parent=137 // pred_check
          %p348 = pneg %p50
        $region140: #{decoder_layer.6} parent=137 // pred_check_branch
          %350 = sbr.rel (%p348) target = $region142
        $region141: #{decoder_layer.6} parent=137 // pred_region
          _
        $region142: #{decoder_layer.6} parent=137 // pred_fallthru
          _
        %s351 = sand.u32 %s67, 1
        %s352 = sand.u32 %s67, 1
        %s353 = smul.addr %s352, 16
        %s354 = scalar_lea.vmem [#allocation3], %s353
        // Predicated region
        $region143: #{decoder_layer.6} parent=137 // pred_check
          %p355 = pneg %p80
        $region144: #{decoder_layer.6} parent=137 // pred_check_branch
          %357 = sbr.rel (%p355) target = $region146
        $region145: #{decoder_layer.6} parent=137 // pred_region
          _
        $region146: #{decoder_layer.6} parent=137 // pred_fallthru
          _
        %s358 = sand.u32 %s97, 1
        %s359 = sand.u32 %s97, 1
        %s360 = smul.addr %s359, 16
        %s361 = scalar_lea.vmem [#allocation4], %s360
        // Predicated region
        $region147: #{decoder_layer.6} parent=137 // pred_check
          %p362 = pneg %p110
        $region148: #{decoder_layer.6} parent=137 // pred_check_branch
          %364 = sbr.rel (%p362) target = $region150
        $region149: #{decoder_layer.6} parent=137 // pred_region
          _
        $region150: #{decoder_layer.6} parent=137 // pred_fallthru
          _
        %s365 = sand.u32 %s37, 1
        %s366 = sand.u32 %s37, 1
        %s367 = smul.addr %s366, 16
        %s368 = scalar_lea.vmem [#allocation2], %s367
        %p369 = pneg %p50
        %p370 = pneg %p47
        %s371 = sand.u32 %s67, 1
        %s372 = sand.u32 %s67, 1
        %s373 = smul.addr %s372, 16
        %s374 = scalar_lea.vmem [#allocation3], %s373
        %p375 = pneg %p80
        %p376 = pneg %p77
        %s377 = sand.u32 %s97, 1
        %s378 = sand.u32 %s97, 1
        %s379 = smul.addr %s378, 16
        %s380 = scalar_lea.vmem [#allocation4], %s379
        %p381 = pneg %p110
        %p382 = pneg %p107
        %p383 = scmp.lt.s32.totalorder %s19, 1
        %s384 = scalar_select %p383, %s19, 1
        %s385 = smul.addr %s384, 2
        %s386 = smul.addr %s385, 8
        %s387 = scalar_lea.vmem %s3, %s386
        %p388 = pneg %p136
        %p389 = pneg %p133
        %p390 = pneg %p164
        %p391 = pneg %p161
        %s392 = sand.u32 %s151, 1
        %s393 = sand.u32 %s151, 1
        %s394 = smul.addr %s393, 16
        %s395 = scalar_lea.vmem [#allocation5], %s394
        %s396 = sadd.s32 %s20, 4
        %s397 = sadd.s32 %s20, 8
        %p398 = scmp.lt.s32.totalorder %s19, 1
        %s399 = scalar_select %p398, %s19, 1
        %s400 = smul.addr %s399, 2
        %s401 = smul.addr %s400, 8
        %s402 = scalar_lea.vmem %s3, %s401
        %v403 = vld [vmem:[%s347] sm:$0xff]
        %v404 = vld [vmem:[%s347 + $0x8] sm:$0xff]
        %v405 = vmul.f32 %v403, 0.125
        %v406 = vmul.f32 %v404, 0.125
        %v407 = vld [vmem:[%s354] sm:$0xff]
        %v408 = vld [vmem:[%s354 + $0x8] sm:$0xff]
        %v409 = vld [vmem:[%s361] sm:$0xff]
        %v410 = vld [vmem:[%s361 + $0x8] sm:$0xff]
        %v411 = vld [vmem:[%s402] sm:$0xff]
        %v412 = vld [vmem:[%s402 + $0x8] sm:$0xff]
        %vm413 = vcmp.ne.s32.totalorder %v411, 0
        %vm414 = vcmp.ne.s32.totalorder %v412, 0
        %vm415 = vcmask 523264
        %v417 = vsel %vm415, %v405, 0
        %v420 = vsel %vm415, %v406, 0
        %v423 = vsel %vm415, %v407, 0
        %v426 = vsel %vm415, %v408, 0
        %428 = vmatpush.xpose.msra.mxu0 0.0
        %429 = vmatpush.xpose.msra.mxu0 0.0
        %430 = vmatpush.xpose.msra.mxu0 0.0
        %431 = vmatpush.xpose.msra.mxu0 0.0
        %432 = vmatpush.xpose.msra.mxu0 0.0
        %433 = vmatpush.xpose.msra.mxu0 0.0
        %434 = vmatpush.xpose.msra.mxu0 0.0
        %435 = vmatpush.xpose.msra.mxu0 0.0
        %436 = vmatpush.xpose.msra.mxu0 0.0
        %437 = vmatpush.xpose.msra.mxu0 0.0
        %438 = vmatpush.xpose.msra.mxu0 0.0
        %439 = vmatpush.xpose.msra.mxu0 0.0
        %440 = vmatpush.xpose.msra.mxu0 0.0
        %441 = vmatpush.xpose.msra.mxu0 0.0
        %442 = vmatpush.xpose.msra.mxu0 %v426
        %443 = vmatpush.xpose.msra.mxu0 %v423
        %444 = vmatmul.f32.gmra.mxu0 %v417
        %v445 = vpop.f32.mrf.mxu0
        %v446 = vadd.f32 0.0, %v445
        %447 = vmatmul.f32.gmra.mxu0 %v420
        %v448 = vpop.f32.mrf.mxu0
        %v449 = vadd.f32 0.0, %v448
        %450 = vdwg.mxu0
        %v451 = vsel %vm413, -1e+09, %v446
        %v452 = vsel %vm414, -1e+09, %v449
        %vm453 = vcmask 130048
        %v454 = vsel %vm453, %v451, -inf
        %455 = vmax.xlane.f32.xlu0 %v454
        %v456 = vpop.xlane.xlu0 %455
        %v457 = vsel %vm453, %v452, -inf
        %458 = vmax.xlane.f32.xlu0 %v457
        %v459 = vpop.xlane.xlu0 %458
        %v460 = vsub.f32 %v451, %v456
        %v461 = vsub.f32 %v452, %v459
        %v462 = vmul.f32 %v460, 1.442695
        %v463 = vpow.pop %v462
        %v464 = vmul.f32 %v461, 1.442695
        %v465 = vpow.pop %v464
        %v466 = vsel %vm453, %v463, 0.0
        %467 = vadd.xlane.f32.xlu0 %v466
        %v468 = vpop.xlane.xlu0 %467
        %v469 = vsel %vm453, %v465, 0.0
        %470 = vadd.xlane.f32.xlu0 %v469
        %v471 = vpop.xlane.xlu0 %470
        %v472 = vrcp.pop %v468
        %v473 = vrcp.pop %v471
        %v474 = vmul.f32 %v463, %v472
        %v475 = vmul.f32 %v465, %v473
        %v477 = vsel %vm453, %v474, 0
        %v480 = vsel %vm453, %v475, 0
        %482 = vmatpush.msra.mxu0 0.0
        %483 = vmatpush.msra.mxu0 0.0
        %484 = vmatpush.msra.mxu0 0.0
        %485 = vmatpush.msra.mxu0 0.0
        %486 = vmatpush.msra.mxu0 0.0
        %487 = vmatpush.msra.mxu0 0.0
        %488 = vmatpush.msra.mxu0 0.0
        %489 = vmatpush.msra.mxu0 0.0
        %490 = vmatpush.msra.mxu0 0.0
        %491 = vmatpush.msra.mxu0 0.0
        %492 = vmatpush.msra.mxu0 0.0
        %493 = vmatpush.msra.mxu0 0.0
        %494 = vmatpush.msra.mxu0 0.0
        %495 = vmatpush.msra.mxu0 0.0
        %496 = vmatpush.msra.mxu0 %v410
        %497 = vmatpush.msra.mxu0 %v409
        %498 = vmatmul.f32.gmra.mxu0 %v477
        %v499 = vpop.f32.mrf.mxu0
        %v500 = vadd.f32 0.0, %v499
        %501 = vmatmul.f32.gmra.mxu0 %v480
        %v502 = vpop.f32.mrf.mxu0
        %v503 = vadd.f32 0.0, %v502
        %504 = vdwg.mxu0
        %505 = vrot.lane.b32.xlu0 %v405, 64
        %v506 = vpop.permute.xlu0 %505
        %507 = vrot.lane.b32.xlu0 %v406, 64
        %v508 = vpop.permute.xlu0 %507
        %509 = vrot.lane.b32.xlu0 %v407, 64
        %v510 = vpop.permute.xlu0 %509
        %511 = vrot.lane.b32.xlu0 %v408, 64
        %v512 = vpop.permute.xlu0 %511
        %v513 = vsel %vm415, %v506, 0
        %v515 = vsel %vm415, %v508, 0
        %v517 = vsel %vm415, %v510, 0
        %v519 = vsel %vm415, %v512, 0
        %521 = vmatpush.xpose.msra.mxu0 0.0
        %522 = vmatpush.xpose.msra.mxu0 0.0
        %523 = vmatpush.xpose.msra.mxu0 0.0
        %524 = vmatpush.xpose.msra.mxu0 0.0
        %525 = vmatpush.xpose.msra.mxu0 0.0
        %526 = vmatpush.xpose.msra.mxu0 0.0
        %527 = vmatpush.xpose.msra.mxu0 0.0
        %528 = vmatpush.xpose.msra.mxu0 0.0
        %529 = vmatpush.xpose.msra.mxu0 0.0
        %530 = vmatpush.xpose.msra.mxu0 0.0
        %531 = vmatpush.xpose.msra.mxu0 0.0
        %532 = vmatpush.xpose.msra.mxu0 0.0
        %533 = vmatpush.xpose.msra.mxu0 0.0
        %534 = vmatpush.xpose.msra.mxu0 0.0
        %535 = vmatpush.xpose.msra.mxu0 %v519
        %536 = vmatpush.xpose.msra.mxu0 %v517
        %537 = vmatmul.f32.gmra.mxu0 %v513
        %v538 = vpop.f32.mrf.mxu0
        %v539 = vadd.f32 0.0, %v538
        %540 = vmatmul.f32.gmra.mxu0 %v515
        %v541 = vpop.f32.mrf.mxu0
        %v542 = vadd.f32 0.0, %v541
        %543 = vdwg.mxu0
        %v544 = vsel %vm413, -1e+09, %v539
        %v545 = vsel %vm414, -1e+09, %v542
        %v546 = vsel %vm453, %v544, -inf
        %547 = vmax.xlane.f32.xlu0 %v546
        %v548 = vpop.xlane.xlu0 %547
        %v549 = vsel %vm453, %v545, -inf
        %550 = vmax.xlane.f32.xlu0 %v549
        %v551 = vpop.xlane.xlu0 %550
        %v552 = vsub.f32 %v544, %v548
        %v553 = vsub.f32 %v545, %v551
        %v554 = vmul.f32 %v552, 1.442695
        %v555 = vpow.pop %v554
        %v556 = vmul.f32 %v553, 1.442695
        %v557 = vpow.pop %v556
        %v558 = vsel %vm453, %v555, 0.0
        %559 = vadd.xlane.f32.xlu0 %v558
        %v560 = vpop.xlane.xlu0 %559
        %v561 = vsel %vm453, %v557, 0.0
        %562 = vadd.xlane.f32.xlu0 %v561
        %v563 = vpop.xlane.xlu0 %562
        %v564 = vrcp.pop %v560
        %v565 = vrcp.pop %v563
        %v566 = vmul.f32 %v555, %v564
        %v567 = vmul.f32 %v557, %v565
        %570 = vrot.lane.b32.xlu0 %v409, 64
        %v571 = vpop.permute.xlu0 %570
        %572 = vrot.lane.b32.xlu0 %v410, 64
        %v573 = vpop.permute.xlu0 %572
        %v577 = vsel %vm453, %v566, 0
        %v580 = vsel %vm453, %v567, 0
        %582 = vmatpush.msra.mxu0 0.0
        %583 = vmatpush.msra.mxu0 0.0
        %584 = vmatpush.msra.mxu0 0.0
        %585 = vmatpush.msra.mxu0 0.0
        %586 = vmatpush.msra.mxu0 0.0
        %587 = vmatpush.msra.mxu0 0.0
        %588 = vmatpush.msra.mxu0 0.0
        %589 = vmatpush.msra.mxu0 0.0
        %590 = vmatpush.msra.mxu0 0.0
        %591 = vmatpush.msra.mxu0 0.0
        %592 = vmatpush.msra.mxu0 0.0
        %593 = vmatpush.msra.mxu0 0.0
        %594 = vmatpush.msra.mxu0 0.0
        %595 = vmatpush.msra.mxu0 0.0
        %596 = vmatpush.msra.mxu0 %v573
        %597 = vmatpush.msra.mxu0 %v571
        %598 = vmatmul.f32.gmra.mxu0 %v577
        %v599 = vpop.f32.mrf.mxu0
        %v600 = vadd.f32 0.0, %v599
        %601 = vmatmul.f32.gmra.mxu0 %v580
        %v602 = vpop.f32.mrf.mxu0
        %v603 = vadd.f32 0.0, %v602
        %604 = vdwg.mxu0
        %607 = vrot.lane.b32.xlu0 %v600, 64
        %v608 = vpop.permute.xlu0 %607
        %609 = vrot.lane.b32.xlu0 %v603, 64
        %v610 = vpop.permute.xlu0 %609
        %v613 = vsel %vm415, %v500, %v608
        %v614 = vsel %vm415, %v503, %v610
        %615 = vst [vmem:[%s395] sm:$0xff] %v613
        %616 = vst [vmem:[%s395 + $0x8] sm:$0xff] %v614
        %s617 = sand.u32 %s151, 1
        %s618 = sand.u32 %s151, 1
        %s619 = smul.addr %s618, 16
        %s620 = scalar_lea.vmem [#allocation5], %s619
        // Predicated region
        $region151: #{decoder_layer.6} parent=137 // pred_check
          %p621 = pneg %p161
        $region152: #{decoder_layer.6} parent=137 // pred_check_branch
          %623 = sbr.rel (%p621) target = $region154
        $region153: #{decoder_layer.6} parent=137 // pred_region
          %s624 = smul.addr %s19, 8
          %s625 = sadd.s32 %s20, %s624
          %s626 = smul.addr %s625, 8
          %s627 = scalar_lea.vmem %s4, %s626
          // Predicated region
          $region155: #{decoder_layer.6} parent=153 // pred_check
            _
          $region156: #{decoder_layer.6} parent=153 // pred_check_branch
            %629 = sbr.rel (0) target = $region158
          $region157: #{decoder_layer.6} parent=153 // pred_region
            // Predicated region
            $region159: #{decoder_layer.6} parent=157 // pred_check
              _
            $region160: #{decoder_layer.6} parent=157 // pred_check_branch
              %631 = sbr.rel (0) target = $region162
            $region161: #{decoder_layer.6} parent=157 // pred_region
              // Predicated region
              $region174: #{decoder_layer.6} parent=161 // pred_check
                _
              $region175: #{decoder_layer.6} parent=161 // pred_check_branch
                %649 = sbr.rel (0) target = $region177
              $region176: #{decoder_layer.6} parent=161 // pred_region
                loop: start=0, step=1, limit=1
                $region178: #{decoder_layer.6} parent=176 // loop_pre_header
                  _
                $region179: #{decoder_layer.6} parent=176 // loop_header
                  %s651 = sphi 0, %s655
                  %p652 = scmp.ge.s32.totalorder %s651, 1
                  %s656 = sphi %s620, %s620
                  %s657 = sphi %s627, %s627
                $region180: #{decoder_layer.6} parent=176 // loop_header_branch
                  %654 = sbr.rel (%p652) target = $region184
                $region181: #{decoder_layer.6} parent=176 // loop_body
                  %v658 = vld [vmem:[%s656] sm:$0xff]
                  %659 = vst [vmem:[%s657] sm:$0xff] %v658
                  %v660 = vld [vmem:[%s656 + $0x8] sm:$0xff]
                  %661 = vst [vmem:[%s657 + $0x20] sm:$0xff] %v660
                $region182: #{decoder_layer.6} parent=176 // loop_footer
                  %s655 = sadd.s32 1, %s651
                $region183: #{decoder_layer.6} parent=176 // loop_footer_branch
                  %650 = sbr.rel target = $region179
                $region184: #{decoder_layer.6} parent=176 // loop_exit
                  _
              $region177: #{decoder_layer.6} parent=161 // pred_fallthru
                _
              // Predicated region
              $region185: #{decoder_layer.6} parent=161 // pred_check
                _
              $region186: #{decoder_layer.6} parent=161 // pred_check_branch
                %663 = sbr.rel target = $region188
              $region187: #{decoder_layer.6} parent=161 // pred_region
                _
              $region188: #{decoder_layer.6} parent=161 // pred_fallthru
                _
            $region162: #{decoder_layer.6} parent=157 // pred_fallthru
              _
            // Predicated region
            $region163: #{decoder_layer.6} parent=157 // pred_check
              _
            $region164: #{decoder_layer.6} parent=157 // pred_check_branch
              %633 = sbr.rel target = $region166
            $region165: #{decoder_layer.6} parent=157 // pred_region
              %s635 = ssub.s32 256, 1
              loop: start=0, step=1, limit=1
              $region167: #{decoder_layer.6} parent=165 // loop_pre_header
                _
              $region168: #{decoder_layer.6} parent=165 // loop_header
                %s637 = sphi 0, %s641
                %p638 = scmp.ge.s32.totalorder %s637, 1
                %s642 = sphi %s620, %s620
                %s643 = sphi %s627, %s627
              $region169: #{decoder_layer.6} parent=165 // loop_header_branch
                %640 = sbr.rel (%p638) target = $region173
              $region170: #{decoder_layer.6} parent=165 // loop_body
                %v644 = vld [vmem:[%s642] sm:%s635]
                %645 = vst [vmem:[%s643] sm:%s635] %v644
                %v646 = vld [vmem:[%s642 + $0x8] sm:%s635]
                %647 = vst [vmem:[%s643 + $0x20] sm:%s635] %v646
              $region171: #{decoder_layer.6} parent=165 // loop_footer
                %s641 = sadd.s32 1, %s637
              $region172: #{decoder_layer.6} parent=165 // loop_footer_branch
                %636 = sbr.rel target = $region168
              $region173: #{decoder_layer.6} parent=165 // loop_exit
                _
            $region166: #{decoder_layer.6} parent=157 // pred_fallthru
              _
          $region158: #{decoder_layer.6} parent=153 // pred_fallthru
            _
          %664 = vnop
        $region154: #{decoder_layer.6} parent=137 // pred_fallthru
          _
      $region138: #{decoder_layer.6} parent=5 // pred_fallthru
        _
      %p665 = scmp.le.s32.totalorder 2, %s10
      // Predicated region
      $region189: #{decoder_layer.6} parent=5 // pred_check
        %p666 = pneg %p665
      $region190: #{decoder_layer.6} parent=5 // pred_check_branch
        %668 = sbr.rel (%p666) target = $region192
      $region191: #{decoder_layer.6} parent=5 // pred_region
        %s669 = ssub.s32 %s10, 2
        // Predicated region
        $region193: #{decoder_layer.6} parent=191 // pred_check
          %p670 = pneg %p167
        $region194: #{decoder_layer.6} parent=191 // pred_check_branch
          %672 = sbr.rel (%p670) target = $region196
        $region195: #{decoder_layer.6} parent=191 // pred_region
          %s673 = sand.u32 %s152, 1
          %s674 = sand.u32 %s152, 1
          %s675 = smul.addr %s674, 16
          %s676 = scalar_lea.vmem [#allocation5], %s675
        $region196: #{decoder_layer.6} parent=191 // pred_fallthru
          _
      $region192: #{decoder_layer.6} parent=5 // pred_fallthru
        _
    $region6: #{decoder_layer.6} parent=1 // loop_footer
      %s14 = sadd.s32 1, %s10
    $region7: #{decoder_layer.6} parent=1 // loop_footer_branch
      %9 = sbr.rel target = $region3
    $region8: #{decoder_layer.6} parent=1 // loop_exit
      _

// kernel: decoder_layer.5
$region0: #{decoder_layer.5}
  #allocation0 [shape = 'u32[]', space=smem, size = 0x4, offset = 0x4, fixed_abs, tag = 'smem constant byte address 0x4 - core index']
  #allocation1 [shape = 'u32[72,128]{1,0:T(1,128)}', space=vmem, size = 0x9000, scoped, tag = 'internal scratch']
  %s0 = inlined_call_operand.vmem [shape: f32[32,512], index: 0, kind: input, shape index: {}]
  %s1 = inlined_call_operand.vmem [shape: f32[512,1536], index: 1, kind: input, shape index: {}]
  %s2 = inlined_call_operand.vmem [shape: f32[1,1536], index: 2, kind: input, shape index: {}]
  %s3 = inlined_call_operand.vmem [shape: f32[32,1536], index: 3, kind: output, shape index: {}]
  %s4 = sld [smem:[#allocation0]]
  $region87: #{decoder_layer.5} parent=0
    _
  %s6 = ssub.s32 1, %s4
  %s7 = scalar_select 0, %s6, %s4
  $region1: #{decoder_layer.5} parent=0
    #allocation2 [shape = 'u8[2097152]{0}', space=vmem, size = 0x200000, scoped, tag = 'input window, operand 1']
    #allocation3 [shape = 'u8[131072]{0}', space=vmem, size = 0x20000, scoped, tag = 'output window, operand 0']
    loop: start=0, step=1, limit=5
    $region2: #{decoder_layer.5} parent=1 // loop_pre_header
      _
    $region3: #{decoder_layer.5} parent=1 // loop_header
      %s9 = sphi 0, %s13
      %p10 = scmp.ge.s32.totalorder %s9, 5
      %s16 = sphi 0, %s28
      %s17 = sphi 0, %s24
      %s18 = sphi 0, %s16
      %s19 = sphi 0, %s17
      %s20 = sphi 0, %s18
      %s21 = sphi 0, %s19
      %s31 = sphi 0, %s33
      %s34 = sphi 0, %s31
      %s35 = sphi 0, %s34
      %s51 = sphi 0, %s35
      %s57 = sphi 0, %s59
      %s60 = sphi 0, %s57
      %s61 = sphi 0, %s60
      %s77 = sphi 0, %s61
      %s83 = sphi 0, %s85
      %s86 = sphi 0, %s83
      %s87 = sphi 0, %s86
      %s103 = sphi 0, %s87
      %s111 = sphi 0, %s113
      %s114 = sphi 0, %s111
      %s115 = sphi 0, %s114
      %s131 = sphi 0, %s115
    $region4: #{decoder_layer.5} parent=1 // loop_header_branch
      %12 = sbr.rel (%p10) target = $region8
    $region5: #{decoder_layer.5} parent=1 // loop_body
      %s14 = ssub.s32 %s9, 1
      %s15 = ssub.s32 %s9, 2
      %s22 = sadd.s32 1, %s17
      %p23 = scmp.ge.s32.totalorder %s22, 3
      %s24 = scalar_select %p23, 0, %s22
      %s25 = sadd.s32 1, %s16
      %s26 = scalar_select %p23, %s25, %s16
      %p27 = scmp.ge.s32.totalorder %s26, 1
      %s28 = scalar_select %p27, 0, %s26
      %s29 = ssub.s32 %s16, %s28
      %p30 = scmp.eq.s32.totalorder %s29, 0
      %s32 = sadd.s32 %s31, 1
      %s33 = scalar_select %p30, %s31, %s32
      %p36 = pneg %p30
      %p37 = scmp.eq.s32.totalorder %s9, 2
      %p38 = por %p36, %p37
      %p39 = scmp.ne.s32.totalorder %s31, %s34
      %p40 = scmp.eq.s32.totalorder %s9, 0
      %p41 = por %p39, %p40
      %p42 = scmp.ne.s32.totalorder %s31, %s34
      %p43 = scmp.eq.s32.totalorder %s14, 2
      %p44 = por %p42, %p43
      %p45 = scmp.ne.s32.totalorder %s34, %s35
      %p46 = scmp.eq.s32.totalorder %s14, 0
      %p47 = por %p45, %p46
      %p48 = scmp.ne.s32.totalorder %s34, %s35
      %p49 = scmp.eq.s32.totalorder %s15, 2
      %p50 = por %p48, %p49
      %p52 = scmp.ne.s32.totalorder %s35, %s51
      %p53 = scmp.eq.s32.totalorder %s15, 0
      %p54 = por %p52, %p53
      %s55 = ssub.s32 %s17, %s24
      %p56 = scmp.eq.s32.totalorder %s55, 0
      %s58 = sadd.s32 %s57, 1
      %s59 = scalar_select %p56, %s57, %s58
      %p62 = pneg %p56
      %p63 = scmp.eq.s32.totalorder %s9, 2
      %p64 = por %p62, %p63
      %p65 = scmp.ne.s32.totalorder %s57, %s60
      %p66 = scmp.eq.s32.totalorder %s9, 0
      %p67 = por %p65, %p66
      %p68 = scmp.ne.s32.totalorder %s57, %s60
      %p69 = scmp.eq.s32.totalorder %s14, 2
      %p70 = por %p68, %p69
      %p71 = scmp.ne.s32.totalorder %s60, %s61
      %p72 = scmp.eq.s32.totalorder %s14, 0
      %p73 = por %p71, %p72
      %p74 = scmp.ne.s32.totalorder %s60, %s61
      %p75 = scmp.eq.s32.totalorder %s15, 2
      %p76 = por %p74, %p75
      %p78 = scmp.ne.s32.totalorder %s61, %s77
      %p79 = scmp.eq.s32.totalorder %s15, 0
      %p80 = por %p78, %p79
      %s81 = ssub.s32 %s17, %s24
      %p82 = scmp.eq.s32.totalorder %s81, 0
      %s84 = sadd.s32 %s83, 1
      %s85 = scalar_select %p82, %s83, %s84
      %p88 = pneg %p82
      %p89 = scmp.eq.s32.totalorder %s9, 2
      %p90 = por %p88, %p89
      %p91 = scmp.ne.s32.totalorder %s83, %s86
      %p92 = scmp.eq.s32.totalorder %s9, 0
      %p93 = por %p91, %p92
      %p94 = scmp.ne.s32.totalorder %s83, %s86
      %p95 = scmp.eq.s32.totalorder %s14, 2
      %p96 = por %p94, %p95
      %p97 = scmp.ne.s32.totalorder %s86, %s87
      %p98 = scmp.eq.s32.totalorder %s14, 0
      %p99 = por %p97, %p98
      %p100 = scmp.ne.s32.totalorder %s86, %s87
      %p101 = scmp.eq.s32.totalorder %s15, 2
      %p102 = por %p100, %p101
      %p104 = scmp.ne.s32.totalorder %s87, %s103
      %p105 = scmp.eq.s32.totalorder %s15, 0
      %p106 = por %p104, %p105
      %s107 = ssub.s32 %s16, %s28
      %s108 = ssub.s32 %s17, %s24
      %s109 = sor.u32 %s107, %s108
      %p110 = scmp.eq.s32.totalorder %s109, 0
      %s112 = sadd.s32 %s111, 1
      %s113 = scalar_select %p110, %s111, %s112
      %p116 = pneg %p110
      %p117 = scmp.eq.s32.totalorder %s9, 2
      %p118 = por %p116, %p117
      %p119 = scmp.ne.s32.totalorder %s111, %s114
      %p120 = scmp.eq.s32.totalorder %s9, 0
      %p121 = por %p119, %p120
      %p122 = scmp.ne.s32.totalorder %s111, %s114
      %p123 = scmp.eq.s32.totalorder %s14, 2
      %p124 = por %p122, %p123
      %p125 = scmp.ne.s32.totalorder %s114, %s115
      %p126 = scmp.eq.s32.totalorder %s14, 0
      %p127 = por %p125, %p126
      %p128 = scmp.ne.s32.totalorder %s114, %s115
      %p129 = scmp.eq.s32.totalorder %s15, 2
      %p130 = por %p128, %p129
      %p132 = scmp.ne.s32.totalorder %s115, %s131
      %p133 = scmp.eq.s32.totalorder %s15, 0
      %p134 = por %p132, %p133
      %p135 = scmp.le.s32.totalorder 1, %s9
      %p136 = scmp.lt.s32.totalorder %s9, 4
      %p137 = pnand %p135, %p136
      %p138 = pneg %p137
      // Predicated region
      $region9: #{decoder_layer.5} parent=5 // pred_check
        _
      $region10: #{decoder_layer.5} parent=5 // pred_check_branch
        %140 = sbr.rel (%p137) target = $region12
      $region11: #{decoder_layer.5} parent=5 // pred_region
        %s141 = ssub.s32 %s9, 1
        // Predicated region
        $region13: #{decoder_layer.5} parent=11 // pred_check
          %p142 = pneg %p47
        $region14: #{decoder_layer.5} parent=11 // pred_check_branch
          %144 = sbr.rel (%p142) target = $region16
        $region15: #{decoder_layer.5} parent=11 // pred_region
          %s145 = smul.u32 4, %s18
          %p146 = scmp.lt.s32.totalorder %s145, 3
          %s147 = scalar_select %p146, %s145, 3
          %s148 = smul.addr %s147, 4
          %s149 = smul.addr %s148, 8
          %s150 = scalar_lea.vmem %s0, %s149
          %s151 = smul.u32 4, %s18
        $region16: #{decoder_layer.5} parent=11 // pred_fallthru
          _
      $region12: #{decoder_layer.5} parent=5 // pred_fallthru
        _
      %p152 = scmp.lt.s32.totalorder %s9, 3
      // Predicated region
      $region17: #{decoder_layer.5} parent=5 // pred_check
        %p153 = pneg %p152
      $region18: #{decoder_layer.5} parent=5 // pred_check_branch
        %155 = sbr.rel (%p153) target = $region20
      $region19: #{decoder_layer.5} parent=5 // pred_region
        // Predicated region
        $region21: #{decoder_layer.5} parent=19 // pred_check
          %p156 = pneg %p67
        $region22: #{decoder_layer.5} parent=19 // pred_check_branch
          %158 = sbr.rel (%p156) target = $region24
        $region23: #{decoder_layer.5} parent=19 // pred_region
          %s159 = sand.u32 %s57, 1
          %s160 = sand.u32 %s57, 1
          %s161 = smul.addr %s160, 2048
          %s162 = scalar_lea.vmem [#allocation2], %s161
          %s163 = smul.u32 4, %s17
          %s164 = smul.addr %s163, 8
          %s165 = scalar_lea.vmem %s1, %s164
          // Predicated region
          $region25: #{decoder_layer.5} parent=23 // pred_check
            _
          $region26: #{decoder_layer.5} parent=23 // pred_check_branch
            %167 = sbr.rel (0) target = $region28
          $region27: #{decoder_layer.5} parent=23 // pred_region
            // Predicated region
            $region29: #{decoder_layer.5} parent=27 // pred_check
              _
            $region30: #{decoder_layer.5} parent=27 // pred_check_branch
              %169 = sbr.rel (0) target = $region32
            $region31: #{decoder_layer.5} parent=27 // pred_region
              loop: start=0, step=1, limit=1
              $region33: #{decoder_layer.5} parent=31 // loop_pre_header
                _
              $region34: #{decoder_layer.5} parent=31 // loop_header
                %s171 = sphi 0, %s175
                %p172 = scmp.ge.s32.totalorder %s171, 1
                %s176 = sphi %s165, %s165
                %s177 = sphi %s162, %s162
              $region35: #{decoder_layer.5} parent=31 // loop_header_branch
                %174 = sbr.rel (%p172) target = $region39
              $region36: #{decoder_layer.5} parent=31 // loop_body
                %v178 = vld [vmem:[%s176] sm:$0xff]
                %179 = vst [vmem:[%s177] sm:$0xff] %v178
                %v180 = vld [vmem:[%s176 + $0x8] sm:$0xff]
                %181 = vst [vmem:[%s177 + $0x8] sm:$0xff] %v180
                %v182 = vld [vmem:[%s176 + $0x10] sm:$0xff]
                %183 = vst [vmem:[%s177 + $0x10] sm:$0xff] %v182
                %v184 = vld [vmem:[%s176 + $0x18] sm:$0xff]
                %185 = vst [vmem:[%s177 + $0x18] sm:$0xff] %v184
                %v186 = vld [vmem:[%s176 + $0x60] sm:$0xff]
                %187 = vst [vmem:[%s177 + $0x20] sm:$0xff] %v186
                %v188 = vld [vmem:[%s176 + $0x68] sm:$0xff]
                %189 = vst [vmem:[%s177 + $0x28] sm:$0xff] %v188
                %v190 = vld [vmem:[%s176 + $0x70] sm:$0xff]
                %191 = vst [vmem:[%s177 + $0x30] sm:$0xff] %v190
                %v192 = vld [vmem:[%s176 + $0x78] sm:$0xff]
                %193 = vst [vmem:[%s177 + $0x38] sm:$0xff] %v192
                %v194 = vld [vmem:[%s176 + $0xc0] sm:$0xff]
                %195 = vst [vmem:[%s177 + $0x40] sm:$0xff] %v194
                %v196 = vld [vmem:[%s176 + $0xc8] sm:$0xff]
                %197 = vst [vmem:[%s177 + $0x48] sm:$0xff] %v196
                %v198 = vld [vmem:[%s176 + $0xd0] sm:$0xff]
                %199 = vst [vmem:[%s177 + $0x50] sm:$0xff] %v198
                %v200 = vld [vmem:[%s176 + $0xd8] sm:$0xff]
                %201 = vst [vmem:[%s177 + $0x58] sm:$0xff] %v200
                %v202 = vld [vmem:[%s176 + $0x120] sm:$0xff]
                %203 = vst [vmem:[%s177 + $0x60] sm:$0xff] %v202
                %v204 = vld [vmem:[%s176 + $0x128] sm:$0xff]
                %205 = vst [vmem:[%s177 + $0x68] sm:$0xff] %v204
                %v206 = vld [vmem:[%s176 + $0x130] sm:$0xff]
                %207 = vst [vmem:[%s177 + $0x70] sm:$0xff] %v206
                %v208 = vld [vmem:[%s176 + $0x138] sm:$0xff]
                %209 = vst [vmem:[%s177 + $0x78] sm:$0xff] %v208
                %v210 = vld [vmem:[%s176 + $0x180] sm:$0xff]
                %211 = vst [vmem:[%s177 + $0x80] sm:$0xff] %v210
                %v212 = vld [vmem:[%s176 + $0x188] sm:$0xff]
                %213 = vst [vmem:[%s177 + $0x88] sm:$0xff] %v212
                %v214 = vld [vmem:[%s176 + $0x190] sm:$0xff]
                %215 = vst [vmem:[%s177 + $0x90] sm:$0xff] %v214
                %v216 = vld [vmem:[%s176 + $0x198] sm:$0xff]
                %217 = vst [vmem:[%s177 + $0x98] sm:$0xff] %v216
                %v218 = vld [vmem:[%s176 + $0x1e0] sm:$0xff]
                %219 = vst [vmem:[%s177 + $0xa0] sm:$0xff] %v218
                %v220 = vld [vmem:[%s176 + $0x1e8] sm:$0xff]
                %221 = vst [vmem:[%s177 + $0xa8] sm:$0xff] %v220
                %v222 = vld [vmem:[%s176 + $0x1f0] sm:$0xff]
                %223 = vst [vmem:[%s177 + $0xb0] sm:$0xff] %v222
                %v224 = vld [vmem:[%s176 + $0x1f8] sm:$0xff]
                %225 = vst [vmem:[%s177 + $0xb8] sm:$0xff] %v224
                %v226 = vld [vmem:[%s176 + $0x240] sm:$0xff]
                %227 = vst [vmem:[%s177 + $0xc0] sm:$0xff] %v226
                %v228 = vld [vmem:[%s176 + $0x248] sm:$0xff]
                %229 = vst [vmem:[%s177 + $0xc8] sm:$0xff] %v228
                %v230 = vld [vmem:[%s176 + $0x250] sm:$0xff]
                %231 = vst [vmem:[%s177 + $0xd0] sm:$0xff] %v230
                %v232 = vld [vmem:[%s176 + $0x258] sm:$0xff]
                %233 = vst [vmem:[%s177 + $0xd8] sm:$0xff] %v232
                %v234 = vld [vmem:[%s176 + $0x2a0] sm:$0xff]
                %235 = vst [vmem:[%s177 + $0xe0] sm:$0xff] %v234
                %v236 = vld [vmem:[%s176 + $0x2a8] sm:$0xff]
                %237 = vst [vmem:[%s177 + $0xe8] sm:$0xff] %v236
                %v238 = vld [vmem:[%s176 + $0x2b0] sm:$0xff]
                %239 = vst [vmem:[%s177 + $0xf0] sm:$0xff] %v238
                %v240 = vld [vmem:[%s176 + $0x2b8] sm:$0xff]
                %241 = vst [vmem:[%s177 + $0xf8] sm:$0xff] %v240
                %v242 = vld [vmem:[%s176 + $0x300] sm:$0xff]
                %243 = vst [vmem:[%s177 + $0x100] sm:$0xff] %v242
                %v244 = vld [vmem:[%s176 + $0x308] sm:$0xff]
                %245 = vst [vmem:[%s177 + $0x108] sm:$0xff] %v244
                %v246 = vld [vmem:[%s176 + $0x310] sm:$0xff]
                %247 = vst [vmem:[%s177 + $0x110] sm:$0xff] %v246
                %v248 = vld [vmem:[%s176 + $0x318] sm:$0xff]
                %249 = vst [vmem:[%s177 + $0x118] sm:$0xff] %v248
                %v250 = vld [vmem:[%s176 + $0x360] sm:$0xff]
                %251 = vst [vmem:[%s177 + $0x120] sm:$0xff] %v250
                %v252 = vld [vmem:[%s176 + $0x368] sm:$0xff]
                %253 = vst [vmem:[%s177 + $0x128] sm:$0xff] %v252
                %v254 = vld [vmem:[%s176 + $0x370] sm:$0xff]
                %255 = vst [vmem:[%s177 + $0x130] sm:$0xff] %v254
                %v256 = vld [vmem:[%s176 + $0x378] sm:$0xff]
                %257 = vst [vmem:[%s177 + $0x138] sm:$0xff] %v256
                %v258 = vld [vmem:[%s176 + $0x3c0] sm:$0xff]
                %259 = vst [vmem:[%s177 + $0x140] sm:$0xff] %v258
                %v260 = vld [vmem:[%s176 + $0x3c8] sm:$0xff]
                %261 = vst [vmem:[%s177 + $0x148] sm:$0xff] %v260
                %v262 = vld [vmem:[%s176 + $0x3d0] sm:$0xff]
                %263 = vst [vmem:[%s177 + $0x150] sm:$0xff] %v262
                %v264 = vld [vmem:[%s176 + $0x3d8] sm:$0xff]
                %265 = vst [vmem:[%s177 + $0x158] sm:$0xff] %v264
                %v266 = vld [vmem:[%s176 + $0x420] sm:$0xff]
                %267 = vst [vmem:[%s177 + $0x160] sm:$0xff] %v266
                %v268 = vld [vmem:[%s176 + $0x428] sm:$0xff]
                %269 = vst [vmem:[%s177 + $0x168] sm:$0xff] %v268
                %v270 = vld [vmem:[%s176 + $0x430] sm:$0xff]
                %271 = vst [vmem:[%s177 + $0x170] sm:$0xff] %v270
                %v272 = vld [vmem:[%s176 + $0x438] sm:$0xff]
                %273 = vst [vmem:[%s177 + $0x178] sm:$0xff] %v272
                %v274 = vld [vmem:[%s176 + $0x480] sm:$0xff]
                %275 = vst [vmem:[%s177 + $0x180] sm:$0xff] %v274
                %v276 = vld [vmem:[%s176 + $0x488] sm:$0xff]
                %277 = vst [vmem:[%s177 + $0x188] sm:$0xff] %v276
                %v278 = vld [vmem:[%s176 + $0x490] sm:$0xff]
                %279 = vst [vmem:[%s177 + $0x190] sm:$0xff] %v278
                %v280 = vld [vmem:[%s176 + $0x498] sm:$0xff]
                %281 = vst [vmem:[%s177 + $0x198] sm:$0xff] %v280
                %v282 = vld [vmem:[%s176 + $0x4e0] sm:$0xff]
                %283 = vst [vmem:[%s177 + $0x1a0] sm:$0xff] %v282
                %v284 = vld [vmem:[%s176 + $0x4e8] sm:$0xff]
                %285 = vst [vmem:[%s177 + $0x1a8] sm:$0xff] %v284
                %v286 = vld [vmem:[%s176 + $0x4f0] sm:$0xff]
                %287 = vst [vmem:[%s177 + $0x1b0] sm:$0xff] %v286
                %v288 = vld [vmem:[%s176 + $0x4f8] sm:$0xff]
                %289 = vst [vmem:[%s177 + $0x1b8] sm:$0xff] %v288
                %v290 = vld [vmem:[%s176 + $0x540] sm:$0xff]
                %291 = vst [vmem:[%s177 + $0x1c0] sm:$0xff] %v290
                %v292 = vld [vmem:[%s176 + $0x548] sm:$0xff]
                %293 = vst [vmem:[%s177 + $0x1c8] sm:$0xff] %v292
                %v294 = vld [vmem:[%s176 + $0x550] sm:$0xff]
                %295 = vst [vmem:[%s177 + $0x1d0] sm:$0xff] %v294
                %v296 = vld [vmem:[%s176 + $0x558] sm:$0xff]
                %297 = vst [vmem:[%s177 + $0x1d8] sm:$0xff] %v296
                %v298 = vld [vmem:[%s176 + $0x5a0] sm:$0xff]
                %299 = vst [vmem:[%s177 + $0x1e0] sm:$0xff] %v298
                %v300 = vld [vmem:[%s176 + $0x5a8] sm:$0xff]
                %301 = vst [vmem:[%s177 + $0x1e8] sm:$0xff] %v300
                %v302 = vld [vmem:[%s176 + $0x5b0] sm:$0xff]
                %303 = vst [vmem:[%s177 + $0x1f0] sm:$0xff] %v302
                %v304 = vld [vmem:[%s176 + $0x5b8] sm:$0xff]
                %305 = vst [vmem:[%s177 + $0x1f8] sm:$0xff] %v304
                %v306 = vld [vmem:[%s176 + $0x600] sm:$0xff]
                %307 = vst [vmem:[%s177 + $0x200] sm:$0xff] %v306
                %v308 = vld [vmem:[%s176 + $0x608] sm:$0xff]
                %309 = vst [vmem:[%s177 + $0x208] sm:$0xff] %v308
                %v310 = vld [vmem:[%s176 + $0x610] sm:$0xff]
                %311 = vst [vmem:[%s177 + $0x210] sm:$0xff] %v310
                %v312 = vld [vmem:[%s176 + $0x618] sm:$0xff]
                %313 = vst [vmem:[%s177 + $0x218] sm:$0xff] %v312
                %v314 = vld [vmem:[%s176 + $0x660] sm:$0xff]
                %315 = vst [vmem:[%s177 + $0x220] sm:$0xff] %v314
                %v316 = vld [vmem:[%s176 + $0x668] sm:$0xff]
                %317 = vst [vmem:[%s177 + $0x228] sm:$0xff] %v316
                %v318 = vld [vmem:[%s176 + $0x670] sm:$0xff]
                %319 = vst [vmem:[%s177 + $0x230] sm:$0xff] %v318
                %v320 = vld [vmem:[%s176 + $0x678] sm:$0xff]
                %321 = vst [vmem:[%s177 + $0x238] sm:$0xff] %v320
                %v322 = vld [vmem:[%s176 + $0x6c0] sm:$0xff]
                %323 = vst [vmem:[%s177 + $0x240] sm:$0xff] %v322
                %v324 = vld [vmem:[%s176 + $0x6c8] sm:$0xff]
                %325 = vst [vmem:[%s177 + $0x248] sm:$0xff] %v324
                %v326 = vld [vmem:[%s176 + $0x6d0] sm:$0xff]
                %327 = vst [vmem:[%s177 + $0x250] sm:$0xff] %v326
                %v328 = vld [vmem:[%s176 + $0x6d8] sm:$0xff]
                %329 = vst [vmem:[%s177 + $0x258] sm:$0xff] %v328
                %v330 = vld [vmem:[%s176 + $0x720] sm:$0xff]
                %331 = vst [vmem:[%s177 + $0x260] sm:$0xff] %v330
                %v332 = vld [vmem:[%s176 + $0x728] sm:$0xff]
                %333 = vst [vmem:[%s177 + $0x268] sm:$0xff] %v332
                %v334 = vld [vmem:[%s176 + $0x730] sm:$0xff]
                %335 = vst [vmem:[%s177 + $0x270] sm:$0xff] %v334
                %v336 = vld [vmem:[%s176 + $0x738] sm:$0xff]
                %337 = vst [vmem:[%s177 + $0x278] sm:$0xff] %v336
                %v338 = vld [vmem:[%s176 + $0x780] sm:$0xff]
                %339 = vst [vmem:[%s177 + $0x280] sm:$0xff] %v338
                %v340 = vld [vmem:[%s176 + $0x788] sm:$0xff]
                %341 = vst [vmem:[%s177 + $0x288] sm:$0xff] %v340
                %v342 = vld [vmem:[%s176 + $0x790] sm:$0xff]
                %343 = vst [vmem:[%s177 + $0x290] sm:$0xff] %v342
                %v344 = vld [vmem:[%s176 + $0x798] sm:$0xff]
                %345 = vst [vmem:[%s177 + $0x298] sm:$0xff] %v344
                %v346 = vld [vmem:[%s176 + $0x7e0] sm:$0xff]
                %347 = vst [vmem:[%s177 + $0x2a0] sm:$0xff] %v346
                %v348 = vld [vmem:[%s176 + $0x7e8] sm:$0xff]
                %349 = vst [vmem:[%s177 + $0x2a8] sm:$0xff] %v348
                %v350 = vld [vmem:[%s176 + $0x7f0] sm:$0xff]
                %351 = vst [vmem:[%s177 + $0x2b0] sm:$0xff] %v350
                %v352 = vld [vmem:[%s176 + $0x7f8] sm:$0xff]
                %353 = vst [vmem:[%s177 + $0x2b8] sm:$0xff] %v352
                %v354 = vld [vmem:[%s176 + $0x840] sm:$0xff]
                %355 = vst [vmem:[%s177 + $0x2c0] sm:$0xff] %v354
                %v356 = vld [vmem:[%s176 + $0x848] sm:$0xff]
                %357 = vst [vmem:[%s177 + $0x2c8] sm:$0xff] %v356
                %v358 = vld [vmem:[%s176 + $0x850] sm:$0xff]
                %359 = vst [vmem:[%s177 + $0x2d0] sm:$0xff] %v358
                %v360 = vld [vmem:[%s176 + $0x858] sm:$0xff]
                %361 = vst [vmem:[%s177 + $0x2d8] sm:$0xff] %v360
                %v362 = vld [vmem:[%s176 + $0x8a0] sm:$0xff]
                %363 = vst [vmem:[%s177 + $0x2e0] sm:$0xff] %v362
                %v364 = vld [vmem:[%s176 + $0x8a8] sm:$0xff]
                %365 = vst [vmem:[%s177 + $0x2e8] sm:$0xff] %v364
                %v366 = vld [vmem:[%s176 + $0x8b0] sm:$0xff]
                %367 = vst [vmem:[%s177 + $0x2f0] sm:$0xff] %v366
                %v368 = vld [vmem:[%s176 + $0x8b8] sm:$0xff]
                %369 = vst [vmem:[%s177 + $0x2f8] sm:$0xff] %v368
                %v370 = vld [vmem:[%s176 + $0x900] sm:$0xff]
                %371 = vst [vmem:[%s177 + $0x300] sm:$0xff] %v370
                %v372 = vld [vmem:[%s176 + $0x908] sm:$0xff]
                %373 = vst [vmem:[%s177 + $0x308] sm:$0xff] %v372
                %v374 = vld [vmem:[%s176 + $0x910] sm:$0xff]
                %375 = vst [vmem:[%s177 + $0x310] sm:$0xff] %v374
                %v376 = vld [vmem:[%s176 + $0x918] sm:$0xff]
                %377 = vst [vmem:[%s177 + $0x318] sm:$0xff] %v376
                %v378 = vld [vmem:[%s176 + $0x960] sm:$0xff]
                %379 = vst [vmem:[%s177 + $0x320] sm:$0xff] %v378
                %v380 = vld [vmem:[%s176 + $0x968] sm:$0xff]
                %381 = vst [vmem:[%s177 + $0x328] sm:$0xff] %v380
                %v382 = vld [vmem:[%s176 + $0x970] sm:$0xff]
                %383 = vst [vmem:[%s177 + $0x330] sm:$0xff] %v382
                %v384 = vld [vmem:[%s176 + $0x978] sm:$0xff]
                %385 = vst [vmem:[%s177 + $0x338] sm:$0xff] %v384
                %v386 = vld [vmem:[%s176 + $0x9c0] sm:$0xff]
                %387 = vst [vmem:[%s177 + $0x340] sm:$0xff] %v386
                %v388 = vld [vmem:[%s176 + $0x9c8] sm:$0xff]
                %389 = vst [vmem:[%s177 + $0x348] sm:$0xff] %v388
                %v390 = vld [vmem:[%s176 + $0x9d0] sm:$0xff]
                %391 = vst [vmem:[%s177 + $0x350] sm:$0xff] %v390
                %v392 = vld [vmem:[%s176 + $0x9d8] sm:$0xff]
                %393 = vst [vmem:[%s177 + $0x358] sm:$0xff] %v392
                %v394 = vld [vmem:[%s176 + $0xa20] sm:$0xff]
                %395 = vst [vmem:[%s177 + $0x360] sm:$0xff] %v394
                %v396 = vld [vmem:[%s176 + $0xa28] sm:$0xff]
                %397 = vst [vmem:[%s177 + $0x368] sm:$0xff] %v396
                %v398 = vld [vmem:[%s176 + $0xa30] sm:$0xff]
                %399 = vst [vmem:[%s177 + $0x370] sm:$0xff] %v398
                %v400 = vld [vmem:[%s176 + $0xa38] sm:$0xff]
                %401 = vst [vmem:[%s177 + $0x378] sm:$0xff] %v400
                %v402 = vld [vmem:[%s176 + $0xa80] sm:$0xff]
                %403 = vst [vmem:[%s177 + $0x380] sm:$0xff] %v402
                %v404 = vld [vmem:[%s176 + $0xa88] sm:$0xff]
                %405 = vst [vmem:[%s177 + $0x388] sm:$0xff] %v404
                %v406 = vld [vmem:[%s176 + $0xa90] sm:$0xff]
                %407 = vst [vmem:[%s177 + $0x390] sm:$0xff] %v406
                %v408 = vld [vmem:[%s176 + $0xa98] sm:$0xff]
                %409 = vst [vmem:[%s177 + $0x398] sm:$0xff] %v408
                %v410 = vld [vmem:[%s176 + $0xae0] sm:$0xff]
                %411 = vst [vmem:[%s177 + $0x3a0] sm:$0xff] %v410
                %v412 = vld [vmem:[%s176 + $0xae8] sm:$0xff]
                %413 = vst [vmem:[%s177 + $0x3a8] sm:$0xff] %v412
                %v414 = vld [vmem:[%s176 + $0xaf0] sm:$0xff]
                %415 = vst [vmem:[%s177 + $0x3b0] sm:$0xff] %v414
                %v416 = vld [vmem:[%s176 + $0xaf8] sm:$0xff]
                %417 = vst [vmem:[%s177 + $0x3b8] sm:$0xff] %v416
                %v418 = vld [vmem:[%s176 + $0xb40] sm:$0xff]
                %419 = vst [vmem:[%s177 + $0x3c0] sm:$0xff] %v418
                %v420 = vld [vmem:[%s176 + $0xb48] sm:$0xff]
                %421 = vst [vmem:[%s177 + $0x3c8] sm:$0xff] %v420
                %v422 = vld [vmem:[%s176 + $0xb50] sm:$0xff]
                %423 = vst [vmem:[%s177 + $0x3d0] sm:$0xff] %v422
                %v424 = vld [vmem:[%s176 + $0xb58] sm:$0xff]
                %425 = vst [vmem:[%s177 + $0x3d8] sm:$0xff] %v424
                %v426 = vld [vmem:[%s176 + $0xba0] sm:$0xff]
                %427 = vst [vmem:[%s177 + $0x3e0] sm:$0xff] %v426
                %v428 = vld [vmem:[%s176 + $0xba8] sm:$0xff]
                %429 = vst [vmem:[%s177 + $0x3e8] sm:$0xff] %v428
                %v430 = vld [vmem:[%s176 + $0xbb0] sm:$0xff]
                %431 = vst [vmem:[%s177 + $0x3f0] sm:$0xff] %v430
                %v432 = vld [vmem:[%s176 + $0xbb8] sm:$0xff]
                %433 = vst [vmem:[%s177 + $0x3f8] sm:$0xff] %v432
                %v434 = vld [vmem:[%s176 + $0xc00] sm:$0xff]
                %435 = vst [vmem:[%s177 + $0x400] sm:$0xff] %v434
                %v436 = vld [vmem:[%s176 + $0xc08] sm:$0xff]
                %437 = vst [vmem:[%s177 + $0x408] sm:$0xff] %v436
                %v438 = vld [vmem:[%s176 + $0xc10] sm:$0xff]
                %439 = vst [vmem:[%s177 + $0x410] sm:$0xff] %v438
                %v440 = vld [vmem:[%s176 + $0xc18] sm:$0xff]
                %441 = vst [vmem:[%s177 + $0x418] sm:$0xff] %v440
                %v442 = vld [vmem:[%s176 + $0xc60] sm:$0xff]
                %443 = vst [vmem:[%s177 + $0x420] sm:$0xff] %v442
                %v444 = vld [vmem:[%s176 + $0xc68] sm:$0xff]
                %445 = vst [vmem:[%s177 + $0x428] sm:$0xff] %v444
                %v446 = vld [vmem:[%s176 + $0xc70] sm:$0xff]
                %447 = vst [vmem:[%s177 + $0x430] sm:$0xff] %v446
                %v448 = vld [vmem:[%s176 + $0xc78] sm:$0xff]
                %449 = vst [vmem:[%s177 + $0x438] sm:$0xff] %v448
                %v450 = vld [vmem:[%s176 + $0xcc0] sm:$0xff]
                %451 = vst [vmem:[%s177 + $0x440] sm:$0xff] %v450
                %v452 = vld [vmem:[%s176 + $0xcc8] sm:$0xff]
                %453 = vst [vmem:[%s177 + $0x448] sm:$0xff] %v452
                %v454 = vld [vmem:[%s176 + $0xcd0] sm:$0xff]
                %455 = vst [vmem:[%s177 + $0x450] sm:$0xff] %v454
                %v456 = vld [vmem:[%s176 + $0xcd8] sm:$0xff]
                %457 = vst [vmem:[%s177 + $0x458] sm:$0xff] %v456
                %v458 = vld [vmem:[%s176 + $0xd20] sm:$0xff]
                %459 = vst [vmem:[%s177 + $0x460] sm:$0xff] %v458
                %v460 = vld [vmem:[%s176 + $0xd28] sm:$0xff]
                %461 = vst [vmem:[%s177 + $0x468] sm:$0xff] %v460
                %v462 = vld [vmem:[%s176 + $0xd30] sm:$0xff]
                %463 = vst [vmem:[%s177 + $0x470] sm:$0xff] %v462
                %v464 = vld [vmem:[%s176 + $0xd38] sm:$0xff]
                %465 = vst [vmem:[%s177 + $0x478] sm:$0xff] %v464
                %v466 = vld [vmem:[%s176 + $0xd80] sm:$0xff]
                %467 = vst [vmem:[%s177 + $0x480] sm:$0xff] %v466
                %v468 = vld [vmem:[%s176 + $0xd88] sm:$0xff]
                %469 = vst [vmem:[%s177 + $0x488] sm:$0xff] %v468
                %v470 = vld [vmem:[%s176 + $0xd90] sm:$0xff]
                %471 = vst [vmem:[%s177 + $0x490] sm:$0xff] %v470
                %v472 = vld [vmem:[%s176 + $0xd98] sm:$0xff]
                %473 = vst [vmem:[%s177 + $0x498] sm:$0xff] %v472
                %v474 = vld [vmem:[%s176 + $0xde0] sm:$0xff]
                %475 = vst [vmem:[%s177 + $0x4a0] sm:$0xff] %v474
                %v476 = vld [vmem:[%s176 + $0xde8] sm:$0xff]
                %477 = vst [vmem:[%s177 + $0x4a8] sm:$0xff] %v476
                %v478 = vld [vmem:[%s176 + $0xdf0] sm:$0xff]
                %479 = vst [vmem:[%s177 + $0x4b0] sm:$0xff] %v478
                %v480 = vld [vmem:[%s176 + $0xdf8] sm:$0xff]
                %481 = vst [vmem:[%s177 + $0x4b8] sm:$0xff] %v480
                %v482 = vld [vmem:[%s176 + $0xe40] sm:$0xff]
                %483 = vst [vmem:[%s177 + $0x4c0] sm:$0xff] %v482
                %v484 = vld [vmem:[%s176 + $0xe48] sm:$0xff]
                %485 = vst [vmem:[%s177 + $0x4c8] sm:$0xff] %v484
                %v486 = vld [vmem:[%s176 + $0xe50] sm:$0xff]
                %487 = vst [vmem:[%s177 + $0x4d0] sm:$0xff] %v486
                %v488 = vld [vmem:[%s176 + $0xe58] sm:$0xff]
                %489 = vst [vmem:[%s177 + $0x4d8] sm:$0xff] %v488
                %v490 = vld [vmem:[%s176 + $0xea0] sm:$0xff]
                %491 = vst [vmem:[%s177 + $0x4e0] sm:$0xff] %v490
                %v492 = vld [vmem:[%s176 + $0xea8] sm:$0xff]
                %493 = vst [vmem:[%s177 + $0x4e8] sm:$0xff] %v492
                %v494 = vld [vmem:[%s176 + $0xeb0] sm:$0xff]
                %495 = vst [vmem:[%s177 + $0x4f0] sm:$0xff] %v494
                %v496 = vld [vmem:[%s176 + $0xeb8] sm:$0xff]
                %497 = vst [vmem:[%s177 + $0x4f8] sm:$0xff] %v496
                %v498 = vld [vmem:[%s176 + $0xf00] sm:$0xff]
                %499 = vst [vmem:[%s177 + $0x500] sm:$0xff] %v498
                %v500 = vld [vmem:[%s176 + $0xf08] sm:$0xff]
                %501 = vst [vmem:[%s177 + $0x508] sm:$0xff] %v500
                %v502 = vld [vmem:[%s176 + $0xf10] sm:$0xff]
                %503 = vst [vmem:[%s177 + $0x510] sm:$0xff] %v502
                %v504 = vld [vmem:[%s176 + $0xf18] sm:$0xff]
                %505 = vst [vmem:[%s177 + $0x518] sm:$0xff] %v504
                %v506 = vld [vmem:[%s176 + $0xf60] sm:$0xff]
                %507 = vst [vmem:[%s177 + $0x520] sm:$0xff] %v506
                %v508 = vld [vmem:[%s176 + $0xf68] sm:$0xff]
                %509 = vst [vmem:[%s177 + $0x528] sm:$0xff] %v508
                %v510 = vld [vmem:[%s176 + $0xf70] sm:$0xff]
                %511 = vst [vmem:[%s177 + $0x530] sm:$0xff] %v510
                %v512 = vld [vmem:[%s176 + $0xf78] sm:$0xff]
                %513 = vst [vmem:[%s177 + $0x538] sm:$0xff] %v512
                %v514 = vld [vmem:[%s176 + $0xfc0] sm:$0xff]
                %515 = vst [vmem:[%s177 + $0x540] sm:$0xff] %v514
                %v516 = vld [vmem:[%s176 + $0xfc8] sm:$0xff]
                %517 = vst [vmem:[%s177 + $0x548] sm:$0xff] %v516
                %v518 = vld [vmem:[%s176 + $0xfd0] sm:$0xff]
                %519 = vst [vmem:[%s177 + $0x550] sm:$0xff] %v518
                %v520 = vld [vmem:[%s176 + $0xfd8] sm:$0xff]
                %521 = vst [vmem:[%s177 + $0x558] sm:$0xff] %v520
                %v522 = vld [vmem:[%s176 + $0x1020] sm:$0xff]
                %523 = vst [vmem:[%s177 + $0x560] sm:$0xff] %v522
                %v524 = vld [vmem:[%s176 + $0x1028] sm:$0xff]
                %525 = vst [vmem:[%s177 + $0x568] sm:$0xff] %v524
                %v526 = vld [vmem:[%s176 + $0x1030] sm:$0xff]
                %527 = vst [vmem:[%s177 + $0x570] sm:$0xff] %v526
                %v528 = vld [vmem:[%s176 + $0x1038] sm:$0xff]
                %529 = vst [vmem:[%s177 + $0x578] sm:$0xff] %v528
                %v530 = vld [vmem:[%s176 + $0x1080] sm:$0xff]
                %531 = vst [vmem:[%s177 + $0x580] sm:$0xff] %v530
                %v532 = vld [vmem:[%s176 + $0x1088] sm:$0xff]
                %533 = vst [vmem:[%s177 + $0x588] sm:$0xff] %v532
                %v534 = vld [vmem:[%s176 + $0x1090] sm:$0xff]
                %535 = vst [vmem:[%s177 + $0x590] sm:$0xff] %v534
                %v536 = vld [vmem:[%s176 + $0x1098] sm:$0xff]
                %537 = vst [vmem:[%s177 + $0x598] sm:$0xff] %v536
                %v538 = vld [vmem:[%s176 + $0x10e0] sm:$0xff]
                %539 = vst [vmem:[%s177 + $0x5a0] sm:$0xff] %v538
                %v540 = vld [vmem:[%s176 + $0x10e8] sm:$0xff]
                %541 = vst [vmem:[%s177 + $0x5a8] sm:$0xff] %v540
                %v542 = vld [vmem:[%s176 + $0x10f0] sm:$0xff]
                %543 = vst [vmem:[%s177 + $0x5b0] sm:$0xff] %v542
                %v544 = vld [vmem:[%s176 + $0x10f8] sm:$0xff]
                %545 = vst [vmem:[%s177 + $0x5b8] sm:$0xff] %v544
                %v546 = vld [vmem:[%s176 + $0x1140] sm:$0xff]
                %547 = vst [vmem:[%s177 + $0x5c0] sm:$0xff] %v546
                %v548 = vld [vmem:[%s176 + $0x1148] sm:$0xff]
                %549 = vst [vmem:[%s177 + $0x5c8] sm:$0xff] %v548
                %v550 = vld [vmem:[%s176 + $0x1150] sm:$0xff]
                %551 = vst [vmem:[%s177 + $0x5d0] sm:$0xff] %v550
                %v552 = vld [vmem:[%s176 + $0x1158] sm:$0xff]
                %553 = vst [vmem:[%s177 + $0x5d8] sm:$0xff] %v552
                %v554 = vld [vmem:[%s176 + $0x11a0] sm:$0xff]
                %555 = vst [vmem:[%s177 + $0x5e0] sm:$0xff] %v554
                %v556 = vld [vmem:[%s176 + $0x11a8] sm:$0xff]
                %557 = vst [vmem:[%s177 + $0x5e8] sm:$0xff] %v556
                %v558 = vld [vmem:[%s176 + $0x11b0] sm:$0xff]
                %559 = vst [vmem:[%s177 + $0x5f0] sm:$0xff] %v558
                %v560 = vld [vmem:[%s176 + $0x11b8] sm:$0xff]
                %561 = vst [vmem:[%s177 + $0x5f8] sm:$0xff] %v560
                %v562 = vld [vmem:[%s176 + $0x1200] sm:$0xff]
                %563 = vst [vmem:[%s177 + $0x600] sm:$0xff] %v562
                %v564 = vld [vmem:[%s176 + $0x1208] sm:$0xff]
                %565 = vst [vmem:[%s177 + $0x608] sm:$0xff] %v564
                %v566 = vld [vmem:[%s176 + $0x1210] sm:$0xff]
                %567 = vst [vmem:[%s177 + $0x610] sm:$0xff] %v566
                %v568 = vld [vmem:[%s176 + $0x1218] sm:$0xff]
                %569 = vst [vmem:[%s177 + $0x618] sm:$0xff] %v568
                %v570 = vld [vmem:[%s176 + $0x1260] sm:$0xff]
                %571 = vst [vmem:[%s177 + $0x620] sm:$0xff] %v570
                %v572 = vld [vmem:[%s176 + $0x1268] sm:$0xff]
                %573 = vst [vmem:[%s177 + $0x628] sm:$0xff] %v572
                %v574 = vld [vmem:[%s176 + $0x1270] sm:$0xff]
                %575 = vst [vmem:[%s177 + $0x630] sm:$0xff] %v574
                %v576 = vld [vmem:[%s176 + $0x1278] sm:$0xff]
                %577 = vst [vmem:[%s177 + $0x638] sm:$0xff] %v576
                %v578 = vld [vmem:[%s176 + $0x12c0] sm:$0xff]
                %579 = vst [vmem:[%s177 + $0x640] sm:$0xff] %v578
                %v580 = vld [vmem:[%s176 + $0x12c8] sm:$0xff]
                %581 = vst [vmem:[%s177 + $0x648] sm:$0xff] %v580
                %v582 = vld [vmem:[%s176 + $0x12d0] sm:$0xff]
                %583 = vst [vmem:[%s177 + $0x650] sm:$0xff] %v582
                %v584 = vld [vmem:[%s176 + $0x12d8] sm:$0xff]
                %585 = vst [vmem:[%s177 + $0x658] sm:$0xff] %v584
                %v586 = vld [vmem:[%s176 + $0x1320] sm:$0xff]
                %587 = vst [vmem:[%s177 + $0x660] sm:$0xff] %v586
                %v588 = vld [vmem:[%s176 + $0x1328] sm:$0xff]
                %589 = vst [vmem:[%s177 + $0x668] sm:$0xff] %v588
                %v590 = vld [vmem:[%s176 + $0x1330] sm:$0xff]
                %591 = vst [vmem:[%s177 + $0x670] sm:$0xff] %v590
                %v592 = vld [vmem:[%s176 + $0x1338] sm:$0xff]
                %593 = vst [vmem:[%s177 + $0x678] sm:$0xff] %v592
                %v594 = vld [vmem:[%s176 + $0x1380] sm:$0xff]
                %595 = vst [vmem:[%s177 + $0x680] sm:$0xff] %v594
                %v596 = vld [vmem:[%s176 + $0x1388] sm:$0xff]
                %597 = vst [vmem:[%s177 + $0x688] sm:$0xff] %v596
                %v598 = vld [vmem:[%s176 + $0x1390] sm:$0xff]
                %599 = vst [vmem:[%s177 + $0x690] sm:$0xff] %v598
                %v600 = vld [vmem:[%s176 + $0x1398] sm:$0xff]
                %601 = vst [vmem:[%s177 + $0x698] sm:$0xff] %v600
                %v602 = vld [vmem:[%s176 + $0x13e0] sm:$0xff]
                %603 = vst [vmem:[%s177 + $0x6a0] sm:$0xff] %v602
                %v604 = vld [vmem:[%s176 + $0x13e8] sm:$0xff]
                %605 = vst [vmem:[%s177 + $0x6a8] sm:$0xff] %v604
                %v606 = vld [vmem:[%s176 + $0x13f0] sm:$0xff]
                %607 = vst [vmem:[%s177 + $0x6b0] sm:$0xff] %v606
                %v608 = vld [vmem:[%s176 + $0x13f8] sm:$0xff]
                %609 = vst [vmem:[%s177 + $0x6b8] sm:$0xff] %v608
                %v610 = vld [vmem:[%s176 + $0x1440] sm:$0xff]
                %611 = vst [vmem:[%s177 + $0x6c0] sm:$0xff] %v610
                %v612 = vld [vmem:[%s176 + $0x1448] sm:$0xff]
                %613 = vst [vmem:[%s177 + $0x6c8] sm:$0xff] %v612
                %v614 = vld [vmem:[%s176 + $0x1450] sm:$0xff]
                %615 = vst [vmem:[%s177 + $0x6d0] sm:$0xff] %v614
                %v616 = vld [vmem:[%s176 + $0x1458] sm:$0xff]
                %617 = vst [vmem:[%s177 + $0x6d8] sm:$0xff] %v616
                %v618 = vld [vmem:[%s176 + $0x14a0] sm:$0xff]
                %619 = vst [vmem:[%s177 + $0x6e0] sm:$0xff] %v618
                %v620 = vld [vmem:[%s176 + $0x14a8] sm:$0xff]
                %621 = vst [vmem:[%s177 + $0x6e8] sm:$0xff] %v620
                %v622 = vld [vmem:[%s176 + $0x14b0] sm:$0xff]
                %623 = vst [vmem:[%s177 + $0x6f0] sm:$0xff] %v622
                %v624 = vld [vmem:[%s176 + $0x14b8] sm:$0xff]
                %625 = vst [vmem:[%s177 + $0x6f8] sm:$0xff] %v624
                %v626 = vld [vmem:[%s176 + $0x1500] sm:$0xff]
                %627 = vst [vmem:[%s177 + $0x700] sm:$0xff] %v626
                %v628 = vld [vmem:[%s176 + $0x1508] sm:$0xff]
                %629 = vst [vmem:[%s177 + $0x708] sm:$0xff] %v628
                %v630 = vld [vmem:[%s176 + $0x1510] sm:$0xff]
                %631 = vst [vmem:[%s177 + $0x710] sm:$0xff] %v630
                %v632 = vld [vmem:[%s176 + $0x1518] sm:$0xff]
                %633 = vst [vmem:[%s177 + $0x718] sm:$0xff] %v632
                %v634 = vld [vmem:[%s176 + $0x1560] sm:$0xff]
                %635 = vst [vmem:[%s177 + $0x720] sm:$0xff] %v634
                %v636 = vld [vmem:[%s176 + $0x1568] sm:$0xff]
                %637 = vst [vmem:[%s177 + $0x728] sm:$0xff] %v636
                %v638 = vld [vmem:[%s176 + $0x1570] sm:$0xff]
                %639 = vst [vmem:[%s177 + $0x730] sm:$0xff] %v638
                %v640 = vld [vmem:[%s176 + $0x1578] sm:$0xff]
                %641 = vst [vmem:[%s177 + $0x738] sm:$0xff] %v640
                %v642 = vld [vmem:[%s176 + $0x15c0] sm:$0xff]
                %643 = vst [vmem:[%s177 + $0x740] sm:$0xff] %v642
                %v644 = vld [vmem:[%s176 + $0x15c8] sm:$0xff]
                %645 = vst [vmem:[%s177 + $0x748] sm:$0xff] %v644
                %v646 = vld [vmem:[%s176 + $0x15d0] sm:$0xff]
                %647 = vst [vmem:[%s177 + $0x750] sm:$0xff] %v646
                %v648 = vld [vmem:[%s176 + $0x15d8] sm:$0xff]
                %649 = vst [vmem:[%s177 + $0x758] sm:$0xff] %v648
                %v650 = vld [vmem:[%s176 + $0x1620] sm:$0xff]
                %651 = vst [vmem:[%s177 + $0x760] sm:$0xff] %v650
                %v652 = vld [vmem:[%s176 + $0x1628] sm:$0xff]
                %653 = vst [vmem:[%s177 + $0x768] sm:$0xff] %v652
                %v654 = vld [vmem:[%s176 + $0x1630] sm:$0xff]
                %655 = vst [vmem:[%s177 + $0x770] sm:$0xff] %v654
                %v656 = vld [vmem:[%s176 + $0x1638] sm:$0xff]
                %657 = vst [vmem:[%s177 + $0x778] sm:$0xff] %v656
                %v658 = vld [vmem:[%s176 + $0x1680] sm:$0xff]
                %659 = vst [vmem:[%s177 + $0x780] sm:$0xff] %v658
                %v660 = vld [vmem:[%s176 + $0x1688] sm:$0xff]
                %661 = vst [vmem:[%s177 + $0x788] sm:$0xff] %v660
                %v662 = vld [vmem:[%s176 + $0x1690] sm:$0xff]
                %663 = vst [vmem:[%s177 + $0x790] sm:$0xff] %v662
                %v664 = vld [vmem:[%s176 + $0x1698] sm:$0xff]
                %665 = vst [vmem:[%s177 + $0x798] sm:$0xff] %v664
                %v666 = vld [vmem:[%s176 + $0x16e0] sm:$0xff]
                %667 = vst [vmem:[%s177 + $0x7a0] sm:$0xff] %v666
                %v668 = vld [vmem:[%s176 + $0x16e8] sm:$0xff]
                %669 = vst [vmem:[%s177 + $0x7a8] sm:$0xff] %v668
                %v670 = vld [vmem:[%s176 + $0x16f0] sm:$0xff]
                %671 = vst [vmem:[%s177 + $0x7b0] sm:$0xff] %v670
                %v672 = vld [vmem:[%s176 + $0x16f8] sm:$0xff]
                %673 = vst [vmem:[%s177 + $0x7b8] sm:$0xff] %v672
                %v674 = vld [vmem:[%s176 + $0x1740] sm:$0xff]
                %675 = vst [vmem:[%s177 + $0x7c0] sm:$0xff] %v674
                %v676 = vld [vmem:[%s176 + $0x1748] sm:$0xff]
                %677 = vst [vmem:[%s177 + $0x7c8] sm:$0xff] %v676
                %v678 = vld [vmem:[%s176 + $0x1750] sm:$0xff]
                %679 = vst [vmem:[%s177 + $0x7d0] sm:$0xff] %v678
                %v680 = vld [vmem:[%s176 + $0x1758] sm:$0xff]
                %681 = vst [vmem:[%s177 + $0x7d8] sm:$0xff] %v680
                %v682 = vld [vmem:[%s176 + $0x17a0] sm:$0xff]
                %683 = vst [vmem:[%s177 + $0x7e0] sm:$0xff] %v682
                %v684 = vld [vmem:[%s176 + $0x17a8] sm:$0xff]
                %685 = vst [vmem:[%s177 + $0x7e8] sm:$0xff] %v684
                %v686 = vld [vmem:[%s176 + $0x17b0] sm:$0xff]
                %687 = vst [vmem:[%s177 + $0x7f0] sm:$0xff] %v686
                %v688 = vld [vmem:[%s176 + $0x17b8] sm:$0xff]
                %689 = vst [vmem:[%s177 + $0x7f8] sm:$0xff] %v688
              $region37: #{decoder_layer.5} parent=31 // loop_footer
                %s175 = sadd.s32 1, %s171
              $region38: #{decoder_layer.5} parent=31 // loop_footer_branch
                %170 = sbr.rel target = $region34
              $region39: #{decoder_layer.5} parent=31 // loop_exit
                _
            $region32: #{decoder_layer.5} parent=27 // pred_fallthru
              _
            // Predicated region
            $region40: #{decoder_layer.5} parent=27 // pred_check
              _
            $region41: #{decoder_layer.5} parent=27 // pred_check_branch
              %691 = sbr.rel target = $region43
            $region42: #{decoder_layer.5} parent=27 // pred_region
              _
            $region43: #{decoder_layer.5} parent=27 // pred_fallthru
              _
          $region28: #{decoder_layer.5} parent=23 // pred_fallthru
            _
          %692 = vnop
        $region24: #{decoder_layer.5} parent=19 // pred_fallthru
          _
        // Predicated region
        $region44: #{decoder_layer.5} parent=19 // pred_check
          %p693 = pneg %p93
        $region45: #{decoder_layer.5} parent=19 // pred_check_branch
          %695 = sbr.rel (%p693) target = $region47
        $region46: #{decoder_layer.5} parent=19 // pred_region
          %s696 = smul.u32 4, %s17
          %p697 = scmp.lt.s32.totalorder %s696, 11
          %s698 = scalar_select %p697, %s696, 11
          %s699 = scalar_lea.vmem %s2, %s698
          %s700 = smul.u32 4, %s17
        $region47: #{decoder_layer.5} parent=19 // pred_fallthru
          _
      $region20: #{decoder_layer.5} parent=5 // pred_fallthru
        _
      %p701 = scmp.le.s32.totalorder 1, %s9
      %p702 = scmp.lt.s32.totalorder %s9, 4
      %p703 = pnand %p701, %p702
      %p704 = pneg %p703
      // Predicated region
      $region48: #{decoder_layer.5} parent=5 // pred_check
        _
      $region49: #{decoder_layer.5} parent=5 // pred_check_branch
        %706 = sbr.rel (%p703) target = $region51
      $region50: #{decoder_layer.5} parent=5 // pred_region
        %s707 = ssub.s32 %s9, 1
        %s708 = sand.u32 %s60, 1
        %s709 = sand.u32 %s60, 1
        %s710 = smul.addr %s709, 2048
        %s711 = scalar_lea.vmem [#allocation2], %s710
        // Predicated region
        $region52: #{decoder_layer.5} parent=50 // pred_check
          %p712 = pneg %p73
        $region53: #{decoder_layer.5} parent=50 // pred_check_branch
          %714 = sbr.rel (%p712) target = $region55
        $region54: #{decoder_layer.5} parent=50 // pred_region
          _
        $region55: #{decoder_layer.5} parent=50 // pred_fallthru
          _
        %s715 = smul.u32 4, %s18
        %p716 = scmp.lt.s32.totalorder %s715, 3
        %s717 = scalar_select %p716, %s715, 3
        %s718 = smul.addr %s717, 4
        %s719 = smul.addr %s718, 8
        %s720 = scalar_lea.vmem %s0, %s719
        %p721 = pneg %p47
        %p722 = pneg %p44
        %s723 = sand.u32 %s60, 1
        %s724 = sand.u32 %s60, 1
        %s725 = smul.addr %s724, 2048
        %s726 = scalar_lea.vmem [#allocation2], %s725
        %p727 = pneg %p73
        %p728 = pneg %p70
        %s729 = smul.u32 4, %s19
        %p730 = scmp.lt.s32.totalorder %s729, 11
        %s731 = scalar_select %p730, %s729, 11
        %s732 = scalar_lea.vmem %s2, %s731
        %p733 = pneg %p99
        %p734 = pneg %p96
        %p735 = pneg %p127
        %p736 = pneg %p124
        %s737 = sand.u32 %s114, 1
        %s738 = sand.u32 %s114, 1
        %s739 = smul.addr %s738, 128
        %s740 = scalar_lea.vmem [#allocation3], %s739
        %s741 = smul.u32 4, %s18
        %p742 = scmp.lt.s32.totalorder %s741, 3
        %s743 = scalar_select %p742, %s741, 3
        %s744 = smul.addr %s743, 4
        %s745 = smul.addr %s744, 8
        %s746 = scalar_lea.vmem %s0, %s745
        %s747 = smul.u32 4, %s18
        %s748 = smul.u32 4, %s19
        %s749 = smul.u32 4, %s19
        %p750 = scmp.lt.s32.totalorder %s749, 11
        %s751 = scalar_select %p750, %s749, 11
        %s752 = scalar_lea.vmem %s2, %s751
        %s753 = smul.u32 4, %s19
        %s754 = smul.u32 4, %s18
        %s755 = smul.u32 4, %s19
        %v756 = vld [vmem:[%s746] sm:$0xff]
        %v757 = vld [vmem:[%s746 + $0x8] sm:$0xff]
        %v758 = vld [vmem:[%s746 + $0x10] sm:$0xff]
        %v759 = vld [vmem:[%s746 + $0x18] sm:$0xff]
        %v760 = vld [vmem:[%s746 + $0x20] sm:$0xff]
        %v761 = vld [vmem:[%s746 + $0x28] sm:$0xff]
        %v762 = vld [vmem:[%s746 + $0x30] sm:$0xff]
        %v763 = vld [vmem:[%s746 + $0x38] sm:$0xff]
        %v764 = vld [vmem:[%s746 + $0x40] sm:$0xff]
        %v765 = vld [vmem:[%s746 + $0x48] sm:$0xff]
        %v766 = vld [vmem:[%s746 + $0x50] sm:$0xff]
        %v767 = vld [vmem:[%s746 + $0x58] sm:$0xff]
        %v768 = vld [vmem:[%s746 + $0x60] sm:$0xff]
        %v769 = vld [vmem:[%s746 + $0x68] sm:$0xff]
        %v770 = vld [vmem:[%s746 + $0x70] sm:$0xff]
        %v771 = vld [vmem:[%s746 + $0x78] sm:$0xff]
        %v772 = vld [vmem:[%s711] sm:$0xff]
        %v773 = vld [vmem:[%s711 + $0x8] sm:$0xff]
        %v774 = vld [vmem:[%s711 + $0x10] sm:$0xff]
        %v775 = vld [vmem:[%s711 + $0x18] sm:$0xff]
        %v776 = vld [vmem:[%s711 + $0x20] sm:$0xff]
        %v777 = vld [vmem:[%s711 + $0x28] sm:$0xff]
        %v778 = vld [vmem:[%s711 + $0x30] sm:$0xff]
        %v779 = vld [vmem:[%s711 + $0x38] sm:$0xff]
        %v780 = vld [vmem:[%s711 + $0x40] sm:$0xff]
        %v781 = vld [vmem:[%s711 + $0x48] sm:$0xff]
        %v782 = vld [vmem:[%s711 + $0x50] sm:$0xff]
        %v783 = vld [vmem:[%s711 + $0x58] sm:$0xff]
        %v784 = vld [vmem:[%s711 + $0x60] sm:$0xff]
        %v785 = vld [vmem:[%s711 + $0x68] sm:$0xff]
        %v786 = vld [vmem:[%s711 + $0x70] sm:$0xff]
        %v787 = vld [vmem:[%s711 + $0x78] sm:$0xff]
        %v788 = vld [vmem:[%s711 + $0x80] sm:$0xff]
        %v789 = vld [vmem:[%s711 + $0x88] sm:$0xff]
        %v790 = vld [vmem:[%s711 + $0x90] sm:$0xff]
        %v791 = vld [vmem:[%s711 + $0x98] sm:$0xff]
        %v792 = vld [vmem:[%s711 + $0xa0] sm:$0xff]
        %v793 = vld [vmem:[%s711 + $0xa8] sm:$0xff]
        %v794 = vld [vmem:[%s711 + $0xb0] sm:$0xff]
        %v795 = vld [vmem:[%s711 + $0xb8] sm:$0xff]
        %v796 = vld [vmem:[%s711 + $0xc0] sm:$0xff]
        %v797 = vld [vmem:[%s711 + $0xc8] sm:$0xff]
        %v798 = vld [vmem:[%s711 + $0xd0] sm:$0xff]
        %v799 = vld [vmem:[%s711 + $0xd8] sm:$0xff]
        %v800 = vld [vmem:[%s711 + $0xe0] sm:$0xff]
        %v801 = vld [vmem:[%s711 + $0xe8] sm:$0xff]
        %v802 = vld [vmem:[%s711 + $0xf0] sm:$0xff]
        %v803 = vld [vmem:[%s711 + $0xf8] sm:$0xff]
        %v804 = vld [vmem:[%s711 + $0x100] sm:$0xff]
        %v805 = vld [vmem:[%s711 + $0x108] sm:$0xff]
        %v806 = vld [vmem:[%s711 + $0x110] sm:$0xff]
        %v807 = vld [vmem:[%s711 + $0x118] sm:$0xff]
        %v808 = vld [vmem:[%s711 + $0x120] sm:$0xff]
        %v809 = vld [vmem:[%s711 + $0x128] sm:$0xff]
        %v810 = vld [vmem:[%s711 + $0x130] sm:$0xff]
        %v811 = vld [vmem:[%s711 + $0x138] sm:$0xff]
        %v812 = vld [vmem:[%s711 + $0x140] sm:$0xff]
        %v813 = vld [vmem:[%s711 + $0x148] sm:$0xff]
        %v814 = vld [vmem:[%s711 + $0x150] sm:$0xff]
        %v815 = vld [vmem:[%s711 + $0x158] sm:$0xff]
        %v816 = vld [vmem:[%s711 + $0x160] sm:$0xff]
        %v817 = vld [vmem:[%s711 + $0x168] sm:$0xff]
        %v818 = vld [vmem:[%s711 + $0x170] sm:$0xff]
        %v819 = vld [vmem:[%s711 + $0x178] sm:$0xff]
        %v820 = vld [vmem:[%s711 + $0x180] sm:$0xff]
        %v821 = vld [vmem:[%s711 + $0x188] sm:$0xff]
        %v822 = vld [vmem:[%s711 + $0x190] sm:$0xff]
        %v823 = vld [vmem:[%s711 + $0x198] sm:$0xff]
        %v824 = vld [vmem:[%s711 + $0x1a0] sm:$0xff]
        %v825 = vld [vmem:[%s711 + $0x1a8] sm:$0xff]
        %v826 = vld [vmem:[%s711 + $0x1b0] sm:$0xff]
        %v827 = vld [vmem:[%s711 + $0x1b8] sm:$0xff]
        %v828 = vld [vmem:[%s711 + $0x1c0] sm:$0xff]
        %v829 = vld [vmem:[%s711 + $0x1c8] sm:$0xff]
        %v830 = vld [vmem:[%s711 + $0x1d0] sm:$0xff]
        %v831 = vld [vmem:[%s711 + $0x1d8] sm:$0xff]
        %v832 = vld [vmem:[%s711 + $0x1e0] sm:$0xff]
        %v833 = vld [vmem:[%s711 + $0x1e8] sm:$0xff]
        %v834 = vld [vmem:[%s711 + $0x1f0] sm:$0xff]
        %v835 = vld [vmem:[%s711 + $0x1f8] sm:$0xff]
        %v836 = vld [vmem:[%s711 + $0x200] sm:$0xff]
        %v837 = vld [vmem:[%s711 + $0x208] sm:$0xff]
        %v838 = vld [vmem:[%s711 + $0x210] sm:$0xff]
        %v839 = vld [vmem:[%s711 + $0x218] sm:$0xff]
        %v840 = vld [vmem:[%s711 + $0x220] sm:$0xff]
        %v841 = vld [vmem:[%s711 + $0x228] sm:$0xff]
        %v842 = vld [vmem:[%s711 + $0x230] sm:$0xff]
        %v843 = vld [vmem:[%s711 + $0x238] sm:$0xff]
        %v844 = vld [vmem:[%s711 + $0x240] sm:$0xff]
        %v845 = vld [vmem:[%s711 + $0x248] sm:$0xff]
        %v846 = vld [vmem:[%s711 + $0x250] sm:$0xff]
        %v847 = vld [vmem:[%s711 + $0x258] sm:$0xff]
        %v848 = vld [vmem:[%s711 + $0x260] sm:$0xff]
        %v849 = vld [vmem:[%s711 + $0x268] sm:$0xff]
        %v850 = vld [vmem:[%s711 + $0x270] sm:$0xff]
        %v851 = vld [vmem:[%s711 + $0x278] sm:$0xff]
        %v852 = vld [vmem:[%s711 + $0x280] sm:$0xff]
        %v853 = vld [vmem:[%s711 + $0x288] sm:$0xff]
        %v854 = vld [vmem:[%s711 + $0x290] sm:$0xff]
        %v855 = vld [vmem:[%s711 + $0x298] sm:$0xff]
        %v856 = vld [vmem:[%s711 + $0x2a0] sm:$0xff]
        %v857 = vld [vmem:[%s711 + $0x2a8] sm:$0xff]
        %v858 = vld [vmem:[%s711 + $0x2b0] sm:$0xff]
        %v859 = vld [vmem:[%s711 + $0x2b8] sm:$0xff]
        %v860 = vld [vmem:[%s711 + $0x2c0] sm:$0xff]
        %v861 = vld [vmem:[%s711 + $0x2c8] sm:$0xff]
        %v862 = vld [vmem:[%s711 + $0x2d0] sm:$0xff]
        %v863 = vld [vmem:[%s711 + $0x2d8] sm:$0xff]
        %v864 = vld [vmem:[%s711 + $0x2e0] sm:$0xff]
        %v865 = vld [vmem:[%s711 + $0x2e8] sm:$0xff]
        %v866 = vld [vmem:[%s711 + $0x2f0] sm:$0xff]
        %v867 = vld [vmem:[%s711 + $0x2f8] sm:$0xff]
        %v868 = vld [vmem:[%s711 + $0x300] sm:$0xff]
        %v869 = vld [vmem:[%s711 + $0x308] sm:$0xff]
        %v870 = vld [vmem:[%s711 + $0x310] sm:$0xff]
        %v871 = vld [vmem:[%s711 + $0x318] sm:$0xff]
        %v872 = vld [vmem:[%s711 + $0x320] sm:$0xff]
        %v873 = vld [vmem:[%s711 + $0x328] sm:$0xff]
        %v874 = vld [vmem:[%s711 + $0x330] sm:$0xff]
        %v875 = vld [vmem:[%s711 + $0x338] sm:$0xff]
        %v876 = vld [vmem:[%s711 + $0x340] sm:$0xff]
        %v877 = vld [vmem:[%s711 + $0x348] sm:$0xff]
        %v878 = vld [vmem:[%s711 + $0x350] sm:$0xff]
        %v879 = vld [vmem:[%s711 + $0x358] sm:$0xff]
        %v880 = vld [vmem:[%s711 + $0x360] sm:$0xff]
        %v881 = vld [vmem:[%s711 + $0x368] sm:$0xff]
        %v882 = vld [vmem:[%s711 + $0x370] sm:$0xff]
        %v883 = vld [vmem:[%s711 + $0x378] sm:$0xff]
        %v884 = vld [vmem:[%s711 + $0x380] sm:$0xff]
        %v885 = vld [vmem:[%s711 + $0x388] sm:$0xff]
        %v886 = vld [vmem:[%s711 + $0x390] sm:$0xff]
        %v887 = vld [vmem:[%s711 + $0x398] sm:$0xff]
        %v888 = vld [vmem:[%s711 + $0x3a0] sm:$0xff]
        %v889 = vld [vmem:[%s711 + $0x3a8] sm:$0xff]
        %v890 = vld [vmem:[%s711 + $0x3b0] sm:$0xff]
        %v891 = vld [vmem:[%s711 + $0x3b8] sm:$0xff]
        %v892 = vld [vmem:[%s711 + $0x3c0] sm:$0xff]
        %v893 = vld [vmem:[%s711 + $0x3c8] sm:$0xff]
        %v894 = vld [vmem:[%s711 + $0x3d0] sm:$0xff]
        %v895 = vld [vmem:[%s711 + $0x3d8] sm:$0xff]
        %v896 = vld [vmem:[%s711 + $0x3e0] sm:$0xff]
        %v897 = vld [vmem:[%s711 + $0x3e8] sm:$0xff]
        %v898 = vld [vmem:[%s711 + $0x3f0] sm:$0xff]
        %v899 = vld [vmem:[%s711 + $0x3f8] sm:$0xff]
        %v900 = vld [vmem:[%s711 + $0x400] sm:$0xff]
        %v901 = vld [vmem:[%s711 + $0x408] sm:$0xff]
        %v902 = vld [vmem:[%s711 + $0x410] sm:$0xff]
        %v903 = vld [vmem:[%s711 + $0x418] sm:$0xff]
        %v904 = vld [vmem:[%s711 + $0x420] sm:$0xff]
        %v905 = vld [vmem:[%s711 + $0x428] sm:$0xff]
        %v906 = vld [vmem:[%s711 + $0x430] sm:$0xff]
        %v907 = vld [vmem:[%s711 + $0x438] sm:$0xff]
        %v908 = vld [vmem:[%s711 + $0x440] sm:$0xff]
        %v909 = vld [vmem:[%s711 + $0x448] sm:$0xff]
        %v910 = vld [vmem:[%s711 + $0x450] sm:$0xff]
        %v911 = vld [vmem:[%s711 + $0x458] sm:$0xff]
        %v912 = vld [vmem:[%s711 + $0x460] sm:$0xff]
        %v913 = vld [vmem:[%s711 + $0x468] sm:$0xff]
        %v914 = vld [vmem:[%s711 + $0x470] sm:$0xff]
        %v915 = vld [vmem:[%s711 + $0x478] sm:$0xff]
        %v916 = vld [vmem:[%s711 + $0x480] sm:$0xff]
        %v917 = vld [vmem:[%s711 + $0x488] sm:$0xff]
        %v918 = vld [vmem:[%s711 + $0x490] sm:$0xff]
        %v919 = vld [vmem:[%s711 + $0x498] sm:$0xff]
        %v920 = vld [vmem:[%s711 + $0x4a0] sm:$0xff]
        %v921 = vld [vmem:[%s711 + $0x4a8] sm:$0xff]
        %v922 = vld [vmem:[%s711 + $0x4b0] sm:$0xff]
        %v923 = vld [vmem:[%s711 + $0x4b8] sm:$0xff]
        %v924 = vld [vmem:[%s711 + $0x4c0] sm:$0xff]
        %v925 = vld [vmem:[%s711 + $0x4c8] sm:$0xff]
        %v926 = vld [vmem:[%s711 + $0x4d0] sm:$0xff]
        %v927 = vld [vmem:[%s711 + $0x4d8] sm:$0xff]
        %v928 = vld [vmem:[%s711 + $0x4e0] sm:$0xff]
        %v929 = vld [vmem:[%s711 + $0x4e8] sm:$0xff]
        %v930 = vld [vmem:[%s711 + $0x4f0] sm:$0xff]
        %v931 = vld [vmem:[%s711 + $0x4f8] sm:$0xff]
        %v932 = vld [vmem:[%s711 + $0x500] sm:$0xff]
        %v933 = vld [vmem:[%s711 + $0x508] sm:$0xff]
        %v934 = vld [vmem:[%s711 + $0x510] sm:$0xff]
        %v935 = vld [vmem:[%s711 + $0x518] sm:$0xff]
        %v936 = vld [vmem:[%s711 + $0x520] sm:$0xff]
        %v937 = vld [vmem:[%s711 + $0x528] sm:$0xff]
        %v938 = vld [vmem:[%s711 + $0x530] sm:$0xff]
        %v939 = vld [vmem:[%s711 + $0x538] sm:$0xff]
        %v940 = vld [vmem:[%s711 + $0x540] sm:$0xff]
        %v941 = vld [vmem:[%s711 + $0x548] sm:$0xff]
        %v942 = vld [vmem:[%s711 + $0x550] sm:$0xff]
        %v943 = vld [vmem:[%s711 + $0x558] sm:$0xff]
        %v944 = vld [vmem:[%s711 + $0x560] sm:$0xff]
        %v945 = vld [vmem:[%s711 + $0x568] sm:$0xff]
        %v946 = vld [vmem:[%s711 + $0x570] sm:$0xff]
        %v947 = vld [vmem:[%s711 + $0x578] sm:$0xff]
        %v948 = vld [vmem:[%s711 + $0x580] sm:$0xff]
        %v949 = vld [vmem:[%s711 + $0x588] sm:$0xff]
        %v950 = vld [vmem:[%s711 + $0x590] sm:$0xff]
        %v951 = vld [vmem:[%s711 + $0x598] sm:$0xff]
        %v952 = vld [vmem:[%s711 + $0x5a0] sm:$0xff]
        %v953 = vld [vmem:[%s711 + $0x5a8] sm:$0xff]
        %v954 = vld [vmem:[%s711 + $0x5b0] sm:$0xff]
        %v955 = vld [vmem:[%s711 + $0x5b8] sm:$0xff]
        %v956 = vld [vmem:[%s711 + $0x5c0] sm:$0xff]
        %v957 = vld [vmem:[%s711 + $0x5c8] sm:$0xff]
        %v958 = vld [vmem:[%s711 + $0x5d0] sm:$0xff]
        %v959 = vld [vmem:[%s711 + $0x5d8] sm:$0xff]
        %v960 = vld [vmem:[%s711 + $0x5e0] sm:$0xff]
        %v961 = vld [vmem:[%s711 + $0x5e8] sm:$0xff]
        %v962 = vld [vmem:[%s711 + $0x5f0] sm:$0xff]
        %v963 = vld [vmem:[%s711 + $0x5f8] sm:$0xff]
        %v964 = vld [vmem:[%s711 + $0x600] sm:$0xff]
        %v965 = vld [vmem:[%s711 + $0x608] sm:$0xff]
        %v966 = vld [vmem:[%s711 + $0x610] sm:$0xff]
        %v967 = vld [vmem:[%s711 + $0x618] sm:$0xff]
        %v968 = vld [vmem:[%s711 + $0x620] sm:$0xff]
        %v969 = vld [vmem:[%s711 + $0x628] sm:$0xff]
        %v970 = vld [vmem:[%s711 + $0x630] sm:$0xff]
        %v971 = vld [vmem:[%s711 + $0x638] sm:$0xff]
        %v972 = vld [vmem:[%s711 + $0x640] sm:$0xff]
        %v973 = vld [vmem:[%s711 + $0x648] sm:$0xff]
        %v974 = vld [vmem:[%s711 + $0x650] sm:$0xff]
        %v975 = vld [vmem:[%s711 + $0x658] sm:$0xff]
        %v976 = vld [vmem:[%s711 + $0x660] sm:$0xff]
        %v977 = vld [vmem:[%s711 + $0x668] sm:$0xff]
        %v978 = vld [vmem:[%s711 + $0x670] sm:$0xff]
        %v979 = vld [vmem:[%s711 + $0x678] sm:$0xff]
        %v980 = vld [vmem:[%s711 + $0x680] sm:$0xff]
        %v981 = vld [vmem:[%s711 + $0x688] sm:$0xff]
        %v982 = vld [vmem:[%s711 + $0x690] sm:$0xff]
        %v983 = vld [vmem:[%s711 + $0x698] sm:$0xff]
        %v984 = vld [vmem:[%s711 + $0x6a0] sm:$0xff]
        %v985 = vld [vmem:[%s711 + $0x6a8] sm:$0xff]
        %v986 = vld [vmem:[%s711 + $0x6b0] sm:$0xff]
        %v987 = vld [vmem:[%s711 + $0x6b8] sm:$0xff]
        %v988 = vld [vmem:[%s711 + $0x6c0] sm:$0xff]
        %v989 = vld [vmem:[%s711 + $0x6c8] sm:$0xff]
        %v990 = vld [vmem:[%s711 + $0x6d0] sm:$0xff]
        %v991 = vld [vmem:[%s711 + $0x6d8] sm:$0xff]
        %v992 = vld [vmem:[%s711 + $0x6e0] sm:$0xff]
        %v993 = vld [vmem:[%s711 + $0x6e8] sm:$0xff]
        %v994 = vld [vmem:[%s711 + $0x6f0] sm:$0xff]
        %v995 = vld [vmem:[%s711 + $0x6f8] sm:$0xff]
        %v996 = vld [vmem:[%s711 + $0x700] sm:$0xff]
        %v997 = vld [vmem:[%s711 + $0x708] sm:$0xff]
        %v998 = vld [vmem:[%s711 + $0x710] sm:$0xff]
        %v999 = vld [vmem:[%s711 + $0x718] sm:$0xff]
        %v1000 = vld [vmem:[%s711 + $0x720] sm:$0xff]
        %v1001 = vld [vmem:[%s711 + $0x728] sm:$0xff]
        %v1002 = vld [vmem:[%s711 + $0x730] sm:$0xff]
        %v1003 = vld [vmem:[%s711 + $0x738] sm:$0xff]
        %v1004 = vld [vmem:[%s711 + $0x740] sm:$0xff]
        %v1005 = vld [vmem:[%s711 + $0x748] sm:$0xff]
        %v1006 = vld [vmem:[%s711 + $0x750] sm:$0xff]
        %v1007 = vld [vmem:[%s711 + $0x758] sm:$0xff]
        %v1008 = vld [vmem:[%s711 + $0x760] sm:$0xff]
        %v1009 = vld [vmem:[%s711 + $0x768] sm:$0xff]
        %v1010 = vld [vmem:[%s711 + $0x770] sm:$0xff]
        %v1011 = vld [vmem:[%s711 + $0x778] sm:$0xff]
        %v1012 = vld [vmem:[%s711 + $0x780] sm:$0xff]
        %v1013 = vld [vmem:[%s711 + $0x788] sm:$0xff]
        %v1014 = vld [vmem:[%s711 + $0x790] sm:$0xff]
        %v1015 = vld [vmem:[%s711 + $0x798] sm:$0xff]
        %v1016 = vld [vmem:[%s711 + $0x7a0] sm:$0xff]
        %v1017 = vld [vmem:[%s711 + $0x7a8] sm:$0xff]
        %v1018 = vld [vmem:[%s711 + $0x7b0] sm:$0xff]
        %v1019 = vld [vmem:[%s711 + $0x7b8] sm:$0xff]
        %v1020 = vld [vmem:[%s711 + $0x7c0] sm:$0xff]
        %v1021 = vld [vmem:[%s711 + $0x7c8] sm:$0xff]
        %v1022 = vld [vmem:[%s711 + $0x7d0] sm:$0xff]
        %v1023 = vld [vmem:[%s711 + $0x7d8] sm:$0xff]
        %v1024 = vld [vmem:[%s711 + $0x7e0] sm:$0xff]
        %v1025 = vld [vmem:[%s711 + $0x7e8] sm:$0xff]
        %v1026 = vld [vmem:[%s711 + $0x7f0] sm:$0xff]
        %v1027 = vld [vmem:[%s711 + $0x7f8] sm:$0xff]
        %v1028 = vld [vmem:[%s752] sm:$0xf]
        %v1030 = vperm.slane %v1028, 0
        %v1031 = vperm.slane %v1028, 1
        %v1032 = vperm.slane %v1028, 2
        %v1033 = vperm.slane %v1028, 3
        %1038 = vmatpush.msra.mxu0 %v832
        %1039 = vmatpush.msra.mxu0 %v828
        %1040 = vmatpush.msra.mxu0 %v824
        %1041 = vmatpush.msra.mxu0 %v820
        %1042 = vmatpush.msra.mxu0 %v816
        %1043 = vmatpush.msra.mxu0 %v812
        %1044 = vmatpush.msra.mxu0 %v808
        %1045 = vmatpush.msra.mxu0 %v804
        %1046 = vmatpush.msra.mxu0 %v800
        %1047 = vmatpush.msra.mxu0 %v796
        %1048 = vmatpush.msra.mxu0 %v792
        %1049 = vmatpush.msra.mxu0 %v788
        %1050 = vmatpush.msra.mxu0 %v784
        %1051 = vmatpush.msra.mxu0 %v780
        %1052 = vmatpush.msra.mxu0 %v776
        %1053 = vmatpush.msra.mxu0 %v772
        %1054 = vmatmul.f32.gmra.mxu0 %v756
        %v1055 = vpop.f32.mrf.mxu0
        %v1056 = vadd.f32 %v1030, %v1055
        %1057 = vmatmul.f32.gmra.mxu0 %v760
        %v1058 = vpop.f32.mrf.mxu0
        %v1059 = vadd.f32 %v1030, %v1058
        %1060 = vmatmul.f32.gmra.mxu0 %v764
        %v1061 = vpop.f32.mrf.mxu0
        %v1062 = vadd.f32 %v1030, %v1061
        %1063 = vmatmul.f32.gmra.mxu0 %v768
        %v1064 = vpop.f32.mrf.mxu0
        %v1065 = vadd.f32 %v1030, %v1064
        %1066 = vdwg.mxu0
        %1067 = vmatpush.msra.mxu0 %v896
        %1068 = vmatpush.msra.mxu0 %v892
        %1069 = vmatpush.msra.mxu0 %v888
        %1070 = vmatpush.msra.mxu0 %v884
        %1071 = vmatpush.msra.mxu0 %v880
        %1072 = vmatpush.msra.mxu0 %v876
        %1073 = vmatpush.msra.mxu0 %v872
        %1074 = vmatpush.msra.mxu0 %v868
        %1075 = vmatpush.msra.mxu0 %v864
        %1076 = vmatpush.msra.mxu0 %v860
        %1077 = vmatpush.msra.mxu0 %v856
        %1078 = vmatpush.msra.mxu0 %v852
        %1079 = vmatpush.msra.mxu0 %v848
        %1080 = vmatpush.msra.mxu0 %v844
        %1081 = vmatpush.msra.mxu0 %v840
        %1082 = vmatpush.msra.mxu0 %v836
        %1083 = vmatmul.f32.gmra.mxu0 %v757
        %v1084 = vpop.f32.mrf.mxu0
        %v1085 = vadd.f32 %v1056, %v1084
        %1086 = vmatmul.f32.gmra.mxu0 %v761
        %v1087 = vpop.f32.mrf.mxu0
        %v1088 = vadd.f32 %v1059, %v1087
        %1089 = vmatmul.f32.gmra.mxu0 %v765
        %v1090 = vpop.f32.mrf.mxu0
        %v1091 = vadd.f32 %v1062, %v1090
        %1092 = vmatmul.f32.gmra.mxu0 %v769
        %v1093 = vpop.f32.mrf.mxu0
        %v1094 = vadd.f32 %v1065, %v1093
        %1095 = vdwg.mxu0
        %1096 = vmatpush.msra.mxu0 %v960
        %1097 = vmatpush.msra.mxu0 %v956
        %1098 = vmatpush.msra.mxu0 %v952
        %1099 = vmatpush.msra.mxu0 %v948
        %1100 = vmatpush.msra.mxu0 %v944
        %1101 = vmatpush.msra.mxu0 %v940
        %1102 = vmatpush.msra.mxu0 %v936
        %1103 = vmatpush.msra.mxu0 %v932
        %1104 = vmatpush.msra.mxu0 %v928
        %1105 = vmatpush.msra.mxu0 %v924
        %1106 = vmatpush.msra.mxu0 %v920
        %1107 = vmatpush.msra.mxu0 %v916
        %1108 = vmatpush.msra.mxu0 %v912
        %1109 = vmatpush.msra.mxu0 %v908
        %1110 = vmatpush.msra.mxu0 %v904
        %1111 = vmatpush.msra.mxu0 %v900
        %1112 = vmatmul.f32.gmra.mxu0 %v758
        %v1113 = vpop.f32.mrf.mxu0
        %v1114 = vadd.f32 %v1085, %v1113
        %1115 = vmatmul.f32.gmra.mxu0 %v762
        %v1116 = vpop.f32.mrf.mxu0
        %v1117 = vadd.f32 %v1088, %v1116
        %1118 = vmatmul.f32.gmra.mxu0 %v766
        %v1119 = vpop.f32.mrf.mxu0
        %v1120 = vadd.f32 %v1091, %v1119
        %1121 = vmatmul.f32.gmra.mxu0 %v770
        %v1122 = vpop.f32.mrf.mxu0
        %v1123 = vadd.f32 %v1094, %v1122
        %1124 = vdwg.mxu0
        %1125 = vmatpush.msra.mxu0 %v1024
        %1126 = vmatpush.msra.mxu0 %v1020
        %1127 = vmatpush.msra.mxu0 %v1016
        %1128 = vmatpush.msra.mxu0 %v1012
        %1129 = vmatpush.msra.mxu0 %v1008
        %1130 = vmatpush.msra.mxu0 %v1004
        %1131 = vmatpush.msra.mxu0 %v1000
        %1132 = vmatpush.msra.mxu0 %v996
        %1133 = vmatpush.msra.mxu0 %v992
        %1134 = vmatpush.msra.mxu0 %v988
        %1135 = vmatpush.msra.mxu0 %v984
        %1136 = vmatpush.msra.mxu0 %v980
        %1137 = vmatpush.msra.mxu0 %v976
        %1138 = vmatpush.msra.mxu0 %v972
        %1139 = vmatpush.msra.mxu0 %v968
        %1140 = vmatpush.msra.mxu0 %v964
        %1141 = vmatmul.f32.gmra.mxu0 %v759
        %v1142 = vpop.f32.mrf.mxu0
        %v1143 = vadd.f32 %v1114, %v1142
        %1144 = vmatmul.f32.gmra.mxu0 %v763
        %v1145 = vpop.f32.mrf.mxu0
        %v1146 = vadd.f32 %v1117, %v1145
        %1147 = vmatmul.f32.gmra.mxu0 %v767
        %v1148 = vpop.f32.mrf.mxu0
        %v1149 = vadd.f32 %v1120, %v1148
        %1150 = vmatmul.f32.gmra.mxu0 %v771
        %v1151 = vpop.f32.mrf.mxu0
        %v1152 = vadd.f32 %v1123, %v1151
        %1153 = vdwg.mxu0
        %1154 = vmatpush.msra.mxu0 %v833
        %1155 = vmatpush.msra.mxu0 %v829
        %1156 = vmatpush.msra.mxu0 %v825
        %1157 = vmatpush.msra.mxu0 %v821
        %1158 = vmatpush.msra.mxu0 %v817
        %1159 = vmatpush.msra.mxu0 %v813
        %1160 = vmatpush.msra.mxu0 %v809
        %1161 = vmatpush.msra.mxu0 %v805
        %1162 = vmatpush.msra.mxu0 %v801
        %1163 = vmatpush.msra.mxu0 %v797
        %1164 = vmatpush.msra.mxu0 %v793
        %1165 = vmatpush.msra.mxu0 %v789
        %1166 = vmatpush.msra.mxu0 %v785
        %1167 = vmatpush.msra.mxu0 %v781
        %1168 = vmatpush.msra.mxu0 %v777
        %1169 = vmatpush.msra.mxu0 %v773
        %1170 = vmatmul.f32.gmra.mxu0 %v756
        %v1171 = vpop.f32.mrf.mxu0
        %v1172 = vadd.f32 %v1031, %v1171
        %1173 = vmatmul.f32.gmra.mxu0 %v760
        %v1174 = vpop.f32.mrf.mxu0
        %v1175 = vadd.f32 %v1031, %v1174
        %1176 = vmatmul.f32.gmra.mxu0 %v764
        %v1177 = vpop.f32.mrf.mxu0
        %v1178 = vadd.f32 %v1031, %v1177
        %1179 = vmatmul.f32.gmra.mxu0 %v768
        %v1180 = vpop.f32.mrf.mxu0
        %v1181 = vadd.f32 %v1031, %v1180
        %1182 = vdwg.mxu0
        %1183 = vmatpush.msra.mxu0 %v897
        %1184 = vmatpush.msra.mxu0 %v893
        %1185 = vmatpush.msra.mxu0 %v889
        %1186 = vmatpush.msra.mxu0 %v885
        %1187 = vmatpush.msra.mxu0 %v881
        %1188 = vmatpush.msra.mxu0 %v877
        %1189 = vmatpush.msra.mxu0 %v873
        %1190 = vmatpush.msra.mxu0 %v869
        %1191 = vmatpush.msra.mxu0 %v865
        %1192 = vmatpush.msra.mxu0 %v861
        %1193 = vmatpush.msra.mxu0 %v857
        %1194 = vmatpush.msra.mxu0 %v853
        %1195 = vmatpush.msra.mxu0 %v849
        %1196 = vmatpush.msra.mxu0 %v845
        %1197 = vmatpush.msra.mxu0 %v841
        %1198 = vmatpush.msra.mxu0 %v837
        %1199 = vmatmul.f32.gmra.mxu0 %v757
        %v1200 = vpop.f32.mrf.mxu0
        %v1201 = vadd.f32 %v1172, %v1200
        %1202 = vmatmul.f32.gmra.mxu0 %v761
        %v1203 = vpop.f32.mrf.mxu0
        %v1204 = vadd.f32 %v1175, %v1203
        %1205 = vmatmul.f32.gmra.mxu0 %v765
        %v1206 = vpop.f32.mrf.mxu0
        %v1207 = vadd.f32 %v1178, %v1206
        %1208 = vmatmul.f32.gmra.mxu0 %v769
        %v1209 = vpop.f32.mrf.mxu0
        %v1210 = vadd.f32 %v1181, %v1209
        %1211 = vdwg.mxu0
        %1212 = vmatpush.msra.mxu0 %v961
        %1213 = vmatpush.msra.mxu0 %v957
        %1214 = vmatpush.msra.mxu0 %v953
        %1215 = vmatpush.msra.mxu0 %v949
        %1216 = vmatpush.msra.mxu0 %v945
        %1217 = vmatpush.msra.mxu0 %v941
        %1218 = vmatpush.msra.mxu0 %v937
        %1219 = vmatpush.msra.mxu0 %v933
        %1220 = vmatpush.msra.mxu0 %v929
        %1221 = vmatpush.msra.mxu0 %v925
        %1222 = vmatpush.msra.mxu0 %v921
        %1223 = vmatpush.msra.mxu0 %v917
        %1224 = vmatpush.msra.mxu0 %v913
        %1225 = vmatpush.msra.mxu0 %v909
        %1226 = vmatpush.msra.mxu0 %v905
        %1227 = vmatpush.msra.mxu0 %v901
        %1228 = vmatmul.f32.gmra.mxu0 %v758
        %v1229 = vpop.f32.mrf.mxu0
        %v1230 = vadd.f32 %v1201, %v1229
        %1231 = vmatmul.f32.gmra.mxu0 %v762
        %v1232 = vpop.f32.mrf.mxu0
        %v1233 = vadd.f32 %v1204, %v1232
        %1234 = vmatmul.f32.gmra.mxu0 %v766
        %v1235 = vpop.f32.mrf.mxu0
        %v1236 = vadd.f32 %v1207, %v1235
        %1237 = vmatmul.f32.gmra.mxu0 %v770
        %v1238 = vpop.f32.mrf.mxu0
        %v1239 = vadd.f32 %v1210, %v1238
        %1240 = vdwg.mxu0
        %1241 = vmatpush.msra.mxu0 %v1025
        %1242 = vmatpush.msra.mxu0 %v1021
        %1243 = vmatpush.msra.mxu0 %v1017
        %1244 = vmatpush.msra.mxu0 %v1013
        %1245 = vmatpush.msra.mxu0 %v1009
        %1246 = vmatpush.msra.mxu0 %v1005
        %1247 = vmatpush.msra.mxu0 %v1001
        %1248 = vmatpush.msra.mxu0 %v997
        %1249 = vmatpush.msra.mxu0 %v993
        %1250 = vmatpush.msra.mxu0 %v989
        %1251 = vmatpush.msra.mxu0 %v985
        %1252 = vmatpush.msra.mxu0 %v981
        %1253 = vmatpush.msra.mxu0 %v977
        %1254 = vmatpush.msra.mxu0 %v973
        %1255 = vmatpush.msra.mxu0 %v969
        %1256 = vmatpush.msra.mxu0 %v965
        %1257 = vmatmul.f32.gmra.mxu0 %v759
        %v1258 = vpop.f32.mrf.mxu0
        %v1259 = vadd.f32 %v1230, %v1258
        %1260 = vmatmul.f32.gmra.mxu0 %v763
        %v1261 = vpop.f32.mrf.mxu0
        %v1262 = vadd.f32 %v1233, %v1261
        %1263 = vmatmul.f32.gmra.mxu0 %v767
        %v1264 = vpop.f32.mrf.mxu0
        %v1265 = vadd.f32 %v1236, %v1264
        %1266 = vmatmul.f32.gmra.mxu0 %v771
        %v1267 = vpop.f32.mrf.mxu0
        %v1268 = vadd.f32 %v1239, %v1267
        %1269 = vdwg.mxu0
        %1270 = vmatpush.msra.mxu0 %v834
        %1271 = vmatpush.msra.mxu0 %v830
        %1272 = vmatpush.msra.mxu0 %v826
        %1273 = vmatpush.msra.mxu0 %v822
        %1274 = vmatpush.msra.mxu0 %v818
        %1275 = vmatpush.msra.mxu0 %v814
        %1276 = vmatpush.msra.mxu0 %v810
        %1277 = vmatpush.msra.mxu0 %v806
        %1278 = vmatpush.msra.mxu0 %v802
        %1279 = vmatpush.msra.mxu0 %v798
        %1280 = vmatpush.msra.mxu0 %v794
        %1281 = vmatpush.msra.mxu0 %v790
        %1282 = vmatpush.msra.mxu0 %v786
        %1283 = vmatpush.msra.mxu0 %v782
        %1284 = vmatpush.msra.mxu0 %v778
        %1285 = vmatpush.msra.mxu0 %v774
        %1286 = vmatmul.f32.gmra.mxu0 %v756
        %v1287 = vpop.f32.mrf.mxu0
        %v1288 = vadd.f32 %v1032, %v1287
        %1289 = vmatmul.f32.gmra.mxu0 %v760
        %v1290 = vpop.f32.mrf.mxu0
        %v1291 = vadd.f32 %v1032, %v1290
        %1292 = vmatmul.f32.gmra.mxu0 %v764
        %v1293 = vpop.f32.mrf.mxu0
        %v1294 = vadd.f32 %v1032, %v1293
        %1295 = vmatmul.f32.gmra.mxu0 %v768
        %v1296 = vpop.f32.mrf.mxu0
        %v1297 = vadd.f32 %v1032, %v1296
        %1298 = vdwg.mxu0
        %1299 = vmatpush.msra.mxu0 %v898
        %1300 = vmatpush.msra.mxu0 %v894
        %1301 = vmatpush.msra.mxu0 %v890
        %1302 = vmatpush.msra.mxu0 %v886
        %1303 = vmatpush.msra.mxu0 %v882
        %1304 = vmatpush.msra.mxu0 %v878
        %1305 = vmatpush.msra.mxu0 %v874
        %1306 = vmatpush.msra.mxu0 %v870
        %1307 = vmatpush.msra.mxu0 %v866
        %1308 = vmatpush.msra.mxu0 %v862
        %1309 = vmatpush.msra.mxu0 %v858
        %1310 = vmatpush.msra.mxu0 %v854
        %1311 = vmatpush.msra.mxu0 %v850
        %1312 = vmatpush.msra.mxu0 %v846
        %1313 = vmatpush.msra.mxu0 %v842
        %1314 = vmatpush.msra.mxu0 %v838
        %1315 = vmatmul.f32.gmra.mxu0 %v757
        %v1316 = vpop.f32.mrf.mxu0
        %v1317 = vadd.f32 %v1288, %v1316
        %1318 = vmatmul.f32.gmra.mxu0 %v761
        %v1319 = vpop.f32.mrf.mxu0
        %v1320 = vadd.f32 %v1291, %v1319
        %1321 = vmatmul.f32.gmra.mxu0 %v765
        %v1322 = vpop.f32.mrf.mxu0
        %v1323 = vadd.f32 %v1294, %v1322
        %1324 = vmatmul.f32.gmra.mxu0 %v769
        %v1325 = vpop.f32.mrf.mxu0
        %v1326 = vadd.f32 %v1297, %v1325
        %1327 = vdwg.mxu0
        %1328 = vmatpush.msra.mxu0 %v962
        %1329 = vmatpush.msra.mxu0 %v958
        %1330 = vmatpush.msra.mxu0 %v954
        %1331 = vmatpush.msra.mxu0 %v950
        %1332 = vmatpush.msra.mxu0 %v946
        %1333 = vmatpush.msra.mxu0 %v942
        %1334 = vmatpush.msra.mxu0 %v938
        %1335 = vmatpush.msra.mxu0 %v934
        %1336 = vmatpush.msra.mxu0 %v930
        %1337 = vmatpush.msra.mxu0 %v926
        %1338 = vmatpush.msra.mxu0 %v922
        %1339 = vmatpush.msra.mxu0 %v918
        %1340 = vmatpush.msra.mxu0 %v914
        %1341 = vmatpush.msra.mxu0 %v910
        %1342 = vmatpush.msra.mxu0 %v906
        %1343 = vmatpush.msra.mxu0 %v902
        %1344 = vmatmul.f32.gmra.mxu0 %v758
        %v1345 = vpop.f32.mrf.mxu0
        %v1346 = vadd.f32 %v1317, %v1345
        %1347 = vmatmul.f32.gmra.mxu0 %v762
        %v1348 = vpop.f32.mrf.mxu0
        %v1349 = vadd.f32 %v1320, %v1348
        %1350 = vmatmul.f32.gmra.mxu0 %v766
        %v1351 = vpop.f32.mrf.mxu0
        %v1352 = vadd.f32 %v1323, %v1351
        %1353 = vmatmul.f32.gmra.mxu0 %v770
        %v1354 = vpop.f32.mrf.mxu0
        %v1355 = vadd.f32 %v1326, %v1354
        %1356 = vdwg.mxu0
        %1357 = vmatpush.msra.mxu0 %v1026
        %1358 = vmatpush.msra.mxu0 %v1022
        %1359 = vmatpush.msra.mxu0 %v1018
        %1360 = vmatpush.msra.mxu0 %v1014
        %1361 = vmatpush.msra.mxu0 %v1010
        %1362 = vmatpush.msra.mxu0 %v1006
        %1363 = vmatpush.msra.mxu0 %v1002
        %1364 = vmatpush.msra.mxu0 %v998
        %1365 = vmatpush.msra.mxu0 %v994
        %1366 = vmatpush.msra.mxu0 %v990
        %1367 = vmatpush.msra.mxu0 %v986
        %1368 = vmatpush.msra.mxu0 %v982
        %1369 = vmatpush.msra.mxu0 %v978
        %1370 = vmatpush.msra.mxu0 %v974
        %1371 = vmatpush.msra.mxu0 %v970
        %1372 = vmatpush.msra.mxu0 %v966
        %1373 = vmatmul.f32.gmra.mxu0 %v759
        %v1374 = vpop.f32.mrf.mxu0
        %v1375 = vadd.f32 %v1346, %v1374
        %1376 = vmatmul.f32.gmra.mxu0 %v763
        %v1377 = vpop.f32.mrf.mxu0
        %v1378 = vadd.f32 %v1349, %v1377
        %1379 = vmatmul.f32.gmra.mxu0 %v767
        %v1380 = vpop.f32.mrf.mxu0
        %v1381 = vadd.f32 %v1352, %v1380
        %1382 = vmatmul.f32.gmra.mxu0 %v771
        %v1383 = vpop.f32.mrf.mxu0
        %v1384 = vadd.f32 %v1355, %v1383
        %1385 = vdwg.mxu0
        %1386 = vmatpush.msra.mxu0 %v835
        %1387 = vmatpush.msra.mxu0 %v831
        %1388 = vmatpush.msra.mxu0 %v827
        %1389 = vmatpush.msra.mxu0 %v823
        %1390 = vmatpush.msra.mxu0 %v819
        %1391 = vmatpush.msra.mxu0 %v815
        %1392 = vmatpush.msra.mxu0 %v811
        %1393 = vmatpush.msra.mxu0 %v807
        %1394 = vmatpush.msra.mxu0 %v803
        %1395 = vmatpush.msra.mxu0 %v799
        %1396 = vmatpush.msra.mxu0 %v795
        %1397 = vmatpush.msra.mxu0 %v791
        %1398 = vmatpush.msra.mxu0 %v787
        %1399 = vmatpush.msra.mxu0 %v783
        %1400 = vmatpush.msra.mxu0 %v779
        %1401 = vmatpush.msra.mxu0 %v775
        %1402 = vmatmul.f32.gmra.mxu0 %v756
        %v1403 = vpop.f32.mrf.mxu0
        %v1404 = vadd.f32 %v1033, %v1403
        %1405 = vmatmul.f32.gmra.mxu0 %v760
        %v1406 = vpop.f32.mrf.mxu0
        %v1407 = vadd.f32 %v1033, %v1406
        %1408 = vmatmul.f32.gmra.mxu0 %v764
        %v1409 = vpop.f32.mrf.mxu0
        %v1410 = vadd.f32 %v1033, %v1409
        %1411 = vmatmul.f32.gmra.mxu0 %v768
        %v1412 = vpop.f32.mrf.mxu0
        %v1413 = vadd.f32 %v1033, %v1412
        %1414 = vdwg.mxu0
        %1415 = vmatpush.msra.mxu0 %v899
        %1416 = vmatpush.msra.mxu0 %v895
        %1417 = vmatpush.msra.mxu0 %v891
        %1418 = vmatpush.msra.mxu0 %v887
        %1419 = vmatpush.msra.mxu0 %v883
        %1420 = vmatpush.msra.mxu0 %v879
        %1421 = vmatpush.msra.mxu0 %v875
        %1422 = vmatpush.msra.mxu0 %v871
        %1423 = vmatpush.msra.mxu0 %v867
        %1424 = vmatpush.msra.mxu0 %v863
        %1425 = vmatpush.msra.mxu0 %v859
        %1426 = vmatpush.msra.mxu0 %v855
        %1427 = vmatpush.msra.mxu0 %v851
        %1428 = vmatpush.msra.mxu0 %v847
        %1429 = vmatpush.msra.mxu0 %v843
        %1430 = vmatpush.msra.mxu0 %v839
        %1431 = vmatmul.f32.gmra.mxu0 %v757
        %v1432 = vpop.f32.mrf.mxu0
        %v1433 = vadd.f32 %v1404, %v1432
        %1434 = vmatmul.f32.gmra.mxu0 %v761
        %v1435 = vpop.f32.mrf.mxu0
        %v1436 = vadd.f32 %v1407, %v1435
        %1437 = vmatmul.f32.gmra.mxu0 %v765
        %v1438 = vpop.f32.mrf.mxu0
        %v1439 = vadd.f32 %v1410, %v1438
        %1440 = vmatmul.f32.gmra.mxu0 %v769
        %v1441 = vpop.f32.mrf.mxu0
        %v1442 = vadd.f32 %v1413, %v1441
        %1443 = vdwg.mxu0
        %1444 = vmatpush.msra.mxu0 %v963
        %1445 = vmatpush.msra.mxu0 %v959
        %1446 = vmatpush.msra.mxu0 %v955
        %1447 = vmatpush.msra.mxu0 %v951
        %1448 = vmatpush.msra.mxu0 %v947
        %1449 = vmatpush.msra.mxu0 %v943
        %1450 = vmatpush.msra.mxu0 %v939
        %1451 = vmatpush.msra.mxu0 %v935
        %1452 = vmatpush.msra.mxu0 %v931
        %1453 = vmatpush.msra.mxu0 %v927
        %1454 = vmatpush.msra.mxu0 %v923
        %1455 = vmatpush.msra.mxu0 %v919
        %1456 = vmatpush.msra.mxu0 %v915
        %1457 = vmatpush.msra.mxu0 %v911
        %1458 = vmatpush.msra.mxu0 %v907
        %1459 = vmatpush.msra.mxu0 %v903
        %1460 = vmatmul.f32.gmra.mxu0 %v758
        %v1461 = vpop.f32.mrf.mxu0
        %v1462 = vadd.f32 %v1433, %v1461
        %1463 = vmatmul.f32.gmra.mxu0 %v762
        %v1464 = vpop.f32.mrf.mxu0
        %v1465 = vadd.f32 %v1436, %v1464
        %1466 = vmatmul.f32.gmra.mxu0 %v766
        %v1467 = vpop.f32.mrf.mxu0
        %v1468 = vadd.f32 %v1439, %v1467
        %1469 = vmatmul.f32.gmra.mxu0 %v770
        %v1470 = vpop.f32.mrf.mxu0
        %v1471 = vadd.f32 %v1442, %v1470
        %1472 = vdwg.mxu0
        %1473 = vmatpush.msra.mxu0 %v1027
        %1474 = vmatpush.msra.mxu0 %v1023
        %1475 = vmatpush.msra.mxu0 %v1019
        %1476 = vmatpush.msra.mxu0 %v1015
        %1477 = vmatpush.msra.mxu0 %v1011
        %1478 = vmatpush.msra.mxu0 %v1007
        %1479 = vmatpush.msra.mxu0 %v1003
        %1480 = vmatpush.msra.mxu0 %v999
        %1481 = vmatpush.msra.mxu0 %v995
        %1482 = vmatpush.msra.mxu0 %v991
        %1483 = vmatpush.msra.mxu0 %v987
        %1484 = vmatpush.msra.mxu0 %v983
        %1485 = vmatpush.msra.mxu0 %v979
        %1486 = vmatpush.msra.mxu0 %v975
        %1487 = vmatpush.msra.mxu0 %v971
        %1488 = vmatpush.msra.mxu0 %v967
        %1489 = vmatmul.f32.gmra.mxu0 %v759
        %v1490 = vpop.f32.mrf.mxu0
        %v1491 = vadd.f32 %v1462, %v1490
        %1492 = vmatmul.f32.gmra.mxu0 %v763
        %v1493 = vpop.f32.mrf.mxu0
        %v1494 = vadd.f32 %v1465, %v1493
        %1495 = vmatmul.f32.gmra.mxu0 %v767
        %v1496 = vpop.f32.mrf.mxu0
        %v1497 = vadd.f32 %v1468, %v1496
        %1498 = vmatmul.f32.gmra.mxu0 %v771
        %v1499 = vpop.f32.mrf.mxu0
        %v1500 = vadd.f32 %v1471, %v1499
        %1501 = vdwg.mxu0
        %1502 = vst [vmem:[%s740] sm:$0xff] %v1143
        %1503 = vst [vmem:[%s740 + $0x8] sm:$0xff] %v1259
        %1504 = vst [vmem:[%s740 + $0x10] sm:$0xff] %v1375
        %1505 = vst [vmem:[%s740 + $0x18] sm:$0xff] %v1491
        %1506 = vst [vmem:[%s740 + $0x20] sm:$0xff] %v1146
        %1507 = vst [vmem:[%s740 + $0x28] sm:$0xff] %v1262
        %1508 = vst [vmem:[%s740 + $0x30] sm:$0xff] %v1378
        %1509 = vst [vmem:[%s740 + $0x38] sm:$0xff] %v1494
        %1510 = vst [vmem:[%s740 + $0x40] sm:$0xff] %v1149
        %1511 = vst [vmem:[%s740 + $0x48] sm:$0xff] %v1265
        %1512 = vst [vmem:[%s740 + $0x50] sm:$0xff] %v1381
        %1513 = vst [vmem:[%s740 + $0x58] sm:$0xff] %v1497
        %1514 = vst [vmem:[%s740 + $0x60] sm:$0xff] %v1152
        %1515 = vst [vmem:[%s740 + $0x68] sm:$0xff] %v1268
        %1516 = vst [vmem:[%s740 + $0x70] sm:$0xff] %v1384
        %1517 = vst [vmem:[%s740 + $0x78] sm:$0xff] %v1500
        %s1518 = sand.u32 %s114, 1
        %s1519 = sand.u32 %s114, 1
        %s1520 = smul.addr %s1519, 128
        %s1521 = scalar_lea.vmem [#allocation3], %s1520
        // Predicated region
        $region56: #{decoder_layer.5} parent=50 // pred_check
          %p1522 = pneg %p124
        $region57: #{decoder_layer.5} parent=50 // pred_check_branch
          %1524 = sbr.rel (%p1522) target = $region59
        $region58: #{decoder_layer.5} parent=50 // pred_region
          %s1525 = smul.u32 4, %s18
          %s1526 = smul.u32 4, %s19
          %s1527 = smul.addr %s1525, 12
          %s1528 = sadd.s32 %s1526, %s1527
          %s1529 = smul.addr %s1528, 8
          %s1530 = scalar_lea.vmem %s3, %s1529
          // Predicated region
          $region60: #{decoder_layer.5} parent=58 // pred_check
            _
          $region61: #{decoder_layer.5} parent=58 // pred_check_branch
            %1532 = sbr.rel (0) target = $region63
          $region62: #{decoder_layer.5} parent=58 // pred_region
            // Predicated region
            $region64: #{decoder_layer.5} parent=62 // pred_check
              _
            $region65: #{decoder_layer.5} parent=62 // pred_check_branch
              %1534 = sbr.rel (0) target = $region67
            $region66: #{decoder_layer.5} parent=62 // pred_region
              loop: start=0, step=1, limit=1
              $region68: #{decoder_layer.5} parent=66 // loop_pre_header
                _
              $region69: #{decoder_layer.5} parent=66 // loop_header
                %s1536 = sphi 0, %s1540
                %p1537 = scmp.ge.s32.totalorder %s1536, 1
                %s1541 = sphi %s1521, %s1521
                %s1542 = sphi %s1530, %s1530
              $region70: #{decoder_layer.5} parent=66 // loop_header_branch
                %1539 = sbr.rel (%p1537) target = $region74
              $region71: #{decoder_layer.5} parent=66 // loop_body
                %v1543 = vld [vmem:[%s1541] sm:$0xff]
                %1544 = vst [vmem:[%s1542] sm:$0xff] %v1543
                %v1545 = vld [vmem:[%s1541 + $0x8] sm:$0xff]
                %1546 = vst [vmem:[%s1542 + $0x8] sm:$0xff] %v1545
                %v1547 = vld [vmem:[%s1541 + $0x10] sm:$0xff]
                %1548 = vst [vmem:[%s1542 + $0x10] sm:$0xff] %v1547
                %v1549 = vld [vmem:[%s1541 + $0x18] sm:$0xff]
                %1550 = vst [vmem:[%s1542 + $0x18] sm:$0xff] %v1549
                %v1551 = vld [vmem:[%s1541 + $0x20] sm:$0xff]
                %1552 = vst [vmem:[%s1542 + $0x60] sm:$0xff] %v1551
                %v1553 = vld [vmem:[%s1541 + $0x28] sm:$0xff]
                %1554 = vst [vmem:[%s1542 + $0x68] sm:$0xff] %v1553
                %v1555 = vld [vmem:[%s1541 + $0x30] sm:$0xff]
                %1556 = vst [vmem:[%s1542 + $0x70] sm:$0xff] %v1555
                %v1557 = vld [vmem:[%s1541 + $0x38] sm:$0xff]
                %1558 = vst [vmem:[%s1542 + $0x78] sm:$0xff] %v1557
                %v1559 = vld [vmem:[%s1541 + $0x40] sm:$0xff]
                %1560 = vst [vmem:[%s1542 + $0xc0] sm:$0xff] %v1559
                %v1561 = vld [vmem:[%s1541 + $0x48] sm:$0xff]
                %1562 = vst [vmem:[%s1542 + $0xc8] sm:$0xff] %v1561
                %v1563 = vld [vmem:[%s1541 + $0x50] sm:$0xff]
                %1564 = vst [vmem:[%s1542 + $0xd0] sm:$0xff] %v1563
                %v1565 = vld [vmem:[%s1541 + $0x58] sm:$0xff]
                %1566 = vst [vmem:[%s1542 + $0xd8] sm:$0xff] %v1565
                %v1567 = vld [vmem:[%s1541 + $0x60] sm:$0xff]
                %1568 = vst [vmem:[%s1542 + $0x120] sm:$0xff] %v1567
                %v1569 = vld [vmem:[%s1541 + $0x68] sm:$0xff]
                %1570 = vst [vmem:[%s1542 + $0x128] sm:$0xff] %v1569
                %v1571 = vld [vmem:[%s1541 + $0x70] sm:$0xff]
                %1572 = vst [vmem:[%s1542 + $0x130] sm:$0xff] %v1571
                %v1573 = vld [vmem:[%s1541 + $0x78] sm:$0xff]
                %1574 = vst [vmem:[%s1542 + $0x138] sm:$0xff] %v1573
              $region72: #{decoder_layer.5} parent=66 // loop_footer
                %s1540 = sadd.s32 1, %s1536
              $region73: #{decoder_layer.5} parent=66 // loop_footer_branch
                %1535 = sbr.rel target = $region69
              $region74: #{decoder_layer.5} parent=66 // loop_exit
                _
            $region67: #{decoder_layer.5} parent=62 // pred_fallthru
              _
            // Predicated region
            $region75: #{decoder_layer.5} parent=62 // pred_check
              _
            $region76: #{decoder_layer.5} parent=62 // pred_check_branch
              %1576 = sbr.rel target = $region78
            $region77: #{decoder_layer.5} parent=62 // pred_region
              _
            $region78: #{decoder_layer.5} parent=62 // pred_fallthru
              _
          $region63: #{decoder_layer.5} parent=58 // pred_fallthru
            _
          %1577 = vnop
        $region59: #{decoder_layer.5} parent=50 // pred_fallthru
          _
      $region51: #{decoder_layer.5} parent=5 // pred_fallthru
        _
      %p1578 = scmp.le.s32.totalorder 2, %s9
      // Predicated region
      $region79: #{decoder_layer.5} parent=5 // pred_check
        %p1579 = pneg %p1578
      $region80: #{decoder_layer.5} parent=5 // pred_check_branch
        %1581 = sbr.rel (%p1579) target = $region82
      $region81: #{decoder_layer.5} parent=5 // pred_region
        %s1582 = ssub.s32 %s9, 2
        // Predicated region
        $region83: #{decoder_layer.5} parent=81 // pred_check
          %p1583 = pneg %p130
        $region84: #{decoder_layer.5} parent=81 // pred_check_branch
          %1585 = sbr.rel (%p1583) target = $region86
        $region85: #{decoder_layer.5} parent=81 // pred_region
          %s1586 = sand.u32 %s115, 1
          %s1587 = sand.u32 %s115, 1
          %s1588 = smul.addr %s1587, 128
          %s1589 = scalar_lea.vmem [#allocation3], %s1588
        $region86: #{decoder_layer.5} parent=81 // pred_fallthru
          _
      $region82: #{decoder_layer.5} parent=5 // pred_fallthru
        _
    $region6: #{decoder_layer.5} parent=1 // loop_footer
      %s13 = sadd.s32 1, %s9
    $region7: #{decoder_layer.5} parent=1 // loop_footer_branch
      %8 = sbr.rel target = $region3
    $region8: #{decoder_layer.5} parent=1 // loop_exit
      _

// kernel: decoder_layer.7
$region0: #{decoder_layer.7}
  #allocation0 [shape = 'u32[]', space=smem, size = 0x4, offset = 0x4, fixed_abs, tag = 'smem constant byte address 0x4 - core index']
  #allocation1 [shape = 'u32[72,128]{1,0:T(1,128)}', space=vmem, size = 0x9000, scoped, tag = 'internal scratch']
  %s0 = inlined_call_operand.vmem [shape: f32[32,512], index: 0, kind: input, shape index: {}]
  %s1 = inlined_call_operand.vmem [shape: f32[512,512], index: 1, kind: input, shape index: {}]
  %s2 = inlined_call_operand.vmem [shape: f32[1,512], index: 2, kind: input, shape index: {}]
  %s3 = inlined_call_operand.vmem [shape: f32[32,512], index: 3, kind: input, shape index: {}]
  %s4 = inlined_call_operand.vmem [shape: f32[1,512], index: 4, kind: input, shape index: {}]
  %s5 = inlined_call_operand.vmem [shape: f32[1,512], index: 5, kind: input, shape index: {}]
  %s6 = inlined_call_operand.vmem [shape: f32[1,512], index: 6, kind: input, shape index: {}]
  %s7 = inlined_call_operand.vmem [shape: f32[1,512], index: 7, kind: input, shape index: {}]
  %s8 = inlined_call_operand.vmem [shape: f32[32,512], index: 8, kind: output, shape index: {}]
  %s9 = sld [smem:[#allocation0]]
  $region42: #{decoder_layer.7} parent=0
    _
  %s11 = ssub.s32 1, %s9
  %s12 = scalar_select 0, %s11, %s9
  // Predicated region
  $region2: #{decoder_layer.7} parent=0 // pred_check
    _
  $region3: #{decoder_layer.7} parent=0 // pred_check_branch
    %14 = sbr.rel (0) target = $region5
  $region4: #{decoder_layer.7} parent=0 // pred_region
    _
  $region5: #{decoder_layer.7} parent=0 // pred_fallthru
    _
  // Predicated region
  $region6: #{decoder_layer.7} parent=0 // pred_check
    _
  $region7: #{decoder_layer.7} parent=0 // pred_check_branch
    %16 = sbr.rel (0) target = $region9
  $region8: #{decoder_layer.7} parent=0 // pred_region
    _
  $region9: #{decoder_layer.7} parent=0 // pred_fallthru
    _
  // Predicated region
  $region10: #{decoder_layer.7} parent=0 // pred_check
    _
  $region11: #{decoder_layer.7} parent=0 // pred_check_branch
    %18 = sbr.rel (0) target = $region13
  $region12: #{decoder_layer.7} parent=0 // pred_region
    _
  $region13: #{decoder_layer.7} parent=0 // pred_fallthru
    _
  // Predicated region
  $region14: #{decoder_layer.7} parent=0 // pred_check
    _
  $region15: #{decoder_layer.7} parent=0 // pred_check_branch
    %20 = sbr.rel (0) target = $region17
  $region16: #{decoder_layer.7} parent=0 // pred_region
    _
  $region17: #{decoder_layer.7} parent=0 // pred_fallthru
    _
  // Predicated region
  $region18: #{decoder_layer.7} parent=0 // pred_check
    _
  $region19: #{decoder_layer.7} parent=0 // pred_check_branch
    %22 = sbr.rel (0) target = $region21
  $region20: #{decoder_layer.7} parent=0 // pred_region
    _
  $region21: #{decoder_layer.7} parent=0 // pred_fallthru
    _
  // Predicated region
  $region22: #{decoder_layer.7} parent=0 // pred_check
    _
  $region23: #{decoder_layer.7} parent=0 // pred_check_branch
    %24 = sbr.rel (0) target = $region25
  $region24: #{decoder_layer.7} parent=0 // pred_region
    _
  $region25: #{decoder_layer.7} parent=0 // pred_fallthru
    _
  // Predicated region
  $region26: #{decoder_layer.7} parent=0 // pred_check
    _
  $region27: #{decoder_layer.7} parent=0 // pred_check_branch
    %26 = sbr.rel (0) target = $region29
  $region28: #{decoder_layer.7} parent=0 // pred_region
    _
  $region29: #{decoder_layer.7} parent=0 // pred_fallthru
    _
  // Predicated region
  $region30: #{decoder_layer.7} parent=0 // pred_check
    _
  $region31: #{decoder_layer.7} parent=0 // pred_check_branch
    %28 = sbr.rel (0) target = $region33
  $region32: #{decoder_layer.7} parent=0 // pred_region
    _
  $region33: #{decoder_layer.7} parent=0 // pred_fallthru
    _
  %v29 = vld [vmem:[%s0] sm:$0xff]
  %v30 = vld [vmem:[%s0 + $0x8] sm:$0xff]
  %v31 = vld [vmem:[%s0 + $0x10] sm:$0xff]
  %v32 = vld [vmem:[%s0 + $0x18] sm:$0xff]
  %v33 = vld [vmem:[%s0 + $0x20] sm:$0xff]
  %v34 = vld [vmem:[%s0 + $0x28] sm:$0xff]
  %v35 = vld [vmem:[%s0 + $0x30] sm:$0xff]
  %v36 = vld [vmem:[%s0 + $0x38] sm:$0xff]
  %v37 = vld [vmem:[%s0 + $0x40] sm:$0xff]
  %v38 = vld [vmem:[%s0 + $0x48] sm:$0xff]
  %v39 = vld [vmem:[%s0 + $0x50] sm:$0xff]
  %v40 = vld [vmem:[%s0 + $0x58] sm:$0xff]
  %v41 = vld [vmem:[%s0 + $0x60] sm:$0xff]
  %v42 = vld [vmem:[%s0 + $0x68] sm:$0xff]
  %v43 = vld [vmem:[%s0 + $0x70] sm:$0xff]
  %v44 = vld [vmem:[%s0 + $0x78] sm:$0xff]
  %v45 = vld [vmem:[%s1] sm:$0xff]
  %v46 = vld [vmem:[%s1 + $0x8] sm:$0xff]
  %v47 = vld [vmem:[%s1 + $0x10] sm:$0xff]
  %v48 = vld [vmem:[%s1 + $0x18] sm:$0xff]
  %v49 = vld [vmem:[%s1 + $0x20] sm:$0xff]
  %v50 = vld [vmem:[%s1 + $0x28] sm:$0xff]
  %v51 = vld [vmem:[%s1 + $0x30] sm:$0xff]
  %v52 = vld [vmem:[%s1 + $0x38] sm:$0xff]
  %v53 = vld [vmem:[%s1 + $0x40] sm:$0xff]
  %v54 = vld [vmem:[%s1 + $0x48] sm:$0xff]
  %v55 = vld [vmem:[%s1 + $0x50] sm:$0xff]
  %v56 = vld [vmem:[%s1 + $0x58] sm:$0xff]
  %v57 = vld [vmem:[%s1 + $0x60] sm:$0xff]
  %v58 = vld [vmem:[%s1 + $0x68] sm:$0xff]
  %v59 = vld [vmem:[%s1 + $0x70] sm:$0xff]
  %v60 = vld [vmem:[%s1 + $0x78] sm:$0xff]
  %v61 = vld [vmem:[%s1 + $0x80] sm:$0xff]
  %v62 = vld [vmem:[%s1 + $0x88] sm:$0xff]
  %v63 = vld [vmem:[%s1 + $0x90] sm:$0xff]
  %v64 = vld [vmem:[%s1 + $0x98] sm:$0xff]
  %v65 = vld [vmem:[%s1 + $0xa0] sm:$0xff]
  %v66 = vld [vmem:[%s1 + $0xa8] sm:$0xff]
  %v67 = vld [vmem:[%s1 + $0xb0] sm:$0xff]
  %v68 = vld [vmem:[%s1 + $0xb8] sm:$0xff]
  %v69 = vld [vmem:[%s1 + $0xc0] sm:$0xff]
  %v70 = vld [vmem:[%s1 + $0xc8] sm:$0xff]
  %v71 = vld [vmem:[%s1 + $0xd0] sm:$0xff]
  %v72 = vld [vmem:[%s1 + $0xd8] sm:$0xff]
  %v73 = vld [vmem:[%s1 + $0xe0] sm:$0xff]
  %v74 = vld [vmem:[%s1 + $0xe8] sm:$0xff]
  %v75 = vld [vmem:[%s1 + $0xf0] sm:$0xff]
  %v76 = vld [vmem:[%s1 + $0xf8] sm:$0xff]
  %v77 = vld [vmem:[%s1 + $0x100] sm:$0xff]
  %v78 = vld [vmem:[%s1 + $0x108] sm:$0xff]
  %v79 = vld [vmem:[%s1 + $0x110] sm:$0xff]
  %v80 = vld [vmem:[%s1 + $0x118] sm:$0xff]
  %v81 = vld [vmem:[%s1 + $0x120] sm:$0xff]
  %v82 = vld [vmem:[%s1 + $0x128] sm:$0xff]
  %v83 = vld [vmem:[%s1 + $0x130] sm:$0xff]
  %v84 = vld [vmem:[%s1 + $0x138] sm:$0xff]
  %v85 = vld [vmem:[%s1 + $0x140] sm:$0xff]
  %v86 = vld [vmem:[%s1 + $0x148] sm:$0xff]
  %v87 = vld [vmem:[%s1 + $0x150] sm:$0xff]
  %v88 = vld [vmem:[%s1 + $0x158] sm:$0xff]
  %v89 = vld [vmem:[%s1 + $0x160] sm:$0xff]
  %v90 = vld [vmem:[%s1 + $0x168] sm:$0xff]
  %v91 = vld [vmem:[%s1 + $0x170] sm:$0xff]
  %v92 = vld [vmem:[%s1 + $0x178] sm:$0xff]
  %v93 = vld [vmem:[%s1 + $0x180] sm:$0xff]
  %v94 = vld [vmem:[%s1 + $0x188] sm:$0xff]
  %v95 = vld [vmem:[%s1 + $0x190] sm:$0xff]
  %v96 = vld [vmem:[%s1 + $0x198] sm:$0xff]
  %v97 = vld [vmem:[%s1 + $0x1a0] sm:$0xff]
  %v98 = vld [vmem:[%s1 + $0x1a8] sm:$0xff]
  %v99 = vld [vmem:[%s1 + $0x1b0] sm:$0xff]
  %v100 = vld [vmem:[%s1 + $0x1b8] sm:$0xff]
  %v101 = vld [vmem:[%s1 + $0x1c0] sm:$0xff]
  %v102 = vld [vmem:[%s1 + $0x1c8] sm:$0xff]
  %v103 = vld [vmem:[%s1 + $0x1d0] sm:$0xff]
  %v104 = vld [vmem:[%s1 + $0x1d8] sm:$0xff]
  %v105 = vld [vmem:[%s1 + $0x1e0] sm:$0xff]
  %v106 = vld [vmem:[%s1 + $0x1e8] sm:$0xff]
  %v107 = vld [vmem:[%s1 + $0x1f0] sm:$0xff]
  %v108 = vld [vmem:[%s1 + $0x1f8] sm:$0xff]
  %v109 = vld [vmem:[%s1 + $0x200] sm:$0xff]
  %v110 = vld [vmem:[%s1 + $0x208] sm:$0xff]
  %v111 = vld [vmem:[%s1 + $0x210] sm:$0xff]
  %v112 = vld [vmem:[%s1 + $0x218] sm:$0xff]
  %v113 = vld [vmem:[%s1 + $0x220] sm:$0xff]
  %v114 = vld [vmem:[%s1 + $0x228] sm:$0xff]
  %v115 = vld [vmem:[%s1 + $0x230] sm:$0xff]
  %v116 = vld [vmem:[%s1 + $0x238] sm:$0xff]
  %v117 = vld [vmem:[%s1 + $0x240] sm:$0xff]
  %v118 = vld [vmem:[%s1 + $0x248] sm:$0xff]
  %v119 = vld [vmem:[%s1 + $0x250] sm:$0xff]
  %v120 = vld [vmem:[%s1 + $0x258] sm:$0xff]
  %v121 = vld [vmem:[%s1 + $0x260] sm:$0xff]
  %v122 = vld [vmem:[%s1 + $0x268] sm:$0xff]
  %v123 = vld [vmem:[%s1 + $0x270] sm:$0xff]
  %v124 = vld [vmem:[%s1 + $0x278] sm:$0xff]
  %v125 = vld [vmem:[%s1 + $0x280] sm:$0xff]
  %v126 = vld [vmem:[%s1 + $0x288] sm:$0xff]
  %v127 = vld [vmem:[%s1 + $0x290] sm:$0xff]
  %v128 = vld [vmem:[%s1 + $0x298] sm:$0xff]
  %v129 = vld [vmem:[%s1 + $0x2a0] sm:$0xff]
  %v130 = vld [vmem:[%s1 + $0x2a8] sm:$0xff]
  %v131 = vld [vmem:[%s1 + $0x2b0] sm:$0xff]
  %v132 = vld [vmem:[%s1 + $0x2b8] sm:$0xff]
  %v133 = vld [vmem:[%s1 + $0x2c0] sm:$0xff]
  %v134 = vld [vmem:[%s1 + $0x2c8] sm:$0xff]
  %v135 = vld [vmem:[%s1 + $0x2d0] sm:$0xff]
  %v136 = vld [vmem:[%s1 + $0x2d8] sm:$0xff]
  %v137 = vld [vmem:[%s1 + $0x2e0] sm:$0xff]
  %v138 = vld [vmem:[%s1 + $0x2e8] sm:$0xff]
  %v139 = vld [vmem:[%s1 + $0x2f0] sm:$0xff]
  %v140 = vld [vmem:[%s1 + $0x2f8] sm:$0xff]
  %v141 = vld [vmem:[%s1 + $0x300] sm:$0xff]
  %v142 = vld [vmem:[%s1 + $0x308] sm:$0xff]
  %v143 = vld [vmem:[%s1 + $0x310] sm:$0xff]
  %v144 = vld [vmem:[%s1 + $0x318] sm:$0xff]
  %v145 = vld [vmem:[%s1 + $0x320] sm:$0xff]
  %v146 = vld [vmem:[%s1 + $0x328] sm:$0xff]
  %v147 = vld [vmem:[%s1 + $0x330] sm:$0xff]
  %v148 = vld [vmem:[%s1 + $0x338] sm:$0xff]
  %v149 = vld [vmem:[%s1 + $0x340] sm:$0xff]
  %v150 = vld [vmem:[%s1 + $0x348] sm:$0xff]
  %v151 = vld [vmem:[%s1 + $0x350] sm:$0xff]
  %v152 = vld [vmem:[%s1 + $0x358] sm:$0xff]
  %v153 = vld [vmem:[%s1 + $0x360] sm:$0xff]
  %v154 = vld [vmem:[%s1 + $0x368] sm:$0xff]
  %v155 = vld [vmem:[%s1 + $0x370] sm:$0xff]
  %v156 = vld [vmem:[%s1 + $0x378] sm:$0xff]
  %v157 = vld [vmem:[%s1 + $0x380] sm:$0xff]
  %v158 = vld [vmem:[%s1 + $0x388] sm:$0xff]
  %v159 = vld [vmem:[%s1 + $0x390] sm:$0xff]
  %v160 = vld [vmem:[%s1 + $0x398] sm:$0xff]
  %v161 = vld [vmem:[%s1 + $0x3a0] sm:$0xff]
  %v162 = vld [vmem:[%s1 + $0x3a8] sm:$0xff]
  %v163 = vld [vmem:[%s1 + $0x3b0] sm:$0xff]
  %v164 = vld [vmem:[%s1 + $0x3b8] sm:$0xff]
  %v165 = vld [vmem:[%s1 + $0x3c0] sm:$0xff]
  %v166 = vld [vmem:[%s1 + $0x3c8] sm:$0xff]
  %v167 = vld [vmem:[%s1 + $0x3d0] sm:$0xff]
  %v168 = vld [vmem:[%s1 + $0x3d8] sm:$0xff]
  %v169 = vld [vmem:[%s1 + $0x3e0] sm:$0xff]
  %v170 = vld [vmem:[%s1 + $0x3e8] sm:$0xff]
  %v171 = vld [vmem:[%s1 + $0x3f0] sm:$0xff]
  %v172 = vld [vmem:[%s1 + $0x3f8] sm:$0xff]
  %v173 = vld [vmem:[%s1 + $0x400] sm:$0xff]
  %v174 = vld [vmem:[%s1 + $0x408] sm:$0xff]
  %v175 = vld [vmem:[%s1 + $0x410] sm:$0xff]
  %v176 = vld [vmem:[%s1 + $0x418] sm:$0xff]
  %v177 = vld [vmem:[%s1 + $0x420] sm:$0xff]
  %v178 = vld [vmem:[%s1 + $0x428] sm:$0xff]
  %v179 = vld [vmem:[%s1 + $0x430] sm:$0xff]
  %v180 = vld [vmem:[%s1 + $0x438] sm:$0xff]
  %v181 = vld [vmem:[%s1 + $0x440] sm:$0xff]
  %v182 = vld [vmem:[%s1 + $0x448] sm:$0xff]
  %v183 = vld [vmem:[%s1 + $0x450] sm:$0xff]
  %v184 = vld [vmem:[%s1 + $0x458] sm:$0xff]
  %v185 = vld [vmem:[%s1 + $0x460] sm:$0xff]
  %v186 = vld [vmem:[%s1 + $0x468] sm:$0xff]
  %v187 = vld [vmem:[%s1 + $0x470] sm:$0xff]
  %v188 = vld [vmem:[%s1 + $0x478] sm:$0xff]
  %v189 = vld [vmem:[%s1 + $0x480] sm:$0xff]
  %v190 = vld [vmem:[%s1 + $0x488] sm:$0xff]
  %v191 = vld [vmem:[%s1 + $0x490] sm:$0xff]
  %v192 = vld [vmem:[%s1 + $0x498] sm:$0xff]
  %v193 = vld [vmem:[%s1 + $0x4a0] sm:$0xff]
  %v194 = vld [vmem:[%s1 + $0x4a8] sm:$0xff]
  %v195 = vld [vmem:[%s1 + $0x4b0] sm:$0xff]
  %v196 = vld [vmem:[%s1 + $0x4b8] sm:$0xff]
  %v197 = vld [vmem:[%s1 + $0x4c0] sm:$0xff]
  %v198 = vld [vmem:[%s1 + $0x4c8] sm:$0xff]
  %v199 = vld [vmem:[%s1 + $0x4d0] sm:$0xff]
  %v200 = vld [vmem:[%s1 + $0x4d8] sm:$0xff]
  %v201 = vld [vmem:[%s1 + $0x4e0] sm:$0xff]
  %v202 = vld [vmem:[%s1 + $0x4e8] sm:$0xff]
  %v203 = vld [vmem:[%s1 + $0x4f0] sm:$0xff]
  %v204 = vld [vmem:[%s1 + $0x4f8] sm:$0xff]
  %v205 = vld [vmem:[%s1 + $0x500] sm:$0xff]
  %v206 = vld [vmem:[%s1 + $0x508] sm:$0xff]
  %v207 = vld [vmem:[%s1 + $0x510] sm:$0xff]
  %v208 = vld [vmem:[%s1 + $0x518] sm:$0xff]
  %v209 = vld [vmem:[%s1 + $0x520] sm:$0xff]
  %v210 = vld [vmem:[%s1 + $0x528] sm:$0xff]
  %v211 = vld [vmem:[%s1 + $0x530] sm:$0xff]
  %v212 = vld [vmem:[%s1 + $0x538] sm:$0xff]
  %v213 = vld [vmem:[%s1 + $0x540] sm:$0xff]
  %v214 = vld [vmem:[%s1 + $0x548] sm:$0xff]
  %v215 = vld [vmem:[%s1 + $0x550] sm:$0xff]
  %v216 = vld [vmem:[%s1 + $0x558] sm:$0xff]
  %v217 = vld [vmem:[%s1 + $0x560] sm:$0xff]
  %v218 = vld [vmem:[%s1 + $0x568] sm:$0xff]
  %v219 = vld [vmem:[%s1 + $0x570] sm:$0xff]
  %v220 = vld [vmem:[%s1 + $0x578] sm:$0xff]
  %v221 = vld [vmem:[%s1 + $0x580] sm:$0xff]
  %v222 = vld [vmem:[%s1 + $0x588] sm:$0xff]
  %v223 = vld [vmem:[%s1 + $0x590] sm:$0xff]
  %v224 = vld [vmem:[%s1 + $0x598] sm:$0xff]
  %v225 = vld [vmem:[%s1 + $0x5a0] sm:$0xff]
  %v226 = vld [vmem:[%s1 + $0x5a8] sm:$0xff]
  %v227 = vld [vmem:[%s1 + $0x5b0] sm:$0xff]
  %v228 = vld [vmem:[%s1 + $0x5b8] sm:$0xff]
  %v229 = vld [vmem:[%s1 + $0x5c0] sm:$0xff]
  %v230 = vld [vmem:[%s1 + $0x5c8] sm:$0xff]
  %v231 = vld [vmem:[%s1 + $0x5d0] sm:$0xff]
  %v232 = vld [vmem:[%s1 + $0x5d8] sm:$0xff]
  %v233 = vld [vmem:[%s1 + $0x5e0] sm:$0xff]
  %v234 = vld [vmem:[%s1 + $0x5e8] sm:$0xff]
  %v235 = vld [vmem:[%s1 + $0x5f0] sm:$0xff]
  %v236 = vld [vmem:[%s1 + $0x5f8] sm:$0xff]
  %v237 = vld [vmem:[%s1 + $0x600] sm:$0xff]
  %v238 = vld [vmem:[%s1 + $0x608] sm:$0xff]
  %v239 = vld [vmem:[%s1 + $0x610] sm:$0xff]
  %v240 = vld [vmem:[%s1 + $0x618] sm:$0xff]
  %v241 = vld [vmem:[%s1 + $0x620] sm:$0xff]
  %v242 = vld [vmem:[%s1 + $0x628] sm:$0xff]
  %v243 = vld [vmem:[%s1 + $0x630] sm:$0xff]
  %v244 = vld [vmem:[%s1 + $0x638] sm:$0xff]
  %v245 = vld [vmem:[%s1 + $0x640] sm:$0xff]
  %v246 = vld [vmem:[%s1 + $0x648] sm:$0xff]
  %v247 = vld [vmem:[%s1 + $0x650] sm:$0xff]
  %v248 = vld [vmem:[%s1 + $0x658] sm:$0xff]
  %v249 = vld [vmem:[%s1 + $0x660] sm:$0xff]
  %v250 = vld [vmem:[%s1 + $0x668] sm:$0xff]
  %v251 = vld [vmem:[%s1 + $0x670] sm:$0xff]
  %v252 = vld [vmem:[%s1 + $0x678] sm:$0xff]
  %v253 = vld [vmem:[%s1 + $0x680] sm:$0xff]
  %v254 = vld [vmem:[%s1 + $0x688] sm:$0xff]
  %v255 = vld [vmem:[%s1 + $0x690] sm:$0xff]
  %v256 = vld [vmem:[%s1 + $0x698] sm:$0xff]
  %v257 = vld [vmem:[%s1 + $0x6a0] sm:$0xff]
  %v258 = vld [vmem:[%s1 + $0x6a8] sm:$0xff]
  %v259 = vld [vmem:[%s1 + $0x6b0] sm:$0xff]
  %v260 = vld [vmem:[%s1 + $0x6b8] sm:$0xff]
  %v261 = vld [vmem:[%s1 + $0x6c0] sm:$0xff]
  %v262 = vld [vmem:[%s1 + $0x6c8] sm:$0xff]
  %v263 = vld [vmem:[%s1 + $0x6d0] sm:$0xff]
  %v264 = vld [vmem:[%s1 + $0x6d8] sm:$0xff]
  %v265 = vld [vmem:[%s1 + $0x6e0] sm:$0xff]
  %v266 = vld [vmem:[%s1 + $0x6e8] sm:$0xff]
  %v267 = vld [vmem:[%s1 + $0x6f0] sm:$0xff]
  %v268 = vld [vmem:[%s1 + $0x6f8] sm:$0xff]
  %v269 = vld [vmem:[%s1 + $0x700] sm:$0xff]
  %v270 = vld [vmem:[%s1 + $0x708] sm:$0xff]
  %v271 = vld [vmem:[%s1 + $0x710] sm:$0xff]
  %v272 = vld [vmem:[%s1 + $0x718] sm:$0xff]
  %v273 = vld [vmem:[%s1 + $0x720] sm:$0xff]
  %v274 = vld [vmem:[%s1 + $0x728] sm:$0xff]
  %v275 = vld [vmem:[%s1 + $0x730] sm:$0xff]
  %v276 = vld [vmem:[%s1 + $0x738] sm:$0xff]
  %v277 = vld [vmem:[%s1 + $0x740] sm:$0xff]
  %v278 = vld [vmem:[%s1 + $0x748] sm:$0xff]
  %v279 = vld [vmem:[%s1 + $0x750] sm:$0xff]
  %v280 = vld [vmem:[%s1 + $0x758] sm:$0xff]
  %v281 = vld [vmem:[%s1 + $0x760] sm:$0xff]
  %v282 = vld [vmem:[%s1 + $0x768] sm:$0xff]
  %v283 = vld [vmem:[%s1 + $0x770] sm:$0xff]
  %v284 = vld [vmem:[%s1 + $0x778] sm:$0xff]
  %v285 = vld [vmem:[%s1 + $0x780] sm:$0xff]
  %v286 = vld [vmem:[%s1 + $0x788] sm:$0xff]
  %v287 = vld [vmem:[%s1 + $0x790] sm:$0xff]
  %v288 = vld [vmem:[%s1 + $0x798] sm:$0xff]
  %v289 = vld [vmem:[%s1 + $0x7a0] sm:$0xff]
  %v290 = vld [vmem:[%s1 + $0x7a8] sm:$0xff]
  %v291 = vld [vmem:[%s1 + $0x7b0] sm:$0xff]
  %v292 = vld [vmem:[%s1 + $0x7b8] sm:$0xff]
  %v293 = vld [vmem:[%s1 + $0x7c0] sm:$0xff]
  %v294 = vld [vmem:[%s1 + $0x7c8] sm:$0xff]
  %v295 = vld [vmem:[%s1 + $0x7d0] sm:$0xff]
  %v296 = vld [vmem:[%s1 + $0x7d8] sm:$0xff]
  %v297 = vld [vmem:[%s1 + $0x7e0] sm:$0xff]
  %v298 = vld [vmem:[%s1 + $0x7e8] sm:$0xff]
  %v299 = vld [vmem:[%s1 + $0x7f0] sm:$0xff]
  %v300 = vld [vmem:[%s1 + $0x7f8] sm:$0xff]
  %v301 = vld [vmem:[%s2] sm:$0xf]
  %v303 = vperm.slane %v301, 0
  %v304 = vperm.slane %v301, 1
  %v305 = vperm.slane %v301, 2
  %v306 = vperm.slane %v301, 3
  %311 = vmatpush.msra.mxu0 %v105
  %312 = vmatpush.msra.mxu0 %v101
  %313 = vmatpush.msra.mxu0 %v97
  %314 = vmatpush.msra.mxu0 %v93
  %315 = vmatpush.msra.mxu0 %v89
  %316 = vmatpush.msra.mxu0 %v85
  %317 = vmatpush.msra.mxu0 %v81
  %318 = vmatpush.msra.mxu0 %v77
  %319 = vmatpush.msra.mxu0 %v73
  %320 = vmatpush.msra.mxu0 %v69
  %321 = vmatpush.msra.mxu0 %v65
  %322 = vmatpush.msra.mxu0 %v61
  %323 = vmatpush.msra.mxu0 %v57
  %324 = vmatpush.msra.mxu0 %v53
  %325 = vmatpush.msra.mxu0 %v49
  %326 = vmatpush.msra.mxu0 %v45
  %327 = vmatmul.f32.gmra.mxu0 %v29
  %v328 = vpop.f32.mrf.mxu0
  %v329 = vadd.f32 %v303, %v328
  %330 = vmatmul.f32.gmra.mxu0 %v33
  %v331 = vpop.f32.mrf.mxu0
  %v332 = vadd.f32 %v303, %v331
  %333 = vmatmul.f32.gmra.mxu0 %v37
  %v334 = vpop.f32.mrf.mxu0
  %v335 = vadd.f32 %v303, %v334
  %336 = vmatmul.f32.gmra.mxu0 %v41
  %v337 = vpop.f32.mrf.mxu0
  %v338 = vadd.f32 %v303, %v337
  %339 = vdwg.mxu0
  %340 = vmatpush.msra.mxu0 %v169
  %341 = vmatpush.msra.mxu0 %v165
  %342 = vmatpush.msra.mxu0 %v161
  %343 = vmatpush.msra.mxu0 %v157
  %344 = vmatpush.msra.mxu0 %v153
  %345 = vmatpush.msra.mxu0 %v149
  %346 = vmatpush.msra.mxu0 %v145
  %347 = vmatpush.msra.mxu0 %v141
  %348 = vmatpush.msra.mxu0 %v137
  %349 = vmatpush.msra.mxu0 %v133
  %350 = vmatpush.msra.mxu0 %v129
  %351 = vmatpush.msra.mxu0 %v125
  %352 = vmatpush.msra.mxu0 %v121
  %353 = vmatpush.msra.mxu0 %v117
  %354 = vmatpush.msra.mxu0 %v113
  %355 = vmatpush.msra.mxu0 %v109
  %356 = vmatmul.f32.gmra.mxu0 %v30
  %v357 = vpop.f32.mrf.mxu0
  %v358 = vadd.f32 %v329, %v357
  %359 = vmatmul.f32.gmra.mxu0 %v34
  %v360 = vpop.f32.mrf.mxu0
  %v361 = vadd.f32 %v332, %v360
  %362 = vmatmul.f32.gmra.mxu0 %v38
  %v363 = vpop.f32.mrf.mxu0
  %v364 = vadd.f32 %v335, %v363
  %365 = vmatmul.f32.gmra.mxu0 %v42
  %v366 = vpop.f32.mrf.mxu0
  %v367 = vadd.f32 %v338, %v366
  %368 = vdwg.mxu0
  %369 = vmatpush.msra.mxu0 %v233
  %370 = vmatpush.msra.mxu0 %v229
  %371 = vmatpush.msra.mxu0 %v225
  %372 = vmatpush.msra.mxu0 %v221
  %373 = vmatpush.msra.mxu0 %v217
  %374 = vmatpush.msra.mxu0 %v213
  %375 = vmatpush.msra.mxu0 %v209
  %376 = vmatpush.msra.mxu0 %v205
  %377 = vmatpush.msra.mxu0 %v201
  %378 = vmatpush.msra.mxu0 %v197
  %379 = vmatpush.msra.mxu0 %v193
  %380 = vmatpush.msra.mxu0 %v189
  %381 = vmatpush.msra.mxu0 %v185
  %382 = vmatpush.msra.mxu0 %v181
  %383 = vmatpush.msra.mxu0 %v177
  %384 = vmatpush.msra.mxu0 %v173
  %385 = vmatmul.f32.gmra.mxu0 %v31
  %v386 = vpop.f32.mrf.mxu0
  %v387 = vadd.f32 %v358, %v386
  %388 = vmatmul.f32.gmra.mxu0 %v35
  %v389 = vpop.f32.mrf.mxu0
  %v390 = vadd.f32 %v361, %v389
  %391 = vmatmul.f32.gmra.mxu0 %v39
  %v392 = vpop.f32.mrf.mxu0
  %v393 = vadd.f32 %v364, %v392
  %394 = vmatmul.f32.gmra.mxu0 %v43
  %v395 = vpop.f32.mrf.mxu0
  %v396 = vadd.f32 %v367, %v395
  %397 = vdwg.mxu0
  %398 = vmatpush.msra.mxu0 %v297
  %399 = vmatpush.msra.mxu0 %v293
  %400 = vmatpush.msra.mxu0 %v289
  %401 = vmatpush.msra.mxu0 %v285
  %402 = vmatpush.msra.mxu0 %v281
  %403 = vmatpush.msra.mxu0 %v277
  %404 = vmatpush.msra.mxu0 %v273
  %405 = vmatpush.msra.mxu0 %v269
  %406 = vmatpush.msra.mxu0 %v265
  %407 = vmatpush.msra.mxu0 %v261
  %408 = vmatpush.msra.mxu0 %v257
  %409 = vmatpush.msra.mxu0 %v253
  %410 = vmatpush.msra.mxu0 %v249
  %411 = vmatpush.msra.mxu0 %v245
  %412 = vmatpush.msra.mxu0 %v241
  %413 = vmatpush.msra.mxu0 %v237
  %414 = vmatmul.f32.gmra.mxu0 %v32
  %v415 = vpop.f32.mrf.mxu0
  %v416 = vadd.f32 %v387, %v415
  %417 = vmatmul.f32.gmra.mxu0 %v36
  %v418 = vpop.f32.mrf.mxu0
  %v419 = vadd.f32 %v390, %v418
  %420 = vmatmul.f32.gmra.mxu0 %v40
  %v421 = vpop.f32.mrf.mxu0
  %v422 = vadd.f32 %v393, %v421
  %423 = vmatmul.f32.gmra.mxu0 %v44
  %v424 = vpop.f32.mrf.mxu0
  %v425 = vadd.f32 %v396, %v424
  %426 = vdwg.mxu0
  %427 = vmatpush.msra.mxu0 %v106
  %428 = vmatpush.msra.mxu0 %v102
  %429 = vmatpush.msra.mxu0 %v98
  %430 = vmatpush.msra.mxu0 %v94
  %431 = vmatpush.msra.mxu0 %v90
  %432 = vmatpush.msra.mxu0 %v86
  %433 = vmatpush.msra.mxu0 %v82
  %434 = vmatpush.msra.mxu0 %v78
  %435 = vmatpush.msra.mxu0 %v74
  %436 = vmatpush.msra.mxu0 %v70
  %437 = vmatpush.msra.mxu0 %v66
  %438 = vmatpush.msra.mxu0 %v62
  %439 = vmatpush.msra.mxu0 %v58
  %440 = vmatpush.msra.mxu0 %v54
  %441 = vmatpush.msra.mxu0 %v50
  %442 = vmatpush.msra.mxu0 %v46
  %443 = vmatmul.f32.gmra.mxu0 %v29
  %v444 = vpop.f32.mrf.mxu0
  %v445 = vadd.f32 %v304, %v444
  %446 = vmatmul.f32.gmra.mxu0 %v33
  %v447 = vpop.f32.mrf.mxu0
  %v448 = vadd.f32 %v304, %v447
  %449 = vmatmul.f32.gmra.mxu0 %v37
  %v450 = vpop.f32.mrf.mxu0
  %v451 = vadd.f32 %v304, %v450
  %452 = vmatmul.f32.gmra.mxu0 %v41
  %v453 = vpop.f32.mrf.mxu0
  %v454 = vadd.f32 %v304, %v453
  %455 = vdwg.mxu0
  %456 = vmatpush.msra.mxu0 %v170
  %457 = vmatpush.msra.mxu0 %v166
  %458 = vmatpush.msra.mxu0 %v162
  %459 = vmatpush.msra.mxu0 %v158
  %460 = vmatpush.msra.mxu0 %v154
  %461 = vmatpush.msra.mxu0 %v150
  %462 = vmatpush.msra.mxu0 %v146
  %463 = vmatpush.msra.mxu0 %v142
  %464 = vmatpush.msra.mxu0 %v138
  %465 = vmatpush.msra.mxu0 %v134
  %466 = vmatpush.msra.mxu0 %v130
  %467 = vmatpush.msra.mxu0 %v126
  %468 = vmatpush.msra.mxu0 %v122
  %469 = vmatpush.msra.mxu0 %v118
  %470 = vmatpush.msra.mxu0 %v114
  %471 = vmatpush.msra.mxu0 %v110
  %472 = vmatmul.f32.gmra.mxu0 %v30
  %v473 = vpop.f32.mrf.mxu0
  %v474 = vadd.f32 %v445, %v473
  %475 = vmatmul.f32.gmra.mxu0 %v34
  %v476 = vpop.f32.mrf.mxu0
  %v477 = vadd.f32 %v448, %v476
  %478 = vmatmul.f32.gmra.mxu0 %v38
  %v479 = vpop.f32.mrf.mxu0
  %v480 = vadd.f32 %v451, %v479
  %481 = vmatmul.f32.gmra.mxu0 %v42
  %v482 = vpop.f32.mrf.mxu0
  %v483 = vadd.f32 %v454, %v482
  %484 = vdwg.mxu0
  %485 = vmatpush.msra.mxu0 %v234
  %486 = vmatpush.msra.mxu0 %v230
  %487 = vmatpush.msra.mxu0 %v226
  %488 = vmatpush.msra.mxu0 %v222
  %489 = vmatpush.msra.mxu0 %v218
  %490 = vmatpush.msra.mxu0 %v214
  %491 = vmatpush.msra.mxu0 %v210
  %492 = vmatpush.msra.mxu0 %v206
  %493 = vmatpush.msra.mxu0 %v202
  %494 = vmatpush.msra.mxu0 %v198
  %495 = vmatpush.msra.mxu0 %v194
  %496 = vmatpush.msra.mxu0 %v190
  %497 = vmatpush.msra.mxu0 %v186
  %498 = vmatpush.msra.mxu0 %v182
  %499 = vmatpush.msra.mxu0 %v178
  %500 = vmatpush.msra.mxu0 %v174
  %501 = vmatmul.f32.gmra.mxu0 %v31
  %v502 = vpop.f32.mrf.mxu0
  %v503 = vadd.f32 %v474, %v502
  %504 = vmatmul.f32.gmra.mxu0 %v35
  %v505 = vpop.f32.mrf.mxu0
  %v506 = vadd.f32 %v477, %v505
  %507 = vmatmul.f32.gmra.mxu0 %v39
  %v508 = vpop.f32.mrf.mxu0
  %v509 = vadd.f32 %v480, %v508
  %510 = vmatmul.f32.gmra.mxu0 %v43
  %v511 = vpop.f32.mrf.mxu0
  %v512 = vadd.f32 %v483, %v511
  %513 = vdwg.mxu0
  %514 = vmatpush.msra.mxu0 %v298
  %515 = vmatpush.msra.mxu0 %v294
  %516 = vmatpush.msra.mxu0 %v290
  %517 = vmatpush.msra.mxu0 %v286
  %518 = vmatpush.msra.mxu0 %v282
  %519 = vmatpush.msra.mxu0 %v278
  %520 = vmatpush.msra.mxu0 %v274
  %521 = vmatpush.msra.mxu0 %v270
  %522 = vmatpush.msra.mxu0 %v266
  %523 = vmatpush.msra.mxu0 %v262
  %524 = vmatpush.msra.mxu0 %v258
  %525 = vmatpush.msra.mxu0 %v254
  %526 = vmatpush.msra.mxu0 %v250
  %527 = vmatpush.msra.mxu0 %v246
  %528 = vmatpush.msra.mxu0 %v242
  %529 = vmatpush.msra.mxu0 %v238
  %530 = vmatmul.f32.gmra.mxu0 %v32
  %v531 = vpop.f32.mrf.mxu0
  %v532 = vadd.f32 %v503, %v531
  %533 = vmatmul.f32.gmra.mxu0 %v36
  %v534 = vpop.f32.mrf.mxu0
  %v535 = vadd.f32 %v506, %v534
  %536 = vmatmul.f32.gmra.mxu0 %v40
  %v537 = vpop.f32.mrf.mxu0
  %v538 = vadd.f32 %v509, %v537
  %539 = vmatmul.f32.gmra.mxu0 %v44
  %v540 = vpop.f32.mrf.mxu0
  %v541 = vadd.f32 %v512, %v540
  %542 = vdwg.mxu0
  %543 = vmatpush.msra.mxu0 %v107
  %544 = vmatpush.msra.mxu0 %v103
  %545 = vmatpush.msra.mxu0 %v99
  %546 = vmatpush.msra.mxu0 %v95
  %547 = vmatpush.msra.mxu0 %v91
  %548 = vmatpush.msra.mxu0 %v87
  %549 = vmatpush.msra.mxu0 %v83
  %550 = vmatpush.msra.mxu0 %v79
  %551 = vmatpush.msra.mxu0 %v75
  %552 = vmatpush.msra.mxu0 %v71
  %553 = vmatpush.msra.mxu0 %v67
  %554 = vmatpush.msra.mxu0 %v63
  %555 = vmatpush.msra.mxu0 %v59
  %556 = vmatpush.msra.mxu0 %v55
  %557 = vmatpush.msra.mxu0 %v51
  %558 = vmatpush.msra.mxu0 %v47
  %559 = vmatmul.f32.gmra.mxu0 %v29
  %v560 = vpop.f32.mrf.mxu0
  %v561 = vadd.f32 %v305, %v560
  %562 = vmatmul.f32.gmra.mxu0 %v33
  %v563 = vpop.f32.mrf.mxu0
  %v564 = vadd.f32 %v305, %v563
  %565 = vmatmul.f32.gmra.mxu0 %v37
  %v566 = vpop.f32.mrf.mxu0
  %v567 = vadd.f32 %v305, %v566
  %568 = vmatmul.f32.gmra.mxu0 %v41
  %v569 = vpop.f32.mrf.mxu0
  %v570 = vadd.f32 %v305, %v569
  %571 = vdwg.mxu0
  %572 = vmatpush.msra.mxu0 %v171
  %573 = vmatpush.msra.mxu0 %v167
  %574 = vmatpush.msra.mxu0 %v163
  %575 = vmatpush.msra.mxu0 %v159
  %576 = vmatpush.msra.mxu0 %v155
  %577 = vmatpush.msra.mxu0 %v151
  %578 = vmatpush.msra.mxu0 %v147
  %579 = vmatpush.msra.mxu0 %v143
  %580 = vmatpush.msra.mxu0 %v139
  %581 = vmatpush.msra.mxu0 %v135
  %582 = vmatpush.msra.mxu0 %v131
  %583 = vmatpush.msra.mxu0 %v127
  %584 = vmatpush.msra.mxu0 %v123
  %585 = vmatpush.msra.mxu0 %v119
  %586 = vmatpush.msra.mxu0 %v115
  %587 = vmatpush.msra.mxu0 %v111
  %588 = vmatmul.f32.gmra.mxu0 %v30
  %v589 = vpop.f32.mrf.mxu0
  %v590 = vadd.f32 %v561, %v589
  %591 = vmatmul.f32.gmra.mxu0 %v34
  %v592 = vpop.f32.mrf.mxu0
  %v593 = vadd.f32 %v564, %v592
  %594 = vmatmul.f32.gmra.mxu0 %v38
  %v595 = vpop.f32.mrf.mxu0
  %v596 = vadd.f32 %v567, %v595
  %597 = vmatmul.f32.gmra.mxu0 %v42
  %v598 = vpop.f32.mrf.mxu0
  %v599 = vadd.f32 %v570, %v598
  %600 = vdwg.mxu0
  %601 = vmatpush.msra.mxu0 %v235
  %602 = vmatpush.msra.mxu0 %v231
  %603 = vmatpush.msra.mxu0 %v227
  %604 = vmatpush.msra.mxu0 %v223
  %605 = vmatpush.msra.mxu0 %v219
  %606 = vmatpush.msra.mxu0 %v215
  %607 = vmatpush.msra.mxu0 %v211
  %608 = vmatpush.msra.mxu0 %v207
  %609 = vmatpush.msra.mxu0 %v203
  %610 = vmatpush.msra.mxu0 %v199
  %611 = vmatpush.msra.mxu0 %v195
  %612 = vmatpush.msra.mxu0 %v191
  %613 = vmatpush.msra.mxu0 %v187
  %614 = vmatpush.msra.mxu0 %v183
  %615 = vmatpush.msra.mxu0 %v179
  %616 = vmatpush.msra.mxu0 %v175
  %617 = vmatmul.f32.gmra.mxu0 %v31
  %v618 = vpop.f32.mrf.mxu0
  %v619 = vadd.f32 %v590, %v618
  %620 = vmatmul.f32.gmra.mxu0 %v35
  %v621 = vpop.f32.mrf.mxu0
  %v622 = vadd.f32 %v593, %v621
  %623 = vmatmul.f32.gmra.mxu0 %v39
  %v624 = vpop.f32.mrf.mxu0
  %v625 = vadd.f32 %v596, %v624
  %626 = vmatmul.f32.gmra.mxu0 %v43
  %v627 = vpop.f32.mrf.mxu0
  %v628 = vadd.f32 %v599, %v627
  %629 = vdwg.mxu0
  %630 = vmatpush.msra.mxu0 %v299
  %631 = vmatpush.msra.mxu0 %v295
  %632 = vmatpush.msra.mxu0 %v291
  %633 = vmatpush.msra.mxu0 %v287
  %634 = vmatpush.msra.mxu0 %v283
  %635 = vmatpush.msra.mxu0 %v279
  %636 = vmatpush.msra.mxu0 %v275
  %637 = vmatpush.msra.mxu0 %v271
  %638 = vmatpush.msra.mxu0 %v267
  %639 = vmatpush.msra.mxu0 %v263
  %640 = vmatpush.msra.mxu0 %v259
  %641 = vmatpush.msra.mxu0 %v255
  %642 = vmatpush.msra.mxu0 %v251
  %643 = vmatpush.msra.mxu0 %v247
  %644 = vmatpush.msra.mxu0 %v243
  %645 = vmatpush.msra.mxu0 %v239
  %646 = vmatmul.f32.gmra.mxu0 %v32
  %v647 = vpop.f32.mrf.mxu0
  %v648 = vadd.f32 %v619, %v647
  %649 = vmatmul.f32.gmra.mxu0 %v36
  %v650 = vpop.f32.mrf.mxu0
  %v651 = vadd.f32 %v622, %v650
  %652 = vmatmul.f32.gmra.mxu0 %v40
  %v653 = vpop.f32.mrf.mxu0
  %v654 = vadd.f32 %v625, %v653
  %655 = vmatmul.f32.gmra.mxu0 %v44
  %v656 = vpop.f32.mrf.mxu0
  %v657 = vadd.f32 %v628, %v656
  %658 = vdwg.mxu0
  %659 = vmatpush.msra.mxu0 %v108
  %660 = vmatpush.msra.mxu0 %v104
  %661 = vmatpush.msra.mxu0 %v100
  %662 = vmatpush.msra.mxu0 %v96
  %663 = vmatpush.msra.mxu0 %v92
  %664 = vmatpush.msra.mxu0 %v88
  %665 = vmatpush.msra.mxu0 %v84
  %666 = vmatpush.msra.mxu0 %v80
  %667 = vmatpush.msra.mxu0 %v76
  %668 = vmatpush.msra.mxu0 %v72
  %669 = vmatpush.msra.mxu0 %v68
  %670 = vmatpush.msra.mxu0 %v64
  %671 = vmatpush.msra.mxu0 %v60
  %672 = vmatpush.msra.mxu0 %v56
  %673 = vmatpush.msra.mxu0 %v52
  %674 = vmatpush.msra.mxu0 %v48
  %675 = vmatmul.f32.gmra.mxu0 %v29
  %v676 = vpop.f32.mrf.mxu0
  %v677 = vadd.f32 %v306, %v676
  %678 = vmatmul.f32.gmra.mxu0 %v33
  %v679 = vpop.f32.mrf.mxu0
  %v680 = vadd.f32 %v306, %v679
  %681 = vmatmul.f32.gmra.mxu0 %v37
  %v682 = vpop.f32.mrf.mxu0
  %v683 = vadd.f32 %v306, %v682
  %684 = vmatmul.f32.gmra.mxu0 %v41
  %v685 = vpop.f32.mrf.mxu0
  %v686 = vadd.f32 %v306, %v685
  %687 = vdwg.mxu0
  %688 = vmatpush.msra.mxu0 %v172
  %689 = vmatpush.msra.mxu0 %v168
  %690 = vmatpush.msra.mxu0 %v164
  %691 = vmatpush.msra.mxu0 %v160
  %692 = vmatpush.msra.mxu0 %v156
  %693 = vmatpush.msra.mxu0 %v152
  %694 = vmatpush.msra.mxu0 %v148
  %695 = vmatpush.msra.mxu0 %v144
  %696 = vmatpush.msra.mxu0 %v140
  %697 = vmatpush.msra.mxu0 %v136
  %698 = vmatpush.msra.mxu0 %v132
  %699 = vmatpush.msra.mxu0 %v128
  %700 = vmatpush.msra.mxu0 %v124
  %701 = vmatpush.msra.mxu0 %v120
  %702 = vmatpush.msra.mxu0 %v116
  %703 = vmatpush.msra.mxu0 %v112
  %704 = vmatmul.f32.gmra.mxu0 %v30
  %v705 = vpop.f32.mrf.mxu0
  %v706 = vadd.f32 %v677, %v705
  %707 = vmatmul.f32.gmra.mxu0 %v34
  %v708 = vpop.f32.mrf.mxu0
  %v709 = vadd.f32 %v680, %v708
  %710 = vmatmul.f32.gmra.mxu0 %v38
  %v711 = vpop.f32.mrf.mxu0
  %v712 = vadd.f32 %v683, %v711
  %713 = vmatmul.f32.gmra.mxu0 %v42
  %v714 = vpop.f32.mrf.mxu0
  %v715 = vadd.f32 %v686, %v714
  %716 = vdwg.mxu0
  %717 = vmatpush.msra.mxu0 %v236
  %718 = vmatpush.msra.mxu0 %v232
  %719 = vmatpush.msra.mxu0 %v228
  %720 = vmatpush.msra.mxu0 %v224
  %721 = vmatpush.msra.mxu0 %v220
  %722 = vmatpush.msra.mxu0 %v216
  %723 = vmatpush.msra.mxu0 %v212
  %724 = vmatpush.msra.mxu0 %v208
  %725 = vmatpush.msra.mxu0 %v204
  %726 = vmatpush.msra.mxu0 %v200
  %727 = vmatpush.msra.mxu0 %v196
  %728 = vmatpush.msra.mxu0 %v192
  %729 = vmatpush.msra.mxu0 %v188
  %730 = vmatpush.msra.mxu0 %v184
  %731 = vmatpush.msra.mxu0 %v180
  %732 = vmatpush.msra.mxu0 %v176
  %733 = vmatmul.f32.gmra.mxu0 %v31
  %v734 = vpop.f32.mrf.mxu0
  %v735 = vadd.f32 %v706, %v734
  %736 = vmatmul.f32.gmra.mxu0 %v35
  %v737 = vpop.f32.mrf.mxu0
  %v738 = vadd.f32 %v709, %v737
  %739 = vmatmul.f32.gmra.mxu0 %v39
  %v740 = vpop.f32.mrf.mxu0
  %v741 = vadd.f32 %v712, %v740
  %742 = vmatmul.f32.gmra.mxu0 %v43
  %v743 = vpop.f32.mrf.mxu0
  %v744 = vadd.f32 %v715, %v743
  %745 = vdwg.mxu0
  %746 = vmatpush.msra.mxu0 %v300
  %747 = vmatpush.msra.mxu0 %v296
  %748 = vmatpush.msra.mxu0 %v292
  %749 = vmatpush.msra.mxu0 %v288
  %750 = vmatpush.msra.mxu0 %v284
  %751 = vmatpush.msra.mxu0 %v280
  %752 = vmatpush.msra.mxu0 %v276
  %753 = vmatpush.msra.mxu0 %v272
  %754 = vmatpush.msra.mxu0 %v268
  %755 = vmatpush.msra.mxu0 %v264
  %756 = vmatpush.msra.mxu0 %v260
  %757 = vmatpush.msra.mxu0 %v256
  %758 = vmatpush.msra.mxu0 %v252
  %759 = vmatpush.msra.mxu0 %v248
  %760 = vmatpush.msra.mxu0 %v244
  %761 = vmatpush.msra.mxu0 %v240
  %762 = vmatmul.f32.gmra.mxu0 %v32
  %v763 = vpop.f32.mrf.mxu0
  %v764 = vadd.f32 %v735, %v763
  %765 = vmatmul.f32.gmra.mxu0 %v36
  %v766 = vpop.f32.mrf.mxu0
  %v767 = vadd.f32 %v738, %v766
  %768 = vmatmul.f32.gmra.mxu0 %v40
  %v769 = vpop.f32.mrf.mxu0
  %v770 = vadd.f32 %v741, %v769
  %771 = vmatmul.f32.gmra.mxu0 %v44
  %v772 = vpop.f32.mrf.mxu0
  %v773 = vadd.f32 %v744, %v772
  %774 = vdwg.mxu0
  %v775 = vld [vmem:[%s3] sm:$0xff]
  %v776 = vld [vmem:[%s3 + $0x8] sm:$0xff]
  %v777 = vld [vmem:[%s3 + $0x10] sm:$0xff]
  %v778 = vld [vmem:[%s3 + $0x18] sm:$0xff]
  %v779 = vld [vmem:[%s3 + $0x20] sm:$0xff]
  %v780 = vld [vmem:[%s3 + $0x28] sm:$0xff]
  %v781 = vld [vmem:[%s3 + $0x30] sm:$0xff]
  %v782 = vld [vmem:[%s3 + $0x38] sm:$0xff]
  %v783 = vld [vmem:[%s3 + $0x40] sm:$0xff]
  %v784 = vld [vmem:[%s3 + $0x48] sm:$0xff]
  %v785 = vld [vmem:[%s3 + $0x50] sm:$0xff]
  %v786 = vld [vmem:[%s3 + $0x58] sm:$0xff]
  %v787 = vld [vmem:[%s3 + $0x60] sm:$0xff]
  %v788 = vld [vmem:[%s3 + $0x68] sm:$0xff]
  %v789 = vld [vmem:[%s3 + $0x70] sm:$0xff]
  %v790 = vld [vmem:[%s3 + $0x78] sm:$0xff]
  %v791 = vadd.f32 %v416, %v775
  %v792 = vadd.f32 %v532, %v776
  %v793 = vadd.f32 %v648, %v777
  %v794 = vadd.f32 %v764, %v778
  %v795 = vadd.f32 %v419, %v779
  %v796 = vadd.f32 %v535, %v780
  %v797 = vadd.f32 %v651, %v781
  %v798 = vadd.f32 %v767, %v782
  %v799 = vadd.f32 %v422, %v783
  %v800 = vadd.f32 %v538, %v784
  %v801 = vadd.f32 %v654, %v785
  %v802 = vadd.f32 %v770, %v786
  %v803 = vadd.f32 %v425, %v787
  %v804 = vadd.f32 %v541, %v788
  %v805 = vadd.f32 %v657, %v789
  %v806 = vadd.f32 %v773, %v790
  %v807 = vld [vmem:[%s4] sm:$0xf]
  %v808 = vld [vmem:[%s5] sm:$0xf]
  %v809 = vadd.f32 %v791, %v792
  %v810 = vadd.f32 %v809, %v793
  %v811 = vadd.f32 %v810, %v794
  %812 = vadd.xlane.f32.xlu0 %v811
  %v813 = vpop.xlane.xlu0 %812
  %v814 = vadd.f32 %v795, %v796
  %v815 = vadd.f32 %v814, %v797
  %v816 = vadd.f32 %v815, %v798
  %817 = vadd.xlane.f32.xlu0 %v816
  %v818 = vpop.xlane.xlu0 %817
  %v819 = vadd.f32 %v799, %v800
  %v820 = vadd.f32 %v819, %v801
  %v821 = vadd.f32 %v820, %v802
  %822 = vadd.xlane.f32.xlu0 %v821
  %v823 = vpop.xlane.xlu0 %822
  %v824 = vadd.f32 %v803, %v804
  %v825 = vadd.f32 %v824, %v805
  %v826 = vadd.f32 %v825, %v806
  %827 = vadd.xlane.f32.xlu0 %v826
  %v828 = vpop.xlane.xlu0 %827
  %v829 = vrcp.pop 512.0
  %v830 = vmul.f32 512.0, %v829
  %v831 = vsub.f32 1.0, %v830
  %v832 = vmul.f32 %v829, %v831
  %v833 = vadd.f32 %v829, %v832
  %vm834 = vweird.f32 %v829
  %v835 = vsel %vm834, %v829, %v833
  %v836 = vmul.f32 %v813, %v835
  %v837 = vmul.f32 %v818, %v835
  %v838 = vmul.f32 %v823, %v835
  %v839 = vmul.f32 %v828, %v835
  %v840 = vsub.f32 %v791, %v836
  %v841 = vsub.f32 %v792, %v836
  %v842 = vsub.f32 %v793, %v836
  %v843 = vsub.f32 %v794, %v836
  %v844 = vsub.f32 %v795, %v837
  %v845 = vsub.f32 %v796, %v837
  %v846 = vsub.f32 %v797, %v837
  %v847 = vsub.f32 %v798, %v837
  %v848 = vsub.f32 %v799, %v838
  %v849 = vsub.f32 %v800, %v838
  %v850 = vsub.f32 %v801, %v838
  %v851 = vsub.f32 %v802, %v838
  %v852 = vsub.f32 %v803, %v839
  %v853 = vsub.f32 %v804, %v839
  %v854 = vsub.f32 %v805, %v839
  %v855 = vsub.f32 %v806, %v839
  %v856 = vmul.f32 %v840, %v840
  %v857 = vmul.f32 %v841, %v841
  %v858 = vmul.f32 %v842, %v842
  %v859 = vmul.f32 %v843, %v843
  %v860 = vmul.f32 %v844, %v844
  %v861 = vmul.f32 %v845, %v845
  %v862 = vmul.f32 %v846, %v846
  %v863 = vmul.f32 %v847, %v847
  %v864 = vmul.f32 %v848, %v848
  %v865 = vmul.f32 %v849, %v849
  %v866 = vmul.f32 %v850, %v850
  %v867 = vmul.f32 %v851, %v851
  %v868 = vmul.f32 %v852, %v852
  %v869 = vmul.f32 %v853, %v853
  %v870 = vmul.f32 %v854, %v854
  %v871 = vmul.f32 %v855, %v855
  %v872 = vadd.f32 %v856, %v857
  %v873 = vadd.f32 %v872, %v858
  %v874 = vadd.f32 %v873, %v859
  %875 = vadd.xlane.f32.xlu0 %v874
  %v876 = vpop.xlane.xlu0 %875
  %v877 = vadd.f32 %v860, %v861
  %v878 = vadd.f32 %v877, %v862
  %v879 = vadd.f32 %v878, %v863
  %880 = vadd.xlane.f32.xlu0 %v879
  %v881 = vpop.xlane.xlu0 %880
  %v882 = vadd.f32 %v864, %v865
  %v883 = vadd.f32 %v882, %v866
  %v884 = vadd.f32 %v883, %v867
  %885 = vadd.xlane.f32.xlu0 %v884
  %v886 = vpop.xlane.xlu0 %885
  %v887 = vadd.f32 %v868, %v869
  %v888 = vadd.f32 %v887, %v870
  %v889 = vadd.f32 %v888, %v871
  %890 = vadd.xlane.f32.xlu0 %v889
  %v891 = vpop.xlane.xlu0 %890
  %v892 = vmul.f32 %v876, %v835
  %v893 = vmul.f32 %v881, %v835
  %v894 = vmul.f32 %v886, %v835
  %v895 = vmul.f32 %v891, %v835
  %v896 = vadd.f32 %v892, 1e-05
  %v897 = vadd.f32 %v893, 1e-05
  %v898 = vadd.f32 %v894, 1e-05
  %v899 = vadd.f32 %v895, 1e-05
  %v900 = vrsqrt.pop %v896
  %v901 = vmul.f32 %v900, %v896
  %v902 = vmul.f32 %v901, %v900
  %v903 = vmul.f32 0.5, %v902
  %v904 = vsub.f32 1.5, %v903
  %v905 = vmul.f32 %v900, %v904
  %vm906 = vweird.f32 %v896
  %vm907 = vweird.f32 %v900
  %vm908 = vmor %vm906, %vm907
  %v909 = vsel %vm908, %v900, %v905
  %v910 = vrsqrt.pop %v897
  %v911 = vmul.f32 %v910, %v897
  %v912 = vmul.f32 %v911, %v910
  %v913 = vmul.f32 0.5, %v912
  %v914 = vsub.f32 1.5, %v913
  %v915 = vmul.f32 %v910, %v914
  %vm916 = vweird.f32 %v897
  %vm917 = vweird.f32 %v910
  %vm918 = vmor %vm916, %vm917
  %v919 = vsel %vm918, %v910, %v915
  %v920 = vrsqrt.pop %v898
  %v921 = vmul.f32 %v920, %v898
  %v922 = vmul.f32 %v921, %v920
  %v923 = vmul.f32 0.5, %v922
  %v924 = vsub.f32 1.5, %v923
  %v925 = vmul.f32 %v920, %v924
  %vm926 = vweird.f32 %v898
  %vm927 = vweird.f32 %v920
  %vm928 = vmor %vm926, %vm927
  %v929 = vsel %vm928, %v920, %v925
  %v930 = vrsqrt.pop %v899
  %v931 = vmul.f32 %v930, %v899
  %v932 = vmul.f32 %v931, %v930
  %v933 = vmul.f32 0.5, %v932
  %v934 = vsub.f32 1.5, %v933
  %v935 = vmul.f32 %v930, %v934
  %vm936 = vweird.f32 %v899
  %vm937 = vweird.f32 %v930
  %vm938 = vmor %vm936, %vm937
  %v939 = vsel %vm938, %v930, %v935
  %v940 = vmul.f32 %v840, %v909
  %v941 = vmul.f32 %v841, %v909
  %v942 = vmul.f32 %v842, %v909
  %v943 = vmul.f32 %v843, %v909
  %v944 = vmul.f32 %v844, %v919
  %v945 = vmul.f32 %v845, %v919
  %v946 = vmul.f32 %v846, %v919
  %v947 = vmul.f32 %v847, %v919
  %v948 = vmul.f32 %v848, %v929
  %v949 = vmul.f32 %v849, %v929
  %v950 = vmul.f32 %v850, %v929
  %v951 = vmul.f32 %v851, %v929
  %v952 = vmul.f32 %v852, %v939
  %v953 = vmul.f32 %v853, %v939
  %v954 = vmul.f32 %v854, %v939
  %v955 = vmul.f32 %v855, %v939
  %v957 = vperm.slane %v807, 0
  %v958 = vperm.slane %v807, 1
  %v959 = vperm.slane %v807, 2
  %v960 = vperm.slane %v807, 3
  %v965 = vmul.f32 %v940, %v957
  %v966 = vmul.f32 %v941, %v958
  %v967 = vmul.f32 %v942, %v959
  %v968 = vmul.f32 %v943, %v960
  %v969 = vmul.f32 %v944, %v957
  %v970 = vmul.f32 %v945, %v958
  %v971 = vmul.f32 %v946, %v959
  %v972 = vmul.f32 %v947, %v960
  %v973 = vmul.f32 %v948, %v957
  %v974 = vmul.f32 %v949, %v958
  %v975 = vmul.f32 %v950, %v959
  %v976 = vmul.f32 %v951, %v960
  %v977 = vmul.f32 %v952, %v957
  %v978 = vmul.f32 %v953, %v958
  %v979 = vmul.f32 %v954, %v959
  %v980 = vmul.f32 %v955, %v960
  %v982 = vperm.slane %v808, 0
  %v983 = vperm.slane %v808, 1
  %v984 = vperm.slane %v808, 2
  %v985 = vperm.slane %v808, 3
  %v990 = vadd.f32 %v965, %v982
  %v991 = vadd.f32 %v966, %v983
  %v992 = vadd.f32 %v967, %v984
  %v993 = vadd.f32 %v968, %v985
  %v994 = vadd.f32 %v969, %v982
  %v995 = vadd.f32 %v970, %v983
  %v996 = vadd.f32 %v971, %v984
  %v997 = vadd.f32 %v972, %v985
  %v998 = vadd.f32 %v973, %v982
  %v999 = vadd.f32 %v974, %v983
  %v1000 = vadd.f32 %v975, %v984
  %v1001 = vadd.f32 %v976, %v985
  %v1002 = vadd.f32 %v977, %v982
  %v1003 = vadd.f32 %v978, %v983
  %v1004 = vadd.f32 %v979, %v984
  %v1005 = vadd.f32 %v980, %v985
  %v1006 = vadd.f32 %v775, %v990
  %v1007 = vadd.f32 %v776, %v991
  %v1008 = vadd.f32 %v777, %v992
  %v1009 = vadd.f32 %v778, %v993
  %v1010 = vadd.f32 %v779, %v994
  %v1011 = vadd.f32 %v780, %v995
  %v1012 = vadd.f32 %v781, %v996
  %v1013 = vadd.f32 %v782, %v997
  %v1014 = vadd.f32 %v783, %v998
  %v1015 = vadd.f32 %v784, %v999
  %v1016 = vadd.f32 %v785, %v1000
  %v1017 = vadd.f32 %v786, %v1001
  %v1018 = vadd.f32 %v787, %v1002
  %v1019 = vadd.f32 %v788, %v1003
  %v1020 = vadd.f32 %v789, %v1004
  %v1021 = vadd.f32 %v790, %v1005
  %v1022 = vld [vmem:[%s6] sm:$0xf]
  %v1023 = vld [vmem:[%s7] sm:$0xf]
  %v1024 = vadd.f32 %v1006, %v1007
  %v1025 = vadd.f32 %v1024, %v1008
  %v1026 = vadd.f32 %v1025, %v1009
  %1027 = vadd.xlane.f32.xlu0 %v1026
  %v1028 = vpop.xlane.xlu0 %1027
  %v1029 = vadd.f32 %v1010, %v1011
  %v1030 = vadd.f32 %v1029, %v1012
  %v1031 = vadd.f32 %v1030, %v1013
  %1032 = vadd.xlane.f32.xlu0 %v1031
  %v1033 = vpop.xlane.xlu0 %1032
  %v1034 = vadd.f32 %v1014, %v1015
  %v1035 = vadd.f32 %v1034, %v1016
  %v1036 = vadd.f32 %v1035, %v1017
  %1037 = vadd.xlane.f32.xlu0 %v1036
  %v1038 = vpop.xlane.xlu0 %1037
  %v1039 = vadd.f32 %v1018, %v1019
  %v1040 = vadd.f32 %v1039, %v1020
  %v1041 = vadd.f32 %v1040, %v1021
  %1042 = vadd.xlane.f32.xlu0 %v1041
  %v1043 = vpop.xlane.xlu0 %1042
  %v1044 = vmul.f32 %v1028, %v835
  %v1045 = vmul.f32 %v1033, %v835
  %v1046 = vmul.f32 %v1038, %v835
  %v1047 = vmul.f32 %v1043, %v835
  %v1048 = vsub.f32 %v1006, %v1044
  %v1049 = vsub.f32 %v1007, %v1044
  %v1050 = vsub.f32 %v1008, %v1044
  %v1051 = vsub.f32 %v1009, %v1044
  %v1052 = vsub.f32 %v1010, %v1045
  %v1053 = vsub.f32 %v1011, %v1045
  %v1054 = vsub.f32 %v1012, %v1045
  %v1055 = vsub.f32 %v1013, %v1045
  %v1056 = vsub.f32 %v1014, %v1046
  %v1057 = vsub.f32 %v1015, %v1046
  %v1058 = vsub.f32 %v1016, %v1046
  %v1059 = vsub.f32 %v1017, %v1046
  %v1060 = vsub.f32 %v1018, %v1047
  %v1061 = vsub.f32 %v1019, %v1047
  %v1062 = vsub.f32 %v1020, %v1047
  %v1063 = vsub.f32 %v1021, %v1047
  %v1064 = vmul.f32 %v1048, %v1048
  %v1065 = vmul.f32 %v1049, %v1049
  %v1066 = vmul.f32 %v1050, %v1050
  %v1067 = vmul.f32 %v1051, %v1051
  %v1068 = vmul.f32 %v1052, %v1052
  %v1069 = vmul.f32 %v1053, %v1053
  %v1070 = vmul.f32 %v1054, %v1054
  %v1071 = vmul.f32 %v1055, %v1055
  %v1072 = vmul.f32 %v1056, %v1056
  %v1073 = vmul.f32 %v1057, %v1057
  %v1074 = vmul.f32 %v1058, %v1058
  %v1075 = vmul.f32 %v1059, %v1059
  %v1076 = vmul.f32 %v1060, %v1060
  %v1077 = vmul.f32 %v1061, %v1061
  %v1078 = vmul.f32 %v1062, %v1062
  %v1079 = vmul.f32 %v1063, %v1063
  %v1080 = vadd.f32 %v1064, %v1065
  %v1081 = vadd.f32 %v1080, %v1066
  %v1082 = vadd.f32 %v1081, %v1067
  %1083 = vadd.xlane.f32.xlu0 %v1082
  %v1084 = vpop.xlane.xlu0 %1083
  %v1085 = vadd.f32 %v1068, %v1069
  %v1086 = vadd.f32 %v1085, %v1070
  %v1087 = vadd.f32 %v1086, %v1071
  %1088 = vadd.xlane.f32.xlu0 %v1087
  %v1089 = vpop.xlane.xlu0 %1088
  %v1090 = vadd.f32 %v1072, %v1073
  %v1091 = vadd.f32 %v1090, %v1074
  %v1092 = vadd.f32 %v1091, %v1075
  %1093 = vadd.xlane.f32.xlu0 %v1092
  %v1094 = vpop.xlane.xlu0 %1093
  %v1095 = vadd.f32 %v1076, %v1077
  %v1096 = vadd.f32 %v1095, %v1078
  %v1097 = vadd.f32 %v1096, %v1079
  %1098 = vadd.xlane.f32.xlu0 %v1097
  %v1099 = vpop.xlane.xlu0 %1098
  %v1100 = vmul.f32 %v1084, %v835
  %v1101 = vmul.f32 %v1089, %v835
  %v1102 = vmul.f32 %v1094, %v835
  %v1103 = vmul.f32 %v1099, %v835
  %v1104 = vadd.f32 %v1100, 1e-05
  %v1105 = vadd.f32 %v1101, 1e-05
  %v1106 = vadd.f32 %v1102, 1e-05
  %v1107 = vadd.f32 %v1103, 1e-05
  %v1108 = vrsqrt.pop %v1104
  %v1109 = vmul.f32 %v1108, %v1104
  %v1110 = vmul.f32 %v1109, %v1108
  %v1111 = vmul.f32 0.5, %v1110
  %v1112 = vsub.f32 1.5, %v1111
  %v1113 = vmul.f32 %v1108, %v1112
  %vm1114 = vweird.f32 %v1104
  %vm1115 = vweird.f32 %v1108
  %vm1116 = vmor %vm1114, %vm1115
  %v1117 = vsel %vm1116, %v1108, %v1113
  %v1118 = vrsqrt.pop %v1105
  %v1119 = vmul.f32 %v1118, %v1105
  %v1120 = vmul.f32 %v1119, %v1118
  %v1121 = vmul.f32 0.5, %v1120
  %v1122 = vsub.f32 1.5, %v1121
  %v1123 = vmul.f32 %v1118, %v1122
  %vm1124 = vweird.f32 %v1105
  %vm1125 = vweird.f32 %v1118
  %vm1126 = vmor %vm1124, %vm1125
  %v1127 = vsel %vm1126, %v1118, %v1123
  %v1128 = vrsqrt.pop %v1106
  %v1129 = vmul.f32 %v1128, %v1106
  %v1130 = vmul.f32 %v1129, %v1128
  %v1131 = vmul.f32 0.5, %v1130
  %v1132 = vsub.f32 1.5, %v1131
  %v1133 = vmul.f32 %v1128, %v1132
  %vm1134 = vweird.f32 %v1106
  %vm1135 = vweird.f32 %v1128
  %vm1136 = vmor %vm1134, %vm1135
  %v1137 = vsel %vm1136, %v1128, %v1133
  %v1138 = vrsqrt.pop %v1107
  %v1139 = vmul.f32 %v1138, %v1107
  %v1140 = vmul.f32 %v1139, %v1138
  %v1141 = vmul.f32 0.5, %v1140
  %v1142 = vsub.f32 1.5, %v1141
  %v1143 = vmul.f32 %v1138, %v1142
  %vm1144 = vweird.f32 %v1107
  %vm1145 = vweird.f32 %v1138
  %vm1146 = vmor %vm1144, %vm1145
  %v1147 = vsel %vm1146, %v1138, %v1143
  %v1148 = vmul.f32 %v1048, %v1117
  %v1149 = vmul.f32 %v1049, %v1117
  %v1150 = vmul.f32 %v1050, %v1117
  %v1151 = vmul.f32 %v1051, %v1117
  %v1152 = vmul.f32 %v1052, %v1127
  %v1153 = vmul.f32 %v1053, %v1127
  %v1154 = vmul.f32 %v1054, %v1127
  %v1155 = vmul.f32 %v1055, %v1127
  %v1156 = vmul.f32 %v1056, %v1137
  %v1157 = vmul.f32 %v1057, %v1137
  %v1158 = vmul.f32 %v1058, %v1137
  %v1159 = vmul.f32 %v1059, %v1137
  %v1160 = vmul.f32 %v1060, %v1147
  %v1161 = vmul.f32 %v1061, %v1147
  %v1162 = vmul.f32 %v1062, %v1147
  %v1163 = vmul.f32 %v1063, %v1147
  %v1165 = vperm.slane %v1022, 0
  %v1166 = vperm.slane %v1022, 1
  %v1167 = vperm.slane %v1022, 2
  %v1168 = vperm.slane %v1022, 3
  %v1173 = vmul.f32 %v1148, %v1165
  %v1174 = vmul.f32 %v1149, %v1166
  %v1175 = vmul.f32 %v1150, %v1167
  %v1176 = vmul.f32 %v1151, %v1168
  %v1177 = vmul.f32 %v1152, %v1165
  %v1178 = vmul.f32 %v1153, %v1166
  %v1179 = vmul.f32 %v1154, %v1167
  %v1180 = vmul.f32 %v1155, %v1168
  %v1181 = vmul.f32 %v1156, %v1165
  %v1182 = vmul.f32 %v1157, %v1166
  %v1183 = vmul.f32 %v1158, %v1167
  %v1184 = vmul.f32 %v1159, %v1168
  %v1185 = vmul.f32 %v1160, %v1165
  %v1186 = vmul.f32 %v1161, %v1166
  %v1187 = vmul.f32 %v1162, %v1167
  %v1188 = vmul.f32 %v1163, %v1168
  %v1190 = vperm.slane %v1023, 0
  %v1191 = vperm.slane %v1023, 1
  %v1192 = vperm.slane %v1023, 2
  %v1193 = vperm.slane %v1023, 3
  %v1198 = vadd.f32 %v1173, %v1190
  %v1199 = vadd.f32 %v1174, %v1191
  %v1200 = vadd.f32 %v1175, %v1192
  %v1201 = vadd.f32 %v1176, %v1193
  %v1202 = vadd.f32 %v1177, %v1190
  %v1203 = vadd.f32 %v1178, %v1191
  %v1204 = vadd.f32 %v1179, %v1192
  %v1205 = vadd.f32 %v1180, %v1193
  %v1206 = vadd.f32 %v1181, %v1190
  %v1207 = vadd.f32 %v1182, %v1191
  %v1208 = vadd.f32 %v1183, %v1192
  %v1209 = vadd.f32 %v1184, %v1193
  %v1210 = vadd.f32 %v1185, %v1190
  %v1211 = vadd.f32 %v1186, %v1191
  %v1212 = vadd.f32 %v1187, %v1192
  %v1213 = vadd.f32 %v1188, %v1193
  %1214 = vst [vmem:[%s8] sm:$0xff] %v1198
  %1215 = vst [vmem:[%s8 + $0x8] sm:$0xff] %v1199
  %1216 = vst [vmem:[%s8 + $0x10] sm:$0xff] %v1200
  %1217 = vst [vmem:[%s8 + $0x18] sm:$0xff] %v1201
  %1218 = vst [vmem:[%s8 + $0x20] sm:$0xff] %v1202
  %1219 = vst [vmem:[%s8 + $0x28] sm:$0xff] %v1203
  %1220 = vst [vmem:[%s8 + $0x30] sm:$0xff] %v1204
  %1221 = vst [vmem:[%s8 + $0x38] sm:$0xff] %v1205
  %1222 = vst [vmem:[%s8 + $0x40] sm:$0xff] %v1206
  %1223 = vst [vmem:[%s8 + $0x48] sm:$0xff] %v1207
  %1224 = vst [vmem:[%s8 + $0x50] sm:$0xff] %v1208
  %1225 = vst [vmem:[%s8 + $0x58] sm:$0xff] %v1209
  %1226 = vst [vmem:[%s8 + $0x60] sm:$0xff] %v1210
  %1227 = vst [vmem:[%s8 + $0x68] sm:$0xff] %v1211
  %1228 = vst [vmem:[%s8 + $0x70] sm:$0xff] %v1212
  %1229 = vst [vmem:[%s8 + $0x78] sm:$0xff] %v1213
  // Predicated region
  $region34: #{decoder_layer.7} parent=0 // pred_check
    _
  $region35: #{decoder_layer.7} parent=0 // pred_check_branch
    %1231 = sbr.rel (0) target = $region37
  $region36: #{decoder_layer.7} parent=0 // pred_region
    _
  $region37: #{decoder_layer.7} parent=0 // pred_fallthru
    _
  // Predicated region
  $region38: #{decoder_layer.7} parent=0 // pred_check
    _
  $region39: #{decoder_layer.7} parent=0 // pred_check_branch
    %1233 = sbr.rel (0) target = $region41
  $region40: #{decoder_layer.7} parent=0 // pred_region
    _
  $region41: #{decoder_layer.7} parent=0 // pred_fallthru
    _

// kernel: decoder_layer.8
$region0: #{decoder_layer.8}
  #allocation0 [shape = 'u32[]', space=smem, size = 0x4, offset = 0x4, fixed_abs, tag = 'smem constant byte address 0x4 - core index']
  #allocation1 [shape = 'u32[72,128]{1,0:T(1,128)}', space=vmem, size = 0x9000, scoped, tag = 'internal scratch']
  %s0 = inlined_call_operand.vmem [shape: f32[32,512], index: 0, kind: input, shape index: {}]
  %s1 = inlined_call_operand.vmem [shape: f32[512,2048], index: 1, kind: input, shape index: {}]
  %s2 = inlined_call_operand.vmem [shape: f32[1,2048], index: 2, kind: input, shape index: {}]
  %s3 = inlined_call_operand.vmem [shape: f32[32,2048], index: 3, kind: output, shape index: {}]
  %s4 = sld [smem:[#allocation0]]
  $region87: #{decoder_layer.8} parent=0
    _
  %s6 = ssub.s32 1, %s4
  %s7 = scalar_select 0, %s6, %s4
  $region1: #{decoder_layer.8} parent=0
    #allocation2 [shape = 'u8[2097152]{0}', space=vmem, size = 0x200000, scoped, tag = 'input window, operand 1']
    #allocation3 [shape = 'u8[131072]{0}', space=vmem, size = 0x20000, scoped, tag = 'output window, operand 0']
    loop: start=0, step=1, limit=6
    $region2: #{decoder_layer.8} parent=1 // loop_pre_header
      _
    $region3: #{decoder_layer.8} parent=1 // loop_header
      %s9 = sphi 0, %s13
      %p10 = scmp.ge.s32.totalorder %s9, 6
      %s16 = sphi 0, %s28
      %s17 = sphi 0, %s24
      %s18 = sphi 0, %s16
      %s19 = sphi 0, %s17
      %s20 = sphi 0, %s18
      %s21 = sphi 0, %s19
      %s31 = sphi 0, %s33
      %s34 = sphi 0, %s31
      %s35 = sphi 0, %s34
      %s51 = sphi 0, %s35
      %s57 = sphi 0, %s59
      %s60 = sphi 0, %s57
      %s61 = sphi 0, %s60
      %s77 = sphi 0, %s61
      %s83 = sphi 0, %s85
      %s86 = sphi 0, %s83
      %s87 = sphi 0, %s86
      %s103 = sphi 0, %s87
      %s111 = sphi 0, %s113
      %s114 = sphi 0, %s111
      %s115 = sphi 0, %s114
      %s131 = sphi 0, %s115
    $region4: #{decoder_layer.8} parent=1 // loop_header_branch
      %12 = sbr.rel (%p10) target = $region8
    $region5: #{decoder_layer.8} parent=1 // loop_body
      %s14 = ssub.s32 %s9, 1
      %s15 = ssub.s32 %s9, 2
      %s22 = sadd.s32 1, %s17
      %p23 = scmp.ge.s32.totalorder %s22, 4
      %s24 = scalar_select %p23, 0, %s22
      %s25 = sadd.s32 1, %s16
      %s26 = scalar_select %p23, %s25, %s16
      %p27 = scmp.ge.s32.totalorder %s26, 1
      %s28 = scalar_select %p27, 0, %s26
      %s29 = ssub.s32 %s16, %s28
      %p30 = scmp.eq.s32.totalorder %s29, 0
      %s32 = sadd.s32 %s31, 1
      %s33 = scalar_select %p30, %s31, %s32
      %p36 = pneg %p30
      %p37 = scmp.eq.s32.totalorder %s9, 3
      %p38 = por %p36, %p37
      %p39 = scmp.ne.s32.totalorder %s31, %s34
      %p40 = scmp.eq.s32.totalorder %s9, 0
      %p41 = por %p39, %p40
      %p42 = scmp.ne.s32.totalorder %s31, %s34
      %p43 = scmp.eq.s32.totalorder %s14, 3
      %p44 = por %p42, %p43
      %p45 = scmp.ne.s32.totalorder %s34, %s35
      %p46 = scmp.eq.s32.totalorder %s14, 0
      %p47 = por %p45, %p46
      %p48 = scmp.ne.s32.totalorder %s34, %s35
      %p49 = scmp.eq.s32.totalorder %s15, 3
      %p50 = por %p48, %p49
      %p52 = scmp.ne.s32.totalorder %s35, %s51
      %p53 = scmp.eq.s32.totalorder %s15, 0
      %p54 = por %p52, %p53
      %s55 = ssub.s32 %s17, %s24
      %p56 = scmp.eq.s32.totalorder %s55, 0
      %s58 = sadd.s32 %s57, 1
      %s59 = scalar_select %p56, %s57, %s58
      %p62 = pneg %p56
      %p63 = scmp.eq.s32.totalorder %s9, 3
      %p64 = por %p62, %p63
      %p65 = scmp.ne.s32.totalorder %s57, %s60
      %p66 = scmp.eq.s32.totalorder %s9, 0
      %p67 = por %p65, %p66
      %p68 = scmp.ne.s32.totalorder %s57, %s60
      %p69 = scmp.eq.s32.totalorder %s14, 3
      %p70 = por %p68, %p69
      %p71 = scmp.ne.s32.totalorder %s60, %s61
      %p72 = scmp.eq.s32.totalorder %s14, 0
      %p73 = por %p71, %p72
      %p74 = scmp.ne.s32.totalorder %s60, %s61
      %p75 = scmp.eq.s32.totalorder %s15, 3
      %p76 = por %p74, %p75
      %p78 = scmp.ne.s32.totalorder %s61, %s77
      %p79 = scmp.eq.s32.totalorder %s15, 0
      %p80 = por %p78, %p79
      %s81 = ssub.s32 %s17, %s24
      %p82 = scmp.eq.s32.totalorder %s81, 0
      %s84 = sadd.s32 %s83, 1
      %s85 = scalar_select %p82, %s83, %s84
      %p88 = pneg %p82
      %p89 = scmp.eq.s32.totalorder %s9, 3
      %p90 = por %p88, %p89
      %p91 = scmp.ne.s32.totalorder %s83, %s86
      %p92 = scmp.eq.s32.totalorder %s9, 0
      %p93 = por %p91, %p92
      %p94 = scmp.ne.s32.totalorder %s83, %s86
      %p95 = scmp.eq.s32.totalorder %s14, 3
      %p96 = por %p94, %p95
      %p97 = scmp.ne.s32.totalorder %s86, %s87
      %p98 = scmp.eq.s32.totalorder %s14, 0
      %p99 = por %p97, %p98
      %p100 = scmp.ne.s32.totalorder %s86, %s87
      %p101 = scmp.eq.s32.totalorder %s15, 3
      %p102 = por %p100, %p101
      %p104 = scmp.ne.s32.totalorder %s87, %s103
      %p105 = scmp.eq.s32.totalorder %s15, 0
      %p106 = por %p104, %p105
      %s107 = ssub.s32 %s16, %s28
      %s108 = ssub.s32 %s17, %s24
      %s109 = sor.u32 %s107, %s108
      %p110 = scmp.eq.s32.totalorder %s109, 0
      %s112 = sadd.s32 %s111, 1
      %s113 = scalar_select %p110, %s111, %s112
      %p116 = pneg %p110
      %p117 = scmp.eq.s32.totalorder %s9, 3
      %p118 = por %p116, %p117
      %p119 = scmp.ne.s32.totalorder %s111, %s114
      %p120 = scmp.eq.s32.totalorder %s9, 0
      %p121 = por %p119, %p120
      %p122 = scmp.ne.s32.totalorder %s111, %s114
      %p123 = scmp.eq.s32.totalorder %s14, 3
      %p124 = por %p122, %p123
      %p125 = scmp.ne.s32.totalorder %s114, %s115
      %p126 = scmp.eq.s32.totalorder %s14, 0
      %p127 = por %p125, %p126
      %p128 = scmp.ne.s32.totalorder %s114, %s115
      %p129 = scmp.eq.s32.totalorder %s15, 3
      %p130 = por %p128, %p129
      %p132 = scmp.ne.s32.totalorder %s115, %s131
      %p133 = scmp.eq.s32.totalorder %s15, 0
      %p134 = por %p132, %p133
      %p135 = scmp.le.s32.totalorder 1, %s9
      %p136 = scmp.lt.s32.totalorder %s9, 5
      %p137 = pnand %p135, %p136
      %p138 = pneg %p137
      // Predicated region
      $region9: #{decoder_layer.8} parent=5 // pred_check
        _
      $region10: #{decoder_layer.8} parent=5 // pred_check_branch
        %140 = sbr.rel (%p137) target = $region12
      $region11: #{decoder_layer.8} parent=5 // pred_region
        %s141 = ssub.s32 %s9, 1
        // Predicated region
        $region13: #{decoder_layer.8} parent=11 // pred_check
          %p142 = pneg %p47
        $region14: #{decoder_layer.8} parent=11 // pred_check_branch
          %144 = sbr.rel (%p142) target = $region16
        $region15: #{decoder_layer.8} parent=11 // pred_region
          %s145 = smul.u32 4, %s18
          %p146 = scmp.lt.s32.totalorder %s145, 3
          %s147 = scalar_select %p146, %s145, 3
          %s148 = smul.addr %s147, 4
          %s149 = smul.addr %s148, 8
          %s150 = scalar_lea.vmem %s0, %s149
          %s151 = smul.u32 4, %s18
        $region16: #{decoder_layer.8} parent=11 // pred_fallthru
          _
      $region12: #{decoder_layer.8} parent=5 // pred_fallthru
        _
      %p152 = scmp.lt.s32.totalorder %s9, 4
      // Predicated region
      $region17: #{decoder_layer.8} parent=5 // pred_check
        %p153 = pneg %p152
      $region18: #{decoder_layer.8} parent=5 // pred_check_branch
        %155 = sbr.rel (%p153) target = $region20
      $region19: #{decoder_layer.8} parent=5 // pred_region
        // Predicated region
        $region21: #{decoder_layer.8} parent=19 // pred_check
          %p156 = pneg %p67
        $region22: #{decoder_layer.8} parent=19 // pred_check_branch
          %158 = sbr.rel (%p156) target = $region24
        $region23: #{decoder_layer.8} parent=19 // pred_region
          %s159 = sand.u32 %s57, 1
          %s160 = sand.u32 %s57, 1
          %s161 = smul.addr %s160, 2048
          %s162 = scalar_lea.vmem [#allocation2], %s161
          %s163 = smul.u32 4, %s17
          %s164 = smul.addr %s163, 8
          %s165 = scalar_lea.vmem %s1, %s164
          // Predicated region
          $region25: #{decoder_layer.8} parent=23 // pred_check
            _
          $region26: #{decoder_layer.8} parent=23 // pred_check_branch
            %167 = sbr.rel (0) target = $region28
          $region27: #{decoder_layer.8} parent=23 // pred_region
            // Predicated region
            $region29: #{decoder_layer.8} parent=27 // pred_check
              _
            $region30: #{decoder_layer.8} parent=27 // pred_check_branch
              %169 = sbr.rel (0) target = $region32
            $region31: #{decoder_layer.8} parent=27 // pred_region
              loop: start=0, step=1, limit=1
              $region33: #{decoder_layer.8} parent=31 // loop_pre_header
                _
              $region34: #{decoder_layer.8} parent=31 // loop_header
                %s171 = sphi 0, %s175
                %p172 = scmp.ge.s32.totalorder %s171, 1
                %s176 = sphi %s165, %s165
                %s177 = sphi %s162, %s162
              $region35: #{decoder_layer.8} parent=31 // loop_header_branch
                %174 = sbr.rel (%p172) target = $region39
              $region36: #{decoder_layer.8} parent=31 // loop_body
                %v178 = vld [vmem:[%s176] sm:$0xff]
                %179 = vst [vmem:[%s177] sm:$0xff] %v178
                %v180 = vld [vmem:[%s176 + $0x8] sm:$0xff]
                %181 = vst [vmem:[%s177 + $0x8] sm:$0xff] %v180
                %v182 = vld [vmem:[%s176 + $0x10] sm:$0xff]
                %183 = vst [vmem:[%s177 + $0x10] sm:$0xff] %v182
                %v184 = vld [vmem:[%s176 + $0x18] sm:$0xff]
                %185 = vst [vmem:[%s177 + $0x18] sm:$0xff] %v184
                %v186 = vld [vmem:[%s176 + $0x80] sm:$0xff]
                %187 = vst [vmem:[%s177 + $0x20] sm:$0xff] %v186
                %v188 = vld [vmem:[%s176 + $0x88] sm:$0xff]
                %189 = vst [vmem:[%s177 + $0x28] sm:$0xff] %v188
                %v190 = vld [vmem:[%s176 + $0x90] sm:$0xff]
                %191 = vst [vmem:[%s177 + $0x30] sm:$0xff] %v190
                %v192 = vld [vmem:[%s176 + $0x98] sm:$0xff]
                %193 = vst [vmem:[%s177 + $0x38] sm:$0xff] %v192
                %v194 = vld [vmem:[%s176 + $0x100] sm:$0xff]
                %195 = vst [vmem:[%s177 + $0x40] sm:$0xff] %v194
                %v196 = vld [vmem:[%s176 + $0x108] sm:$0xff]
                %197 = vst [vmem:[%s177 + $0x48] sm:$0xff] %v196
                %v198 = vld [vmem:[%s176 + $0x110] sm:$0xff]
                %199 = vst [vmem:[%s177 + $0x50] sm:$0xff] %v198
                %v200 = vld [vmem:[%s176 + $0x118] sm:$0xff]
                %201 = vst [vmem:[%s177 + $0x58] sm:$0xff] %v200
                %v202 = vld [vmem:[%s176 + $0x180] sm:$0xff]
                %203 = vst [vmem:[%s177 + $0x60] sm:$0xff] %v202
                %v204 = vld [vmem:[%s176 + $0x188] sm:$0xff]
                %205 = vst [vmem:[%s177 + $0x68] sm:$0xff] %v204
                %v206 = vld [vmem:[%s176 + $0x190] sm:$0xff]
                %207 = vst [vmem:[%s177 + $0x70] sm:$0xff] %v206
                %v208 = vld [vmem:[%s176 + $0x198] sm:$0xff]
                %209 = vst [vmem:[%s177 + $0x78] sm:$0xff] %v208
                %v210 = vld [vmem:[%s176 + $0x200] sm:$0xff]
                %211 = vst [vmem:[%s177 + $0x80] sm:$0xff] %v210
                %v212 = vld [vmem:[%s176 + $0x208] sm:$0xff]
                %213 = vst [vmem:[%s177 + $0x88] sm:$0xff] %v212
                %v214 = vld [vmem:[%s176 + $0x210] sm:$0xff]
                %215 = vst [vmem:[%s177 + $0x90] sm:$0xff] %v214
                %v216 = vld [vmem:[%s176 + $0x218] sm:$0xff]
                %217 = vst [vmem:[%s177 + $0x98] sm:$0xff] %v216
                %v218 = vld [vmem:[%s176 + $0x280] sm:$0xff]
                %219 = vst [vmem:[%s177 + $0xa0] sm:$0xff] %v218
                %v220 = vld [vmem:[%s176 + $0x288] sm:$0xff]
                %221 = vst [vmem:[%s177 + $0xa8] sm:$0xff] %v220
                %v222 = vld [vmem:[%s176 + $0x290] sm:$0xff]
                %223 = vst [vmem:[%s177 + $0xb0] sm:$0xff] %v222
                %v224 = vld [vmem:[%s176 + $0x298] sm:$0xff]
                %225 = vst [vmem:[%s177 + $0xb8] sm:$0xff] %v224
                %v226 = vld [vmem:[%s176 + $0x300] sm:$0xff]
                %227 = vst [vmem:[%s177 + $0xc0] sm:$0xff] %v226
                %v228 = vld [vmem:[%s176 + $0x308] sm:$0xff]
                %229 = vst [vmem:[%s177 + $0xc8] sm:$0xff] %v228
                %v230 = vld [vmem:[%s176 + $0x310] sm:$0xff]
                %231 = vst [vmem:[%s177 + $0xd0] sm:$0xff] %v230
                %v232 = vld [vmem:[%s176 + $0x318] sm:$0xff]
                %233 = vst [vmem:[%s177 + $0xd8] sm:$0xff] %v232
                %v234 = vld [vmem:[%s176 + $0x380] sm:$0xff]
                %235 = vst [vmem:[%s177 + $0xe0] sm:$0xff] %v234
                %v236 = vld [vmem:[%s176 + $0x388] sm:$0xff]
                %237 = vst [vmem:[%s177 + $0xe8] sm:$0xff] %v236
                %v238 = vld [vmem:[%s176 + $0x390] sm:$0xff]
                %239 = vst [vmem:[%s177 + $0xf0] sm:$0xff] %v238
                %v240 = vld [vmem:[%s176 + $0x398] sm:$0xff]
                %241 = vst [vmem:[%s177 + $0xf8] sm:$0xff] %v240
                %v242 = vld [vmem:[%s176 + $0x400] sm:$0xff]
                %243 = vst [vmem:[%s177 + $0x100] sm:$0xff] %v242
                %v244 = vld [vmem:[%s176 + $0x408] sm:$0xff]
                %245 = vst [vmem:[%s177 + $0x108] sm:$0xff] %v244
                %v246 = vld [vmem:[%s176 + $0x410] sm:$0xff]
                %247 = vst [vmem:[%s177 + $0x110] sm:$0xff] %v246
                %v248 = vld [vmem:[%s176 + $0x418] sm:$0xff]
                %249 = vst [vmem:[%s177 + $0x118] sm:$0xff] %v248
                %v250 = vld [vmem:[%s176 + $0x480] sm:$0xff]
                %251 = vst [vmem:[%s177 + $0x120] sm:$0xff] %v250
                %v252 = vld [vmem:[%s176 + $0x488] sm:$0xff]
                %253 = vst [vmem:[%s177 + $0x128] sm:$0xff] %v252
                %v254 = vld [vmem:[%s176 + $0x490] sm:$0xff]
                %255 = vst [vmem:[%s177 + $0x130] sm:$0xff] %v254
                %v256 = vld [vmem:[%s176 + $0x498] sm:$0xff]
                %257 = vst [vmem:[%s177 + $0x138] sm:$0xff] %v256
                %v258 = vld [vmem:[%s176 + $0x500] sm:$0xff]
                %259 = vst [vmem:[%s177 + $0x140] sm:$0xff] %v258
                %v260 = vld [vmem:[%s176 + $0x508] sm:$0xff]
                %261 = vst [vmem:[%s177 + $0x148] sm:$0xff] %v260
                %v262 = vld [vmem:[%s176 + $0x510] sm:$0xff]
                %263 = vst [vmem:[%s177 + $0x150] sm:$0xff] %v262
                %v264 = vld [vmem:[%s176 + $0x518] sm:$0xff]
                %265 = vst [vmem:[%s177 + $0x158] sm:$0xff] %v264
                %v266 = vld [vmem:[%s176 + $0x580] sm:$0xff]
                %267 = vst [vmem:[%s177 + $0x160] sm:$0xff] %v266
                %v268 = vld [vmem:[%s176 + $0x588] sm:$0xff]
                %269 = vst [vmem:[%s177 + $0x168] sm:$0xff] %v268
                %v270 = vld [vmem:[%s176 + $0x590] sm:$0xff]
                %271 = vst [vmem:[%s177 + $0x170] sm:$0xff] %v270
                %v272 = vld [vmem:[%s176 + $0x598] sm:$0xff]
                %273 = vst [vmem:[%s177 + $0x178] sm:$0xff] %v272
                %v274 = vld [vmem:[%s176 + $0x600] sm:$0xff]
                %275 = vst [vmem:[%s177 + $0x180] sm:$0xff] %v274
                %v276 = vld [vmem:[%s176 + $0x608] sm:$0xff]
                %277 = vst [vmem:[%s177 + $0x188] sm:$0xff] %v276
                %v278 = vld [vmem:[%s176 + $0x610] sm:$0xff]
                %279 = vst [vmem:[%s177 + $0x190] sm:$0xff] %v278
                %v280 = vld [vmem:[%s176 + $0x618] sm:$0xff]
                %281 = vst [vmem:[%s177 + $0x198] sm:$0xff] %v280
                %v282 = vld [vmem:[%s176 + $0x680] sm:$0xff]
                %283 = vst [vmem:[%s177 + $0x1a0] sm:$0xff] %v282
                %v284 = vld [vmem:[%s176 + $0x688] sm:$0xff]
                %285 = vst [vmem:[%s177 + $0x1a8] sm:$0xff] %v284
                %v286 = vld [vmem:[%s176 + $0x690] sm:$0xff]
                %287 = vst [vmem:[%s177 + $0x1b0] sm:$0xff] %v286
                %v288 = vld [vmem:[%s176 + $0x698] sm:$0xff]
                %289 = vst [vmem:[%s177 + $0x1b8] sm:$0xff] %v288
                %v290 = vld [vmem:[%s176 + $0x700] sm:$0xff]
                %291 = vst [vmem:[%s177 + $0x1c0] sm:$0xff] %v290
                %v292 = vld [vmem:[%s176 + $0x708] sm:$0xff]
                %293 = vst [vmem:[%s177 + $0x1c8] sm:$0xff] %v292
                %v294 = vld [vmem:[%s176 + $0x710] sm:$0xff]
                %295 = vst [vmem:[%s177 + $0x1d0] sm:$0xff] %v294
                %v296 = vld [vmem:[%s176 + $0x718] sm:$0xff]
                %297 = vst [vmem:[%s177 + $0x1d8] sm:$0xff] %v296
                %v298 = vld [vmem:[%s176 + $0x780] sm:$0xff]
                %299 = vst [vmem:[%s177 + $0x1e0] sm:$0xff] %v298
                %v300 = vld [vmem:[%s176 + $0x788] sm:$0xff]
                %301 = vst [vmem:[%s177 + $0x1e8] sm:$0xff] %v300
                %v302 = vld [vmem:[%s176 + $0x790] sm:$0xff]
                %303 = vst [vmem:[%s177 + $0x1f0] sm:$0xff] %v302
                %v304 = vld [vmem:[%s176 + $0x798] sm:$0xff]
                %305 = vst [vmem:[%s177 + $0x1f8] sm:$0xff] %v304
                %v306 = vld [vmem:[%s176 + $0x800] sm:$0xff]
                %307 = vst [vmem:[%s177 + $0x200] sm:$0xff] %v306
                %v308 = vld [vmem:[%s176 + $0x808] sm:$0xff]
                %309 = vst [vmem:[%s177 + $0x208] sm:$0xff] %v308
                %v310 = vld [vmem:[%s176 + $0x810] sm:$0xff]
                %311 = vst [vmem:[%s177 + $0x210] sm:$0xff] %v310
                %v312 = vld [vmem:[%s176 + $0x818] sm:$0xff]
                %313 = vst [vmem:[%s177 + $0x218] sm:$0xff] %v312
                %v314 = vld [vmem:[%s176 + $0x880] sm:$0xff]
                %315 = vst [vmem:[%s177 + $0x220] sm:$0xff] %v314
                %v316 = vld [vmem:[%s176 + $0x888] sm:$0xff]
                %317 = vst [vmem:[%s177 + $0x228] sm:$0xff] %v316
                %v318 = vld [vmem:[%s176 + $0x890] sm:$0xff]
                %319 = vst [vmem:[%s177 + $0x230] sm:$0xff] %v318
                %v320 = vld [vmem:[%s176 + $0x898] sm:$0xff]
                %321 = vst [vmem:[%s177 + $0x238] sm:$0xff] %v320
                %v322 = vld [vmem:[%s176 + $0x900] sm:$0xff]
                %323 = vst [vmem:[%s177 + $0x240] sm:$0xff] %v322
                %v324 = vld [vmem:[%s176 + $0x908] sm:$0xff]
                %325 = vst [vmem:[%s177 + $0x248] sm:$0xff] %v324
                %v326 = vld [vmem:[%s176 + $0x910] sm:$0xff]
                %327 = vst [vmem:[%s177 + $0x250] sm:$0xff] %v326
                %v328 = vld [vmem:[%s176 + $0x918] sm:$0xff]
                %329 = vst [vmem:[%s177 + $0x258] sm:$0xff] %v328
                %v330 = vld [vmem:[%s176 + $0x980] sm:$0xff]
                %331 = vst [vmem:[%s177 + $0x260] sm:$0xff] %v330
                %v332 = vld [vmem:[%s176 + $0x988] sm:$0xff]
                %333 = vst [vmem:[%s177 + $0x268] sm:$0xff] %v332
                %v334 = vld [vmem:[%s176 + $0x990] sm:$0xff]
                %335 = vst [vmem:[%s177 + $0x270] sm:$0xff] %v334
                %v336 = vld [vmem:[%s176 + $0x998] sm:$0xff]
                %337 = vst [vmem:[%s177 + $0x278] sm:$0xff] %v336
                %v338 = vld [vmem:[%s176 + $0xa00] sm:$0xff]
                %339 = vst [vmem:[%s177 + $0x280] sm:$0xff] %v338
                %v340 = vld [vmem:[%s176 + $0xa08] sm:$0xff]
                %341 = vst [vmem:[%s177 + $0x288] sm:$0xff] %v340
                %v342 = vld [vmem:[%s176 + $0xa10] sm:$0xff]
                %343 = vst [vmem:[%s177 + $0x290] sm:$0xff] %v342
                %v344 = vld [vmem:[%s176 + $0xa18] sm:$0xff]
                %345 = vst [vmem:[%s177 + $0x298] sm:$0xff] %v344
                %v346 = vld [vmem:[%s176 + $0xa80] sm:$0xff]
                %347 = vst [vmem:[%s177 + $0x2a0] sm:$0xff] %v346
                %v348 = vld [vmem:[%s176 + $0xa88] sm:$0xff]
                %349 = vst [vmem:[%s177 + $0x2a8] sm:$0xff] %v348
                %v350 = vld [vmem:[%s176 + $0xa90] sm:$0xff]
                %351 = vst [vmem:[%s177 + $0x2b0] sm:$0xff] %v350
                %v352 = vld [vmem:[%s176 + $0xa98] sm:$0xff]
                %353 = vst [vmem:[%s177 + $0x2b8] sm:$0xff] %v352
                %v354 = vld [vmem:[%s176 + $0xb00] sm:$0xff]
                %355 = vst [vmem:[%s177 + $0x2c0] sm:$0xff] %v354
                %v356 = vld [vmem:[%s176 + $0xb08] sm:$0xff]
                %357 = vst [vmem:[%s177 + $0x2c8] sm:$0xff] %v356
                %v358 = vld [vmem:[%s176 + $0xb10] sm:$0xff]
                %359 = vst [vmem:[%s177 + $0x2d0] sm:$0xff] %v358
                %v360 = vld [vmem:[%s176 + $0xb18] sm:$0xff]
                %361 = vst [vmem:[%s177 + $0x2d8] sm:$0xff] %v360
                %v362 = vld [vmem:[%s176 + $0xb80] sm:$0xff]
                %363 = vst [vmem:[%s177 + $0x2e0] sm:$0xff] %v362
                %v364 = vld [vmem:[%s176 + $0xb88] sm:$0xff]
                %365 = vst [vmem:[%s177 + $0x2e8] sm:$0xff] %v364
                %v366 = vld [vmem:[%s176 + $0xb90] sm:$0xff]
                %367 = vst [vmem:[%s177 + $0x2f0] sm:$0xff] %v366
                %v368 = vld [vmem:[%s176 + $0xb98] sm:$0xff]
                %369 = vst [vmem:[%s177 + $0x2f8] sm:$0xff] %v368
                %v370 = vld [vmem:[%s176 + $0xc00] sm:$0xff]
                %371 = vst [vmem:[%s177 + $0x300] sm:$0xff] %v370
                %v372 = vld [vmem:[%s176 + $0xc08] sm:$0xff]
                %373 = vst [vmem:[%s177 + $0x308] sm:$0xff] %v372
                %v374 = vld [vmem:[%s176 + $0xc10] sm:$0xff]
                %375 = vst [vmem:[%s177 + $0x310] sm:$0xff] %v374
                %v376 = vld [vmem:[%s176 + $0xc18] sm:$0xff]
                %377 = vst [vmem:[%s177 + $0x318] sm:$0xff] %v376
                %v378 = vld [vmem:[%s176 + $0xc80] sm:$0xff]
                %379 = vst [vmem:[%s177 + $0x320] sm:$0xff] %v378
                %v380 = vld [vmem:[%s176 + $0xc88] sm:$0xff]
                %381 = vst [vmem:[%s177 + $0x328] sm:$0xff] %v380
                %v382 = vld [vmem:[%s176 + $0xc90] sm:$0xff]
                %383 = vst [vmem:[%s177 + $0x330] sm:$0xff] %v382
                %v384 = vld [vmem:[%s176 + $0xc98] sm:$0xff]
                %385 = vst [vmem:[%s177 + $0x338] sm:$0xff] %v384
                %v386 = vld [vmem:[%s176 + $0xd00] sm:$0xff]
                %387 = vst [vmem:[%s177 + $0x340] sm:$0xff] %v386
                %v388 = vld [vmem:[%s176 + $0xd08] sm:$0xff]
                %389 = vst [vmem:[%s177 + $0x348] sm:$0xff] %v388
                %v390 = vld [vmem:[%s176 + $0xd10] sm:$0xff]
                %391 = vst [vmem:[%s177 + $0x350] sm:$0xff] %v390
                %v392 = vld [vmem:[%s176 + $0xd18] sm:$0xff]
                %393 = vst [vmem:[%s177 + $0x358] sm:$0xff] %v392
                %v394 = vld [vmem:[%s176 + $0xd80] sm:$0xff]
                %395 = vst [vmem:[%s177 + $0x360] sm:$0xff] %v394
                %v396 = vld [vmem:[%s176 + $0xd88] sm:$0xff]
                %397 = vst [vmem:[%s177 + $0x368] sm:$0xff] %v396
                %v398 = vld [vmem:[%s176 + $0xd90] sm:$0xff]
                %399 = vst [vmem:[%s177 + $0x370] sm:$0xff] %v398
                %v400 = vld [vmem:[%s176 + $0xd98] sm:$0xff]
                %401 = vst [vmem:[%s177 + $0x378] sm:$0xff] %v400
                %v402 = vld [vmem:[%s176 + $0xe00] sm:$0xff]
                %403 = vst [vmem:[%s177 + $0x380] sm:$0xff] %v402
                %v404 = vld [vmem:[%s176 + $0xe08] sm:$0xff]
                %405 = vst [vmem:[%s177 + $0x388] sm:$0xff] %v404
                %v406 = vld [vmem:[%s176 + $0xe10] sm:$0xff]
                %407 = vst [vmem:[%s177 + $0x390] sm:$0xff] %v406
                %v408 = vld [vmem:[%s176 + $0xe18] sm:$0xff]
                %409 = vst [vmem:[%s177 + $0x398] sm:$0xff] %v408
                %v410 = vld [vmem:[%s176 + $0xe80] sm:$0xff]
                %411 = vst [vmem:[%s177 + $0x3a0] sm:$0xff] %v410
                %v412 = vld [vmem:[%s176 + $0xe88] sm:$0xff]
                %413 = vst [vmem:[%s177 + $0x3a8] sm:$0xff] %v412
                %v414 = vld [vmem:[%s176 + $0xe90] sm:$0xff]
                %415 = vst [vmem:[%s177 + $0x3b0] sm:$0xff] %v414
                %v416 = vld [vmem:[%s176 + $0xe98] sm:$0xff]
                %417 = vst [vmem:[%s177 + $0x3b8] sm:$0xff] %v416
                %v418 = vld [vmem:[%s176 + $0xf00] sm:$0xff]
                %419 = vst [vmem:[%s177 + $0x3c0] sm:$0xff] %v418
                %v420 = vld [vmem:[%s176 + $0xf08] sm:$0xff]
                %421 = vst [vmem:[%s177 + $0x3c8] sm:$0xff] %v420
                %v422 = vld [vmem:[%s176 + $0xf10] sm:$0xff]
                %423 = vst [vmem:[%s177 + $0x3d0] sm:$0xff] %v422
                %v424 = vld [vmem:[%s176 + $0xf18] sm:$0xff]
                %425 = vst [vmem:[%s177 + $0x3d8] sm:$0xff] %v424
                %v426 = vld [vmem:[%s176 + $0xf80] sm:$0xff]
                %427 = vst [vmem:[%s177 + $0x3e0] sm:$0xff] %v426
                %v428 = vld [vmem:[%s176 + $0xf88] sm:$0xff]
                %429 = vst [vmem:[%s177 + $0x3e8] sm:$0xff] %v428
                %v430 = vld [vmem:[%s176 + $0xf90] sm:$0xff]
                %431 = vst [vmem:[%s177 + $0x3f0] sm:$0xff] %v430
                %v432 = vld [vmem:[%s176 + $0xf98] sm:$0xff]
                %433 = vst [vmem:[%s177 + $0x3f8] sm:$0xff] %v432
                %v434 = vld [vmem:[%s176 + $0x1000] sm:$0xff]
                %435 = vst [vmem:[%s177 + $0x400] sm:$0xff] %v434
                %v436 = vld [vmem:[%s176 + $0x1008] sm:$0xff]
                %437 = vst [vmem:[%s177 + $0x408] sm:$0xff] %v436
                %v438 = vld [vmem:[%s176 + $0x1010] sm:$0xff]
                %439 = vst [vmem:[%s177 + $0x410] sm:$0xff] %v438
                %v440 = vld [vmem:[%s176 + $0x1018] sm:$0xff]
                %441 = vst [vmem:[%s177 + $0x418] sm:$0xff] %v440
                %v442 = vld [vmem:[%s176 + $0x1080] sm:$0xff]
                %443 = vst [vmem:[%s177 + $0x420] sm:$0xff] %v442
                %v444 = vld [vmem:[%s176 + $0x1088] sm:$0xff]
                %445 = vst [vmem:[%s177 + $0x428] sm:$0xff] %v444
                %v446 = vld [vmem:[%s176 + $0x1090] sm:$0xff]
                %447 = vst [vmem:[%s177 + $0x430] sm:$0xff] %v446
                %v448 = vld [vmem:[%s176 + $0x1098] sm:$0xff]
                %449 = vst [vmem:[%s177 + $0x438] sm:$0xff] %v448
                %v450 = vld [vmem:[%s176 + $0x1100] sm:$0xff]
                %451 = vst [vmem:[%s177 + $0x440] sm:$0xff] %v450
                %v452 = vld [vmem:[%s176 + $0x1108] sm:$0xff]
                %453 = vst [vmem:[%s177 + $0x448] sm:$0xff] %v452
                %v454 = vld [vmem:[%s176 + $0x1110] sm:$0xff]
                %455 = vst [vmem:[%s177 + $0x450] sm:$0xff] %v454
                %v456 = vld [vmem:[%s176 + $0x1118] sm:$0xff]
                %457 = vst [vmem:[%s177 + $0x458] sm:$0xff] %v456
                %v458 = vld [vmem:[%s176 + $0x1180] sm:$0xff]
                %459 = vst [vmem:[%s177 + $0x460] sm:$0xff] %v458
                %v460 = vld [vmem:[%s176 + $0x1188] sm:$0xff]
                %461 = vst [vmem:[%s177 + $0x468] sm:$0xff] %v460
                %v462 = vld [vmem:[%s176 + $0x1190] sm:$0xff]
                %463 = vst [vmem:[%s177 + $0x470] sm:$0xff] %v462
                %v464 = vld [vmem:[%s176 + $0x1198] sm:$0xff]
                %465 = vst [vmem:[%s177 + $0x478] sm:$0xff] %v464
                %v466 = vld [vmem:[%s176 + $0x1200] sm:$0xff]
                %467 = vst [vmem:[%s177 + $0x480] sm:$0xff] %v466
                %v468 = vld [vmem:[%s176 + $0x1208] sm:$0xff]
                %469 = vst [vmem:[%s177 + $0x488] sm:$0xff] %v468
                %v470 = vld [vmem:[%s176 + $0x1210] sm:$0xff]
                %471 = vst [vmem:[%s177 + $0x490] sm:$0xff] %v470
                %v472 = vld [vmem:[%s176 + $0x1218] sm:$0xff]
                %473 = vst [vmem:[%s177 + $0x498] sm:$0xff] %v472
                %v474 = vld [vmem:[%s176 + $0x1280] sm:$0xff]
                %475 = vst [vmem:[%s177 + $0x4a0] sm:$0xff] %v474
                %v476 = vld [vmem:[%s176 + $0x1288] sm:$0xff]
                %477 = vst [vmem:[%s177 + $0x4a8] sm:$0xff] %v476
                %v478 = vld [vmem:[%s176 + $0x1290] sm:$0xff]
                %479 = vst [vmem:[%s177 + $0x4b0] sm:$0xff] %v478
                %v480 = vld [vmem:[%s176 + $0x1298] sm:$0xff]
                %481 = vst [vmem:[%s177 + $0x4b8] sm:$0xff] %v480
                %v482 = vld [vmem:[%s176 + $0x1300] sm:$0xff]
                %483 = vst [vmem:[%s177 + $0x4c0] sm:$0xff] %v482
                %v484 = vld [vmem:[%s176 + $0x1308] sm:$0xff]
                %485 = vst [vmem:[%s177 + $0x4c8] sm:$0xff] %v484
                %v486 = vld [vmem:[%s176 + $0x1310] sm:$0xff]
                %487 = vst [vmem:[%s177 + $0x4d0] sm:$0xff] %v486
                %v488 = vld [vmem:[%s176 + $0x1318] sm:$0xff]
                %489 = vst [vmem:[%s177 + $0x4d8] sm:$0xff] %v488
                %v490 = vld [vmem:[%s176 + $0x1380] sm:$0xff]
                %491 = vst [vmem:[%s177 + $0x4e0] sm:$0xff] %v490
                %v492 = vld [vmem:[%s176 + $0x1388] sm:$0xff]
                %493 = vst [vmem:[%s177 + $0x4e8] sm:$0xff] %v492
                %v494 = vld [vmem:[%s176 + $0x1390] sm:$0xff]
                %495 = vst [vmem:[%s177 + $0x4f0] sm:$0xff] %v494
                %v496 = vld [vmem:[%s176 + $0x1398] sm:$0xff]
                %497 = vst [vmem:[%s177 + $0x4f8] sm:$0xff] %v496
                %v498 = vld [vmem:[%s176 + $0x1400] sm:$0xff]
                %499 = vst [vmem:[%s177 + $0x500] sm:$0xff] %v498
                %v500 = vld [vmem:[%s176 + $0x1408] sm:$0xff]
                %501 = vst [vmem:[%s177 + $0x508] sm:$0xff] %v500
                %v502 = vld [vmem:[%s176 + $0x1410] sm:$0xff]
                %503 = vst [vmem:[%s177 + $0x510] sm:$0xff] %v502
                %v504 = vld [vmem:[%s176 + $0x1418] sm:$0xff]
                %505 = vst [vmem:[%s177 + $0x518] sm:$0xff] %v504
                %v506 = vld [vmem:[%s176 + $0x1480] sm:$0xff]
                %507 = vst [vmem:[%s177 + $0x520] sm:$0xff] %v506
                %v508 = vld [vmem:[%s176 + $0x1488] sm:$0xff]
                %509 = vst [vmem:[%s177 + $0x528] sm:$0xff] %v508
                %v510 = vld [vmem:[%s176 + $0x1490] sm:$0xff]
                %511 = vst [vmem:[%s177 + $0x530] sm:$0xff] %v510
                %v512 = vld [vmem:[%s176 + $0x1498] sm:$0xff]
                %513 = vst [vmem:[%s177 + $0x538] sm:$0xff] %v512
                %v514 = vld [vmem:[%s176 + $0x1500] sm:$0xff]
                %515 = vst [vmem:[%s177 + $0x540] sm:$0xff] %v514
                %v516 = vld [vmem:[%s176 + $0x1508] sm:$0xff]
                %517 = vst [vmem:[%s177 + $0x548] sm:$0xff] %v516
                %v518 = vld [vmem:[%s176 + $0x1510] sm:$0xff]
                %519 = vst [vmem:[%s177 + $0x550] sm:$0xff] %v518
                %v520 = vld [vmem:[%s176 + $0x1518] sm:$0xff]
                %521 = vst [vmem:[%s177 + $0x558] sm:$0xff] %v520
                %v522 = vld [vmem:[%s176 + $0x1580] sm:$0xff]
                %523 = vst [vmem:[%s177 + $0x560] sm:$0xff] %v522
                %v524 = vld [vmem:[%s176 + $0x1588] sm:$0xff]
                %525 = vst [vmem:[%s177 + $0x568] sm:$0xff] %v524
                %v526 = vld [vmem:[%s176 + $0x1590] sm:$0xff]
                %527 = vst [vmem:[%s177 + $0x570] sm:$0xff] %v526
                %v528 = vld [vmem:[%s176 + $0x1598] sm:$0xff]
                %529 = vst [vmem:[%s177 + $0x578] sm:$0xff] %v528
                %v530 = vld [vmem:[%s176 + $0x1600] sm:$0xff]
                %531 = vst [vmem:[%s177 + $0x580] sm:$0xff] %v530
                %v532 = vld [vmem:[%s176 + $0x1608] sm:$0xff]
                %533 = vst [vmem:[%s177 + $0x588] sm:$0xff] %v532
                %v534 = vld [vmem:[%s176 + $0x1610] sm:$0xff]
                %535 = vst [vmem:[%s177 + $0x590] sm:$0xff] %v534
                %v536 = vld [vmem:[%s176 + $0x1618] sm:$0xff]
                %537 = vst [vmem:[%s177 + $0x598] sm:$0xff] %v536
                %v538 = vld [vmem:[%s176 + $0x1680] sm:$0xff]
                %539 = vst [vmem:[%s177 + $0x5a0] sm:$0xff] %v538
                %v540 = vld [vmem:[%s176 + $0x1688] sm:$0xff]
                %541 = vst [vmem:[%s177 + $0x5a8] sm:$0xff] %v540
                %v542 = vld [vmem:[%s176 + $0x1690] sm:$0xff]
                %543 = vst [vmem:[%s177 + $0x5b0] sm:$0xff] %v542
                %v544 = vld [vmem:[%s176 + $0x1698] sm:$0xff]
                %545 = vst [vmem:[%s177 + $0x5b8] sm:$0xff] %v544
                %v546 = vld [vmem:[%s176 + $0x1700] sm:$0xff]
                %547 = vst [vmem:[%s177 + $0x5c0] sm:$0xff] %v546
                %v548 = vld [vmem:[%s176 + $0x1708] sm:$0xff]
                %549 = vst [vmem:[%s177 + $0x5c8] sm:$0xff] %v548
                %v550 = vld [vmem:[%s176 + $0x1710] sm:$0xff]
                %551 = vst [vmem:[%s177 + $0x5d0] sm:$0xff] %v550
                %v552 = vld [vmem:[%s176 + $0x1718] sm:$0xff]
                %553 = vst [vmem:[%s177 + $0x5d8] sm:$0xff] %v552
                %v554 = vld [vmem:[%s176 + $0x1780] sm:$0xff]
                %555 = vst [vmem:[%s177 + $0x5e0] sm:$0xff] %v554
                %v556 = vld [vmem:[%s176 + $0x1788] sm:$0xff]
                %557 = vst [vmem:[%s177 + $0x5e8] sm:$0xff] %v556
                %v558 = vld [vmem:[%s176 + $0x1790] sm:$0xff]
                %559 = vst [vmem:[%s177 + $0x5f0] sm:$0xff] %v558
                %v560 = vld [vmem:[%s176 + $0x1798] sm:$0xff]
                %561 = vst [vmem:[%s177 + $0x5f8] sm:$0xff] %v560
                %v562 = vld [vmem:[%s176 + $0x1800] sm:$0xff]
                %563 = vst [vmem:[%s177 + $0x600] sm:$0xff] %v562
                %v564 = vld [vmem:[%s176 + $0x1808] sm:$0xff]
                %565 = vst [vmem:[%s177 + $0x608] sm:$0xff] %v564
                %v566 = vld [vmem:[%s176 + $0x1810] sm:$0xff]
                %567 = vst [vmem:[%s177 + $0x610] sm:$0xff] %v566
                %v568 = vld [vmem:[%s176 + $0x1818] sm:$0xff]
                %569 = vst [vmem:[%s177 + $0x618] sm:$0xff] %v568
                %v570 = vld [vmem:[%s176 + $0x1880] sm:$0xff]
                %571 = vst [vmem:[%s177 + $0x620] sm:$0xff] %v570
                %v572 = vld [vmem:[%s176 + $0x1888] sm:$0xff]
                %573 = vst [vmem:[%s177 + $0x628] sm:$0xff] %v572
                %v574 = vld [vmem:[%s176 + $0x1890] sm:$0xff]
                %575 = vst [vmem:[%s177 + $0x630] sm:$0xff] %v574
                %v576 = vld [vmem:[%s176 + $0x1898] sm:$0xff]
                %577 = vst [vmem:[%s177 + $0x638] sm:$0xff] %v576
                %v578 = vld [vmem:[%s176 + $0x1900] sm:$0xff]
                %579 = vst [vmem:[%s177 + $0x640] sm:$0xff] %v578
                %v580 = vld [vmem:[%s176 + $0x1908] sm:$0xff]
                %581 = vst [vmem:[%s177 + $0x648] sm:$0xff] %v580
                %v582 = vld [vmem:[%s176 + $0x1910] sm:$0xff]
                %583 = vst [vmem:[%s177 + $0x650] sm:$0xff] %v582
                %v584 = vld [vmem:[%s176 + $0x1918] sm:$0xff]
                %585 = vst [vmem:[%s177 + $0x658] sm:$0xff] %v584
                %v586 = vld [vmem:[%s176 + $0x1980] sm:$0xff]
                %587 = vst [vmem:[%s177 + $0x660] sm:$0xff] %v586
                %v588 = vld [vmem:[%s176 + $0x1988] sm:$0xff]
                %589 = vst [vmem:[%s177 + $0x668] sm:$0xff] %v588
                %v590 = vld [vmem:[%s176 + $0x1990] sm:$0xff]
                %591 = vst [vmem:[%s177 + $0x670] sm:$0xff] %v590
                %v592 = vld [vmem:[%s176 + $0x1998] sm:$0xff]
                %593 = vst [vmem:[%s177 + $0x678] sm:$0xff] %v592
                %v594 = vld [vmem:[%s176 + $0x1a00] sm:$0xff]
                %595 = vst [vmem:[%s177 + $0x680] sm:$0xff] %v594
                %v596 = vld [vmem:[%s176 + $0x1a08] sm:$0xff]
                %597 = vst [vmem:[%s177 + $0x688] sm:$0xff] %v596
                %v598 = vld [vmem:[%s176 + $0x1a10] sm:$0xff]
                %599 = vst [vmem:[%s177 + $0x690] sm:$0xff] %v598
                %v600 = vld [vmem:[%s176 + $0x1a18] sm:$0xff]
                %601 = vst [vmem:[%s177 + $0x698] sm:$0xff] %v600
                %v602 = vld [vmem:[%s176 + $0x1a80] sm:$0xff]
                %603 = vst [vmem:[%s177 + $0x6a0] sm:$0xff] %v602
                %v604 = vld [vmem:[%s176 + $0x1a88] sm:$0xff]
                %605 = vst [vmem:[%s177 + $0x6a8] sm:$0xff] %v604
                %v606 = vld [vmem:[%s176 + $0x1a90] sm:$0xff]
                %607 = vst [vmem:[%s177 + $0x6b0] sm:$0xff] %v606
                %v608 = vld [vmem:[%s176 + $0x1a98] sm:$0xff]
                %609 = vst [vmem:[%s177 + $0x6b8] sm:$0xff] %v608
                %v610 = vld [vmem:[%s176 + $0x1b00] sm:$0xff]
                %611 = vst [vmem:[%s177 + $0x6c0] sm:$0xff] %v610
                %v612 = vld [vmem:[%s176 + $0x1b08] sm:$0xff]
                %613 = vst [vmem:[%s177 + $0x6c8] sm:$0xff] %v612
                %v614 = vld [vmem:[%s176 + $0x1b10] sm:$0xff]
                %615 = vst [vmem:[%s177 + $0x6d0] sm:$0xff] %v614
                %v616 = vld [vmem:[%s176 + $0x1b18] sm:$0xff]
                %617 = vst [vmem:[%s177 + $0x6d8] sm:$0xff] %v616
                %v618 = vld [vmem:[%s176 + $0x1b80] sm:$0xff]
                %619 = vst [vmem:[%s177 + $0x6e0] sm:$0xff] %v618
                %v620 = vld [vmem:[%s176 + $0x1b88] sm:$0xff]
                %621 = vst [vmem:[%s177 + $0x6e8] sm:$0xff] %v620
                %v622 = vld [vmem:[%s176 + $0x1b90] sm:$0xff]
                %623 = vst [vmem:[%s177 + $0x6f0] sm:$0xff] %v622
                %v624 = vld [vmem:[%s176 + $0x1b98] sm:$0xff]
                %625 = vst [vmem:[%s177 + $0x6f8] sm:$0xff] %v624
                %v626 = vld [vmem:[%s176 + $0x1c00] sm:$0xff]
                %627 = vst [vmem:[%s177 + $0x700] sm:$0xff] %v626
                %v628 = vld [vmem:[%s176 + $0x1c08] sm:$0xff]
                %629 = vst [vmem:[%s177 + $0x708] sm:$0xff] %v628
                %v630 = vld [vmem:[%s176 + $0x1c10] sm:$0xff]
                %631 = vst [vmem:[%s177 + $0x710] sm:$0xff] %v630
                %v632 = vld [vmem:[%s176 + $0x1c18] sm:$0xff]
                %633 = vst [vmem:[%s177 + $0x718] sm:$0xff] %v632
                %v634 = vld [vmem:[%s176 + $0x1c80] sm:$0xff]
                %635 = vst [vmem:[%s177 + $0x720] sm:$0xff] %v634
                %v636 = vld [vmem:[%s176 + $0x1c88] sm:$0xff]
                %637 = vst [vmem:[%s177 + $0x728] sm:$0xff] %v636
                %v638 = vld [vmem:[%s176 + $0x1c90] sm:$0xff]
                %639 = vst [vmem:[%s177 + $0x730] sm:$0xff] %v638
                %v640 = vld [vmem:[%s176 + $0x1c98] sm:$0xff]
                %641 = vst [vmem:[%s177 + $0x738] sm:$0xff] %v640
                %v642 = vld [vmem:[%s176 + $0x1d00] sm:$0xff]
                %643 = vst [vmem:[%s177 + $0x740] sm:$0xff] %v642
                %v644 = vld [vmem:[%s176 + $0x1d08] sm:$0xff]
                %645 = vst [vmem:[%s177 + $0x748] sm:$0xff] %v644
                %v646 = vld [vmem:[%s176 + $0x1d10] sm:$0xff]
                %647 = vst [vmem:[%s177 + $0x750] sm:$0xff] %v646
                %v648 = vld [vmem:[%s176 + $0x1d18] sm:$0xff]
                %649 = vst [vmem:[%s177 + $0x758] sm:$0xff] %v648
                %v650 = vld [vmem:[%s176 + $0x1d80] sm:$0xff]
                %651 = vst [vmem:[%s177 + $0x760] sm:$0xff] %v650
                %v652 = vld [vmem:[%s176 + $0x1d88] sm:$0xff]
                %653 = vst [vmem:[%s177 + $0x768] sm:$0xff] %v652
                %v654 = vld [vmem:[%s176 + $0x1d90] sm:$0xff]
                %655 = vst [vmem:[%s177 + $0x770] sm:$0xff] %v654
                %v656 = vld [vmem:[%s176 + $0x1d98] sm:$0xff]
                %657 = vst [vmem:[%s177 + $0x778] sm:$0xff] %v656
                %v658 = vld [vmem:[%s176 + $0x1e00] sm:$0xff]
                %659 = vst [vmem:[%s177 + $0x780] sm:$0xff] %v658
                %v660 = vld [vmem:[%s176 + $0x1e08] sm:$0xff]
                %661 = vst [vmem:[%s177 + $0x788] sm:$0xff] %v660
                %v662 = vld [vmem:[%s176 + $0x1e10] sm:$0xff]
                %663 = vst [vmem:[%s177 + $0x790] sm:$0xff] %v662
                %v664 = vld [vmem:[%s176 + $0x1e18] sm:$0xff]
                %665 = vst [vmem:[%s177 + $0x798] sm:$0xff] %v664
                %v666 = vld [vmem:[%s176 + $0x1e80] sm:$0xff]
                %667 = vst [vmem:[%s177 + $0x7a0] sm:$0xff] %v666
                %v668 = vld [vmem:[%s176 + $0x1e88] sm:$0xff]
                %669 = vst [vmem:[%s177 + $0x7a8] sm:$0xff] %v668
                %v670 = vld [vmem:[%s176 + $0x1e90] sm:$0xff]
                %671 = vst [vmem:[%s177 + $0x7b0] sm:$0xff] %v670
                %v672 = vld [vmem:[%s176 + $0x1e98] sm:$0xff]
                %673 = vst [vmem:[%s177 + $0x7b8] sm:$0xff] %v672
                %v674 = vld [vmem:[%s176 + $0x1f00] sm:$0xff]
                %675 = vst [vmem:[%s177 + $0x7c0] sm:$0xff] %v674
                %v676 = vld [vmem:[%s176 + $0x1f08] sm:$0xff]
                %677 = vst [vmem:[%s177 + $0x7c8] sm:$0xff] %v676
                %v678 = vld [vmem:[%s176 + $0x1f10] sm:$0xff]
                %679 = vst [vmem:[%s177 + $0x7d0] sm:$0xff] %v678
                %v680 = vld [vmem:[%s176 + $0x1f18] sm:$0xff]
                %681 = vst [vmem:[%s177 + $0x7d8] sm:$0xff] %v680
                %v682 = vld [vmem:[%s176 + $0x1f80] sm:$0xff]
                %683 = vst [vmem:[%s177 + $0x7e0] sm:$0xff] %v682
                %v684 = vld [vmem:[%s176 + $0x1f88] sm:$0xff]
                %685 = vst [vmem:[%s177 + $0x7e8] sm:$0xff] %v684
                %v686 = vld [vmem:[%s176 + $0x1f90] sm:$0xff]
                %687 = vst [vmem:[%s177 + $0x7f0] sm:$0xff] %v686
                %v688 = vld [vmem:[%s176 + $0x1f98] sm:$0xff]
                %689 = vst [vmem:[%s177 + $0x7f8] sm:$0xff] %v688
              $region37: #{decoder_layer.8} parent=31 // loop_footer
                %s175 = sadd.s32 1, %s171
              $region38: #{decoder_layer.8} parent=31 // loop_footer_branch
                %170 = sbr.rel target = $region34
              $region39: #{decoder_layer.8} parent=31 // loop_exit
                _
            $region32: #{decoder_layer.8} parent=27 // pred_fallthru
              _
            // Predicated region
            $region40: #{decoder_layer.8} parent=27 // pred_check
              _
            $region41: #{decoder_layer.8} parent=27 // pred_check_branch
              %691 = sbr.rel target = $region43
            $region42: #{decoder_layer.8} parent=27 // pred_region
              _
            $region43: #{decoder_layer.8} parent=27 // pred_fallthru
              _
          $region28: #{decoder_layer.8} parent=23 // pred_fallthru
            _
          %692 = vnop
        $region24: #{decoder_layer.8} parent=19 // pred_fallthru
          _
        // Predicated region
        $region44: #{decoder_layer.8} parent=19 // pred_check
          %p693 = pneg %p93
        $region45: #{decoder_layer.8} parent=19 // pred_check_branch
          %695 = sbr.rel (%p693) target = $region47
        $region46: #{decoder_layer.8} parent=19 // pred_region
          %s696 = smul.u32 4, %s17
          %p697 = scmp.lt.s32.totalorder %s696, 15
          %s698 = scalar_select %p697, %s696, 15
          %s699 = scalar_lea.vmem %s2, %s698
          %s700 = smul.u32 4, %s17
        $region47: #{decoder_layer.8} parent=19 // pred_fallthru
          _
      $region20: #{decoder_layer.8} parent=5 // pred_fallthru
        _
      %p701 = scmp.le.s32.totalorder 1, %s9
      %p702 = scmp.lt.s32.totalorder %s9, 5
      %p703 = pnand %p701, %p702
      %p704 = pneg %p703
      // Predicated region
      $region48: #{decoder_layer.8} parent=5 // pred_check
        _
      $region49: #{decoder_layer.8} parent=5 // pred_check_branch
        %706 = sbr.rel (%p703) target = $region51
      $region50: #{decoder_layer.8} parent=5 // pred_region
        %s707 = ssub.s32 %s9, 1
        %s708 = sand.u32 %s60, 1
        %s709 = sand.u32 %s60, 1
        %s710 = smul.addr %s709, 2048
        %s711 = scalar_lea.vmem [#allocation2], %s710
        // Predicated region
        $region52: #{decoder_layer.8} parent=50 // pred_check
          %p712 = pneg %p73
        $region53: #{decoder_layer.8} parent=50 // pred_check_branch
          %714 = sbr.rel (%p712) target = $region55
        $region54: #{decoder_layer.8} parent=50 // pred_region
          _
        $region55: #{decoder_layer.8} parent=50 // pred_fallthru
          _
        %s715 = smul.u32 4, %s18
        %p716 = scmp.lt.s32.totalorder %s715, 3
        %s717 = scalar_select %p716, %s715, 3
        %s718 = smul.addr %s717, 4
        %s719 = smul.addr %s718, 8
        %s720 = scalar_lea.vmem %s0, %s719
        %p721 = pneg %p47
        %p722 = pneg %p44
        %s723 = sand.u32 %s60, 1
        %s724 = sand.u32 %s60, 1
        %s725 = smul.addr %s724, 2048
        %s726 = scalar_lea.vmem [#allocation2], %s725
        %p727 = pneg %p73
        %p728 = pneg %p70
        %s729 = smul.u32 4, %s19
        %p730 = scmp.lt.s32.totalorder %s729, 15
        %s731 = scalar_select %p730, %s729, 15
        %s732 = scalar_lea.vmem %s2, %s731
        %p733 = pneg %p99
        %p734 = pneg %p96
        %p735 = pneg %p127
        %p736 = pneg %p124
        %s737 = sand.u32 %s114, 1
        %s738 = sand.u32 %s114, 1
        %s739 = smul.addr %s738, 128
        %s740 = scalar_lea.vmem [#allocation3], %s739
        %s741 = smul.u32 4, %s18
        %p742 = scmp.lt.s32.totalorder %s741, 3
        %s743 = scalar_select %p742, %s741, 3
        %s744 = smul.addr %s743, 4
        %s745 = smul.addr %s744, 8
        %s746 = scalar_lea.vmem %s0, %s745
        %s747 = smul.u32 4, %s18
        %s748 = smul.u32 4, %s19
        %s749 = smul.u32 4, %s19
        %p750 = scmp.lt.s32.totalorder %s749, 15
        %s751 = scalar_select %p750, %s749, 15
        %s752 = scalar_lea.vmem %s2, %s751
        %s753 = smul.u32 4, %s19
        %s754 = smul.u32 4, %s18
        %s755 = smul.u32 4, %s19
        %v756 = vld [vmem:[%s746] sm:$0xff]
        %v757 = vld [vmem:[%s746 + $0x8] sm:$0xff]
        %v758 = vld [vmem:[%s746 + $0x10] sm:$0xff]
        %v759 = vld [vmem:[%s746 + $0x18] sm:$0xff]
        %v760 = vld [vmem:[%s746 + $0x20] sm:$0xff]
        %v761 = vld [vmem:[%s746 + $0x28] sm:$0xff]
        %v762 = vld [vmem:[%s746 + $0x30] sm:$0xff]
        %v763 = vld [vmem:[%s746 + $0x38] sm:$0xff]
        %v764 = vld [vmem:[%s746 + $0x40] sm:$0xff]
        %v765 = vld [vmem:[%s746 + $0x48] sm:$0xff]
        %v766 = vld [vmem:[%s746 + $0x50] sm:$0xff]
        %v767 = vld [vmem:[%s746 + $0x58] sm:$0xff]
        %v768 = vld [vmem:[%s746 + $0x60] sm:$0xff]
        %v769 = vld [vmem:[%s746 + $0x68] sm:$0xff]
        %v770 = vld [vmem:[%s746 + $0x70] sm:$0xff]
        %v771 = vld [vmem:[%s746 + $0x78] sm:$0xff]
        %v772 = vld [vmem:[%s711] sm:$0xff]
        %v773 = vld [vmem:[%s711 + $0x8] sm:$0xff]
        %v774 = vld [vmem:[%s711 + $0x10] sm:$0xff]
        %v775 = vld [vmem:[%s711 + $0x18] sm:$0xff]
        %v776 = vld [vmem:[%s711 + $0x20] sm:$0xff]
        %v777 = vld [vmem:[%s711 + $0x28] sm:$0xff]
        %v778 = vld [vmem:[%s711 + $0x30] sm:$0xff]
        %v779 = vld [vmem:[%s711 + $0x38] sm:$0xff]
        %v780 = vld [vmem:[%s711 + $0x40] sm:$0xff]
        %v781 = vld [vmem:[%s711 + $0x48] sm:$0xff]
        %v782 = vld [vmem:[%s711 + $0x50] sm:$0xff]
        %v783 = vld [vmem:[%s711 + $0x58] sm:$0xff]
        %v784 = vld [vmem:[%s711 + $0x60] sm:$0xff]
        %v785 = vld [vmem:[%s711 + $0x68] sm:$0xff]
        %v786 = vld [vmem:[%s711 + $0x70] sm:$0xff]
        %v787 = vld [vmem:[%s711 + $0x78] sm:$0xff]
        %v788 = vld [vmem:[%s711 + $0x80] sm:$0xff]
        %v789 = vld [vmem:[%s711 + $0x88] sm:$0xff]
        %v790 = vld [vmem:[%s711 + $0x90] sm:$0xff]
        %v791 = vld [vmem:[%s711 + $0x98] sm:$0xff]
        %v792 = vld [vmem:[%s711 + $0xa0] sm:$0xff]
        %v793 = vld [vmem:[%s711 + $0xa8] sm:$0xff]
        %v794 = vld [vmem:[%s711 + $0xb0] sm:$0xff]
        %v795 = vld [vmem:[%s711 + $0xb8] sm:$0xff]
        %v796 = vld [vmem:[%s711 + $0xc0] sm:$0xff]
        %v797 = vld [vmem:[%s711 + $0xc8] sm:$0xff]
        %v798 = vld [vmem:[%s711 + $0xd0] sm:$0xff]
        %v799 = vld [vmem:[%s711 + $0xd8] sm:$0xff]
        %v800 = vld [vmem:[%s711 + $0xe0] sm:$0xff]
        %v801 = vld [vmem:[%s711 + $0xe8] sm:$0xff]
        %v802 = vld [vmem:[%s711 + $0xf0] sm:$0xff]
        %v803 = vld [vmem:[%s711 + $0xf8] sm:$0xff]
        %v804 = vld [vmem:[%s711 + $0x100] sm:$0xff]
        %v805 = vld [vmem:[%s711 + $0x108] sm:$0xff]
        %v806 = vld [vmem:[%s711 + $0x110] sm:$0xff]
        %v807 = vld [vmem:[%s711 + $0x118] sm:$0xff]
        %v808 = vld [vmem:[%s711 + $0x120] sm:$0xff]
        %v809 = vld [vmem:[%s711 + $0x128] sm:$0xff]
        %v810 = vld [vmem:[%s711 + $0x130] sm:$0xff]
        %v811 = vld [vmem:[%s711 + $0x138] sm:$0xff]
        %v812 = vld [vmem:[%s711 + $0x140] sm:$0xff]
        %v813 = vld [vmem:[%s711 + $0x148] sm:$0xff]
        %v814 = vld [vmem:[%s711 + $0x150] sm:$0xff]
        %v815 = vld [vmem:[%s711 + $0x158] sm:$0xff]
        %v816 = vld [vmem:[%s711 + $0x160] sm:$0xff]
        %v817 = vld [vmem:[%s711 + $0x168] sm:$0xff]
        %v818 = vld [vmem:[%s711 + $0x170] sm:$0xff]
        %v819 = vld [vmem:[%s711 + $0x178] sm:$0xff]
        %v820 = vld [vmem:[%s711 + $0x180] sm:$0xff]
        %v821 = vld [vmem:[%s711 + $0x188] sm:$0xff]
        %v822 = vld [vmem:[%s711 + $0x190] sm:$0xff]
        %v823 = vld [vmem:[%s711 + $0x198] sm:$0xff]
        %v824 = vld [vmem:[%s711 + $0x1a0] sm:$0xff]
        %v825 = vld [vmem:[%s711 + $0x1a8] sm:$0xff]
        %v826 = vld [vmem:[%s711 + $0x1b0] sm:$0xff]
        %v827 = vld [vmem:[%s711 + $0x1b8] sm:$0xff]
        %v828 = vld [vmem:[%s711 + $0x1c0] sm:$0xff]
        %v829 = vld [vmem:[%s711 + $0x1c8] sm:$0xff]
        %v830 = vld [vmem:[%s711 + $0x1d0] sm:$0xff]
        %v831 = vld [vmem:[%s711 + $0x1d8] sm:$0xff]
        %v832 = vld [vmem:[%s711 + $0x1e0] sm:$0xff]
        %v833 = vld [vmem:[%s711 + $0x1e8] sm:$0xff]
        %v834 = vld [vmem:[%s711 + $0x1f0] sm:$0xff]
        %v835 = vld [vmem:[%s711 + $0x1f8] sm:$0xff]
        %v836 = vld [vmem:[%s711 + $0x200] sm:$0xff]
        %v837 = vld [vmem:[%s711 + $0x208] sm:$0xff]
        %v838 = vld [vmem:[%s711 + $0x210] sm:$0xff]
        %v839 = vld [vmem:[%s711 + $0x218] sm:$0xff]
        %v840 = vld [vmem:[%s711 + $0x220] sm:$0xff]
        %v841 = vld [vmem:[%s711 + $0x228] sm:$0xff]
        %v842 = vld [vmem:[%s711 + $0x230] sm:$0xff]
        %v843 = vld [vmem:[%s711 + $0x238] sm:$0xff]
        %v844 = vld [vmem:[%s711 + $0x240] sm:$0xff]
        %v845 = vld [vmem:[%s711 + $0x248] sm:$0xff]
        %v846 = vld [vmem:[%s711 + $0x250] sm:$0xff]
        %v847 = vld [vmem:[%s711 + $0x258] sm:$0xff]
        %v848 = vld [vmem:[%s711 + $0x260] sm:$0xff]
        %v849 = vld [vmem:[%s711 + $0x268] sm:$0xff]
        %v850 = vld [vmem:[%s711 + $0x270] sm:$0xff]
        %v851 = vld [vmem:[%s711 + $0x278] sm:$0xff]
        %v852 = vld [vmem:[%s711 + $0x280] sm:$0xff]
        %v853 = vld [vmem:[%s711 + $0x288] sm:$0xff]
        %v854 = vld [vmem:[%s711 + $0x290] sm:$0xff]
        %v855 = vld [vmem:[%s711 + $0x298] sm:$0xff]
        %v856 = vld [vmem:[%s711 + $0x2a0] sm:$0xff]
        %v857 = vld [vmem:[%s711 + $0x2a8] sm:$0xff]
        %v858 = vld [vmem:[%s711 + $0x2b0] sm:$0xff]
        %v859 = vld [vmem:[%s711 + $0x2b8] sm:$0xff]
        %v860 = vld [vmem:[%s711 + $0x2c0] sm:$0xff]
        %v861 = vld [vmem:[%s711 + $0x2c8] sm:$0xff]
        %v862 = vld [vmem:[%s711 + $0x2d0] sm:$0xff]
        %v863 = vld [vmem:[%s711 + $0x2d8] sm:$0xff]
        %v864 = vld [vmem:[%s711 + $0x2e0] sm:$0xff]
        %v865 = vld [vmem:[%s711 + $0x2e8] sm:$0xff]
        %v866 = vld [vmem:[%s711 + $0x2f0] sm:$0xff]
        %v867 = vld [vmem:[%s711 + $0x2f8] sm:$0xff]
        %v868 = vld [vmem:[%s711 + $0x300] sm:$0xff]
        %v869 = vld [vmem:[%s711 + $0x308] sm:$0xff]
        %v870 = vld [vmem:[%s711 + $0x310] sm:$0xff]
        %v871 = vld [vmem:[%s711 + $0x318] sm:$0xff]
        %v872 = vld [vmem:[%s711 + $0x320] sm:$0xff]
        %v873 = vld [vmem:[%s711 + $0x328] sm:$0xff]
        %v874 = vld [vmem:[%s711 + $0x330] sm:$0xff]
        %v875 = vld [vmem:[%s711 + $0x338] sm:$0xff]
        %v876 = vld [vmem:[%s711 + $0x340] sm:$0xff]
        %v877 = vld [vmem:[%s711 + $0x348] sm:$0xff]
        %v878 = vld [vmem:[%s711 + $0x350] sm:$0xff]
        %v879 = vld [vmem:[%s711 + $0x358] sm:$0xff]
        %v880 = vld [vmem:[%s711 + $0x360] sm:$0xff]
        %v881 = vld [vmem:[%s711 + $0x368] sm:$0xff]
        %v882 = vld [vmem:[%s711 + $0x370] sm:$0xff]
        %v883 = vld [vmem:[%s711 + $0x378] sm:$0xff]
        %v884 = vld [vmem:[%s711 + $0x380] sm:$0xff]
        %v885 = vld [vmem:[%s711 + $0x388] sm:$0xff]
        %v886 = vld [vmem:[%s711 + $0x390] sm:$0xff]
        %v887 = vld [vmem:[%s711 + $0x398] sm:$0xff]
        %v888 = vld [vmem:[%s711 + $0x3a0] sm:$0xff]
        %v889 = vld [vmem:[%s711 + $0x3a8] sm:$0xff]
        %v890 = vld [vmem:[%s711 + $0x3b0] sm:$0xff]
        %v891 = vld [vmem:[%s711 + $0x3b8] sm:$0xff]
        %v892 = vld [vmem:[%s711 + $0x3c0] sm:$0xff]
        %v893 = vld [vmem:[%s711 + $0x3c8] sm:$0xff]
        %v894 = vld [vmem:[%s711 + $0x3d0] sm:$0xff]
        %v895 = vld [vmem:[%s711 + $0x3d8] sm:$0xff]
        %v896 = vld [vmem:[%s711 + $0x3e0] sm:$0xff]
        %v897 = vld [vmem:[%s711 + $0x3e8] sm:$0xff]
        %v898 = vld [vmem:[%s711 + $0x3f0] sm:$0xff]
        %v899 = vld [vmem:[%s711 + $0x3f8] sm:$0xff]
        %v900 = vld [vmem:[%s711 + $0x400] sm:$0xff]
        %v901 = vld [vmem:[%s711 + $0x408] sm:$0xff]
        %v902 = vld [vmem:[%s711 + $0x410] sm:$0xff]
        %v903 = vld [vmem:[%s711 + $0x418] sm:$0xff]
        %v904 = vld [vmem:[%s711 + $0x420] sm:$0xff]
        %v905 = vld [vmem:[%s711 + $0x428] sm:$0xff]
        %v906 = vld [vmem:[%s711 + $0x430] sm:$0xff]
        %v907 = vld [vmem:[%s711 + $0x438] sm:$0xff]
        %v908 = vld [vmem:[%s711 + $0x440] sm:$0xff]
        %v909 = vld [vmem:[%s711 + $0x448] sm:$0xff]
        %v910 = vld [vmem:[%s711 + $0x450] sm:$0xff]
        %v911 = vld [vmem:[%s711 + $0x458] sm:$0xff]
        %v912 = vld [vmem:[%s711 + $0x460] sm:$0xff]
        %v913 = vld [vmem:[%s711 + $0x468] sm:$0xff]
        %v914 = vld [vmem:[%s711 + $0x470] sm:$0xff]
        %v915 = vld [vmem:[%s711 + $0x478] sm:$0xff]
        %v916 = vld [vmem:[%s711 + $0x480] sm:$0xff]
        %v917 = vld [vmem:[%s711 + $0x488] sm:$0xff]
        %v918 = vld [vmem:[%s711 + $0x490] sm:$0xff]
        %v919 = vld [vmem:[%s711 + $0x498] sm:$0xff]
        %v920 = vld [vmem:[%s711 + $0x4a0] sm:$0xff]
        %v921 = vld [vmem:[%s711 + $0x4a8] sm:$0xff]
        %v922 = vld [vmem:[%s711 + $0x4b0] sm:$0xff]
        %v923 = vld [vmem:[%s711 + $0x4b8] sm:$0xff]
        %v924 = vld [vmem:[%s711 + $0x4c0] sm:$0xff]
        %v925 = vld [vmem:[%s711 + $0x4c8] sm:$0xff]
        %v926 = vld [vmem:[%s711 + $0x4d0] sm:$0xff]
        %v927 = vld [vmem:[%s711 + $0x4d8] sm:$0xff]
        %v928 = vld [vmem:[%s711 + $0x4e0] sm:$0xff]
        %v929 = vld [vmem:[%s711 + $0x4e8] sm:$0xff]
        %v930 = vld [vmem:[%s711 + $0x4f0] sm:$0xff]
        %v931 = vld [vmem:[%s711 + $0x4f8] sm:$0xff]
        %v932 = vld [vmem:[%s711 + $0x500] sm:$0xff]
        %v933 = vld [vmem:[%s711 + $0x508] sm:$0xff]
        %v934 = vld [vmem:[%s711 + $0x510] sm:$0xff]
        %v935 = vld [vmem:[%s711 + $0x518] sm:$0xff]
        %v936 = vld [vmem:[%s711 + $0x520] sm:$0xff]
        %v937 = vld [vmem:[%s711 + $0x528] sm:$0xff]
        %v938 = vld [vmem:[%s711 + $0x530] sm:$0xff]
        %v939 = vld [vmem:[%s711 + $0x538] sm:$0xff]
        %v940 = vld [vmem:[%s711 + $0x540] sm:$0xff]
        %v941 = vld [vmem:[%s711 + $0x548] sm:$0xff]
        %v942 = vld [vmem:[%s711 + $0x550] sm:$0xff]
        %v943 = vld [vmem:[%s711 + $0x558] sm:$0xff]
        %v944 = vld [vmem:[%s711 + $0x560] sm:$0xff]
        %v945 = vld [vmem:[%s711 + $0x568] sm:$0xff]
        %v946 = vld [vmem:[%s711 + $0x570] sm:$0xff]
        %v947 = vld [vmem:[%s711 + $0x578] sm:$0xff]
        %v948 = vld [vmem:[%s711 + $0x580] sm:$0xff]
        %v949 = vld [vmem:[%s711 + $0x588] sm:$0xff]
        %v950 = vld [vmem:[%s711 + $0x590] sm:$0xff]
        %v951 = vld [vmem:[%s711 + $0x598] sm:$0xff]
        %v952 = vld [vmem:[%s711 + $0x5a0] sm:$0xff]
        %v953 = vld [vmem:[%s711 + $0x5a8] sm:$0xff]
        %v954 = vld [vmem:[%s711 + $0x5b0] sm:$0xff]
        %v955 = vld [vmem:[%s711 + $0x5b8] sm:$0xff]
        %v956 = vld [vmem:[%s711 + $0x5c0] sm:$0xff]
        %v957 = vld [vmem:[%s711 + $0x5c8] sm:$0xff]
        %v958 = vld [vmem:[%s711 + $0x5d0] sm:$0xff]
        %v959 = vld [vmem:[%s711 + $0x5d8] sm:$0xff]
        %v960 = vld [vmem:[%s711 + $0x5e0] sm:$0xff]
        %v961 = vld [vmem:[%s711 + $0x5e8] sm:$0xff]
        %v962 = vld [vmem:[%s711 + $0x5f0] sm:$0xff]
        %v963 = vld [vmem:[%s711 + $0x5f8] sm:$0xff]
        %v964 = vld [vmem:[%s711 + $0x600] sm:$0xff]
        %v965 = vld [vmem:[%s711 + $0x608] sm:$0xff]
        %v966 = vld [vmem:[%s711 + $0x610] sm:$0xff]
        %v967 = vld [vmem:[%s711 + $0x618] sm:$0xff]
        %v968 = vld [vmem:[%s711 + $0x620] sm:$0xff]
        %v969 = vld [vmem:[%s711 + $0x628] sm:$0xff]
        %v970 = vld [vmem:[%s711 + $0x630] sm:$0xff]
        %v971 = vld [vmem:[%s711 + $0x638] sm:$0xff]
        %v972 = vld [vmem:[%s711 + $0x640] sm:$0xff]
        %v973 = vld [vmem:[%s711 + $0x648] sm:$0xff]
        %v974 = vld [vmem:[%s711 + $0x650] sm:$0xff]
        %v975 = vld [vmem:[%s711 + $0x658] sm:$0xff]
        %v976 = vld [vmem:[%s711 + $0x660] sm:$0xff]
        %v977 = vld [vmem:[%s711 + $0x668] sm:$0xff]
        %v978 = vld [vmem:[%s711 + $0x670] sm:$0xff]
        %v979 = vld [vmem:[%s711 + $0x678] sm:$0xff]
        %v980 = vld [vmem:[%s711 + $0x680] sm:$0xff]
        %v981 = vld [vmem:[%s711 + $0x688] sm:$0xff]
        %v982 = vld [vmem:[%s711 + $0x690] sm:$0xff]
        %v983 = vld [vmem:[%s711 + $0x698] sm:$0xff]
        %v984 = vld [vmem:[%s711 + $0x6a0] sm:$0xff]
        %v985 = vld [vmem:[%s711 + $0x6a8] sm:$0xff]
        %v986 = vld [vmem:[%s711 + $0x6b0] sm:$0xff]
        %v987 = vld [vmem:[%s711 + $0x6b8] sm:$0xff]
        %v988 = vld [vmem:[%s711 + $0x6c0] sm:$0xff]
        %v989 = vld [vmem:[%s711 + $0x6c8] sm:$0xff]
        %v990 = vld [vmem:[%s711 + $0x6d0] sm:$0xff]
        %v991 = vld [vmem:[%s711 + $0x6d8] sm:$0xff]
        %v992 = vld [vmem:[%s711 + $0x6e0] sm:$0xff]
        %v993 = vld [vmem:[%s711 + $0x6e8] sm:$0xff]
        %v994 = vld [vmem:[%s711 + $0x6f0] sm:$0xff]
        %v995 = vld [vmem:[%s711 + $0x6f8] sm:$0xff]
        %v996 = vld [vmem:[%s711 + $0x700] sm:$0xff]
        %v997 = vld [vmem:[%s711 + $0x708] sm:$0xff]
        %v998 = vld [vmem:[%s711 + $0x710] sm:$0xff]
        %v999 = vld [vmem:[%s711 + $0x718] sm:$0xff]
        %v1000 = vld [vmem:[%s711 + $0x720] sm:$0xff]
        %v1001 = vld [vmem:[%s711 + $0x728] sm:$0xff]
        %v1002 = vld [vmem:[%s711 + $0x730] sm:$0xff]
        %v1003 = vld [vmem:[%s711 + $0x738] sm:$0xff]
        %v1004 = vld [vmem:[%s711 + $0x740] sm:$0xff]
        %v1005 = vld [vmem:[%s711 + $0x748] sm:$0xff]
        %v1006 = vld [vmem:[%s711 + $0x750] sm:$0xff]
        %v1007 = vld [vmem:[%s711 + $0x758] sm:$0xff]
        %v1008 = vld [vmem:[%s711 + $0x760] sm:$0xff]
        %v1009 = vld [vmem:[%s711 + $0x768] sm:$0xff]
        %v1010 = vld [vmem:[%s711 + $0x770] sm:$0xff]
        %v1011 = vld [vmem:[%s711 + $0x778] sm:$0xff]
        %v1012 = vld [vmem:[%s711 + $0x780] sm:$0xff]
        %v1013 = vld [vmem:[%s711 + $0x788] sm:$0xff]
        %v1014 = vld [vmem:[%s711 + $0x790] sm:$0xff]
        %v1015 = vld [vmem:[%s711 + $0x798] sm:$0xff]
        %v1016 = vld [vmem:[%s711 + $0x7a0] sm:$0xff]
        %v1017 = vld [vmem:[%s711 + $0x7a8] sm:$0xff]
        %v1018 = vld [vmem:[%s711 + $0x7b0] sm:$0xff]
        %v1019 = vld [vmem:[%s711 + $0x7b8] sm:$0xff]
        %v1020 = vld [vmem:[%s711 + $0x7c0] sm:$0xff]
        %v1021 = vld [vmem:[%s711 + $0x7c8] sm:$0xff]
        %v1022 = vld [vmem:[%s711 + $0x7d0] sm:$0xff]
        %v1023 = vld [vmem:[%s711 + $0x7d8] sm:$0xff]
        %v1024 = vld [vmem:[%s711 + $0x7e0] sm:$0xff]
        %v1025 = vld [vmem:[%s711 + $0x7e8] sm:$0xff]
        %v1026 = vld [vmem:[%s711 + $0x7f0] sm:$0xff]
        %v1027 = vld [vmem:[%s711 + $0x7f8] sm:$0xff]
        %v1028 = vld [vmem:[%s752] sm:$0xf]
        %v1030 = vperm.slane %v1028, 0
        %v1031 = vperm.slane %v1028, 1
        %v1032 = vperm.slane %v1028, 2
        %v1033 = vperm.slane %v1028, 3
        %1038 = vmatpush.msra.mxu0 %v832
        %1039 = vmatpush.msra.mxu0 %v828
        %1040 = vmatpush.msra.mxu0 %v824
        %1041 = vmatpush.msra.mxu0 %v820
        %1042 = vmatpush.msra.mxu0 %v816
        %1043 = vmatpush.msra.mxu0 %v812
        %1044 = vmatpush.msra.mxu0 %v808
        %1045 = vmatpush.msra.mxu0 %v804
        %1046 = vmatpush.msra.mxu0 %v800
        %1047 = vmatpush.msra.mxu0 %v796
        %1048 = vmatpush.msra.mxu0 %v792
        %1049 = vmatpush.msra.mxu0 %v788
        %1050 = vmatpush.msra.mxu0 %v784
        %1051 = vmatpush.msra.mxu0 %v780
        %1052 = vmatpush.msra.mxu0 %v776
        %1053 = vmatpush.msra.mxu0 %v772
        %1054 = vmatmul.f32.gmra.mxu0 %v756
        %v1055 = vpop.f32.mrf.mxu0
        %v1056 = vadd.f32 %v1030, %v1055
        %1057 = vmatmul.f32.gmra.mxu0 %v760
        %v1058 = vpop.f32.mrf.mxu0
        %v1059 = vadd.f32 %v1030, %v1058
        %1060 = vmatmul.f32.gmra.mxu0 %v764
        %v1061 = vpop.f32.mrf.mxu0
        %v1062 = vadd.f32 %v1030, %v1061
        %1063 = vmatmul.f32.gmra.mxu0 %v768
        %v1064 = vpop.f32.mrf.mxu0
        %v1065 = vadd.f32 %v1030, %v1064
        %1066 = vdwg.mxu0
        %1067 = vmatpush.msra.mxu0 %v896
        %1068 = vmatpush.msra.mxu0 %v892
        %1069 = vmatpush.msra.mxu0 %v888
        %1070 = vmatpush.msra.mxu0 %v884
        %1071 = vmatpush.msra.mxu0 %v880
        %1072 = vmatpush.msra.mxu0 %v876
        %1073 = vmatpush.msra.mxu0 %v872
        %1074 = vmatpush.msra.mxu0 %v868
        %1075 = vmatpush.msra.mxu0 %v864
        %1076 = vmatpush.msra.mxu0 %v860
        %1077 = vmatpush.msra.mxu0 %v856
        %1078 = vmatpush.msra.mxu0 %v852
        %1079 = vmatpush.msra.mxu0 %v848
        %1080 = vmatpush.msra.mxu0 %v844
        %1081 = vmatpush.msra.mxu0 %v840
        %1082 = vmatpush.msra.mxu0 %v836
        %1083 = vmatmul.f32.gmra.mxu0 %v757
        %v1084 = vpop.f32.mrf.mxu0
        %v1085 = vadd.f32 %v1056, %v1084
        %1086 = vmatmul.f32.gmra.mxu0 %v761
        %v1087 = vpop.f32.mrf.mxu0
        %v1088 = vadd.f32 %v1059, %v1087
        %1089 = vmatmul.f32.gmra.mxu0 %v765
        %v1090 = vpop.f32.mrf.mxu0
        %v1091 = vadd.f32 %v1062, %v1090
        %1092 = vmatmul.f32.gmra.mxu0 %v769
        %v1093 = vpop.f32.mrf.mxu0
        %v1094 = vadd.f32 %v1065, %v1093
        %1095 = vdwg.mxu0
        %1096 = vmatpush.msra.mxu0 %v960
        %1097 = vmatpush.msra.mxu0 %v956
        %1098 = vmatpush.msra.mxu0 %v952
        %1099 = vmatpush.msra.mxu0 %v948
        %1100 = vmatpush.msra.mxu0 %v944
        %1101 = vmatpush.msra.mxu0 %v940
        %1102 = vmatpush.msra.mxu0 %v936
        %1103 = vmatpush.msra.mxu0 %v932
        %1104 = vmatpush.msra.mxu0 %v928
        %1105 = vmatpush.msra.mxu0 %v924
        %1106 = vmatpush.msra.mxu0 %v920
        %1107 = vmatpush.msra.mxu0 %v916
        %1108 = vmatpush.msra.mxu0 %v912
        %1109 = vmatpush.msra.mxu0 %v908
        %1110 = vmatpush.msra.mxu0 %v904
        %1111 = vmatpush.msra.mxu0 %v900
        %1112 = vmatmul.f32.gmra.mxu0 %v758
        %v1113 = vpop.f32.mrf.mxu0
        %v1114 = vadd.f32 %v1085, %v1113
        %1115 = vmatmul.f32.gmra.mxu0 %v762
        %v1116 = vpop.f32.mrf.mxu0
        %v1117 = vadd.f32 %v1088, %v1116
        %1118 = vmatmul.f32.gmra.mxu0 %v766
        %v1119 = vpop.f32.mrf.mxu0
        %v1120 = vadd.f32 %v1091, %v1119
        %1121 = vmatmul.f32.gmra.mxu0 %v770
        %v1122 = vpop.f32.mrf.mxu0
        %v1123 = vadd.f32 %v1094, %v1122
        %1124 = vdwg.mxu0
        %1125 = vmatpush.msra.mxu0 %v1024
        %1126 = vmatpush.msra.mxu0 %v1020
        %1127 = vmatpush.msra.mxu0 %v1016
        %1128 = vmatpush.msra.mxu0 %v1012
        %1129 = vmatpush.msra.mxu0 %v1008
        %1130 = vmatpush.msra.mxu0 %v1004
        %1131 = vmatpush.msra.mxu0 %v1000
        %1132 = vmatpush.msra.mxu0 %v996
        %1133 = vmatpush.msra.mxu0 %v992
        %1134 = vmatpush.msra.mxu0 %v988
        %1135 = vmatpush.msra.mxu0 %v984
        %1136 = vmatpush.msra.mxu0 %v980
        %1137 = vmatpush.msra.mxu0 %v976
        %1138 = vmatpush.msra.mxu0 %v972
        %1139 = vmatpush.msra.mxu0 %v968
        %1140 = vmatpush.msra.mxu0 %v964
        %1141 = vmatmul.f32.gmra.mxu0 %v759
        %v1142 = vpop.f32.mrf.mxu0
        %v1143 = vadd.f32 %v1114, %v1142
        %1144 = vmatmul.f32.gmra.mxu0 %v763
        %v1145 = vpop.f32.mrf.mxu0
        %v1146 = vadd.f32 %v1117, %v1145
        %1147 = vmatmul.f32.gmra.mxu0 %v767
        %v1148 = vpop.f32.mrf.mxu0
        %v1149 = vadd.f32 %v1120, %v1148
        %1150 = vmatmul.f32.gmra.mxu0 %v771
        %v1151 = vpop.f32.mrf.mxu0
        %v1152 = vadd.f32 %v1123, %v1151
        %1153 = vdwg.mxu0
        %1154 = vmatpush.msra.mxu0 %v833
        %1155 = vmatpush.msra.mxu0 %v829
        %1156 = vmatpush.msra.mxu0 %v825
        %1157 = vmatpush.msra.mxu0 %v821
        %1158 = vmatpush.msra.mxu0 %v817
        %1159 = vmatpush.msra.mxu0 %v813
        %1160 = vmatpush.msra.mxu0 %v809
        %1161 = vmatpush.msra.mxu0 %v805
        %1162 = vmatpush.msra.mxu0 %v801
        %1163 = vmatpush.msra.mxu0 %v797
        %1164 = vmatpush.msra.mxu0 %v793
        %1165 = vmatpush.msra.mxu0 %v789
        %1166 = vmatpush.msra.mxu0 %v785
        %1167 = vmatpush.msra.mxu0 %v781
        %1168 = vmatpush.msra.mxu0 %v777
        %1169 = vmatpush.msra.mxu0 %v773
        %1170 = vmatmul.f32.gmra.mxu0 %v756
        %v1171 = vpop.f32.mrf.mxu0
        %v1172 = vadd.f32 %v1031, %v1171
        %1173 = vmatmul.f32.gmra.mxu0 %v760
        %v1174 = vpop.f32.mrf.mxu0
        %v1175 = vadd.f32 %v1031, %v1174
        %1176 = vmatmul.f32.gmra.mxu0 %v764
        %v1177 = vpop.f32.mrf.mxu0
        %v1178 = vadd.f32 %v1031, %v1177
        %1179 = vmatmul.f32.gmra.mxu0 %v768
        %v1180 = vpop.f32.mrf.mxu0
        %v1181 = vadd.f32 %v1031, %v1180
        %1182 = vdwg.mxu0
        %1183 = vmatpush.msra.mxu0 %v897
        %1184 = vmatpush.msra.mxu0 %v893
        %1185 = vmatpush.msra.mxu0 %v889
        %1186 = vmatpush.msra.mxu0 %v885
        %1187 = vmatpush.msra.mxu0 %v881
        %1188 = vmatpush.msra.mxu0 %v877
        %1189 = vmatpush.msra.mxu0 %v873
        %1190 = vmatpush.msra.mxu0 %v869
        %1191 = vmatpush.msra.mxu0 %v865
        %1192 = vmatpush.msra.mxu0 %v861
        %1193 = vmatpush.msra.mxu0 %v857
        %1194 = vmatpush.msra.mxu0 %v853
        %1195 = vmatpush.msra.mxu0 %v849
        %1196 = vmatpush.msra.mxu0 %v845
        %1197 = vmatpush.msra.mxu0 %v841
        %1198 = vmatpush.msra.mxu0 %v837
        %1199 = vmatmul.f32.gmra.mxu0 %v757
        %v1200 = vpop.f32.mrf.mxu0
        %v1201 = vadd.f32 %v1172, %v1200
        %1202 = vmatmul.f32.gmra.mxu0 %v761
        %v1203 = vpop.f32.mrf.mxu0
        %v1204 = vadd.f32 %v1175, %v1203
        %1205 = vmatmul.f32.gmra.mxu0 %v765
        %v1206 = vpop.f32.mrf.mxu0
        %v1207 = vadd.f32 %v1178, %v1206
        %1208 = vmatmul.f32.gmra.mxu0 %v769
        %v1209 = vpop.f32.mrf.mxu0
        %v1210 = vadd.f32 %v1181, %v1209
        %1211 = vdwg.mxu0
        %1212 = vmatpush.msra.mxu0 %v961
        %1213 = vmatpush.msra.mxu0 %v957
        %1214 = vmatpush.msra.mxu0 %v953
        %1215 = vmatpush.msra.mxu0 %v949
        %1216 = vmatpush.msra.mxu0 %v945
        %1217 = vmatpush.msra.mxu0 %v941
        %1218 = vmatpush.msra.mxu0 %v937
        %1219 = vmatpush.msra.mxu0 %v933
        %1220 = vmatpush.msra.mxu0 %v929
        %1221 = vmatpush.msra.mxu0 %v925
        %1222 = vmatpush.msra.mxu0 %v921
        %1223 = vmatpush.msra.mxu0 %v917
        %1224 = vmatpush.msra.mxu0 %v913
        %1225 = vmatpush.msra.mxu0 %v909
        %1226 = vmatpush.msra.mxu0 %v905
        %1227 = vmatpush.msra.mxu0 %v901
        %1228 = vmatmul.f32.gmra.mxu0 %v758
        %v1229 = vpop.f32.mrf.mxu0
        %v1230 = vadd.f32 %v1201, %v1229
        %1231 = vmatmul.f32.gmra.mxu0 %v762
        %v1232 = vpop.f32.mrf.mxu0
        %v1233 = vadd.f32 %v1204, %v1232
        %1234 = vmatmul.f32.gmra.mxu0 %v766
        %v1235 = vpop.f32.mrf.mxu0
        %v1236 = vadd.f32 %v1207, %v1235
        %1237 = vmatmul.f32.gmra.mxu0 %v770
        %v1238 = vpop.f32.mrf.mxu0
        %v1239 = vadd.f32 %v1210, %v1238
        %1240 = vdwg.mxu0
        %1241 = vmatpush.msra.mxu0 %v1025
        %1242 = vmatpush.msra.mxu0 %v1021
        %1243 = vmatpush.msra.mxu0 %v1017
        %1244 = vmatpush.msra.mxu0 %v1013
        %1245 = vmatpush.msra.mxu0 %v1009
        %1246 = vmatpush.msra.mxu0 %v1005
        %1247 = vmatpush.msra.mxu0 %v1001
        %1248 = vmatpush.msra.mxu0 %v997
        %1249 = vmatpush.msra.mxu0 %v993
        %1250 = vmatpush.msra.mxu0 %v989
        %1251 = vmatpush.msra.mxu0 %v985
        %1252 = vmatpush.msra.mxu0 %v981
        %1253 = vmatpush.msra.mxu0 %v977
        %1254 = vmatpush.msra.mxu0 %v973
        %1255 = vmatpush.msra.mxu0 %v969
        %1256 = vmatpush.msra.mxu0 %v965
        %1257 = vmatmul.f32.gmra.mxu0 %v759
        %v1258 = vpop.f32.mrf.mxu0
        %v1259 = vadd.f32 %v1230, %v1258
        %1260 = vmatmul.f32.gmra.mxu0 %v763
        %v1261 = vpop.f32.mrf.mxu0
        %v1262 = vadd.f32 %v1233, %v1261
        %1263 = vmatmul.f32.gmra.mxu0 %v767
        %v1264 = vpop.f32.mrf.mxu0
        %v1265 = vadd.f32 %v1236, %v1264
        %1266 = vmatmul.f32.gmra.mxu0 %v771
        %v1267 = vpop.f32.mrf.mxu0
        %v1268 = vadd.f32 %v1239, %v1267
        %1269 = vdwg.mxu0
        %1270 = vmatpush.msra.mxu0 %v834
        %1271 = vmatpush.msra.mxu0 %v830
        %1272 = vmatpush.msra.mxu0 %v826
        %1273 = vmatpush.msra.mxu0 %v822
        %1274 = vmatpush.msra.mxu0 %v818
        %1275 = vmatpush.msra.mxu0 %v814
        %1276 = vmatpush.msra.mxu0 %v810
        %1277 = vmatpush.msra.mxu0 %v806
        %1278 = vmatpush.msra.mxu0 %v802
        %1279 = vmatpush.msra.mxu0 %v798
        %1280 = vmatpush.msra.mxu0 %v794
        %1281 = vmatpush.msra.mxu0 %v790
        %1282 = vmatpush.msra.mxu0 %v786
        %1283 = vmatpush.msra.mxu0 %v782
        %1284 = vmatpush.msra.mxu0 %v778
        %1285 = vmatpush.msra.mxu0 %v774
        %1286 = vmatmul.f32.gmra.mxu0 %v756
        %v1287 = vpop.f32.mrf.mxu0
        %v1288 = vadd.f32 %v1032, %v1287
        %1289 = vmatmul.f32.gmra.mxu0 %v760
        %v1290 = vpop.f32.mrf.mxu0
        %v1291 = vadd.f32 %v1032, %v1290
        %1292 = vmatmul.f32.gmra.mxu0 %v764
        %v1293 = vpop.f32.mrf.mxu0
        %v1294 = vadd.f32 %v1032, %v1293
        %1295 = vmatmul.f32.gmra.mxu0 %v768
        %v1296 = vpop.f32.mrf.mxu0
        %v1297 = vadd.f32 %v1032, %v1296
        %1298 = vdwg.mxu0
        %1299 = vmatpush.msra.mxu0 %v898
        %1300 = vmatpush.msra.mxu0 %v894
        %1301 = vmatpush.msra.mxu0 %v890
        %1302 = vmatpush.msra.mxu0 %v886
        %1303 = vmatpush.msra.mxu0 %v882
        %1304 = vmatpush.msra.mxu0 %v878
        %1305 = vmatpush.msra.mxu0 %v874
        %1306 = vmatpush.msra.mxu0 %v870
        %1307 = vmatpush.msra.mxu0 %v866
        %1308 = vmatpush.msra.mxu0 %v862
        %1309 = vmatpush.msra.mxu0 %v858
        %1310 = vmatpush.msra.mxu0 %v854
        %1311 = vmatpush.msra.mxu0 %v850
        %1312 = vmatpush.msra.mxu0 %v846
        %1313 = vmatpush.msra.mxu0 %v842
        %1314 = vmatpush.msra.mxu0 %v838
        %1315 = vmatmul.f32.gmra.mxu0 %v757
        %v1316 = vpop.f32.mrf.mxu0
        %v1317 = vadd.f32 %v1288, %v1316
        %1318 = vmatmul.f32.gmra.mxu0 %v761
        %v1319 = vpop.f32.mrf.mxu0
        %v1320 = vadd.f32 %v1291, %v1319
        %1321 = vmatmul.f32.gmra.mxu0 %v765
        %v1322 = vpop.f32.mrf.mxu0
        %v1323 = vadd.f32 %v1294, %v1322
        %1324 = vmatmul.f32.gmra.mxu0 %v769
        %v1325 = vpop.f32.mrf.mxu0
        %v1326 = vadd.f32 %v1297, %v1325
        %1327 = vdwg.mxu0
        %1328 = vmatpush.msra.mxu0 %v962
        %1329 = vmatpush.msra.mxu0 %v958
        %1330 = vmatpush.msra.mxu0 %v954
        %1331 = vmatpush.msra.mxu0 %v950
        %1332 = vmatpush.msra.mxu0 %v946
        %1333 = vmatpush.msra.mxu0 %v942
        %1334 = vmatpush.msra.mxu0 %v938
        %1335 = vmatpush.msra.mxu0 %v934
        %1336 = vmatpush.msra.mxu0 %v930
        %1337 = vmatpush.msra.mxu0 %v926
        %1338 = vmatpush.msra.mxu0 %v922
        %1339 = vmatpush.msra.mxu0 %v918
        %1340 = vmatpush.msra.mxu0 %v914
        %1341 = vmatpush.msra.mxu0 %v910
        %1342 = vmatpush.msra.mxu0 %v906
        %1343 = vmatpush.msra.mxu0 %v902
        %1344 = vmatmul.f32.gmra.mxu0 %v758
        %v1345 = vpop.f32.mrf.mxu0
        %v1346 = vadd.f32 %v1317, %v1345
        %1347 = vmatmul.f32.gmra.mxu0 %v762
        %v1348 = vpop.f32.mrf.mxu0
        %v1349 = vadd.f32 %v1320, %v1348
        %1350 = vmatmul.f32.gmra.mxu0 %v766
        %v1351 = vpop.f32.mrf.mxu0
        %v1352 = vadd.f32 %v1323, %v1351
        %1353 = vmatmul.f32.gmra.mxu0 %v770
        %v1354 = vpop.f32.mrf.mxu0
        %v1355 = vadd.f32 %v1326, %v1354
        %1356 = vdwg.mxu0
        %1357 = vmatpush.msra.mxu0 %v1026
        %1358 = vmatpush.msra.mxu0 %v1022
        %1359 = vmatpush.msra.mxu0 %v1018
        %1360 = vmatpush.msra.mxu0 %v1014
        %1361 = vmatpush.msra.mxu0 %v1010
        %1362 = vmatpush.msra.mxu0 %v1006
        %1363 = vmatpush.msra.mxu0 %v1002
        %1364 = vmatpush.msra.mxu0 %v998
        %1365 = vmatpush.msra.mxu0 %v994
        %1366 = vmatpush.msra.mxu0 %v990
        %1367 = vmatpush.msra.mxu0 %v986
        %1368 = vmatpush.msra.mxu0 %v982
        %1369 = vmatpush.msra.mxu0 %v978
        %1370 = vmatpush.msra.mxu0 %v974
        %1371 = vmatpush.msra.mxu0 %v970
        %1372 = vmatpush.msra.mxu0 %v966
        %1373 = vmatmul.f32.gmra.mxu0 %v759
        %v1374 = vpop.f32.mrf.mxu0
        %v1375 = vadd.f32 %v1346, %v1374
        %1376 = vmatmul.f32.gmra.mxu0 %v763
        %v1377 = vpop.f32.mrf.mxu0
        %v1378 = vadd.f32 %v1349, %v1377
        %1379 = vmatmul.f32.gmra.mxu0 %v767
        %v1380 = vpop.f32.mrf.mxu0
        %v1381 = vadd.f32 %v1352, %v1380
        %1382 = vmatmul.f32.gmra.mxu0 %v771
        %v1383 = vpop.f32.mrf.mxu0
        %v1384 = vadd.f32 %v1355, %v1383
        %1385 = vdwg.mxu0
        %1386 = vmatpush.msra.mxu0 %v835
        %1387 = vmatpush.msra.mxu0 %v831
        %1388 = vmatpush.msra.mxu0 %v827
        %1389 = vmatpush.msra.mxu0 %v823
        %1390 = vmatpush.msra.mxu0 %v819
        %1391 = vmatpush.msra.mxu0 %v815
        %1392 = vmatpush.msra.mxu0 %v811
        %1393 = vmatpush.msra.mxu0 %v807
        %1394 = vmatpush.msra.mxu0 %v803
        %1395 = vmatpush.msra.mxu0 %v799
        %1396 = vmatpush.msra.mxu0 %v795
        %1397 = vmatpush.msra.mxu0 %v791
        %1398 = vmatpush.msra.mxu0 %v787
        %1399 = vmatpush.msra.mxu0 %v783
        %1400 = vmatpush.msra.mxu0 %v779
        %1401 = vmatpush.msra.mxu0 %v775
        %1402 = vmatmul.f32.gmra.mxu0 %v756
        %v1403 = vpop.f32.mrf.mxu0
        %v1404 = vadd.f32 %v1033, %v1403
        %1405 = vmatmul.f32.gmra.mxu0 %v760
        %v1406 = vpop.f32.mrf.mxu0
        %v1407 = vadd.f32 %v1033, %v1406
        %1408 = vmatmul.f32.gmra.mxu0 %v764
        %v1409 = vpop.f32.mrf.mxu0
        %v1410 = vadd.f32 %v1033, %v1409
        %1411 = vmatmul.f32.gmra.mxu0 %v768
        %v1412 = vpop.f32.mrf.mxu0
        %v1413 = vadd.f32 %v1033, %v1412
        %1414 = vdwg.mxu0
        %1415 = vmatpush.msra.mxu0 %v899
        %1416 = vmatpush.msra.mxu0 %v895
        %1417 = vmatpush.msra.mxu0 %v891
        %1418 = vmatpush.msra.mxu0 %v887
        %1419 = vmatpush.msra.mxu0 %v883
        %1420 = vmatpush.msra.mxu0 %v879
        %1421 = vmatpush.msra.mxu0 %v875
        %1422 = vmatpush.msra.mxu0 %v871
        %1423 = vmatpush.msra.mxu0 %v867
        %1424 = vmatpush.msra.mxu0 %v863
        %1425 = vmatpush.msra.mxu0 %v859
        %1426 = vmatpush.msra.mxu0 %v855
        %1427 = vmatpush.msra.mxu0 %v851
        %1428 = vmatpush.msra.mxu0 %v847
        %1429 = vmatpush.msra.mxu0 %v843
        %1430 = vmatpush.msra.mxu0 %v839
        %1431 = vmatmul.f32.gmra.mxu0 %v757
        %v1432 = vpop.f32.mrf.mxu0
        %v1433 = vadd.f32 %v1404, %v1432
        %1434 = vmatmul.f32.gmra.mxu0 %v761
        %v1435 = vpop.f32.mrf.mxu0
        %v1436 = vadd.f32 %v1407, %v1435
        %1437 = vmatmul.f32.gmra.mxu0 %v765
        %v1438 = vpop.f32.mrf.mxu0
        %v1439 = vadd.f32 %v1410, %v1438
        %1440 = vmatmul.f32.gmra.mxu0 %v769
        %v1441 = vpop.f32.mrf.mxu0
        %v1442 = vadd.f32 %v1413, %v1441
        %1443 = vdwg.mxu0
        %1444 = vmatpush.msra.mxu0 %v963
        %1445 = vmatpush.msra.mxu0 %v959
        %1446 = vmatpush.msra.mxu0 %v955
        %1447 = vmatpush.msra.mxu0 %v951
        %1448 = vmatpush.msra.mxu0 %v947
        %1449 = vmatpush.msra.mxu0 %v943
        %1450 = vmatpush.msra.mxu0 %v939
        %1451 = vmatpush.msra.mxu0 %v935
        %1452 = vmatpush.msra.mxu0 %v931
        %1453 = vmatpush.msra.mxu0 %v927
        %1454 = vmatpush.msra.mxu0 %v923
        %1455 = vmatpush.msra.mxu0 %v919
        %1456 = vmatpush.msra.mxu0 %v915
        %1457 = vmatpush.msra.mxu0 %v911
        %1458 = vmatpush.msra.mxu0 %v907
        %1459 = vmatpush.msra.mxu0 %v903
        %1460 = vmatmul.f32.gmra.mxu0 %v758
        %v1461 = vpop.f32.mrf.mxu0
        %v1462 = vadd.f32 %v1433, %v1461
        %1463 = vmatmul.f32.gmra.mxu0 %v762
        %v1464 = vpop.f32.mrf.mxu0
        %v1465 = vadd.f32 %v1436, %v1464
        %1466 = vmatmul.f32.gmra.mxu0 %v766
        %v1467 = vpop.f32.mrf.mxu0
        %v1468 = vadd.f32 %v1439, %v1467
        %1469 = vmatmul.f32.gmra.mxu0 %v770
        %v1470 = vpop.f32.mrf.mxu0
        %v1471 = vadd.f32 %v1442, %v1470
        %1472 = vdwg.mxu0
        %1473 = vmatpush.msra.mxu0 %v1027
        %1474 = vmatpush.msra.mxu0 %v1023
        %1475 = vmatpush.msra.mxu0 %v1019
        %1476 = vmatpush.msra.mxu0 %v1015
        %1477 = vmatpush.msra.mxu0 %v1011
        %1478 = vmatpush.msra.mxu0 %v1007
        %1479 = vmatpush.msra.mxu0 %v1003
        %1480 = vmatpush.msra.mxu0 %v999
        %1481 = vmatpush.msra.mxu0 %v995
        %1482 = vmatpush.msra.mxu0 %v991
        %1483 = vmatpush.msra.mxu0 %v987
        %1484 = vmatpush.msra.mxu0 %v983
        %1485 = vmatpush.msra.mxu0 %v979
        %1486 = vmatpush.msra.mxu0 %v975
        %1487 = vmatpush.msra.mxu0 %v971
        %1488 = vmatpush.msra.mxu0 %v967
        %1489 = vmatmul.f32.gmra.mxu0 %v759
        %v1490 = vpop.f32.mrf.mxu0
        %v1491 = vadd.f32 %v1462, %v1490
        %1492 = vmatmul.f32.gmra.mxu0 %v763
        %v1493 = vpop.f32.mrf.mxu0
        %v1494 = vadd.f32 %v1465, %v1493
        %1495 = vmatmul.f32.gmra.mxu0 %v767
        %v1496 = vpop.f32.mrf.mxu0
        %v1497 = vadd.f32 %v1468, %v1496
        %1498 = vmatmul.f32.gmra.mxu0 %v771
        %v1499 = vpop.f32.mrf.mxu0
        %v1500 = vadd.f32 %v1471, %v1499
        %1501 = vdwg.mxu0
        %v1502 = vmax.f32 %v1143, 0.0
        %v1503 = vmax.f32 %v1259, 0.0
        %v1504 = vmax.f32 %v1375, 0.0
        %v1505 = vmax.f32 %v1491, 0.0
        %v1506 = vmax.f32 %v1146, 0.0
        %v1507 = vmax.f32 %v1262, 0.0
        %v1508 = vmax.f32 %v1378, 0.0
        %v1509 = vmax.f32 %v1494, 0.0
        %v1510 = vmax.f32 %v1149, 0.0
        %v1511 = vmax.f32 %v1265, 0.0
        %v1512 = vmax.f32 %v1381, 0.0
        %v1513 = vmax.f32 %v1497, 0.0
        %v1514 = vmax.f32 %v1152, 0.0
        %v1515 = vmax.f32 %v1268, 0.0
        %v1516 = vmax.f32 %v1384, 0.0
        %v1517 = vmax.f32 %v1500, 0.0
        %1518 = vst [vmem:[%s740] sm:$0xff] %v1502
        %1519 = vst [vmem:[%s740 + $0x8] sm:$0xff] %v1503
        %1520 = vst [vmem:[%s740 + $0x10] sm:$0xff] %v1504
        %1521 = vst [vmem:[%s740 + $0x18] sm:$0xff] %v1505
        %1522 = vst [vmem:[%s740 + $0x20] sm:$0xff] %v1506
        %1523 = vst [vmem:[%s740 + $0x28] sm:$0xff] %v1507
        %1524 = vst [vmem:[%s740 + $0x30] sm:$0xff] %v1508
        %1525 = vst [vmem:[%s740 + $0x38] sm:$0xff] %v1509
        %1526 = vst [vmem:[%s740 + $0x40] sm:$0xff] %v1510
        %1527 = vst [vmem:[%s740 + $0x48] sm:$0xff] %v1511
        %1528 = vst [vmem:[%s740 + $0x50] sm:$0xff] %v1512
        %1529 = vst [vmem:[%s740 + $0x58] sm:$0xff] %v1513
        %1530 = vst [vmem:[%s740 + $0x60] sm:$0xff] %v1514
        %1531 = vst [vmem:[%s740 + $0x68] sm:$0xff] %v1515
        %1532 = vst [vmem:[%s740 + $0x70] sm:$0xff] %v1516
        %1533 = vst [vmem:[%s740 + $0x78] sm:$0xff] %v1517
        %s1534 = sand.u32 %s114, 1
        %s1535 = sand.u32 %s114, 1
        %s1536 = smul.addr %s1535, 128
        %s1537 = scalar_lea.vmem [#allocation3], %s1536
        // Predicated region
        $region56: #{decoder_layer.8} parent=50 // pred_check
          %p1538 = pneg %p124
        $region57: #{decoder_layer.8} parent=50 // pred_check_branch
          %1540 = sbr.rel (%p1538) target = $region59
        $region58: #{decoder_layer.8} parent=50 // pred_region
          %s1541 = smul.u32 4, %s18
          %s1542 = smul.u32 4, %s19
          %s1543 = smul.addr %s1541, 16
          %s1544 = sadd.s32 %s1542, %s1543
          %s1545 = smul.addr %s1544, 8
          %s1546 = scalar_lea.vmem %s3, %s1545
          // Predicated region
          $region60: #{decoder_layer.8} parent=58 // pred_check
            _
          $region61: #{decoder_layer.8} parent=58 // pred_check_branch
            %1548 = sbr.rel (0) target = $region63
          $region62: #{decoder_layer.8} parent=58 // pred_region
            // Predicated region
            $region64: #{decoder_layer.8} parent=62 // pred_check
              _
            $region65: #{decoder_layer.8} parent=62 // pred_check_branch
              %1550 = sbr.rel (0) target = $region67
            $region66: #{decoder_layer.8} parent=62 // pred_region
              loop: start=0, step=1, limit=1
              $region68: #{decoder_layer.8} parent=66 // loop_pre_header
                _
              $region69: #{decoder_layer.8} parent=66 // loop_header
                %s1552 = sphi 0, %s1556
                %p1553 = scmp.ge.s32.totalorder %s1552, 1
                %s1557 = sphi %s1537, %s1537
                %s1558 = sphi %s1546, %s1546
              $region70: #{decoder_layer.8} parent=66 // loop_header_branch
                %1555 = sbr.rel (%p1553) target = $region74
              $region71: #{decoder_layer.8} parent=66 // loop_body
                %v1559 = vld [vmem:[%s1557] sm:$0xff]
                %1560 = vst [vmem:[%s1558] sm:$0xff] %v1559
                %v1561 = vld [vmem:[%s1557 + $0x8] sm:$0xff]
                %1562 = vst [vmem:[%s1558 + $0x8] sm:$0xff] %v1561
                %v1563 = vld [vmem:[%s1557 + $0x10] sm:$0xff]
                %1564 = vst [vmem:[%s1558 + $0x10] sm:$0xff] %v1563
                %v1565 = vld [vmem:[%s1557 + $0x18] sm:$0xff]
                %1566 = vst [vmem:[%s1558 + $0x18] sm:$0xff] %v1565
                %v1567 = vld [vmem:[%s1557 + $0x20] sm:$0xff]
                %1568 = vst [vmem:[%s1558 + $0x80] sm:$0xff] %v1567
                %v1569 = vld [vmem:[%s1557 + $0x28] sm:$0xff]
                %1570 = vst [vmem:[%s1558 + $0x88] sm:$0xff] %v1569
                %v1571 = vld [vmem:[%s1557 + $0x30] sm:$0xff]
                %1572 = vst [vmem:[%s1558 + $0x90] sm:$0xff] %v1571
                %v1573 = vld [vmem:[%s1557 + $0x38] sm:$0xff]
                %1574 = vst [vmem:[%s1558 + $0x98] sm:$0xff] %v1573
                %v1575 = vld [vmem:[%s1557 + $0x40] sm:$0xff]
                %1576 = vst [vmem:[%s1558 + $0x100] sm:$0xff] %v1575
                %v1577 = vld [vmem:[%s1557 + $0x48] sm:$0xff]
                %1578 = vst [vmem:[%s1558 + $0x108] sm:$0xff] %v1577
                %v1579 = vld [vmem:[%s1557 + $0x50] sm:$0xff]
                %1580 = vst [vmem:[%s1558 + $0x110] sm:$0xff] %v1579
                %v1581 = vld [vmem:[%s1557 + $0x58] sm:$0xff]
                %1582 = vst [vmem:[%s1558 + $0x118] sm:$0xff] %v1581
                %v1583 = vld [vmem:[%s1557 + $0x60] sm:$0xff]
                %1584 = vst [vmem:[%s1558 + $0x180] sm:$0xff] %v1583
                %v1585 = vld [vmem:[%s1557 + $0x68] sm:$0xff]
                %1586 = vst [vmem:[%s1558 + $0x188] sm:$0xff] %v1585
                %v1587 = vld [vmem:[%s1557 + $0x70] sm:$0xff]
                %1588 = vst [vmem:[%s1558 + $0x190] sm:$0xff] %v1587
                %v1589 = vld [vmem:[%s1557 + $0x78] sm:$0xff]
                %1590 = vst [vmem:[%s1558 + $0x198] sm:$0xff] %v1589
              $region72: #{decoder_layer.8} parent=66 // loop_footer
                %s1556 = sadd.s32 1, %s1552
              $region73: #{decoder_layer.8} parent=66 // loop_footer_branch
                %1551 = sbr.rel target = $region69
              $region74: #{decoder_layer.8} parent=66 // loop_exit
                _
            $region67: #{decoder_layer.8} parent=62 // pred_fallthru
              _
            // Predicated region
            $region75: #{decoder_layer.8} parent=62 // pred_check
              _
            $region76: #{decoder_layer.8} parent=62 // pred_check_branch
              %1592 = sbr.rel target = $region78
            $region77: #{decoder_layer.8} parent=62 // pred_region
              _
            $region78: #{decoder_layer.8} parent=62 // pred_fallthru
              _
          $region63: #{decoder_layer.8} parent=58 // pred_fallthru
            _
          %1593 = vnop
        $region59: #{decoder_layer.8} parent=50 // pred_fallthru
          _
      $region51: #{decoder_layer.8} parent=5 // pred_fallthru
        _
      %p1594 = scmp.le.s32.totalorder 2, %s9
      // Predicated region
      $region79: #{decoder_layer.8} parent=5 // pred_check
        %p1595 = pneg %p1594
      $region80: #{decoder_layer.8} parent=5 // pred_check_branch
        %1597 = sbr.rel (%p1595) target = $region82
      $region81: #{decoder_layer.8} parent=5 // pred_region
        %s1598 = ssub.s32 %s9, 2
        // Predicated region
        $region83: #{decoder_layer.8} parent=81 // pred_check
          %p1599 = pneg %p130
        $region84: #{decoder_layer.8} parent=81 // pred_check_branch
          %1601 = sbr.rel (%p1599) target = $region86
        $region85: #{decoder_layer.8} parent=81 // pred_region
          %s1602 = sand.u32 %s115, 1
          %s1603 = sand.u32 %s115, 1
          %s1604 = smul.addr %s1603, 128
          %s1605 = scalar_lea.vmem [#allocation3], %s1604
        $region86: #{decoder_layer.8} parent=81 // pred_fallthru
          _
      $region82: #{decoder_layer.8} parent=5 // pred_fallthru
        _
    $region6: #{decoder_layer.8} parent=1 // loop_footer
      %s13 = sadd.s32 1, %s9
    $region7: #{decoder_layer.8} parent=1 // loop_footer_branch
      %8 = sbr.rel target = $region3
    $region8: #{decoder_layer.8} parent=1 // loop_exit
      _

// kernel: decoder_layer.9
$region0: #{decoder_layer.9}
  #allocation0 [shape = 'u32[]', space=smem, size = 0x4, offset = 0x4, fixed_abs, tag = 'smem constant byte address 0x4 - core index']
  #allocation1 [shape = 'u32[72,128]{1,0:T(1,128)}', space=vmem, size = 0x9000, scoped, tag = 'internal scratch']
  %s0 = inlined_call_operand.vmem [shape: f32[32,2048], index: 0, kind: input, shape index: {}]
  %s1 = inlined_call_operand.hbm [shape: f32[2048,512], index: 1, kind: input, shape index: {}]
  %s2 = inlined_call_operand.vmem [shape: f32[1,512], index: 2, kind: input, shape index: {}]
  %s3 = inlined_call_operand.vmem [shape: f32[32,512], index: 3, kind: input, shape index: {}]
  %s4 = inlined_call_operand.vmem [shape: f32[1,512], index: 4, kind: input, shape index: {}]
  %s5 = inlined_call_operand.vmem [shape: f32[1,512], index: 5, kind: input, shape index: {}]
  %s6 = inlined_call_operand.vmem [shape: f32[1,512], index: 6, kind: input, shape index: {}]
  %s7 = inlined_call_operand.vmem [shape: f32[1,512], index: 7, kind: input, shape index: {}]
  %s8 = inlined_call_operand.hbm [shape: f32[32,512], index: 8, kind: output, shape index: {}]
  %s9 = sld [smem:[#allocation0]]
  $region46: #{decoder_layer.9} parent=0
    _
  %s11 = ssub.s32 1, %s9
  %s12 = scalar_select 0, %s11, %s9
  $region1: #{decoder_layer.9} parent=0
    #allocation2 [shape = 'u8[4194304]{0}', space=vmem, size = 0x400000, scoped, tag = 'input window, operand 1, single buffered']
    #allocation3 [shape = 's32[1]{0}', space=sflag, size = 0x4, scoped, tag = 'scoped memory for decoder_layer.9']
    #allocation4 [shape = 's32[1]{0}', space=sflag, size = 0x4, scoped, tag = 'scoped memory for decoder_layer.9']
    #allocation5 [shape = 'u8[65536]{0}', space=vmem, size = 0x10000, scoped, tag = 'output window, operand 0, single buffered']
    %13 = vsyncpa [#allocation3], 0
    %14 = vsyncpa [#allocation4], 0
    // Predicated region
    $region2: #{decoder_layer.9} parent=1 // pred_check
      _
    $region3: #{decoder_layer.9} parent=1 // pred_check_branch
      %16 = sbr.rel (0) target = $region5
    $region4: #{decoder_layer.9} parent=1 // pred_region
      _
    $region5: #{decoder_layer.9} parent=1 // pred_fallthru
      _
    // Predicated region
    $region6: #{decoder_layer.9} parent=1 // pred_check
      _
    $region7: #{decoder_layer.9} parent=1 // pred_check_branch
      %18 = sbr.rel (0) target = $region9
    $region8: #{decoder_layer.9} parent=1 // pred_region
      %20 = vsyncadd [#allocation3], 0
      %s21 = sshll.u32 %s1, 4
      %s22 = int_to_ptr.hbm [resolvable:$true] %s21
      %s23 = sshll.u32 [#allocation2], 4
      %s24 = int_to_ptr.vmem [resolvable:$true] %s23
      %29 = dma.hbm_to_vmem [thread:$0]  %s22, 131072, %s24, [#allocation3], 512, 512, 32
    $region9: #{decoder_layer.9} parent=1 // pred_fallthru
      _
    // Predicated region
    $region10: #{decoder_layer.9} parent=1 // pred_check
      _
    $region11: #{decoder_layer.9} parent=1 // pred_check_branch
      %31 = sbr.rel (0) target = $region13
    $region12: #{decoder_layer.9} parent=1 // pred_region
      _
    $region13: #{decoder_layer.9} parent=1 // pred_fallthru
      _
    // Predicated region
    $region14: #{decoder_layer.9} parent=1 // pred_check
      _
    $region15: #{decoder_layer.9} parent=1 // pred_check_branch
      %33 = sbr.rel (0) target = $region17
    $region16: #{decoder_layer.9} parent=1 // pred_region
      _
    $region17: #{decoder_layer.9} parent=1 // pred_fallthru
      _
    // Predicated region
    $region18: #{decoder_layer.9} parent=1 // pred_check
      _
    $region19: #{decoder_layer.9} parent=1 // pred_check_branch
      %35 = sbr.rel (0) target = $region21
    $region20: #{decoder_layer.9} parent=1 // pred_region
      _
    $region21: #{decoder_layer.9} parent=1 // pred_fallthru
      _
    // Predicated region
    $region22: #{decoder_layer.9} parent=1 // pred_check
      _
    $region23: #{decoder_layer.9} parent=1 // pred_check_branch
      %37 = sbr.rel (0) target = $region25
    $region24: #{decoder_layer.9} parent=1 // pred_region
      _
    $region25: #{decoder_layer.9} parent=1 // pred_fallthru
      _
    // Predicated region
    $region26: #{decoder_layer.9} parent=1 // pred_check
      _
    $region27: #{decoder_layer.9} parent=1 // pred_check_branch
      %39 = sbr.rel (0) target = $region29
    $region28: #{decoder_layer.9} parent=1 // pred_region
      _
    $region29: #{decoder_layer.9} parent=1 // pred_fallthru
      _
    // Predicated region
    $region30: #{decoder_layer.9} parent=1 // pred_check
      _
    $region31: #{decoder_layer.9} parent=1 // pred_check_branch
      %41 = sbr.rel (0) target = $region33
    $region32: #{decoder_layer.9} parent=1 // pred_region
      _
    $region33: #{decoder_layer.9} parent=1 // pred_fallthru
      _
    // Predicated region
    $region34: #{decoder_layer.9} parent=1 // pred_check
      _
    $region35: #{decoder_layer.9} parent=1 // pred_check_branch
      %43 = sbr.rel (0) target = $region37
    $region36: #{decoder_layer.9} parent=1 // pred_region
      %45 = dma.done [#allocation3], 131072
    $region37: #{decoder_layer.9} parent=1 // pred_fallthru
      _
    %v46 = vld [vmem:[%s0] sm:$0xff]
    %v47 = vld [vmem:[%s0 + $0x8] sm:$0xff]
    %v48 = vld [vmem:[%s0 + $0x10] sm:$0xff]
    %v49 = vld [vmem:[%s0 + $0x18] sm:$0xff]
    %v50 = vld [vmem:[%s0 + $0x20] sm:$0xff]
    %v51 = vld [vmem:[%s0 + $0x28] sm:$0xff]
    %v52 = vld [vmem:[%s0 + $0x30] sm:$0xff]
    %v53 = vld [vmem:[%s0 + $0x38] sm:$0xff]
    %v54 = vld [vmem:[%s0 + $0x40] sm:$0xff]
    %v55 = vld [vmem:[%s0 + $0x48] sm:$0xff]
    %v56 = vld [vmem:[%s0 + $0x50] sm:$0xff]
    %v57 = vld [vmem:[%s0 + $0x58] sm:$0xff]
    %v58 = vld [vmem:[%s0 + $0x60] sm:$0xff]
    %v59 = vld [vmem:[%s0 + $0x68] sm:$0xff]
    %v60 = vld [vmem:[%s0 + $0x70] sm:$0xff]
    %v61 = vld [vmem:[%s0 + $0x78] sm:$0xff]
    %v62 = vld [vmem:[%s0 + $0x80] sm:$0xff]
    %v63 = vld [vmem:[%s0 + $0x88] sm:$0xff]
    %v64 = vld [vmem:[%s0 + $0x90] sm:$0xff]
    %v65 = vld [vmem:[%s0 + $0x98] sm:$0xff]
    %v66 = vld [vmem:[%s0 + $0xa0] sm:$0xff]
    %v67 = vld [vmem:[%s0 + $0xa8] sm:$0xff]
    %v68 = vld [vmem:[%s0 + $0xb0] sm:$0xff]
    %v69 = vld [vmem:[%s0 + $0xb8] sm:$0xff]
    %v70 = vld [vmem:[%s0 + $0xc0] sm:$0xff]
    %v71 = vld [vmem:[%s0 + $0xc8] sm:$0xff]
    %v72 = vld [vmem:[%s0 + $0xd0] sm:$0xff]
    %v73 = vld [vmem:[%s0 + $0xd8] sm:$0xff]
    %v74 = vld [vmem:[%s0 + $0xe0] sm:$0xff]
    %v75 = vld [vmem:[%s0 + $0xe8] sm:$0xff]
    %v76 = vld [vmem:[%s0 + $0xf0] sm:$0xff]
    %v77 = vld [vmem:[%s0 + $0xf8] sm:$0xff]
    %v78 = vld [vmem:[%s0 + $0x100] sm:$0xff]
    %v79 = vld [vmem:[%s0 + $0x108] sm:$0xff]
    %v80 = vld [vmem:[%s0 + $0x110] sm:$0xff]
    %v81 = vld [vmem:[%s0 + $0x118] sm:$0xff]
    %v82 = vld [vmem:[%s0 + $0x120] sm:$0xff]
    %v83 = vld [vmem:[%s0 + $0x128] sm:$0xff]
    %v84 = vld [vmem:[%s0 + $0x130] sm:$0xff]
    %v85 = vld [vmem:[%s0 + $0x138] sm:$0xff]
    %v86 = vld [vmem:[%s0 + $0x140] sm:$0xff]
    %v87 = vld [vmem:[%s0 + $0x148] sm:$0xff]
    %v88 = vld [vmem:[%s0 + $0x150] sm:$0xff]
    %v89 = vld [vmem:[%s0 + $0x158] sm:$0xff]
    %v90 = vld [vmem:[%s0 + $0x160] sm:$0xff]
    %v91 = vld [vmem:[%s0 + $0x168] sm:$0xff]
    %v92 = vld [vmem:[%s0 + $0x170] sm:$0xff]
    %v93 = vld [vmem:[%s0 + $0x178] sm:$0xff]
    %v94 = vld [vmem:[%s0 + $0x180] sm:$0xff]
    %v95 = vld [vmem:[%s0 + $0x188] sm:$0xff]
    %v96 = vld [vmem:[%s0 + $0x190] sm:$0xff]
    %v97 = vld [vmem:[%s0 + $0x198] sm:$0xff]
    %v98 = vld [vmem:[%s0 + $0x1a0] sm:$0xff]
    %v99 = vld [vmem:[%s0 + $0x1a8] sm:$0xff]
    %v100 = vld [vmem:[%s0 + $0x1b0] sm:$0xff]
    %v101 = vld [vmem:[%s0 + $0x1b8] sm:$0xff]
    %v102 = vld [vmem:[%s0 + $0x1c0] sm:$0xff]
    %v103 = vld [vmem:[%s0 + $0x1c8] sm:$0xff]
    %v104 = vld [vmem:[%s0 + $0x1d0] sm:$0xff]
    %v105 = vld [vmem:[%s0 + $0x1d8] sm:$0xff]
    %v106 = vld [vmem:[%s0 + $0x1e0] sm:$0xff]
    %v107 = vld [vmem:[%s0 + $0x1e8] sm:$0xff]
    %v108 = vld [vmem:[%s0 + $0x1f0] sm:$0xff]
    %v109 = vld [vmem:[%s0 + $0x1f8] sm:$0xff]
    %v110 = vld [vmem:[#allocation2] sm:$0xff]
    %v111 = vld [vmem:[#allocation2 + $0x8] sm:$0xff]
    %v112 = vld [vmem:[#allocation2 + $0x10] sm:$0xff]
    %v113 = vld [vmem:[#allocation2 + $0x18] sm:$0xff]
    %v114 = vld [vmem:[#allocation2 + $0x20] sm:$0xff]
    %v115 = vld [vmem:[#allocation2 + $0x28] sm:$0xff]
    %v116 = vld [vmem:[#allocation2 + $0x30] sm:$0xff]
    %v117 = vld [vmem:[#allocation2 + $0x38] sm:$0xff]
    %v118 = vld [vmem:[#allocation2 + $0x40] sm:$0xff]
    %v119 = vld [vmem:[#allocation2 + $0x48] sm:$0xff]
    %v120 = vld [vmem:[#allocation2 + $0x50] sm:$0xff]
    %v121 = vld [vmem:[#allocation2 + $0x58] sm:$0xff]
    %v122 = vld [vmem:[#allocation2 + $0x60] sm:$0xff]
    %v123 = vld [vmem:[#allocation2 + $0x68] sm:$0xff]
    %v124 = vld [vmem:[#allocation2 + $0x70] sm:$0xff]
    %v125 = vld [vmem:[#allocation2 + $0x78] sm:$0xff]
    %v126 = vld [vmem:[#allocation2 + $0x80] sm:$0xff]
    %v127 = vld [vmem:[#allocation2 + $0x88] sm:$0xff]
    %v128 = vld [vmem:[#allocation2 + $0x90] sm:$0xff]
    %v129 = vld [vmem:[#allocation2 + $0x98] sm:$0xff]
    %v130 = vld [vmem:[#allocation2 + $0xa0] sm:$0xff]
    %v131 = vld [vmem:[#allocation2 + $0xa8] sm:$0xff]
    %v132 = vld [vmem:[#allocation2 + $0xb0] sm:$0xff]
    %v133 = vld [vmem:[#allocation2 + $0xb8] sm:$0xff]
    %v134 = vld [vmem:[#allocation2 + $0xc0] sm:$0xff]
    %v135 = vld [vmem:[#allocation2 + $0xc8] sm:$0xff]
    %v136 = vld [vmem:[#allocation2 + $0xd0] sm:$0xff]
    %v137 = vld [vmem:[#allocation2 + $0xd8] sm:$0xff]
    %v138 = vld [vmem:[#allocation2 + $0xe0] sm:$0xff]
    %v139 = vld [vmem:[#allocation2 + $0xe8] sm:$0xff]
    %v140 = vld [vmem:[#allocation2 + $0xf0] sm:$0xff]
    %v141 = vld [vmem:[#allocation2 + $0xf8] sm:$0xff]
    %v142 = vld [vmem:[#allocation2 + $0x100] sm:$0xff]
    %v143 = vld [vmem:[#allocation2 + $0x108] sm:$0xff]
    %v144 = vld [vmem:[#allocation2 + $0x110] sm:$0xff]
    %v145 = vld [vmem:[#allocation2 + $0x118] sm:$0xff]
    %v146 = vld [vmem:[#allocation2 + $0x120] sm:$0xff]
    %v147 = vld [vmem:[#allocation2 + $0x128] sm:$0xff]
    %v148 = vld [vmem:[#allocation2 + $0x130] sm:$0xff]
    %v149 = vld [vmem:[#allocation2 + $0x138] sm:$0xff]
    %v150 = vld [vmem:[#allocation2 + $0x140] sm:$0xff]
    %v151 = vld [vmem:[#allocation2 + $0x148] sm:$0xff]
    %v152 = vld [vmem:[#allocation2 + $0x150] sm:$0xff]
    %v153 = vld [vmem:[#allocation2 + $0x158] sm:$0xff]
    %v154 = vld [vmem:[#allocation2 + $0x160] sm:$0xff]
    %v155 = vld [vmem:[#allocation2 + $0x168] sm:$0xff]
    %v156 = vld [vmem:[#allocation2 + $0x170] sm:$0xff]
    %v157 = vld [vmem:[#allocation2 + $0x178] sm:$0xff]
    %v158 = vld [vmem:[#allocation2 + $0x180] sm:$0xff]
    %v159 = vld [vmem:[#allocation2 + $0x188] sm:$0xff]
    %v160 = vld [vmem:[#allocation2 + $0x190] sm:$0xff]
    %v161 = vld [vmem:[#allocation2 + $0x198] sm:$0xff]
    %v162 = vld [vmem:[#allocation2 + $0x1a0] sm:$0xff]
    %v163 = vld [vmem:[#allocation2 + $0x1a8] sm:$0xff]
    %v164 = vld [vmem:[#allocation2 + $0x1b0] sm:$0xff]
    %v165 = vld [vmem:[#allocation2 + $0x1b8] sm:$0xff]
    %v166 = vld [vmem:[#allocation2 + $0x1c0] sm:$0xff]
    %v167 = vld [vmem:[#allocation2 + $0x1c8] sm:$0xff]
    %v168 = vld [vmem:[#allocation2 + $0x1d0] sm:$0xff]
    %v169 = vld [vmem:[#allocation2 + $0x1d8] sm:$0xff]
    %v170 = vld [vmem:[#allocation2 + $0x1e0] sm:$0xff]
    %v171 = vld [vmem:[#allocation2 + $0x1e8] sm:$0xff]
    %v172 = vld [vmem:[#allocation2 + $0x1f0] sm:$0xff]
    %v173 = vld [vmem:[#allocation2 + $0x1f8] sm:$0xff]
    %v174 = vld [vmem:[#allocation2 + $0x200] sm:$0xff]
    %v175 = vld [vmem:[#allocation2 + $0x208] sm:$0xff]
    %v176 = vld [vmem:[#allocation2 + $0x210] sm:$0xff]
    %v177 = vld [vmem:[#allocation2 + $0x218] sm:$0xff]
    %v178 = vld [vmem:[#allocation2 + $0x220] sm:$0xff]
    %v179 = vld [vmem:[#allocation2 + $0x228] sm:$0xff]
    %v180 = vld [vmem:[#allocation2 + $0x230] sm:$0xff]
    %v181 = vld [vmem:[#allocation2 + $0x238] sm:$0xff]
    %v182 = vld [vmem:[#allocation2 + $0x240] sm:$0xff]
    %v183 = vld [vmem:[#allocation2 + $0x248] sm:$0xff]
    %v184 = vld [vmem:[#allocation2 + $0x250] sm:$0xff]
    %v185 = vld [vmem:[#allocation2 + $0x258] sm:$0xff]
    %v186 = vld [vmem:[#allocation2 + $0x260] sm:$0xff]
    %v187 = vld [vmem:[#allocation2 + $0x268] sm:$0xff]
    %v188 = vld [vmem:[#allocation2 + $0x270] sm:$0xff]
    %v189 = vld [vmem:[#allocation2 + $0x278] sm:$0xff]
    %v190 = vld [vmem:[#allocation2 + $0x280] sm:$0xff]
    %v191 = vld [vmem:[#allocation2 + $0x288] sm:$0xff]
    %v192 = vld [vmem:[#allocation2 + $0x290] sm:$0xff]
    %v193 = vld [vmem:[#allocation2 + $0x298] sm:$0xff]
    %v194 = vld [vmem:[#allocation2 + $0x2a0] sm:$0xff]
    %v195 = vld [vmem:[#allocation2 + $0x2a8] sm:$0xff]
    %v196 = vld [vmem:[#allocation2 + $0x2b0] sm:$0xff]
    %v197 = vld [vmem:[#allocation2 + $0x2b8] sm:$0xff]
    %v198 = vld [vmem:[#allocation2 + $0x2c0] sm:$0xff]
    %v199 = vld [vmem:[#allocation2 + $0x2c8] sm:$0xff]
    %v200 = vld [vmem:[#allocation2 + $0x2d0] sm:$0xff]
    %v201 = vld [vmem:[#allocation2 + $0x2d8] sm:$0xff]
    %v202 = vld [vmem:[#allocation2 + $0x2e0] sm:$0xff]
    %v203 = vld [vmem:[#allocation2 + $0x2e8] sm:$0xff]
    %v204 = vld [vmem:[#allocation2 + $0x2f0] sm:$0xff]
    %v205 = vld [vmem:[#allocation2 + $0x2f8] sm:$0xff]
    %v206 = vld [vmem:[#allocation2 + $0x300] sm:$0xff]
    %v207 = vld [vmem:[#allocation2 + $0x308] sm:$0xff]
    %v208 = vld [vmem:[#allocation2 + $0x310] sm:$0xff]
    %v209 = vld [vmem:[#allocation2 + $0x318] sm:$0xff]
    %v210 = vld [vmem:[#allocation2 + $0x320] sm:$0xff]
    %v211 = vld [vmem:[#allocation2 + $0x328] sm:$0xff]
    %v212 = vld [vmem:[#allocation2 + $0x330] sm:$0xff]
    %v213 = vld [vmem:[#allocation2 + $0x338] sm:$0xff]
    %v214 = vld [vmem:[#allocation2 + $0x340] sm:$0xff]
    %v215 = vld [vmem:[#allocation2 + $0x348] sm:$0xff]
    %v216 = vld [vmem:[#allocation2 + $0x350] sm:$0xff]
    %v217 = vld [vmem:[#allocation2 + $0x358] sm:$0xff]
    %v218 = vld [vmem:[#allocation2 + $0x360] sm:$0xff]
    %v219 = vld [vmem:[#allocation2 + $0x368] sm:$0xff]
    %v220 = vld [vmem:[#allocation2 + $0x370] sm:$0xff]
    %v221 = vld [vmem:[#allocation2 + $0x378] sm:$0xff]
    %v222 = vld [vmem:[#allocation2 + $0x380] sm:$0xff]
    %v223 = vld [vmem:[#allocation2 + $0x388] sm:$0xff]
    %v224 = vld [vmem:[#allocation2 + $0x390] sm:$0xff]
    %v225 = vld [vmem:[#allocation2 + $0x398] sm:$0xff]
    %v226 = vld [vmem:[#allocation2 + $0x3a0] sm:$0xff]
    %v227 = vld [vmem:[#allocation2 + $0x3a8] sm:$0xff]
    %v228 = vld [vmem:[#allocation2 + $0x3b0] sm:$0xff]
    %v229 = vld [vmem:[#allocation2 + $0x3b8] sm:$0xff]
    %v230 = vld [vmem:[#allocation2 + $0x3c0] sm:$0xff]
    %v231 = vld [vmem:[#allocation2 + $0x3c8] sm:$0xff]
    %v232 = vld [vmem:[#allocation2 + $0x3d0] sm:$0xff]
    %v233 = vld [vmem:[#allocation2 + $0x3d8] sm:$0xff]
    %v234 = vld [vmem:[#allocation2 + $0x3e0] sm:$0xff]
    %v235 = vld [vmem:[#allocation2 + $0x3e8] sm:$0xff]
    %v236 = vld [vmem:[#allocation2 + $0x3f0] sm:$0xff]
    %v237 = vld [vmem:[#allocation2 + $0x3f8] sm:$0xff]
    %v238 = vld [vmem:[#allocation2 + $0x400] sm:$0xff]
    %v239 = vld [vmem:[#allocation2 + $0x408] sm:$0xff]
    %v240 = vld [vmem:[#allocation2 + $0x410] sm:$0xff]
    %v241 = vld [vmem:[#allocation2 + $0x418] sm:$0xff]
    %v242 = vld [vmem:[#allocation2 + $0x420] sm:$0xff]
    %v243 = vld [vmem:[#allocation2 + $0x428] sm:$0xff]
    %v244 = vld [vmem:[#allocation2 + $0x430] sm:$0xff]
    %v245 = vld [vmem:[#allocation2 + $0x438] sm:$0xff]
    %v246 = vld [vmem:[#allocation2 + $0x440] sm:$0xff]
    %v247 = vld [vmem:[#allocation2 + $0x448] sm:$0xff]
    %v248 = vld [vmem:[#allocation2 + $0x450] sm:$0xff]
    %v249 = vld [vmem:[#allocation2 + $0x458] sm:$0xff]
    %v250 = vld [vmem:[#allocation2 + $0x460] sm:$0xff]
    %v251 = vld [vmem:[#allocation2 + $0x468] sm:$0xff]
    %v252 = vld [vmem:[#allocation2 + $0x470] sm:$0xff]
    %v253 = vld [vmem:[#allocation2 + $0x478] sm:$0xff]
    %v254 = vld [vmem:[#allocation2 + $0x480] sm:$0xff]
    %v255 = vld [vmem:[#allocation2 + $0x488] sm:$0xff]
    %v256 = vld [vmem:[#allocation2 + $0x490] sm:$0xff]
    %v257 = vld [vmem:[#allocation2 + $0x498] sm:$0xff]
    %v258 = vld [vmem:[#allocation2 + $0x4a0] sm:$0xff]
    %v259 = vld [vmem:[#allocation2 + $0x4a8] sm:$0xff]
    %v260 = vld [vmem:[#allocation2 + $0x4b0] sm:$0xff]
    %v261 = vld [vmem:[#allocation2 + $0x4b8] sm:$0xff]
    %v262 = vld [vmem:[#allocation2 + $0x4c0] sm:$0xff]
    %v263 = vld [vmem:[#allocation2 + $0x4c8] sm:$0xff]
    %v264 = vld [vmem:[#allocation2 + $0x4d0] sm:$0xff]
    %v265 = vld [vmem:[#allocation2 + $0x4d8] sm:$0xff]
    %v266 = vld [vmem:[#allocation2 + $0x4e0] sm:$0xff]
    %v267 = vld [vmem:[#allocation2 + $0x4e8] sm:$0xff]
    %v268 = vld [vmem:[#allocation2 + $0x4f0] sm:$0xff]
    %v269 = vld [vmem:[#allocation2 + $0x4f8] sm:$0xff]
    %v270 = vld [vmem:[#allocation2 + $0x500] sm:$0xff]
    %v271 = vld [vmem:[#allocation2 + $0x508] sm:$0xff]
    %v272 = vld [vmem:[#allocation2 + $0x510] sm:$0xff]
    %v273 = vld [vmem:[#allocation2 + $0x518] sm:$0xff]
    %v274 = vld [vmem:[#allocation2 + $0x520] sm:$0xff]
    %v275 = vld [vmem:[#allocation2 + $0x528] sm:$0xff]
    %v276 = vld [vmem:[#allocation2 + $0x530] sm:$0xff]
    %v277 = vld [vmem:[#allocation2 + $0x538] sm:$0xff]
    %v278 = vld [vmem:[#allocation2 + $0x540] sm:$0xff]
    %v279 = vld [vmem:[#allocation2 + $0x548] sm:$0xff]
    %v280 = vld [vmem:[#allocation2 + $0x550] sm:$0xff]
    %v281 = vld [vmem:[#allocation2 + $0x558] sm:$0xff]
    %v282 = vld [vmem:[#allocation2 + $0x560] sm:$0xff]
    %v283 = vld [vmem:[#allocation2 + $0x568] sm:$0xff]
    %v284 = vld [vmem:[#allocation2 + $0x570] sm:$0xff]
    %v285 = vld [vmem:[#allocation2 + $0x578] sm:$0xff]
    %v286 = vld [vmem:[#allocation2 + $0x580] sm:$0xff]
    %v287 = vld [vmem:[#allocation2 + $0x588] sm:$0xff]
    %v288 = vld [vmem:[#allocation2 + $0x590] sm:$0xff]
    %v289 = vld [vmem:[#allocation2 + $0x598] sm:$0xff]
    %v290 = vld [vmem:[#allocation2 + $0x5a0] sm:$0xff]
    %v291 = vld [vmem:[#allocation2 + $0x5a8] sm:$0xff]
    %v292 = vld [vmem:[#allocation2 + $0x5b0] sm:$0xff]
    %v293 = vld [vmem:[#allocation2 + $0x5b8] sm:$0xff]
    %v294 = vld [vmem:[#allocation2 + $0x5c0] sm:$0xff]
    %v295 = vld [vmem:[#allocation2 + $0x5c8] sm:$0xff]
    %v296 = vld [vmem:[#allocation2 + $0x5d0] sm:$0xff]
    %v297 = vld [vmem:[#allocation2 + $0x5d8] sm:$0xff]
    %v298 = vld [vmem:[#allocation2 + $0x5e0] sm:$0xff]
    %v299 = vld [vmem:[#allocation2 + $0x5e8] sm:$0xff]
    %v300 = vld [vmem:[#allocation2 + $0x5f0] sm:$0xff]
    %v301 = vld [vmem:[#allocation2 + $0x5f8] sm:$0xff]
    %v302 = vld [vmem:[#allocation2 + $0x600] sm:$0xff]
    %v303 = vld [vmem:[#allocation2 + $0x608] sm:$0xff]
    %v304 = vld [vmem:[#allocation2 + $0x610] sm:$0xff]
    %v305 = vld [vmem:[#allocation2 + $0x618] sm:$0xff]
    %v306 = vld [vmem:[#allocation2 + $0x620] sm:$0xff]
    %v307 = vld [vmem:[#allocation2 + $0x628] sm:$0xff]
    %v308 = vld [vmem:[#allocation2 + $0x630] sm:$0xff]
    %v309 = vld [vmem:[#allocation2 + $0x638] sm:$0xff]
    %v310 = vld [vmem:[#allocation2 + $0x640] sm:$0xff]
    %v311 = vld [vmem:[#allocation2 + $0x648] sm:$0xff]
    %v312 = vld [vmem:[#allocation2 + $0x650] sm:$0xff]
    %v313 = vld [vmem:[#allocation2 + $0x658] sm:$0xff]
    %v314 = vld [vmem:[#allocation2 + $0x660] sm:$0xff]
    %v315 = vld [vmem:[#allocation2 + $0x668] sm:$0xff]
    %v316 = vld [vmem:[#allocation2 + $0x670] sm:$0xff]
    %v317 = vld [vmem:[#allocation2 + $0x678] sm:$0xff]
    %v318 = vld [vmem:[#allocation2 + $0x680] sm:$0xff]
    %v319 = vld [vmem:[#allocation2 + $0x688] sm:$0xff]
    %v320 = vld [vmem:[#allocation2 + $0x690] sm:$0xff]
    %v321 = vld [vmem:[#allocation2 + $0x698] sm:$0xff]
    %v322 = vld [vmem:[#allocation2 + $0x6a0] sm:$0xff]
    %v323 = vld [vmem:[#allocation2 + $0x6a8] sm:$0xff]
    %v324 = vld [vmem:[#allocation2 + $0x6b0] sm:$0xff]
    %v325 = vld [vmem:[#allocation2 + $0x6b8] sm:$0xff]
    %v326 = vld [vmem:[#allocation2 + $0x6c0] sm:$0xff]
    %v327 = vld [vmem:[#allocation2 + $0x6c8] sm:$0xff]
    %v328 = vld [vmem:[#allocation2 + $0x6d0] sm:$0xff]
    %v329 = vld [vmem:[#allocation2 + $0x6d8] sm:$0xff]
    %v330 = vld [vmem:[#allocation2 + $0x6e0] sm:$0xff]
    %v331 = vld [vmem:[#allocation2 + $0x6e8] sm:$0xff]
    %v332 = vld [vmem:[#allocation2 + $0x6f0] sm:$0xff]
    %v333 = vld [vmem:[#allocation2 + $0x6f8] sm:$0xff]
    %v334 = vld [vmem:[#allocation2 + $0x700] sm:$0xff]
    %v335 = vld [vmem:[#allocation2 + $0x708] sm:$0xff]
    %v336 = vld [vmem:[#allocation2 + $0x710] sm:$0xff]
    %v337 = vld [vmem:[#allocation2 + $0x718] sm:$0xff]
    %v338 = vld [vmem:[#allocation2 + $0x720] sm:$0xff]
    %v339 = vld [vmem:[#allocation2 + $0x728] sm:$0xff]
    %v340 = vld [vmem:[#allocation2 + $0x730] sm:$0xff]
    %v341 = vld [vmem:[#allocation2 + $0x738] sm:$0xff]
    %v342 = vld [vmem:[#allocation2 + $0x740] sm:$0xff]
    %v343 = vld [vmem:[#allocation2 + $0x748] sm:$0xff]
    %v344 = vld [vmem:[#allocation2 + $0x750] sm:$0xff]
    %v345 = vld [vmem:[#allocation2 + $0x758] sm:$0xff]
    %v346 = vld [vmem:[#allocation2 + $0x760] sm:$0xff]
    %v347 = vld [vmem:[#allocation2 + $0x768] sm:$0xff]
    %v348 = vld [vmem:[#allocation2 + $0x770] sm:$0xff]
    %v349 = vld [vmem:[#allocation2 + $0x778] sm:$0xff]
    %v350 = vld [vmem:[#allocation2 + $0x780] sm:$0xff]
    %v351 = vld [vmem:[#allocation2 + $0x788] sm:$0xff]
    %v352 = vld [vmem:[#allocation2 + $0x790] sm:$0xff]
    %v353 = vld [vmem:[#allocation2 + $0x798] sm:$0xff]
    %v354 = vld [vmem:[#allocation2 + $0x7a0] sm:$0xff]
    %v355 = vld [vmem:[#allocation2 + $0x7a8] sm:$0xff]
    %v356 = vld [vmem:[#allocation2 + $0x7b0] sm:$0xff]
    %v357 = vld [vmem:[#allocation2 + $0x7b8] sm:$0xff]
    %v358 = vld [vmem:[#allocation2 + $0x7c0] sm:$0xff]
    %v359 = vld [vmem:[#allocation2 + $0x7c8] sm:$0xff]
    %v360 = vld [vmem:[#allocation2 + $0x7d0] sm:$0xff]
    %v361 = vld [vmem:[#allocation2 + $0x7d8] sm:$0xff]
    %v362 = vld [vmem:[#allocation2 + $0x7e0] sm:$0xff]
    %v363 = vld [vmem:[#allocation2 + $0x7e8] sm:$0xff]
    %v364 = vld [vmem:[#allocation2 + $0x7f0] sm:$0xff]
    %v365 = vld [vmem:[#allocation2 + $0x7f8] sm:$0xff]
    %v366 = vld [vmem:[#allocation2 + $0x800] sm:$0xff]
    %v367 = vld [vmem:[#allocation2 + $0x808] sm:$0xff]
    %v368 = vld [vmem:[#allocation2 + $0x810] sm:$0xff]
    %v369 = vld [vmem:[#allocation2 + $0x818] sm:$0xff]
    %v370 = vld [vmem:[#allocation2 + $0x820] sm:$0xff]
    %v371 = vld [vmem:[#allocation2 + $0x828] sm:$0xff]
    %v372 = vld [vmem:[#allocation2 + $0x830] sm:$0xff]
    %v373 = vld [vmem:[#allocation2 + $0x838] sm:$0xff]
    %v374 = vld [vmem:[#allocation2 + $0x840] sm:$0xff]
    %v375 = vld [vmem:[#allocation2 + $0x848] sm:$0xff]
    %v376 = vld [vmem:[#allocation2 + $0x850] sm:$0xff]
    %v377 = vld [vmem:[#allocation2 + $0x858] sm:$0xff]
    %v378 = vld [vmem:[#allocation2 + $0x860] sm:$0xff]
    %v379 = vld [vmem:[#allocation2 + $0x868] sm:$0xff]
    %v380 = vld [vmem:[#allocation2 + $0x870] sm:$0xff]
    %v381 = vld [vmem:[#allocation2 + $0x878] sm:$0xff]
    %v382 = vld [vmem:[#allocation2 + $0x880] sm:$0xff]
    %v383 = vld [vmem:[#allocation2 + $0x888] sm:$0xff]
    %v384 = vld [vmem:[#allocation2 + $0x890] sm:$0xff]
    %v385 = vld [vmem:[#allocation2 + $0x898] sm:$0xff]
    %v386 = vld [vmem:[#allocation2 + $0x8a0] sm:$0xff]
    %v387 = vld [vmem:[#allocation2 + $0x8a8] sm:$0xff]
    %v388 = vld [vmem:[#allocation2 + $0x8b0] sm:$0xff]
    %v389 = vld [vmem:[#allocation2 + $0x8b8] sm:$0xff]
    %v390 = vld [vmem:[#allocation2 + $0x8c0] sm:$0xff]
    %v391 = vld [vmem:[#allocation2 + $0x8c8] sm:$0xff]
    %v392 = vld [vmem:[#allocation2 + $0x8d0] sm:$0xff]
    %v393 = vld [vmem:[#allocation2 + $0x8d8] sm:$0xff]
    %v394 = vld [vmem:[#allocation2 + $0x8e0] sm:$0xff]
    %v395 = vld [vmem:[#allocation2 + $0x8e8] sm:$0xff]
    %v396 = vld [vmem:[#allocation2 + $0x8f0] sm:$0xff]
    %v397 = vld [vmem:[#allocation2 + $0x8f8] sm:$0xff]
    %v398 = vld [vmem:[#allocation2 + $0x900] sm:$0xff]
    %v399 = vld [vmem:[#allocation2 + $0x908] sm:$0xff]
    %v400 = vld [vmem:[#allocation2 + $0x910] sm:$0xff]
    %v401 = vld [vmem:[#allocation2 + $0x918] sm:$0xff]
    %v402 = vld [vmem:[#allocation2 + $0x920] sm:$0xff]
    %v403 = vld [vmem:[#allocation2 + $0x928] sm:$0xff]
    %v404 = vld [vmem:[#allocation2 + $0x930] sm:$0xff]
    %v405 = vld [vmem:[#allocation2 + $0x938] sm:$0xff]
    %v406 = vld [vmem:[#allocation2 + $0x940] sm:$0xff]
    %v407 = vld [vmem:[#allocation2 + $0x948] sm:$0xff]
    %v408 = vld [vmem:[#allocation2 + $0x950] sm:$0xff]
    %v409 = vld [vmem:[#allocation2 + $0x958] sm:$0xff]
    %v410 = vld [vmem:[#allocation2 + $0x960] sm:$0xff]
    %v411 = vld [vmem:[#allocation2 + $0x968] sm:$0xff]
    %v412 = vld [vmem:[#allocation2 + $0x970] sm:$0xff]
    %v413 = vld [vmem:[#allocation2 + $0x978] sm:$0xff]
    %v414 = vld [vmem:[#allocation2 + $0x980] sm:$0xff]
    %v415 = vld [vmem:[#allocation2 + $0x988] sm:$0xff]
    %v416 = vld [vmem:[#allocation2 + $0x990] sm:$0xff]
    %v417 = vld [vmem:[#allocation2 + $0x998] sm:$0xff]
    %v418 = vld [vmem:[#allocation2 + $0x9a0] sm:$0xff]
    %v419 = vld [vmem:[#allocation2 + $0x9a8] sm:$0xff]
    %v420 = vld [vmem:[#allocation2 + $0x9b0] sm:$0xff]
    %v421 = vld [vmem:[#allocation2 + $0x9b8] sm:$0xff]
    %v422 = vld [vmem:[#allocation2 + $0x9c0] sm:$0xff]
    %v423 = vld [vmem:[#allocation2 + $0x9c8] sm:$0xff]
    %v424 = vld [vmem:[#allocation2 + $0x9d0] sm:$0xff]
    %v425 = vld [vmem:[#allocation2 + $0x9d8] sm:$0xff]
    %v426 = vld [vmem:[#allocation2 + $0x9e0] sm:$0xff]
    %v427 = vld [vmem:[#allocation2 + $0x9e8] sm:$0xff]
    %v428 = vld [vmem:[#allocation2 + $0x9f0] sm:$0xff]
    %v429 = vld [vmem:[#allocation2 + $0x9f8] sm:$0xff]
    %v430 = vld [vmem:[#allocation2 + $0xa00] sm:$0xff]
    %v431 = vld [vmem:[#allocation2 + $0xa08] sm:$0xff]
    %v432 = vld [vmem:[#allocation2 + $0xa10] sm:$0xff]
    %v433 = vld [vmem:[#allocation2 + $0xa18] sm:$0xff]
    %v434 = vld [vmem:[#allocation2 + $0xa20] sm:$0xff]
    %v435 = vld [vmem:[#allocation2 + $0xa28] sm:$0xff]
    %v436 = vld [vmem:[#allocation2 + $0xa30] sm:$0xff]
    %v437 = vld [vmem:[#allocation2 + $0xa38] sm:$0xff]
    %v438 = vld [vmem:[#allocation2 + $0xa40] sm:$0xff]
    %v439 = vld [vmem:[#allocation2 + $0xa48] sm:$0xff]
    %v440 = vld [vmem:[#allocation2 + $0xa50] sm:$0xff]
    %v441 = vld [vmem:[#allocation2 + $0xa58] sm:$0xff]
    %v442 = vld [vmem:[#allocation2 + $0xa60] sm:$0xff]
    %v443 = vld [vmem:[#allocation2 + $0xa68] sm:$0xff]
    %v444 = vld [vmem:[#allocation2 + $0xa70] sm:$0xff]
    %v445 = vld [vmem:[#allocation2 + $0xa78] sm:$0xff]
    %v446 = vld [vmem:[#allocation2 + $0xa80] sm:$0xff]
    %v447 = vld [vmem:[#allocation2 + $0xa88] sm:$0xff]
    %v448 = vld [vmem:[#allocation2 + $0xa90] sm:$0xff]
    %v449 = vld [vmem:[#allocation2 + $0xa98] sm:$0xff]
    %v450 = vld [vmem:[#allocation2 + $0xaa0] sm:$0xff]
    %v451 = vld [vmem:[#allocation2 + $0xaa8] sm:$0xff]
    %v452 = vld [vmem:[#allocation2 + $0xab0] sm:$0xff]
    %v453 = vld [vmem:[#allocation2 + $0xab8] sm:$0xff]
    %v454 = vld [vmem:[#allocation2 + $0xac0] sm:$0xff]
    %v455 = vld [vmem:[#allocation2 + $0xac8] sm:$0xff]
    %v456 = vld [vmem:[#allocation2 + $0xad0] sm:$0xff]
    %v457 = vld [vmem:[#allocation2 + $0xad8] sm:$0xff]
    %v458 = vld [vmem:[#allocation2 + $0xae0] sm:$0xff]
    %v459 = vld [vmem:[#allocation2 + $0xae8] sm:$0xff]
    %v460 = vld [vmem:[#allocation2 + $0xaf0] sm:$0xff]
    %v461 = vld [vmem:[#allocation2 + $0xaf8] sm:$0xff]
    %v462 = vld [vmem:[#allocation2 + $0xb00] sm:$0xff]
    %v463 = vld [vmem:[#allocation2 + $0xb08] sm:$0xff]
    %v464 = vld [vmem:[#allocation2 + $0xb10] sm:$0xff]
    %v465 = vld [vmem:[#allocation2 + $0xb18] sm:$0xff]
    %v466 = vld [vmem:[#allocation2 + $0xb20] sm:$0xff]
    %v467 = vld [vmem:[#allocation2 + $0xb28] sm:$0xff]
    %v468 = vld [vmem:[#allocation2 + $0xb30] sm:$0xff]
    %v469 = vld [vmem:[#allocation2 + $0xb38] sm:$0xff]
    %v470 = vld [vmem:[#allocation2 + $0xb40] sm:$0xff]
    %v471 = vld [vmem:[#allocation2 + $0xb48] sm:$0xff]
    %v472 = vld [vmem:[#allocation2 + $0xb50] sm:$0xff]
    %v473 = vld [vmem:[#allocation2 + $0xb58] sm:$0xff]
    %v474 = vld [vmem:[#allocation2 + $0xb60] sm:$0xff]
    %v475 = vld [vmem:[#allocation2 + $0xb68] sm:$0xff]
    %v476 = vld [vmem:[#allocation2 + $0xb70] sm:$0xff]
    %v477 = vld [vmem:[#allocation2 + $0xb78] sm:$0xff]
    %v478 = vld [vmem:[#allocation2 + $0xb80] sm:$0xff]
    %v479 = vld [vmem:[#allocation2 + $0xb88] sm:$0xff]
    %v480 = vld [vmem:[#allocation2 + $0xb90] sm:$0xff]
    %v481 = vld [vmem:[#allocation2 + $0xb98] sm:$0xff]
    %v482 = vld [vmem:[#allocation2 + $0xba0] sm:$0xff]
    %v483 = vld [vmem:[#allocation2 + $0xba8] sm:$0xff]
    %v484 = vld [vmem:[#allocation2 + $0xbb0] sm:$0xff]
    %v485 = vld [vmem:[#allocation2 + $0xbb8] sm:$0xff]
    %v486 = vld [vmem:[#allocation2 + $0xbc0] sm:$0xff]
    %v487 = vld [vmem:[#allocation2 + $0xbc8] sm:$0xff]
    %v488 = vld [vmem:[#allocation2 + $0xbd0] sm:$0xff]
    %v489 = vld [vmem:[#allocation2 + $0xbd8] sm:$0xff]
    %v490 = vld [vmem:[#allocation2 + $0xbe0] sm:$0xff]
    %v491 = vld [vmem:[#allocation2 + $0xbe8] sm:$0xff]
    %v492 = vld [vmem:[#allocation2 + $0xbf0] sm:$0xff]
    %v493 = vld [vmem:[#allocation2 + $0xbf8] sm:$0xff]
    %v494 = vld [vmem:[#allocation2 + $0xc00] sm:$0xff]
    %v495 = vld [vmem:[#allocation2 + $0xc08] sm:$0xff]
    %v496 = vld [vmem:[#allocation2 + $0xc10] sm:$0xff]
    %v497 = vld [vmem:[#allocation2 + $0xc18] sm:$0xff]
    %v498 = vld [vmem:[#allocation2 + $0xc20] sm:$0xff]
    %v499 = vld [vmem:[#allocation2 + $0xc28] sm:$0xff]
    %v500 = vld [vmem:[#allocation2 + $0xc30] sm:$0xff]
    %v501 = vld [vmem:[#allocation2 + $0xc38] sm:$0xff]
    %v502 = vld [vmem:[#allocation2 + $0xc40] sm:$0xff]
    %v503 = vld [vmem:[#allocation2 + $0xc48] sm:$0xff]
    %v504 = vld [vmem:[#allocation2 + $0xc50] sm:$0xff]
    %v505 = vld [vmem:[#allocation2 + $0xc58] sm:$0xff]
    %v506 = vld [vmem:[#allocation2 + $0xc60] sm:$0xff]
    %v507 = vld [vmem:[#allocation2 + $0xc68] sm:$0xff]
    %v508 = vld [vmem:[#allocation2 + $0xc70] sm:$0xff]
    %v509 = vld [vmem:[#allocation2 + $0xc78] sm:$0xff]
    %v510 = vld [vmem:[#allocation2 + $0xc80] sm:$0xff]
    %v511 = vld [vmem:[#allocation2 + $0xc88] sm:$0xff]
    %v512 = vld [vmem:[#allocation2 + $0xc90] sm:$0xff]
    %v513 = vld [vmem:[#allocation2 + $0xc98] sm:$0xff]
    %v514 = vld [vmem:[#allocation2 + $0xca0] sm:$0xff]
    %v515 = vld [vmem:[#allocation2 + $0xca8] sm:$0xff]
    %v516 = vld [vmem:[#allocation2 + $0xcb0] sm:$0xff]
    %v517 = vld [vmem:[#allocation2 + $0xcb8] sm:$0xff]
    %v518 = vld [vmem:[#allocation2 + $0xcc0] sm:$0xff]
    %v519 = vld [vmem:[#allocation2 + $0xcc8] sm:$0xff]
    %v520 = vld [vmem:[#allocation2 + $0xcd0] sm:$0xff]
    %v521 = vld [vmem:[#allocation2 + $0xcd8] sm:$0xff]
    %v522 = vld [vmem:[#allocation2 + $0xce0] sm:$0xff]
    %v523 = vld [vmem:[#allocation2 + $0xce8] sm:$0xff]
    %v524 = vld [vmem:[#allocation2 + $0xcf0] sm:$0xff]
    %v525 = vld [vmem:[#allocation2 + $0xcf8] sm:$0xff]
    %v526 = vld [vmem:[#allocation2 + $0xd00] sm:$0xff]
    %v527 = vld [vmem:[#allocation2 + $0xd08] sm:$0xff]
    %v528 = vld [vmem:[#allocation2 + $0xd10] sm:$0xff]
    %v529 = vld [vmem:[#allocation2 + $0xd18] sm:$0xff]
    %v530 = vld [vmem:[#allocation2 + $0xd20] sm:$0xff]
    %v531 = vld [vmem:[#allocation2 + $0xd28] sm:$0xff]
    %v532 = vld [vmem:[#allocation2 + $0xd30] sm:$0xff]
    %v533 = vld [vmem:[#allocation2 + $0xd38] sm:$0xff]
    %v534 = vld [vmem:[#allocation2 + $0xd40] sm:$0xff]
    %v535 = vld [vmem:[#allocation2 + $0xd48] sm:$0xff]
    %v536 = vld [vmem:[#allocation2 + $0xd50] sm:$0xff]
    %v537 = vld [vmem:[#allocation2 + $0xd58] sm:$0xff]
    %v538 = vld [vmem:[#allocation2 + $0xd60] sm:$0xff]
    %v539 = vld [vmem:[#allocation2 + $0xd68] sm:$0xff]
    %v540 = vld [vmem:[#allocation2 + $0xd70] sm:$0xff]
    %v541 = vld [vmem:[#allocation2 + $0xd78] sm:$0xff]
    %v542 = vld [vmem:[#allocation2 + $0xd80] sm:$0xff]
    %v543 = vld [vmem:[#allocation2 + $0xd88] sm:$0xff]
    %v544 = vld [vmem:[#allocation2 + $0xd90] sm:$0xff]
    %v545 = vld [vmem:[#allocation2 + $0xd98] sm:$0xff]
    %v546 = vld [vmem:[#allocation2 + $0xda0] sm:$0xff]
    %v547 = vld [vmem:[#allocation2 + $0xda8] sm:$0xff]
    %v548 = vld [vmem:[#allocation2 + $0xdb0] sm:$0xff]
    %v549 = vld [vmem:[#allocation2 + $0xdb8] sm:$0xff]
    %v550 = vld [vmem:[#allocation2 + $0xdc0] sm:$0xff]
    %v551 = vld [vmem:[#allocation2 + $0xdc8] sm:$0xff]
    %v552 = vld [vmem:[#allocation2 + $0xdd0] sm:$0xff]
    %v553 = vld [vmem:[#allocation2 + $0xdd8] sm:$0xff]
    %v554 = vld [vmem:[#allocation2 + $0xde0] sm:$0xff]
    %v555 = vld [vmem:[#allocation2 + $0xde8] sm:$0xff]
    %v556 = vld [vmem:[#allocation2 + $0xdf0] sm:$0xff]
    %v557 = vld [vmem:[#allocation2 + $0xdf8] sm:$0xff]
    %v558 = vld [vmem:[#allocation2 + $0xe00] sm:$0xff]
    %v559 = vld [vmem:[#allocation2 + $0xe08] sm:$0xff]
    %v560 = vld [vmem:[#allocation2 + $0xe10] sm:$0xff]
    %v561 = vld [vmem:[#allocation2 + $0xe18] sm:$0xff]
    %v562 = vld [vmem:[#allocation2 + $0xe20] sm:$0xff]
    %v563 = vld [vmem:[#allocation2 + $0xe28] sm:$0xff]
    %v564 = vld [vmem:[#allocation2 + $0xe30] sm:$0xff]
    %v565 = vld [vmem:[#allocation2 + $0xe38] sm:$0xff]
    %v566 = vld [vmem:[#allocation2 + $0xe40] sm:$0xff]
    %v567 = vld [vmem:[#allocation2 + $0xe48] sm:$0xff]
    %v568 = vld [vmem:[#allocation2 + $0xe50] sm:$0xff]
    %v569 = vld [vmem:[#allocation2 + $0xe58] sm:$0xff]
    %v570 = vld [vmem:[#allocation2 + $0xe60] sm:$0xff]
    %v571 = vld [vmem:[#allocation2 + $0xe68] sm:$0xff]
    %v572 = vld [vmem:[#allocation2 + $0xe70] sm:$0xff]
    %v573 = vld [vmem:[#allocation2 + $0xe78] sm:$0xff]
    %v574 = vld [vmem:[#allocation2 + $0xe80] sm:$0xff]
    %v575 = vld [vmem:[#allocation2 + $0xe88] sm:$0xff]
    %v576 = vld [vmem:[#allocation2 + $0xe90] sm:$0xff]
    %v577 = vld [vmem:[#allocation2 + $0xe98] sm:$0xff]
    %v578 = vld [vmem:[#allocation2 + $0xea0] sm:$0xff]
    %v579 = vld [vmem:[#allocation2 + $0xea8] sm:$0xff]
    %v580 = vld [vmem:[#allocation2 + $0xeb0] sm:$0xff]
    %v581 = vld [vmem:[#allocation2 + $0xeb8] sm:$0xff]
    %v582 = vld [vmem:[#allocation2 + $0xec0] sm:$0xff]
    %v583 = vld [vmem:[#allocation2 + $0xec8] sm:$0xff]
    %v584 = vld [vmem:[#allocation2 + $0xed0] sm:$0xff]
    %v585 = vld [vmem:[#allocation2 + $0xed8] sm:$0xff]
    %v586 = vld [vmem:[#allocation2 + $0xee0] sm:$0xff]
    %v587 = vld [vmem:[#allocation2 + $0xee8] sm:$0xff]
    %v588 = vld [vmem:[#allocation2 + $0xef0] sm:$0xff]
    %v589 = vld [vmem:[#allocation2 + $0xef8] sm:$0xff]
    %v590 = vld [vmem:[#allocation2 + $0xf00] sm:$0xff]
    %v591 = vld [vmem:[#allocation2 + $0xf08] sm:$0xff]
    %v592 = vld [vmem:[#allocation2 + $0xf10] sm:$0xff]
    %v593 = vld [vmem:[#allocation2 + $0xf18] sm:$0xff]
    %v594 = vld [vmem:[#allocation2 + $0xf20] sm:$0xff]
    %v595 = vld [vmem:[#allocation2 + $0xf28] sm:$0xff]
    %v596 = vld [vmem:[#allocation2 + $0xf30] sm:$0xff]
    %v597 = vld [vmem:[#allocation2 + $0xf38] sm:$0xff]
    %v598 = vld [vmem:[#allocation2 + $0xf40] sm:$0xff]
    %v599 = vld [vmem:[#allocation2 + $0xf48] sm:$0xff]
    %v600 = vld [vmem:[#allocation2 + $0xf50] sm:$0xff]
    %v601 = vld [vmem:[#allocation2 + $0xf58] sm:$0xff]
    %v602 = vld [vmem:[#allocation2 + $0xf60] sm:$0xff]
    %v603 = vld [vmem:[#allocation2 + $0xf68] sm:$0xff]
    %v604 = vld [vmem:[#allocation2 + $0xf70] sm:$0xff]
    %v605 = vld [vmem:[#allocation2 + $0xf78] sm:$0xff]
    %v606 = vld [vmem:[#allocation2 + $0xf80] sm:$0xff]
    %v607 = vld [vmem:[#allocation2 + $0xf88] sm:$0xff]
    %v608 = vld [vmem:[#allocation2 + $0xf90] sm:$0xff]
    %v609 = vld [vmem:[#allocation2 + $0xf98] sm:$0xff]
    %v610 = vld [vmem:[#allocation2 + $0xfa0] sm:$0xff]
    %v611 = vld [vmem:[#allocation2 + $0xfa8] sm:$0xff]
    %v612 = vld [vmem:[#allocation2 + $0xfb0] sm:$0xff]
    %v613 = vld [vmem:[#allocation2 + $0xfb8] sm:$0xff]
    %v614 = vld [vmem:[#allocation2 + $0xfc0] sm:$0xff]
    %v615 = vld [vmem:[#allocation2 + $0xfc8] sm:$0xff]
    %v616 = vld [vmem:[#allocation2 + $0xfd0] sm:$0xff]
    %v617 = vld [vmem:[#allocation2 + $0xfd8] sm:$0xff]
    %v618 = vld [vmem:[#allocation2 + $0xfe0] sm:$0xff]
    %v619 = vld [vmem:[#allocation2 + $0xfe8] sm:$0xff]
    %v620 = vld [vmem:[#allocation2 + $0xff0] sm:$0xff]
    %v621 = vld [vmem:[#allocation2 + $0xff8] sm:$0xff]
    %v622 = vld [vmem:[#allocation2 + $0x1000] sm:$0xff]
    %v623 = vld [vmem:[#allocation2 + $0x1008] sm:$0xff]
    %v624 = vld [vmem:[#allocation2 + $0x1010] sm:$0xff]
    %v625 = vld [vmem:[#allocation2 + $0x1018] sm:$0xff]
    %v626 = vld [vmem:[#allocation2 + $0x1020] sm:$0xff]
    %v627 = vld [vmem:[#allocation2 + $0x1028] sm:$0xff]
    %v628 = vld [vmem:[#allocation2 + $0x1030] sm:$0xff]
    %v629 = vld [vmem:[#allocation2 + $0x1038] sm:$0xff]
    %v630 = vld [vmem:[#allocation2 + $0x1040] sm:$0xff]
    %v631 = vld [vmem:[#allocation2 + $0x1048] sm:$0xff]
    %v632 = vld [vmem:[#allocation2 + $0x1050] sm:$0xff]
    %v633 = vld [vmem:[#allocation2 + $0x1058] sm:$0xff]
    %v634 = vld [vmem:[#allocation2 + $0x1060] sm:$0xff]
    %v635 = vld [vmem:[#allocation2 + $0x1068] sm:$0xff]
    %v636 = vld [vmem:[#allocation2 + $0x1070] sm:$0xff]
    %v637 = vld [vmem:[#allocation2 + $0x1078] sm:$0xff]
    %v638 = vld [vmem:[#allocation2 + $0x1080] sm:$0xff]
    %v639 = vld [vmem:[#allocation2 + $0x1088] sm:$0xff]
    %v640 = vld [vmem:[#allocation2 + $0x1090] sm:$0xff]
    %v641 = vld [vmem:[#allocation2 + $0x1098] sm:$0xff]
    %v642 = vld [vmem:[#allocation2 + $0x10a0] sm:$0xff]
    %v643 = vld [vmem:[#allocation2 + $0x10a8] sm:$0xff]
    %v644 = vld [vmem:[#allocation2 + $0x10b0] sm:$0xff]
    %v645 = vld [vmem:[#allocation2 + $0x10b8] sm:$0xff]
    %v646 = vld [vmem:[#allocation2 + $0x10c0] sm:$0xff]
    %v647 = vld [vmem:[#allocation2 + $0x10c8] sm:$0xff]
    %v648 = vld [vmem:[#allocation2 + $0x10d0] sm:$0xff]
    %v649 = vld [vmem:[#allocation2 + $0x10d8] sm:$0xff]
    %v650 = vld [vmem:[#allocation2 + $0x10e0] sm:$0xff]
    %v651 = vld [vmem:[#allocation2 + $0x10e8] sm:$0xff]
    %v652 = vld [vmem:[#allocation2 + $0x10f0] sm:$0xff]
    %v653 = vld [vmem:[#allocation2 + $0x10f8] sm:$0xff]
    %v654 = vld [vmem:[#allocation2 + $0x1100] sm:$0xff]
    %v655 = vld [vmem:[#allocation2 + $0x1108] sm:$0xff]
    %v656 = vld [vmem:[#allocation2 + $0x1110] sm:$0xff]
    %v657 = vld [vmem:[#allocation2 + $0x1118] sm:$0xff]
    %v658 = vld [vmem:[#allocation2 + $0x1120] sm:$0xff]
    %v659 = vld [vmem:[#allocation2 + $0x1128] sm:$0xff]
    %v660 = vld [vmem:[#allocation2 + $0x1130] sm:$0xff]
    %v661 = vld [vmem:[#allocation2 + $0x1138] sm:$0xff]
    %v662 = vld [vmem:[#allocation2 + $0x1140] sm:$0xff]
    %v663 = vld [vmem:[#allocation2 + $0x1148] sm:$0xff]
    %v664 = vld [vmem:[#allocation2 + $0x1150] sm:$0xff]
    %v665 = vld [vmem:[#allocation2 + $0x1158] sm:$0xff]
    %v666 = vld [vmem:[#allocation2 + $0x1160] sm:$0xff]
    %v667 = vld [vmem:[#allocation2 + $0x1168] sm:$0xff]
    %v668 = vld [vmem:[#allocation2 + $0x1170] sm:$0xff]
    %v669 = vld [vmem:[#allocation2 + $0x1178] sm:$0xff]
    %v670 = vld [vmem:[#allocation2 + $0x1180] sm:$0xff]
    %v671 = vld [vmem:[#allocation2 + $0x1188] sm:$0xff]
    %v672 = vld [vmem:[#allocation2 + $0x1190] sm:$0xff]
    %v673 = vld [vmem:[#allocation2 + $0x1198] sm:$0xff]
    %v674 = vld [vmem:[#allocation2 + $0x11a0] sm:$0xff]
    %v675 = vld [vmem:[#allocation2 + $0x11a8] sm:$0xff]
    %v676 = vld [vmem:[#allocation2 + $0x11b0] sm:$0xff]
    %v677 = vld [vmem:[#allocation2 + $0x11b8] sm:$0xff]
    %v678 = vld [vmem:[#allocation2 + $0x11c0] sm:$0xff]
    %v679 = vld [vmem:[#allocation2 + $0x11c8] sm:$0xff]
    %v680 = vld [vmem:[#allocation2 + $0x11d0] sm:$0xff]
    %v681 = vld [vmem:[#allocation2 + $0x11d8] sm:$0xff]
    %v682 = vld [vmem:[#allocation2 + $0x11e0] sm:$0xff]
    %v683 = vld [vmem:[#allocation2 + $0x11e8] sm:$0xff]
    %v684 = vld [vmem:[#allocation2 + $0x11f0] sm:$0xff]
    %v685 = vld [vmem:[#allocation2 + $0x11f8] sm:$0xff]
    %v686 = vld [vmem:[#allocation2 + $0x1200] sm:$0xff]
    %v687 = vld [vmem:[#allocation2 + $0x1208] sm:$0xff]
    %v688 = vld [vmem:[#allocation2 + $0x1210] sm:$0xff]
    %v689 = vld [vmem:[#allocation2 + $0x1218] sm:$0xff]
    %v690 = vld [vmem:[#allocation2 + $0x1220] sm:$0xff]
    %v691 = vld [vmem:[#allocation2 + $0x1228] sm:$0xff]
    %v692 = vld [vmem:[#allocation2 + $0x1230] sm:$0xff]
    %v693 = vld [vmem:[#allocation2 + $0x1238] sm:$0xff]
    %v694 = vld [vmem:[#allocation2 + $0x1240] sm:$0xff]
    %v695 = vld [vmem:[#allocation2 + $0x1248] sm:$0xff]
    %v696 = vld [vmem:[#allocation2 + $0x1250] sm:$0xff]
    %v697 = vld [vmem:[#allocation2 + $0x1258] sm:$0xff]
    %v698 = vld [vmem:[#allocation2 + $0x1260] sm:$0xff]
    %v699 = vld [vmem:[#allocation2 + $0x1268] sm:$0xff]
    %v700 = vld [vmem:[#allocation2 + $0x1270] sm:$0xff]
    %v701 = vld [vmem:[#allocation2 + $0x1278] sm:$0xff]
    %v702 = vld [vmem:[#allocation2 + $0x1280] sm:$0xff]
    %v703 = vld [vmem:[#allocation2 + $0x1288] sm:$0xff]
    %v704 = vld [vmem:[#allocation2 + $0x1290] sm:$0xff]
    %v705 = vld [vmem:[#allocation2 + $0x1298] sm:$0xff]
    %v706 = vld [vmem:[#allocation2 + $0x12a0] sm:$0xff]
    %v707 = vld [vmem:[#allocation2 + $0x12a8] sm:$0xff]
    %v708 = vld [vmem:[#allocation2 + $0x12b0] sm:$0xff]
    %v709 = vld [vmem:[#allocation2 + $0x12b8] sm:$0xff]
    %v710 = vld [vmem:[#allocation2 + $0x12c0] sm:$0xff]
    %v711 = vld [vmem:[#allocation2 + $0x12c8] sm:$0xff]
    %v712 = vld [vmem:[#allocation2 + $0x12d0] sm:$0xff]
    %v713 = vld [vmem:[#allocation2 + $0x12d8] sm:$0xff]
    %v714 = vld [vmem:[#allocation2 + $0x12e0] sm:$0xff]
    %v715 = vld [vmem:[#allocation2 + $0x12e8] sm:$0xff]
    %v716 = vld [vmem:[#allocation2 + $0x12f0] sm:$0xff]
    %v717 = vld [vmem:[#allocation2 + $0x12f8] sm:$0xff]
    %v718 = vld [vmem:[#allocation2 + $0x1300] sm:$0xff]
    %v719 = vld [vmem:[#allocation2 + $0x1308] sm:$0xff]
    %v720 = vld [vmem:[#allocation2 + $0x1310] sm:$0xff]
    %v721 = vld [vmem:[#allocation2 + $0x1318] sm:$0xff]
    %v722 = vld [vmem:[#allocation2 + $0x1320] sm:$0xff]
    %v723 = vld [vmem:[#allocation2 + $0x1328] sm:$0xff]
    %v724 = vld [vmem:[#allocation2 + $0x1330] sm:$0xff]
    %v725 = vld [vmem:[#allocation2 + $0x1338] sm:$0xff]
    %v726 = vld [vmem:[#allocation2 + $0x1340] sm:$0xff]
    %v727 = vld [vmem:[#allocation2 + $0x1348] sm:$0xff]
    %v728 = vld [vmem:[#allocation2 + $0x1350] sm:$0xff]
    %v729 = vld [vmem:[#allocation2 + $0x1358] sm:$0xff]
    %v730 = vld [vmem:[#allocation2 + $0x1360] sm:$0xff]
    %v731 = vld [vmem:[#allocation2 + $0x1368] sm:$0xff]
    %v732 = vld [vmem:[#allocation2 + $0x1370] sm:$0xff]
    %v733 = vld [vmem:[#allocation2 + $0x1378] sm:$0xff]
    %v734 = vld [vmem:[#allocation2 + $0x1380] sm:$0xff]
    %v735 = vld [vmem:[#allocation2 + $0x1388] sm:$0xff]
    %v736 = vld [vmem:[#allocation2 + $0x1390] sm:$0xff]
    %v737 = vld [vmem:[#allocation2 + $0x1398] sm:$0xff]
    %v738 = vld [vmem:[#allocation2 + $0x13a0] sm:$0xff]
    %v739 = vld [vmem:[#allocation2 + $0x13a8] sm:$0xff]
    %v740 = vld [vmem:[#allocation2 + $0x13b0] sm:$0xff]
    %v741 = vld [vmem:[#allocation2 + $0x13b8] sm:$0xff]
    %v742 = vld [vmem:[#allocation2 + $0x13c0] sm:$0xff]
    %v743 = vld [vmem:[#allocation2 + $0x13c8] sm:$0xff]
    %v744 = vld [vmem:[#allocation2 + $0x13d0] sm:$0xff]
    %v745 = vld [vmem:[#allocation2 + $0x13d8] sm:$0xff]
    %v746 = vld [vmem:[#allocation2 + $0x13e0] sm:$0xff]
    %v747 = vld [vmem:[#allocation2 + $0x13e8] sm:$0xff]
    %v748 = vld [vmem:[#allocation2 + $0x13f0] sm:$0xff]
    %v749 = vld [vmem:[#allocation2 + $0x13f8] sm:$0xff]
    %v750 = vld [vmem:[#allocation2 + $0x1400] sm:$0xff]
    %v751 = vld [vmem:[#allocation2 + $0x1408] sm:$0xff]
    %v752 = vld [vmem:[#allocation2 + $0x1410] sm:$0xff]
    %v753 = vld [vmem:[#allocation2 + $0x1418] sm:$0xff]
    %v754 = vld [vmem:[#allocation2 + $0x1420] sm:$0xff]
    %v755 = vld [vmem:[#allocation2 + $0x1428] sm:$0xff]
    %v756 = vld [vmem:[#allocation2 + $0x1430] sm:$0xff]
    %v757 = vld [vmem:[#allocation2 + $0x1438] sm:$0xff]
    %v758 = vld [vmem:[#allocation2 + $0x1440] sm:$0xff]
    %v759 = vld [vmem:[#allocation2 + $0x1448] sm:$0xff]
    %v760 = vld [vmem:[#allocation2 + $0x1450] sm:$0xff]
    %v761 = vld [vmem:[#allocation2 + $0x1458] sm:$0xff]
    %v762 = vld [vmem:[#allocation2 + $0x1460] sm:$0xff]
    %v763 = vld [vmem:[#allocation2 + $0x1468] sm:$0xff]
    %v764 = vld [vmem:[#allocation2 + $0x1470] sm:$0xff]
    %v765 = vld [vmem:[#allocation2 + $0x1478] sm:$0xff]
    %v766 = vld [vmem:[#allocation2 + $0x1480] sm:$0xff]
    %v767 = vld [vmem:[#allocation2 + $0x1488] sm:$0xff]
    %v768 = vld [vmem:[#allocation2 + $0x1490] sm:$0xff]
    %v769 = vld [vmem:[#allocation2 + $0x1498] sm:$0xff]
    %v770 = vld [vmem:[#allocation2 + $0x14a0] sm:$0xff]
    %v771 = vld [vmem:[#allocation2 + $0x14a8] sm:$0xff]
    %v772 = vld [vmem:[#allocation2 + $0x14b0] sm:$0xff]
    %v773 = vld [vmem:[#allocation2 + $0x14b8] sm:$0xff]
    %v774 = vld [vmem:[#allocation2 + $0x14c0] sm:$0xff]
    %v775 = vld [vmem:[#allocation2 + $0x14c8] sm:$0xff]
    %v776 = vld [vmem:[#allocation2 + $0x14d0] sm:$0xff]
    %v777 = vld [vmem:[#allocation2 + $0x14d8] sm:$0xff]
    %v778 = vld [vmem:[#allocation2 + $0x14e0] sm:$0xff]
    %v779 = vld [vmem:[#allocation2 + $0x14e8] sm:$0xff]
    %v780 = vld [vmem:[#allocation2 + $0x14f0] sm:$0xff]
    %v781 = vld [vmem:[#allocation2 + $0x14f8] sm:$0xff]
    %v782 = vld [vmem:[#allocation2 + $0x1500] sm:$0xff]
    %v783 = vld [vmem:[#allocation2 + $0x1508] sm:$0xff]
    %v784 = vld [vmem:[#allocation2 + $0x1510] sm:$0xff]
    %v785 = vld [vmem:[#allocation2 + $0x1518] sm:$0xff]
    %v786 = vld [vmem:[#allocation2 + $0x1520] sm:$0xff]
    %v787 = vld [vmem:[#allocation2 + $0x1528] sm:$0xff]
    %v788 = vld [vmem:[#allocation2 + $0x1530] sm:$0xff]
    %v789 = vld [vmem:[#allocation2 + $0x1538] sm:$0xff]
    %v790 = vld [vmem:[#allocation2 + $0x1540] sm:$0xff]
    %v791 = vld [vmem:[#allocation2 + $0x1548] sm:$0xff]
    %v792 = vld [vmem:[#allocation2 + $0x1550] sm:$0xff]
    %v793 = vld [vmem:[#allocation2 + $0x1558] sm:$0xff]
    %v794 = vld [vmem:[#allocation2 + $0x1560] sm:$0xff]
    %v795 = vld [vmem:[#allocation2 + $0x1568] sm:$0xff]
    %v796 = vld [vmem:[#allocation2 + $0x1570] sm:$0xff]
    %v797 = vld [vmem:[#allocation2 + $0x1578] sm:$0xff]
    %v798 = vld [vmem:[#allocation2 + $0x1580] sm:$0xff]
    %v799 = vld [vmem:[#allocation2 + $0x1588] sm:$0xff]
    %v800 = vld [vmem:[#allocation2 + $0x1590] sm:$0xff]
    %v801 = vld [vmem:[#allocation2 + $0x1598] sm:$0xff]
    %v802 = vld [vmem:[#allocation2 + $0x15a0] sm:$0xff]
    %v803 = vld [vmem:[#allocation2 + $0x15a8] sm:$0xff]
    %v804 = vld [vmem:[#allocation2 + $0x15b0] sm:$0xff]
    %v805 = vld [vmem:[#allocation2 + $0x15b8] sm:$0xff]
    %v806 = vld [vmem:[#allocation2 + $0x15c0] sm:$0xff]
    %v807 = vld [vmem:[#allocation2 + $0x15c8] sm:$0xff]
    %v808 = vld [vmem:[#allocation2 + $0x15d0] sm:$0xff]
    %v809 = vld [vmem:[#allocation2 + $0x15d8] sm:$0xff]
    %v810 = vld [vmem:[#allocation2 + $0x15e0] sm:$0xff]
    %v811 = vld [vmem:[#allocation2 + $0x15e8] sm:$0xff]
    %v812 = vld [vmem:[#allocation2 + $0x15f0] sm:$0xff]
    %v813 = vld [vmem:[#allocation2 + $0x15f8] sm:$0xff]
    %v814 = vld [vmem:[#allocation2 + $0x1600] sm:$0xff]
    %v815 = vld [vmem:[#allocation2 + $0x1608] sm:$0xff]
    %v816 = vld [vmem:[#allocation2 + $0x1610] sm:$0xff]
    %v817 = vld [vmem:[#allocation2 + $0x1618] sm:$0xff]
    %v818 = vld [vmem:[#allocation2 + $0x1620] sm:$0xff]
    %v819 = vld [vmem:[#allocation2 + $0x1628] sm:$0xff]
    %v820 = vld [vmem:[#allocation2 + $0x1630] sm:$0xff]
    %v821 = vld [vmem:[#allocation2 + $0x1638] sm:$0xff]
    %v822 = vld [vmem:[#allocation2 + $0x1640] sm:$0xff]
    %v823 = vld [vmem:[#allocation2 + $0x1648] sm:$0xff]
    %v824 = vld [vmem:[#allocation2 + $0x1650] sm:$0xff]
    %v825 = vld [vmem:[#allocation2 + $0x1658] sm:$0xff]
    %v826 = vld [vmem:[#allocation2 + $0x1660] sm:$0xff]
    %v827 = vld [vmem:[#allocation2 + $0x1668] sm:$0xff]
    %v828 = vld [vmem:[#allocation2 + $0x1670] sm:$0xff]
    %v829 = vld [vmem:[#allocation2 + $0x1678] sm:$0xff]
    %v830 = vld [vmem:[#allocation2 + $0x1680] sm:$0xff]
    %v831 = vld [vmem:[#allocation2 + $0x1688] sm:$0xff]
    %v832 = vld [vmem:[#allocation2 + $0x1690] sm:$0xff]
    %v833 = vld [vmem:[#allocation2 + $0x1698] sm:$0xff]
    %v834 = vld [vmem:[#allocation2 + $0x16a0] sm:$0xff]
    %v835 = vld [vmem:[#allocation2 + $0x16a8] sm:$0xff]
    %v836 = vld [vmem:[#allocation2 + $0x16b0] sm:$0xff]
    %v837 = vld [vmem:[#allocation2 + $0x16b8] sm:$0xff]
    %v838 = vld [vmem:[#allocation2 + $0x16c0] sm:$0xff]
    %v839 = vld [vmem:[#allocation2 + $0x16c8] sm:$0xff]
    %v840 = vld [vmem:[#allocation2 + $0x16d0] sm:$0xff]
    %v841 = vld [vmem:[#allocation2 + $0x16d8] sm:$0xff]
    %v842 = vld [vmem:[#allocation2 + $0x16e0] sm:$0xff]
    %v843 = vld [vmem:[#allocation2 + $0x16e8] sm:$0xff]
    %v844 = vld [vmem:[#allocation2 + $0x16f0] sm:$0xff]
    %v845 = vld [vmem:[#allocation2 + $0x16f8] sm:$0xff]
    %v846 = vld [vmem:[#allocation2 + $0x1700] sm:$0xff]
    %v847 = vld [vmem:[#allocation2 + $0x1708] sm:$0xff]
    %v848 = vld [vmem:[#allocation2 + $0x1710] sm:$0xff]
    %v849 = vld [vmem:[#allocation2 + $0x1718] sm:$0xff]
    %v850 = vld [vmem:[#allocation2 + $0x1720] sm:$0xff]
    %v851 = vld [vmem:[#allocation2 + $0x1728] sm:$0xff]
    %v852 = vld [vmem:[#allocation2 + $0x1730] sm:$0xff]
    %v853 = vld [vmem:[#allocation2 + $0x1738] sm:$0xff]
    %v854 = vld [vmem:[#allocation2 + $0x1740] sm:$0xff]
    %v855 = vld [vmem:[#allocation2 + $0x1748] sm:$0xff]
    %v856 = vld [vmem:[#allocation2 + $0x1750] sm:$0xff]
    %v857 = vld [vmem:[#allocation2 + $0x1758] sm:$0xff]
    %v858 = vld [vmem:[#allocation2 + $0x1760] sm:$0xff]
    %v859 = vld [vmem:[#allocation2 + $0x1768] sm:$0xff]
    %v860 = vld [vmem:[#allocation2 + $0x1770] sm:$0xff]
    %v861 = vld [vmem:[#allocation2 + $0x1778] sm:$0xff]
    %v862 = vld [vmem:[#allocation2 + $0x1780] sm:$0xff]
    %v863 = vld [vmem:[#allocation2 + $0x1788] sm:$0xff]
    %v864 = vld [vmem:[#allocation2 + $0x1790] sm:$0xff]
    %v865 = vld [vmem:[#allocation2 + $0x1798] sm:$0xff]
    %v866 = vld [vmem:[#allocation2 + $0x17a0] sm:$0xff]
    %v867 = vld [vmem:[#allocation2 + $0x17a8] sm:$0xff]
    %v868 = vld [vmem:[#allocation2 + $0x17b0] sm:$0xff]
    %v869 = vld [vmem:[#allocation2 + $0x17b8] sm:$0xff]
    %v870 = vld [vmem:[#allocation2 + $0x17c0] sm:$0xff]
    %v871 = vld [vmem:[#allocation2 + $0x17c8] sm:$0xff]
    %v872 = vld [vmem:[#allocation2 + $0x17d0] sm:$0xff]
    %v873 = vld [vmem:[#allocation2 + $0x17d8] sm:$0xff]
    %v874 = vld [vmem:[#allocation2 + $0x17e0] sm:$0xff]
    %v875 = vld [vmem:[#allocation2 + $0x17e8] sm:$0xff]
    %v876 = vld [vmem:[#allocation2 + $0x17f0] sm:$0xff]
    %v877 = vld [vmem:[#allocation2 + $0x17f8] sm:$0xff]
    %v878 = vld [vmem:[#allocation2 + $0x1800] sm:$0xff]
    %v879 = vld [vmem:[#allocation2 + $0x1808] sm:$0xff]
    %v880 = vld [vmem:[#allocation2 + $0x1810] sm:$0xff]
    %v881 = vld [vmem:[#allocation2 + $0x1818] sm:$0xff]
    %v882 = vld [vmem:[#allocation2 + $0x1820] sm:$0xff]
    %v883 = vld [vmem:[#allocation2 + $0x1828] sm:$0xff]
    %v884 = vld [vmem:[#allocation2 + $0x1830] sm:$0xff]
    %v885 = vld [vmem:[#allocation2 + $0x1838] sm:$0xff]
    %v886 = vld [vmem:[#allocation2 + $0x1840] sm:$0xff]
    %v887 = vld [vmem:[#allocation2 + $0x1848] sm:$0xff]
    %v888 = vld [vmem:[#allocation2 + $0x1850] sm:$0xff]
    %v889 = vld [vmem:[#allocation2 + $0x1858] sm:$0xff]
    %v890 = vld [vmem:[#allocation2 + $0x1860] sm:$0xff]
    %v891 = vld [vmem:[#allocation2 + $0x1868] sm:$0xff]
    %v892 = vld [vmem:[#allocation2 + $0x1870] sm:$0xff]
    %v893 = vld [vmem:[#allocation2 + $0x1878] sm:$0xff]
    %v894 = vld [vmem:[#allocation2 + $0x1880] sm:$0xff]
    %v895 = vld [vmem:[#allocation2 + $0x1888] sm:$0xff]
    %v896 = vld [vmem:[#allocation2 + $0x1890] sm:$0xff]
    %v897 = vld [vmem:[#allocation2 + $0x1898] sm:$0xff]
    %v898 = vld [vmem:[#allocation2 + $0x18a0] sm:$0xff]
    %v899 = vld [vmem:[#allocation2 + $0x18a8] sm:$0xff]
    %v900 = vld [vmem:[#allocation2 + $0x18b0] sm:$0xff]
    %v901 = vld [vmem:[#allocation2 + $0x18b8] sm:$0xff]
    %v902 = vld [vmem:[#allocation2 + $0x18c0] sm:$0xff]
    %v903 = vld [vmem:[#allocation2 + $0x18c8] sm:$0xff]
    %v904 = vld [vmem:[#allocation2 + $0x18d0] sm:$0xff]
    %v905 = vld [vmem:[#allocation2 + $0x18d8] sm:$0xff]
    %v906 = vld [vmem:[#allocation2 + $0x18e0] sm:$0xff]
    %v907 = vld [vmem:[#allocation2 + $0x18e8] sm:$0xff]
    %v908 = vld [vmem:[#allocation2 + $0x18f0] sm:$0xff]
    %v909 = vld [vmem:[#allocation2 + $0x18f8] sm:$0xff]
    %v910 = vld [vmem:[#allocation2 + $0x1900] sm:$0xff]
    %v911 = vld [vmem:[#allocation2 + $0x1908] sm:$0xff]
    %v912 = vld [vmem:[#allocation2 + $0x1910] sm:$0xff]
    %v913 = vld [vmem:[#allocation2 + $0x1918] sm:$0xff]
    %v914 = vld [vmem:[#allocation2 + $0x1920] sm:$0xff]
    %v915 = vld [vmem:[#allocation2 + $0x1928] sm:$0xff]
    %v916 = vld [vmem:[#allocation2 + $0x1930] sm:$0xff]
    %v917 = vld [vmem:[#allocation2 + $0x1938] sm:$0xff]
    %v918 = vld [vmem:[#allocation2 + $0x1940] sm:$0xff]
    %v919 = vld [vmem:[#allocation2 + $0x1948] sm:$0xff]
    %v920 = vld [vmem:[#allocation2 + $0x1950] sm:$0xff]
    %v921 = vld [vmem:[#allocation2 + $0x1958] sm:$0xff]
    %v922 = vld [vmem:[#allocation2 + $0x1960] sm:$0xff]
    %v923 = vld [vmem:[#allocation2 + $0x1968] sm:$0xff]
    %v924 = vld [vmem:[#allocation2 + $0x1970] sm:$0xff]
    %v925 = vld [vmem:[#allocation2 + $0x1978] sm:$0xff]
    %v926 = vld [vmem:[#allocation2 + $0x1980] sm:$0xff]
    %v927 = vld [vmem:[#allocation2 + $0x1988] sm:$0xff]
    %v928 = vld [vmem:[#allocation2 + $0x1990] sm:$0xff]
    %v929 = vld [vmem:[#allocation2 + $0x1998] sm:$0xff]
    %v930 = vld [vmem:[#allocation2 + $0x19a0] sm:$0xff]
    %v931 = vld [vmem:[#allocation2 + $0x19a8] sm:$0xff]
    %v932 = vld [vmem:[#allocation2 + $0x19b0] sm:$0xff]
    %v933 = vld [vmem:[#allocation2 + $0x19b8] sm:$0xff]
    %v934 = vld [vmem:[#allocation2 + $0x19c0] sm:$0xff]
    %v935 = vld [vmem:[#allocation2 + $0x19c8] sm:$0xff]
    %v936 = vld [vmem:[#allocation2 + $0x19d0] sm:$0xff]
    %v937 = vld [vmem:[#allocation2 + $0x19d8] sm:$0xff]
    %v938 = vld [vmem:[#allocation2 + $0x19e0] sm:$0xff]
    %v939 = vld [vmem:[#allocation2 + $0x19e8] sm:$0xff]
    %v940 = vld [vmem:[#allocation2 + $0x19f0] sm:$0xff]
    %v941 = vld [vmem:[#allocation2 + $0x19f8] sm:$0xff]
    %v942 = vld [vmem:[#allocation2 + $0x1a00] sm:$0xff]
    %v943 = vld [vmem:[#allocation2 + $0x1a08] sm:$0xff]
    %v944 = vld [vmem:[#allocation2 + $0x1a10] sm:$0xff]
    %v945 = vld [vmem:[#allocation2 + $0x1a18] sm:$0xff]
    %v946 = vld [vmem:[#allocation2 + $0x1a20] sm:$0xff]
    %v947 = vld [vmem:[#allocation2 + $0x1a28] sm:$0xff]
    %v948 = vld [vmem:[#allocation2 + $0x1a30] sm:$0xff]
    %v949 = vld [vmem:[#allocation2 + $0x1a38] sm:$0xff]
    %v950 = vld [vmem:[#allocation2 + $0x1a40] sm:$0xff]
    %v951 = vld [vmem:[#allocation2 + $0x1a48] sm:$0xff]
    %v952 = vld [vmem:[#allocation2 + $0x1a50] sm:$0xff]
    %v953 = vld [vmem:[#allocation2 + $0x1a58] sm:$0xff]
    %v954 = vld [vmem:[#allocation2 + $0x1a60] sm:$0xff]
    %v955 = vld [vmem:[#allocation2 + $0x1a68] sm:$0xff]
    %v956 = vld [vmem:[#allocation2 + $0x1a70] sm:$0xff]
    %v957 = vld [vmem:[#allocation2 + $0x1a78] sm:$0xff]
    %v958 = vld [vmem:[#allocation2 + $0x1a80] sm:$0xff]
    %v959 = vld [vmem:[#allocation2 + $0x1a88] sm:$0xff]
    %v960 = vld [vmem:[#allocation2 + $0x1a90] sm:$0xff]
    %v961 = vld [vmem:[#allocation2 + $0x1a98] sm:$0xff]
    %v962 = vld [vmem:[#allocation2 + $0x1aa0] sm:$0xff]
    %v963 = vld [vmem:[#allocation2 + $0x1aa8] sm:$0xff]
    %v964 = vld [vmem:[#allocation2 + $0x1ab0] sm:$0xff]
    %v965 = vld [vmem:[#allocation2 + $0x1ab8] sm:$0xff]
    %v966 = vld [vmem:[#allocation2 + $0x1ac0] sm:$0xff]
    %v967 = vld [vmem:[#allocation2 + $0x1ac8] sm:$0xff]
    %v968 = vld [vmem:[#allocation2 + $0x1ad0] sm:$0xff]
    %v969 = vld [vmem:[#allocation2 + $0x1ad8] sm:$0xff]
    %v970 = vld [vmem:[#allocation2 + $0x1ae0] sm:$0xff]
    %v971 = vld [vmem:[#allocation2 + $0x1ae8] sm:$0xff]
    %v972 = vld [vmem:[#allocation2 + $0x1af0] sm:$0xff]
    %v973 = vld [vmem:[#allocation2 + $0x1af8] sm:$0xff]
    %v974 = vld [vmem:[#allocation2 + $0x1b00] sm:$0xff]
    %v975 = vld [vmem:[#allocation2 + $0x1b08] sm:$0xff]
    %v976 = vld [vmem:[#allocation2 + $0x1b10] sm:$0xff]
    %v977 = vld [vmem:[#allocation2 + $0x1b18] sm:$0xff]
    %v978 = vld [vmem:[#allocation2 + $0x1b20] sm:$0xff]
    %v979 = vld [vmem:[#allocation2 + $0x1b28] sm:$0xff]
    %v980 = vld [vmem:[#allocation2 + $0x1b30] sm:$0xff]
    %v981 = vld [vmem:[#allocation2 + $0x1b38] sm:$0xff]
    %v982 = vld [vmem:[#allocation2 + $0x1b40] sm:$0xff]
    %v983 = vld [vmem:[#allocation2 + $0x1b48] sm:$0xff]
    %v984 = vld [vmem:[#allocation2 + $0x1b50] sm:$0xff]
    %v985 = vld [vmem:[#allocation2 + $0x1b58] sm:$0xff]
    %v986 = vld [vmem:[#allocation2 + $0x1b60] sm:$0xff]
    %v987 = vld [vmem:[#allocation2 + $0x1b68] sm:$0xff]
    %v988 = vld [vmem:[#allocation2 + $0x1b70] sm:$0xff]
    %v989 = vld [vmem:[#allocation2 + $0x1b78] sm:$0xff]
    %v990 = vld [vmem:[#allocation2 + $0x1b80] sm:$0xff]
    %v991 = vld [vmem:[#allocation2 + $0x1b88] sm:$0xff]
    %v992 = vld [vmem:[#allocation2 + $0x1b90] sm:$0xff]
    %v993 = vld [vmem:[#allocation2 + $0x1b98] sm:$0xff]
    %v994 = vld [vmem:[#allocation2 + $0x1ba0] sm:$0xff]
    %v995 = vld [vmem:[#allocation2 + $0x1ba8] sm:$0xff]
    %v996 = vld [vmem:[#allocation2 + $0x1bb0] sm:$0xff]
    %v997 = vld [vmem:[#allocation2 + $0x1bb8] sm:$0xff]
    %v998 = vld [vmem:[#allocation2 + $0x1bc0] sm:$0xff]
    %v999 = vld [vmem:[#allocation2 + $0x1bc8] sm:$0xff]
    %v1000 = vld [vmem:[#allocation2 + $0x1bd0] sm:$0xff]
    %v1001 = vld [vmem:[#allocation2 + $0x1bd8] sm:$0xff]
    %v1002 = vld [vmem:[#allocation2 + $0x1be0] sm:$0xff]
    %v1003 = vld [vmem:[#allocation2 + $0x1be8] sm:$0xff]
    %v1004 = vld [vmem:[#allocation2 + $0x1bf0] sm:$0xff]
    %v1005 = vld [vmem:[#allocation2 + $0x1bf8] sm:$0xff]
    %v1006 = vld [vmem:[#allocation2 + $0x1c00] sm:$0xff]
    %v1007 = vld [vmem:[#allocation2 + $0x1c08] sm:$0xff]
    %v1008 = vld [vmem:[#allocation2 + $0x1c10] sm:$0xff]
    %v1009 = vld [vmem:[#allocation2 + $0x1c18] sm:$0xff]
    %v1010 = vld [vmem:[#allocation2 + $0x1c20] sm:$0xff]
    %v1011 = vld [vmem:[#allocation2 + $0x1c28] sm:$0xff]
    %v1012 = vld [vmem:[#allocation2 + $0x1c30] sm:$0xff]
    %v1013 = vld [vmem:[#allocation2 + $0x1c38] sm:$0xff]
    %v1014 = vld [vmem:[#allocation2 + $0x1c40] sm:$0xff]
    %v1015 = vld [vmem:[#allocation2 + $0x1c48] sm:$0xff]
    %v1016 = vld [vmem:[#allocation2 + $0x1c50] sm:$0xff]
    %v1017 = vld [vmem:[#allocation2 + $0x1c58] sm:$0xff]
    %v1018 = vld [vmem:[#allocation2 + $0x1c60] sm:$0xff]
    %v1019 = vld [vmem:[#allocation2 + $0x1c68] sm:$0xff]
    %v1020 = vld [vmem:[#allocation2 + $0x1c70] sm:$0xff]
    %v1021 = vld [vmem:[#allocation2 + $0x1c78] sm:$0xff]
    %v1022 = vld [vmem:[#allocation2 + $0x1c80] sm:$0xff]
    %v1023 = vld [vmem:[#allocation2 + $0x1c88] sm:$0xff]
    %v1024 = vld [vmem:[#allocation2 + $0x1c90] sm:$0xff]
    %v1025 = vld [vmem:[#allocation2 + $0x1c98] sm:$0xff]
    %v1026 = vld [vmem:[#allocation2 + $0x1ca0] sm:$0xff]
    %v1027 = vld [vmem:[#allocation2 + $0x1ca8] sm:$0xff]
    %v1028 = vld [vmem:[#allocation2 + $0x1cb0] sm:$0xff]
    %v1029 = vld [vmem:[#allocation2 + $0x1cb8] sm:$0xff]
    %v1030 = vld [vmem:[#allocation2 + $0x1cc0] sm:$0xff]
    %v1031 = vld [vmem:[#allocation2 + $0x1cc8] sm:$0xff]
    %v1032 = vld [vmem:[#allocation2 + $0x1cd0] sm:$0xff]
    %v1033 = vld [vmem:[#allocation2 + $0x1cd8] sm:$0xff]
    %v1034 = vld [vmem:[#allocation2 + $0x1ce0] sm:$0xff]
    %v1035 = vld [vmem:[#allocation2 + $0x1ce8] sm:$0xff]
    %v1036 = vld [vmem:[#allocation2 + $0x1cf0] sm:$0xff]
    %v1037 = vld [vmem:[#allocation2 + $0x1cf8] sm:$0xff]
    %v1038 = vld [vmem:[#allocation2 + $0x1d00] sm:$0xff]
    %v1039 = vld [vmem:[#allocation2 + $0x1d08] sm:$0xff]
    %v1040 = vld [vmem:[#allocation2 + $0x1d10] sm:$0xff]
    %v1041 = vld [vmem:[#allocation2 + $0x1d18] sm:$0xff]
    %v1042 = vld [vmem:[#allocation2 + $0x1d20] sm:$0xff]
    %v1043 = vld [vmem:[#allocation2 + $0x1d28] sm:$0xff]
    %v1044 = vld [vmem:[#allocation2 + $0x1d30] sm:$0xff]
    %v1045 = vld [vmem:[#allocation2 + $0x1d38] sm:$0xff]
    %v1046 = vld [vmem:[#allocation2 + $0x1d40] sm:$0xff]
    %v1047 = vld [vmem:[#allocation2 + $0x1d48] sm:$0xff]
    %v1048 = vld [vmem:[#allocation2 + $0x1d50] sm:$0xff]
    %v1049 = vld [vmem:[#allocation2 + $0x1d58] sm:$0xff]
    %v1050 = vld [vmem:[#allocation2 + $0x1d60] sm:$0xff]
    %v1051 = vld [vmem:[#allocation2 + $0x1d68] sm:$0xff]
    %v1052 = vld [vmem:[#allocation2 + $0x1d70] sm:$0xff]
    %v1053 = vld [vmem:[#allocation2 + $0x1d78] sm:$0xff]
    %v1054 = vld [vmem:[#allocation2 + $0x1d80] sm:$0xff]
    %v1055 = vld [vmem:[#allocation2 + $0x1d88] sm:$0xff]
    %v1056 = vld [vmem:[#allocation2 + $0x1d90] sm:$0xff]
    %v1057 = vld [vmem:[#allocation2 + $0x1d98] sm:$0xff]
    %v1058 = vld [vmem:[#allocation2 + $0x1da0] sm:$0xff]
    %v1059 = vld [vmem:[#allocation2 + $0x1da8] sm:$0xff]
    %v1060 = vld [vmem:[#allocation2 + $0x1db0] sm:$0xff]
    %v1061 = vld [vmem:[#allocation2 + $0x1db8] sm:$0xff]
    %v1062 = vld [vmem:[#allocation2 + $0x1dc0] sm:$0xff]
    %v1063 = vld [vmem:[#allocation2 + $0x1dc8] sm:$0xff]
    %v1064 = vld [vmem:[#allocation2 + $0x1dd0] sm:$0xff]
    %v1065 = vld [vmem:[#allocation2 + $0x1dd8] sm:$0xff]
    %v1066 = vld [vmem:[#allocation2 + $0x1de0] sm:$0xff]
    %v1067 = vld [vmem:[#allocation2 + $0x1de8] sm:$0xff]
    %v1068 = vld [vmem:[#allocation2 + $0x1df0] sm:$0xff]
    %v1069 = vld [vmem:[#allocation2 + $0x1df8] sm:$0xff]
    %v1070 = vld [vmem:[#allocation2 + $0x1e00] sm:$0xff]
    %v1071 = vld [vmem:[#allocation2 + $0x1e08] sm:$0xff]
    %v1072 = vld [vmem:[#allocation2 + $0x1e10] sm:$0xff]
    %v1073 = vld [vmem:[#allocation2 + $0x1e18] sm:$0xff]
    %v1074 = vld [vmem:[#allocation2 + $0x1e20] sm:$0xff]
    %v1075 = vld [vmem:[#allocation2 + $0x1e28] sm:$0xff]
    %v1076 = vld [vmem:[#allocation2 + $0x1e30] sm:$0xff]
    %v1077 = vld [vmem:[#allocation2 + $0x1e38] sm:$0xff]
    %v1078 = vld [vmem:[#allocation2 + $0x1e40] sm:$0xff]
    %v1079 = vld [vmem:[#allocation2 + $0x1e48] sm:$0xff]
    %v1080 = vld [vmem:[#allocation2 + $0x1e50] sm:$0xff]
    %v1081 = vld [vmem:[#allocation2 + $0x1e58] sm:$0xff]
    %v1082 = vld [vmem:[#allocation2 + $0x1e60] sm:$0xff]
    %v1083 = vld [vmem:[#allocation2 + $0x1e68] sm:$0xff]
    %v1084 = vld [vmem:[#allocation2 + $0x1e70] sm:$0xff]
    %v1085 = vld [vmem:[#allocation2 + $0x1e78] sm:$0xff]
    %v1086 = vld [vmem:[#allocation2 + $0x1e80] sm:$0xff]
    %v1087 = vld [vmem:[#allocation2 + $0x1e88] sm:$0xff]
    %v1088 = vld [vmem:[#allocation2 + $0x1e90] sm:$0xff]
    %v1089 = vld [vmem:[#allocation2 + $0x1e98] sm:$0xff]
    %v1090 = vld [vmem:[#allocation2 + $0x1ea0] sm:$0xff]
    %v1091 = vld [vmem:[#allocation2 + $0x1ea8] sm:$0xff]
    %v1092 = vld [vmem:[#allocation2 + $0x1eb0] sm:$0xff]
    %v1093 = vld [vmem:[#allocation2 + $0x1eb8] sm:$0xff]
    %v1094 = vld [vmem:[#allocation2 + $0x1ec0] sm:$0xff]
    %v1095 = vld [vmem:[#allocation2 + $0x1ec8] sm:$0xff]
    %v1096 = vld [vmem:[#allocation2 + $0x1ed0] sm:$0xff]
    %v1097 = vld [vmem:[#allocation2 + $0x1ed8] sm:$0xff]
    %v1098 = vld [vmem:[#allocation2 + $0x1ee0] sm:$0xff]
    %v1099 = vld [vmem:[#allocation2 + $0x1ee8] sm:$0xff]
    %v1100 = vld [vmem:[#allocation2 + $0x1ef0] sm:$0xff]
    %v1101 = vld [vmem:[#allocation2 + $0x1ef8] sm:$0xff]
    %v1102 = vld [vmem:[#allocation2 + $0x1f00] sm:$0xff]
    %v1103 = vld [vmem:[#allocation2 + $0x1f08] sm:$0xff]
    %v1104 = vld [vmem:[#allocation2 + $0x1f10] sm:$0xff]
    %v1105 = vld [vmem:[#allocation2 + $0x1f18] sm:$0xff]
    %v1106 = vld [vmem:[#allocation2 + $0x1f20] sm:$0xff]
    %v1107 = vld [vmem:[#allocation2 + $0x1f28] sm:$0xff]
    %v1108 = vld [vmem:[#allocation2 + $0x1f30] sm:$0xff]
    %v1109 = vld [vmem:[#allocation2 + $0x1f38] sm:$0xff]
    %v1110 = vld [vmem:[#allocation2 + $0x1f40] sm:$0xff]
    %v1111 = vld [vmem:[#allocation2 + $0x1f48] sm:$0xff]
    %v1112 = vld [vmem:[#allocation2 + $0x1f50] sm:$0xff]
    %v1113 = vld [vmem:[#allocation2 + $0x1f58] sm:$0xff]
    %v1114 = vld [vmem:[#allocation2 + $0x1f60] sm:$0xff]
    %v1115 = vld [vmem:[#allocation2 + $0x1f68] sm:$0xff]
    %v1116 = vld [vmem:[#allocation2 + $0x1f70] sm:$0xff]
    %v1117 = vld [vmem:[#allocation2 + $0x1f78] sm:$0xff]
    %v1118 = vld [vmem:[#allocation2 + $0x1f80] sm:$0xff]
    %v1119 = vld [vmem:[#allocation2 + $0x1f88] sm:$0xff]
    %v1120 = vld [vmem:[#allocation2 + $0x1f90] sm:$0xff]
    %v1121 = vld [vmem:[#allocation2 + $0x1f98] sm:$0xff]
    %v1122 = vld [vmem:[#allocation2 + $0x1fa0] sm:$0xff]
    %v1123 = vld [vmem:[#allocation2 + $0x1fa8] sm:$0xff]
    %v1124 = vld [vmem:[#allocation2 + $0x1fb0] sm:$0xff]
    %v1125 = vld [vmem:[#allocation2 + $0x1fb8] sm:$0xff]
    %v1126 = vld [vmem:[#allocation2 + $0x1fc0] sm:$0xff]
    %v1127 = vld [vmem:[#allocation2 + $0x1fc8] sm:$0xff]
    %v1128 = vld [vmem:[#allocation2 + $0x1fd0] sm:$0xff]
    %v1129 = vld [vmem:[#allocation2 + $0x1fd8] sm:$0xff]
    %v1130 = vld [vmem:[#allocation2 + $0x1fe0] sm:$0xff]
    %v1131 = vld [vmem:[#allocation2 + $0x1fe8] sm:$0xff]
    %v1132 = vld [vmem:[#allocation2 + $0x1ff0] sm:$0xff]
    %v1133 = vld [vmem:[#allocation2 + $0x1ff8] sm:$0xff]
    %v1134 = vld [vmem:[%s2] sm:$0xf]
    %v1136 = vperm.slane %v1134, 0
    %v1137 = vperm.slane %v1134, 1
    %v1138 = vperm.slane %v1134, 2
    %v1139 = vperm.slane %v1134, 3
    %1144 = vmatpush.msra.mxu0 %v170
    %1145 = vmatpush.msra.mxu0 %v166
    %1146 = vmatpush.msra.mxu0 %v162
    %1147 = vmatpush.msra.mxu0 %v158
    %1148 = vmatpush.msra.mxu0 %v154
    %1149 = vmatpush.msra.mxu0 %v150
    %1150 = vmatpush.msra.mxu0 %v146
    %1151 = vmatpush.msra.mxu0 %v142
    %1152 = vmatpush.msra.mxu0 %v138
    %1153 = vmatpush.msra.mxu0 %v134
    %1154 = vmatpush.msra.mxu0 %v130
    %1155 = vmatpush.msra.mxu0 %v126
    %1156 = vmatpush.msra.mxu0 %v122
    %1157 = vmatpush.msra.mxu0 %v118
    %1158 = vmatpush.msra.mxu0 %v114
    %1159 = vmatpush.msra.mxu0 %v110
    %1160 = vmatmul.f32.gmra.mxu0 %v46
    %v1161 = vpop.f32.mrf.mxu0
    %v1162 = vadd.f32 %v1136, %v1161
    %1163 = vmatmul.f32.gmra.mxu0 %v62
    %v1164 = vpop.f32.mrf.mxu0
    %v1165 = vadd.f32 %v1136, %v1164
    %1166 = vmatmul.f32.gmra.mxu0 %v78
    %v1167 = vpop.f32.mrf.mxu0
    %v1168 = vadd.f32 %v1136, %v1167
    %1169 = vmatmul.f32.gmra.mxu0 %v94
    %v1170 = vpop.f32.mrf.mxu0
    %v1171 = vadd.f32 %v1136, %v1170
    %1172 = vdwg.mxu0
    %1173 = vmatpush.msra.mxu0 %v234
    %1174 = vmatpush.msra.mxu0 %v230
    %1175 = vmatpush.msra.mxu0 %v226
    %1176 = vmatpush.msra.mxu0 %v222
    %1177 = vmatpush.msra.mxu0 %v218
    %1178 = vmatpush.msra.mxu0 %v214
    %1179 = vmatpush.msra.mxu0 %v210
    %1180 = vmatpush.msra.mxu0 %v206
    %1181 = vmatpush.msra.mxu0 %v202
    %1182 = vmatpush.msra.mxu0 %v198
    %1183 = vmatpush.msra.mxu0 %v194
    %1184 = vmatpush.msra.mxu0 %v190
    %1185 = vmatpush.msra.mxu0 %v186
    %1186 = vmatpush.msra.mxu0 %v182
    %1187 = vmatpush.msra.mxu0 %v178
    %1188 = vmatpush.msra.mxu0 %v174
    %1189 = vmatmul.f32.gmra.mxu0 %v47
    %v1190 = vpop.f32.mrf.mxu0
    %v1191 = vadd.f32 %v1162, %v1190
    %1192 = vmatmul.f32.gmra.mxu0 %v63
    %v1193 = vpop.f32.mrf.mxu0
    %v1194 = vadd.f32 %v1165, %v1193
    %1195 = vmatmul.f32.gmra.mxu0 %v79
    %v1196 = vpop.f32.mrf.mxu0
    %v1197 = vadd.f32 %v1168, %v1196
    %1198 = vmatmul.f32.gmra.mxu0 %v95
    %v1199 = vpop.f32.mrf.mxu0
    %v1200 = vadd.f32 %v1171, %v1199
    %1201 = vdwg.mxu0
    %1202 = vmatpush.msra.mxu0 %v298
    %1203 = vmatpush.msra.mxu0 %v294
    %1204 = vmatpush.msra.mxu0 %v290
    %1205 = vmatpush.msra.mxu0 %v286
    %1206 = vmatpush.msra.mxu0 %v282
    %1207 = vmatpush.msra.mxu0 %v278
    %1208 = vmatpush.msra.mxu0 %v274
    %1209 = vmatpush.msra.mxu0 %v270
    %1210 = vmatpush.msra.mxu0 %v266
    %1211 = vmatpush.msra.mxu0 %v262
    %1212 = vmatpush.msra.mxu0 %v258
    %1213 = vmatpush.msra.mxu0 %v254
    %1214 = vmatpush.msra.mxu0 %v250
    %1215 = vmatpush.msra.mxu0 %v246
    %1216 = vmatpush.msra.mxu0 %v242
    %1217 = vmatpush.msra.mxu0 %v238
    %1218 = vmatmul.f32.gmra.mxu0 %v48
    %v1219 = vpop.f32.mrf.mxu0
    %v1220 = vadd.f32 %v1191, %v1219
    %1221 = vmatmul.f32.gmra.mxu0 %v64
    %v1222 = vpop.f32.mrf.mxu0
    %v1223 = vadd.f32 %v1194, %v1222
    %1224 = vmatmul.f32.gmra.mxu0 %v80
    %v1225 = vpop.f32.mrf.mxu0
    %v1226 = vadd.f32 %v1197, %v1225
    %1227 = vmatmul.f32.gmra.mxu0 %v96
    %v1228 = vpop.f32.mrf.mxu0
    %v1229 = vadd.f32 %v1200, %v1228
    %1230 = vdwg.mxu0
    %1231 = vmatpush.msra.mxu0 %v362
    %1232 = vmatpush.msra.mxu0 %v358
    %1233 = vmatpush.msra.mxu0 %v354
    %1234 = vmatpush.msra.mxu0 %v350
    %1235 = vmatpush.msra.mxu0 %v346
    %1236 = vmatpush.msra.mxu0 %v342
    %1237 = vmatpush.msra.mxu0 %v338
    %1238 = vmatpush.msra.mxu0 %v334
    %1239 = vmatpush.msra.mxu0 %v330
    %1240 = vmatpush.msra.mxu0 %v326
    %1241 = vmatpush.msra.mxu0 %v322
    %1242 = vmatpush.msra.mxu0 %v318
    %1243 = vmatpush.msra.mxu0 %v314
    %1244 = vmatpush.msra.mxu0 %v310
    %1245 = vmatpush.msra.mxu0 %v306
    %1246 = vmatpush.msra.mxu0 %v302
    %1247 = vmatmul.f32.gmra.mxu0 %v49
    %v1248 = vpop.f32.mrf.mxu0
    %v1249 = vadd.f32 %v1220, %v1248
    %1250 = vmatmul.f32.gmra.mxu0 %v65
    %v1251 = vpop.f32.mrf.mxu0
    %v1252 = vadd.f32 %v1223, %v1251
    %1253 = vmatmul.f32.gmra.mxu0 %v81
    %v1254 = vpop.f32.mrf.mxu0
    %v1255 = vadd.f32 %v1226, %v1254
    %1256 = vmatmul.f32.gmra.mxu0 %v97
    %v1257 = vpop.f32.mrf.mxu0
    %v1258 = vadd.f32 %v1229, %v1257
    %1259 = vdwg.mxu0
    %1260 = vmatpush.msra.mxu0 %v426
    %1261 = vmatpush.msra.mxu0 %v422
    %1262 = vmatpush.msra.mxu0 %v418
    %1263 = vmatpush.msra.mxu0 %v414
    %1264 = vmatpush.msra.mxu0 %v410
    %1265 = vmatpush.msra.mxu0 %v406
    %1266 = vmatpush.msra.mxu0 %v402
    %1267 = vmatpush.msra.mxu0 %v398
    %1268 = vmatpush.msra.mxu0 %v394
    %1269 = vmatpush.msra.mxu0 %v390
    %1270 = vmatpush.msra.mxu0 %v386
    %1271 = vmatpush.msra.mxu0 %v382
    %1272 = vmatpush.msra.mxu0 %v378
    %1273 = vmatpush.msra.mxu0 %v374
    %1274 = vmatpush.msra.mxu0 %v370
    %1275 = vmatpush.msra.mxu0 %v366
    %1276 = vmatmul.f32.gmra.mxu0 %v50
    %v1277 = vpop.f32.mrf.mxu0
    %v1278 = vadd.f32 %v1249, %v1277
    %1279 = vmatmul.f32.gmra.mxu0 %v66
    %v1280 = vpop.f32.mrf.mxu0
    %v1281 = vadd.f32 %v1252, %v1280
    %1282 = vmatmul.f32.gmra.mxu0 %v82
    %v1283 = vpop.f32.mrf.mxu0
    %v1284 = vadd.f32 %v1255, %v1283
    %1285 = vmatmul.f32.gmra.mxu0 %v98
    %v1286 = vpop.f32.mrf.mxu0
    %v1287 = vadd.f32 %v1258, %v1286
    %1288 = vdwg.mxu0
    %1289 = vmatpush.msra.mxu0 %v490
    %1290 = vmatpush.msra.mxu0 %v486
    %1291 = vmatpush.msra.mxu0 %v482
    %1292 = vmatpush.msra.mxu0 %v478
    %1293 = vmatpush.msra.mxu0 %v474
    %1294 = vmatpush.msra.mxu0 %v470
    %1295 = vmatpush.msra.mxu0 %v466
    %1296 = vmatpush.msra.mxu0 %v462
    %1297 = vmatpush.msra.mxu0 %v458
    %1298 = vmatpush.msra.mxu0 %v454
    %1299 = vmatpush.msra.mxu0 %v450
    %1300 = vmatpush.msra.mxu0 %v446
    %1301 = vmatpush.msra.mxu0 %v442
    %1302 = vmatpush.msra.mxu0 %v438
    %1303 = vmatpush.msra.mxu0 %v434
    %1304 = vmatpush.msra.mxu0 %v430
    %1305 = vmatmul.f32.gmra.mxu0 %v51
    %v1306 = vpop.f32.mrf.mxu0
    %v1307 = vadd.f32 %v1278, %v1306
    %1308 = vmatmul.f32.gmra.mxu0 %v67
    %v1309 = vpop.f32.mrf.mxu0
    %v1310 = vadd.f32 %v1281, %v1309
    %1311 = vmatmul.f32.gmra.mxu0 %v83
    %v1312 = vpop.f32.mrf.mxu0
    %v1313 = vadd.f32 %v1284, %v1312
    %1314 = vmatmul.f32.gmra.mxu0 %v99
    %v1315 = vpop.f32.mrf.mxu0
    %v1316 = vadd.f32 %v1287, %v1315
    %1317 = vdwg.mxu0
    %1318 = vmatpush.msra.mxu0 %v554
    %1319 = vmatpush.msra.mxu0 %v550
    %1320 = vmatpush.msra.mxu0 %v546
    %1321 = vmatpush.msra.mxu0 %v542
    %1322 = vmatpush.msra.mxu0 %v538
    %1323 = vmatpush.msra.mxu0 %v534
    %1324 = vmatpush.msra.mxu0 %v530
    %1325 = vmatpush.msra.mxu0 %v526
    %1326 = vmatpush.msra.mxu0 %v522
    %1327 = vmatpush.msra.mxu0 %v518
    %1328 = vmatpush.msra.mxu0 %v514
    %1329 = vmatpush.msra.mxu0 %v510
    %1330 = vmatpush.msra.mxu0 %v506
    %1331 = vmatpush.msra.mxu0 %v502
    %1332 = vmatpush.msra.mxu0 %v498
    %1333 = vmatpush.msra.mxu0 %v494
    %1334 = vmatmul.f32.gmra.mxu0 %v52
    %v1335 = vpop.f32.mrf.mxu0
    %v1336 = vadd.f32 %v1307, %v1335
    %1337 = vmatmul.f32.gmra.mxu0 %v68
    %v1338 = vpop.f32.mrf.mxu0
    %v1339 = vadd.f32 %v1310, %v1338
    %1340 = vmatmul.f32.gmra.mxu0 %v84
    %v1341 = vpop.f32.mrf.mxu0
    %v1342 = vadd.f32 %v1313, %v1341
    %1343 = vmatmul.f32.gmra.mxu0 %v100
    %v1344 = vpop.f32.mrf.mxu0
    %v1345 = vadd.f32 %v1316, %v1344
    %1346 = vdwg.mxu0
    %1347 = vmatpush.msra.mxu0 %v618
    %1348 = vmatpush.msra.mxu0 %v614
    %1349 = vmatpush.msra.mxu0 %v610
    %1350 = vmatpush.msra.mxu0 %v606
    %1351 = vmatpush.msra.mxu0 %v602
    %1352 = vmatpush.msra.mxu0 %v598
    %1353 = vmatpush.msra.mxu0 %v594
    %1354 = vmatpush.msra.mxu0 %v590
    %1355 = vmatpush.msra.mxu0 %v586
    %1356 = vmatpush.msra.mxu0 %v582
    %1357 = vmatpush.msra.mxu0 %v578
    %1358 = vmatpush.msra.mxu0 %v574
    %1359 = vmatpush.msra.mxu0 %v570
    %1360 = vmatpush.msra.mxu0 %v566
    %1361 = vmatpush.msra.mxu0 %v562
    %1362 = vmatpush.msra.mxu0 %v558
    %1363 = vmatmul.f32.gmra.mxu0 %v53
    %v1364 = vpop.f32.mrf.mxu0
    %v1365 = vadd.f32 %v1336, %v1364
    %1366 = vmatmul.f32.gmra.mxu0 %v69
    %v1367 = vpop.f32.mrf.mxu0
    %v1368 = vadd.f32 %v1339, %v1367
    %1369 = vmatmul.f32.gmra.mxu0 %v85
    %v1370 = vpop.f32.mrf.mxu0
    %v1371 = vadd.f32 %v1342, %v1370
    %1372 = vmatmul.f32.gmra.mxu0 %v101
    %v1373 = vpop.f32.mrf.mxu0
    %v1374 = vadd.f32 %v1345, %v1373
    %1375 = vdwg.mxu0
    %1376 = vmatpush.msra.mxu0 %v682
    %1377 = vmatpush.msra.mxu0 %v678
    %1378 = vmatpush.msra.mxu0 %v674
    %1379 = vmatpush.msra.mxu0 %v670
    %1380 = vmatpush.msra.mxu0 %v666
    %1381 = vmatpush.msra.mxu0 %v662
    %1382 = vmatpush.msra.mxu0 %v658
    %1383 = vmatpush.msra.mxu0 %v654
    %1384 = vmatpush.msra.mxu0 %v650
    %1385 = vmatpush.msra.mxu0 %v646
    %1386 = vmatpush.msra.mxu0 %v642
    %1387 = vmatpush.msra.mxu0 %v638
    %1388 = vmatpush.msra.mxu0 %v634
    %1389 = vmatpush.msra.mxu0 %v630
    %1390 = vmatpush.msra.mxu0 %v626
    %1391 = vmatpush.msra.mxu0 %v622
    %1392 = vmatmul.f32.gmra.mxu0 %v54
    %v1393 = vpop.f32.mrf.mxu0
    %v1394 = vadd.f32 %v1365, %v1393
    %1395 = vmatmul.f32.gmra.mxu0 %v70
    %v1396 = vpop.f32.mrf.mxu0
    %v1397 = vadd.f32 %v1368, %v1396
    %1398 = vmatmul.f32.gmra.mxu0 %v86
    %v1399 = vpop.f32.mrf.mxu0
    %v1400 = vadd.f32 %v1371, %v1399
    %1401 = vmatmul.f32.gmra.mxu0 %v102
    %v1402 = vpop.f32.mrf.mxu0
    %v1403 = vadd.f32 %v1374, %v1402
    %1404 = vdwg.mxu0
    %1405 = vmatpush.msra.mxu0 %v746
    %1406 = vmatpush.msra.mxu0 %v742
    %1407 = vmatpush.msra.mxu0 %v738
    %1408 = vmatpush.msra.mxu0 %v734
    %1409 = vmatpush.msra.mxu0 %v730
    %1410 = vmatpush.msra.mxu0 %v726
    %1411 = vmatpush.msra.mxu0 %v722
    %1412 = vmatpush.msra.mxu0 %v718
    %1413 = vmatpush.msra.mxu0 %v714
    %1414 = vmatpush.msra.mxu0 %v710
    %1415 = vmatpush.msra.mxu0 %v706
    %1416 = vmatpush.msra.mxu0 %v702
    %1417 = vmatpush.msra.mxu0 %v698
    %1418 = vmatpush.msra.mxu0 %v694
    %1419 = vmatpush.msra.mxu0 %v690
    %1420 = vmatpush.msra.mxu0 %v686
    %1421 = vmatmul.f32.gmra.mxu0 %v55
    %v1422 = vpop.f32.mrf.mxu0
    %v1423 = vadd.f32 %v1394, %v1422
    %1424 = vmatmul.f32.gmra.mxu0 %v71
    %v1425 = vpop.f32.mrf.mxu0
    %v1426 = vadd.f32 %v1397, %v1425
    %1427 = vmatmul.f32.gmra.mxu0 %v87
    %v1428 = vpop.f32.mrf.mxu0
    %v1429 = vadd.f32 %v1400, %v1428
    %1430 = vmatmul.f32.gmra.mxu0 %v103
    %v1431 = vpop.f32.mrf.mxu0
    %v1432 = vadd.f32 %v1403, %v1431
    %1433 = vdwg.mxu0
    %1434 = vmatpush.msra.mxu0 %v810
    %1435 = vmatpush.msra.mxu0 %v806
    %1436 = vmatpush.msra.mxu0 %v802
    %1437 = vmatpush.msra.mxu0 %v798
    %1438 = vmatpush.msra.mxu0 %v794
    %1439 = vmatpush.msra.mxu0 %v790
    %1440 = vmatpush.msra.mxu0 %v786
    %1441 = vmatpush.msra.mxu0 %v782
    %1442 = vmatpush.msra.mxu0 %v778
    %1443 = vmatpush.msra.mxu0 %v774
    %1444 = vmatpush.msra.mxu0 %v770
    %1445 = vmatpush.msra.mxu0 %v766
    %1446 = vmatpush.msra.mxu0 %v762
    %1447 = vmatpush.msra.mxu0 %v758
    %1448 = vmatpush.msra.mxu0 %v754
    %1449 = vmatpush.msra.mxu0 %v750
    %1450 = vmatmul.f32.gmra.mxu0 %v56
    %v1451 = vpop.f32.mrf.mxu0
    %v1452 = vadd.f32 %v1423, %v1451
    %1453 = vmatmul.f32.gmra.mxu0 %v72
    %v1454 = vpop.f32.mrf.mxu0
    %v1455 = vadd.f32 %v1426, %v1454
    %1456 = vmatmul.f32.gmra.mxu0 %v88
    %v1457 = vpop.f32.mrf.mxu0
    %v1458 = vadd.f32 %v1429, %v1457
    %1459 = vmatmul.f32.gmra.mxu0 %v104
    %v1460 = vpop.f32.mrf.mxu0
    %v1461 = vadd.f32 %v1432, %v1460
    %1462 = vdwg.mxu0
    %1463 = vmatpush.msra.mxu0 %v874
    %1464 = vmatpush.msra.mxu0 %v870
    %1465 = vmatpush.msra.mxu0 %v866
    %1466 = vmatpush.msra.mxu0 %v862
    %1467 = vmatpush.msra.mxu0 %v858
    %1468 = vmatpush.msra.mxu0 %v854
    %1469 = vmatpush.msra.mxu0 %v850
    %1470 = vmatpush.msra.mxu0 %v846
    %1471 = vmatpush.msra.mxu0 %v842
    %1472 = vmatpush.msra.mxu0 %v838
    %1473 = vmatpush.msra.mxu0 %v834
    %1474 = vmatpush.msra.mxu0 %v830
    %1475 = vmatpush.msra.mxu0 %v826
    %1476 = vmatpush.msra.mxu0 %v822
    %1477 = vmatpush.msra.mxu0 %v818
    %1478 = vmatpush.msra.mxu0 %v814
    %1479 = vmatmul.f32.gmra.mxu0 %v57
    %v1480 = vpop.f32.mrf.mxu0
    %v1481 = vadd.f32 %v1452, %v1480
    %1482 = vmatmul.f32.gmra.mxu0 %v73
    %v1483 = vpop.f32.mrf.mxu0
    %v1484 = vadd.f32 %v1455, %v1483
    %1485 = vmatmul.f32.gmra.mxu0 %v89
    %v1486 = vpop.f32.mrf.mxu0
    %v1487 = vadd.f32 %v1458, %v1486
    %1488 = vmatmul.f32.gmra.mxu0 %v105
    %v1489 = vpop.f32.mrf.mxu0
    %v1490 = vadd.f32 %v1461, %v1489
    %1491 = vdwg.mxu0
    %1492 = vmatpush.msra.mxu0 %v938
    %1493 = vmatpush.msra.mxu0 %v934
    %1494 = vmatpush.msra.mxu0 %v930
    %1495 = vmatpush.msra.mxu0 %v926
    %1496 = vmatpush.msra.mxu0 %v922
    %1497 = vmatpush.msra.mxu0 %v918
    %1498 = vmatpush.msra.mxu0 %v914
    %1499 = vmatpush.msra.mxu0 %v910
    %1500 = vmatpush.msra.mxu0 %v906
    %1501 = vmatpush.msra.mxu0 %v902
    %1502 = vmatpush.msra.mxu0 %v898
    %1503 = vmatpush.msra.mxu0 %v894
    %1504 = vmatpush.msra.mxu0 %v890
    %1505 = vmatpush.msra.mxu0 %v886
    %1506 = vmatpush.msra.mxu0 %v882
    %1507 = vmatpush.msra.mxu0 %v878
    %1508 = vmatmul.f32.gmra.mxu0 %v58
    %v1509 = vpop.f32.mrf.mxu0
    %v1510 = vadd.f32 %v1481, %v1509
    %1511 = vmatmul.f32.gmra.mxu0 %v74
    %v1512 = vpop.f32.mrf.mxu0
    %v1513 = vadd.f32 %v1484, %v1512
    %1514 = vmatmul.f32.gmra.mxu0 %v90
    %v1515 = vpop.f32.mrf.mxu0
    %v1516 = vadd.f32 %v1487, %v1515
    %1517 = vmatmul.f32.gmra.mxu0 %v106
    %v1518 = vpop.f32.mrf.mxu0
    %v1519 = vadd.f32 %v1490, %v1518
    %1520 = vdwg.mxu0
    %1521 = vmatpush.msra.mxu0 %v1002
    %1522 = vmatpush.msra.mxu0 %v998
    %1523 = vmatpush.msra.mxu0 %v994
    %1524 = vmatpush.msra.mxu0 %v990
    %1525 = vmatpush.msra.mxu0 %v986
    %1526 = vmatpush.msra.mxu0 %v982
    %1527 = vmatpush.msra.mxu0 %v978
    %1528 = vmatpush.msra.mxu0 %v974
    %1529 = vmatpush.msra.mxu0 %v970
    %1530 = vmatpush.msra.mxu0 %v966
    %1531 = vmatpush.msra.mxu0 %v962
    %1532 = vmatpush.msra.mxu0 %v958
    %1533 = vmatpush.msra.mxu0 %v954
    %1534 = vmatpush.msra.mxu0 %v950
    %1535 = vmatpush.msra.mxu0 %v946
    %1536 = vmatpush.msra.mxu0 %v942
    %1537 = vmatmul.f32.gmra.mxu0 %v59
    %v1538 = vpop.f32.mrf.mxu0
    %v1539 = vadd.f32 %v1510, %v1538
    %1540 = vmatmul.f32.gmra.mxu0 %v75
    %v1541 = vpop.f32.mrf.mxu0
    %v1542 = vadd.f32 %v1513, %v1541
    %1543 = vmatmul.f32.gmra.mxu0 %v91
    %v1544 = vpop.f32.mrf.mxu0
    %v1545 = vadd.f32 %v1516, %v1544
    %1546 = vmatmul.f32.gmra.mxu0 %v107
    %v1547 = vpop.f32.mrf.mxu0
    %v1548 = vadd.f32 %v1519, %v1547
    %1549 = vdwg.mxu0
    %1550 = vmatpush.msra.mxu0 %v1066
    %1551 = vmatpush.msra.mxu0 %v1062
    %1552 = vmatpush.msra.mxu0 %v1058
    %1553 = vmatpush.msra.mxu0 %v1054
    %1554 = vmatpush.msra.mxu0 %v1050
    %1555 = vmatpush.msra.mxu0 %v1046
    %1556 = vmatpush.msra.mxu0 %v1042
    %1557 = vmatpush.msra.mxu0 %v1038
    %1558 = vmatpush.msra.mxu0 %v1034
    %1559 = vmatpush.msra.mxu0 %v1030
    %1560 = vmatpush.msra.mxu0 %v1026
    %1561 = vmatpush.msra.mxu0 %v1022
    %1562 = vmatpush.msra.mxu0 %v1018
    %1563 = vmatpush.msra.mxu0 %v1014
    %1564 = vmatpush.msra.mxu0 %v1010
    %1565 = vmatpush.msra.mxu0 %v1006
    %1566 = vmatmul.f32.gmra.mxu0 %v60
    %v1567 = vpop.f32.mrf.mxu0
    %v1568 = vadd.f32 %v1539, %v1567
    %1569 = vmatmul.f32.gmra.mxu0 %v76
    %v1570 = vpop.f32.mrf.mxu0
    %v1571 = vadd.f32 %v1542, %v1570
    %1572 = vmatmul.f32.gmra.mxu0 %v92
    %v1573 = vpop.f32.mrf.mxu0
    %v1574 = vadd.f32 %v1545, %v1573
    %1575 = vmatmul.f32.gmra.mxu0 %v108
    %v1576 = vpop.f32.mrf.mxu0
    %v1577 = vadd.f32 %v1548, %v1576
    %1578 = vdwg.mxu0
    %1579 = vmatpush.msra.mxu0 %v1130
    %1580 = vmatpush.msra.mxu0 %v1126
    %1581 = vmatpush.msra.mxu0 %v1122
    %1582 = vmatpush.msra.mxu0 %v1118
    %1583 = vmatpush.msra.mxu0 %v1114
    %1584 = vmatpush.msra.mxu0 %v1110
    %1585 = vmatpush.msra.mxu0 %v1106
    %1586 = vmatpush.msra.mxu0 %v1102
    %1587 = vmatpush.msra.mxu0 %v1098
    %1588 = vmatpush.msra.mxu0 %v1094
    %1589 = vmatpush.msra.mxu0 %v1090
    %1590 = vmatpush.msra.mxu0 %v1086
    %1591 = vmatpush.msra.mxu0 %v1082
    %1592 = vmatpush.msra.mxu0 %v1078
    %1593 = vmatpush.msra.mxu0 %v1074
    %1594 = vmatpush.msra.mxu0 %v1070
    %1595 = vmatmul.f32.gmra.mxu0 %v61
    %v1596 = vpop.f32.mrf.mxu0
    %v1597 = vadd.f32 %v1568, %v1596
    %1598 = vmatmul.f32.gmra.mxu0 %v77
    %v1599 = vpop.f32.mrf.mxu0
    %v1600 = vadd.f32 %v1571, %v1599
    %1601 = vmatmul.f32.gmra.mxu0 %v93
    %v1602 = vpop.f32.mrf.mxu0
    %v1603 = vadd.f32 %v1574, %v1602
    %1604 = vmatmul.f32.gmra.mxu0 %v109
    %v1605 = vpop.f32.mrf.mxu0
    %v1606 = vadd.f32 %v1577, %v1605
    %1607 = vdwg.mxu0
    %1608 = vmatpush.msra.mxu0 %v171
    %1609 = vmatpush.msra.mxu0 %v167
    %1610 = vmatpush.msra.mxu0 %v163
    %1611 = vmatpush.msra.mxu0 %v159
    %1612 = vmatpush.msra.mxu0 %v155
    %1613 = vmatpush.msra.mxu0 %v151
    %1614 = vmatpush.msra.mxu0 %v147
    %1615 = vmatpush.msra.mxu0 %v143
    %1616 = vmatpush.msra.mxu0 %v139
    %1617 = vmatpush.msra.mxu0 %v135
    %1618 = vmatpush.msra.mxu0 %v131
    %1619 = vmatpush.msra.mxu0 %v127
    %1620 = vmatpush.msra.mxu0 %v123
    %1621 = vmatpush.msra.mxu0 %v119
    %1622 = vmatpush.msra.mxu0 %v115
    %1623 = vmatpush.msra.mxu0 %v111
    %1624 = vmatmul.f32.gmra.mxu0 %v46
    %v1625 = vpop.f32.mrf.mxu0
    %v1626 = vadd.f32 %v1137, %v1625
    %1627 = vmatmul.f32.gmra.mxu0 %v62
    %v1628 = vpop.f32.mrf.mxu0
    %v1629 = vadd.f32 %v1137, %v1628
    %1630 = vmatmul.f32.gmra.mxu0 %v78
    %v1631 = vpop.f32.mrf.mxu0
    %v1632 = vadd.f32 %v1137, %v1631
    %1633 = vmatmul.f32.gmra.mxu0 %v94
    %v1634 = vpop.f32.mrf.mxu0
    %v1635 = vadd.f32 %v1137, %v1634
    %1636 = vdwg.mxu0
    %1637 = vmatpush.msra.mxu0 %v235
    %1638 = vmatpush.msra.mxu0 %v231
    %1639 = vmatpush.msra.mxu0 %v227
    %1640 = vmatpush.msra.mxu0 %v223
    %1641 = vmatpush.msra.mxu0 %v219
    %1642 = vmatpush.msra.mxu0 %v215
    %1643 = vmatpush.msra.mxu0 %v211
    %1644 = vmatpush.msra.mxu0 %v207
    %1645 = vmatpush.msra.mxu0 %v203
    %1646 = vmatpush.msra.mxu0 %v199
    %1647 = vmatpush.msra.mxu0 %v195
    %1648 = vmatpush.msra.mxu0 %v191
    %1649 = vmatpush.msra.mxu0 %v187
    %1650 = vmatpush.msra.mxu0 %v183
    %1651 = vmatpush.msra.mxu0 %v179
    %1652 = vmatpush.msra.mxu0 %v175
    %1653 = vmatmul.f32.gmra.mxu0 %v47
    %v1654 = vpop.f32.mrf.mxu0
    %v1655 = vadd.f32 %v1626, %v1654
    %1656 = vmatmul.f32.gmra.mxu0 %v63
    %v1657 = vpop.f32.mrf.mxu0
    %v1658 = vadd.f32 %v1629, %v1657
    %1659 = vmatmul.f32.gmra.mxu0 %v79
    %v1660 = vpop.f32.mrf.mxu0
    %v1661 = vadd.f32 %v1632, %v1660
    %1662 = vmatmul.f32.gmra.mxu0 %v95
    %v1663 = vpop.f32.mrf.mxu0
    %v1664 = vadd.f32 %v1635, %v1663
    %1665 = vdwg.mxu0
    %1666 = vmatpush.msra.mxu0 %v299
    %1667 = vmatpush.msra.mxu0 %v295
    %1668 = vmatpush.msra.mxu0 %v291
    %1669 = vmatpush.msra.mxu0 %v287
    %1670 = vmatpush.msra.mxu0 %v283
    %1671 = vmatpush.msra.mxu0 %v279
    %1672 = vmatpush.msra.mxu0 %v275
    %1673 = vmatpush.msra.mxu0 %v271
    %1674 = vmatpush.msra.mxu0 %v267
    %1675 = vmatpush.msra.mxu0 %v263
    %1676 = vmatpush.msra.mxu0 %v259
    %1677 = vmatpush.msra.mxu0 %v255
    %1678 = vmatpush.msra.mxu0 %v251
    %1679 = vmatpush.msra.mxu0 %v247
    %1680 = vmatpush.msra.mxu0 %v243
    %1681 = vmatpush.msra.mxu0 %v239
    %1682 = vmatmul.f32.gmra.mxu0 %v48
    %v1683 = vpop.f32.mrf.mxu0
    %v1684 = vadd.f32 %v1655, %v1683
    %1685 = vmatmul.f32.gmra.mxu0 %v64
    %v1686 = vpop.f32.mrf.mxu0
    %v1687 = vadd.f32 %v1658, %v1686
    %1688 = vmatmul.f32.gmra.mxu0 %v80
    %v1689 = vpop.f32.mrf.mxu0
    %v1690 = vadd.f32 %v1661, %v1689
    %1691 = vmatmul.f32.gmra.mxu0 %v96
    %v1692 = vpop.f32.mrf.mxu0
    %v1693 = vadd.f32 %v1664, %v1692
    %1694 = vdwg.mxu0
    %1695 = vmatpush.msra.mxu0 %v363
    %1696 = vmatpush.msra.mxu0 %v359
    %1697 = vmatpush.msra.mxu0 %v355
    %1698 = vmatpush.msra.mxu0 %v351
    %1699 = vmatpush.msra.mxu0 %v347
    %1700 = vmatpush.msra.mxu0 %v343
    %1701 = vmatpush.msra.mxu0 %v339
    %1702 = vmatpush.msra.mxu0 %v335
    %1703 = vmatpush.msra.mxu0 %v331
    %1704 = vmatpush.msra.mxu0 %v327
    %1705 = vmatpush.msra.mxu0 %v323
    %1706 = vmatpush.msra.mxu0 %v319
    %1707 = vmatpush.msra.mxu0 %v315
    %1708 = vmatpush.msra.mxu0 %v311
    %1709 = vmatpush.msra.mxu0 %v307
    %1710 = vmatpush.msra.mxu0 %v303
    %1711 = vmatmul.f32.gmra.mxu0 %v49
    %v1712 = vpop.f32.mrf.mxu0
    %v1713 = vadd.f32 %v1684, %v1712
    %1714 = vmatmul.f32.gmra.mxu0 %v65
    %v1715 = vpop.f32.mrf.mxu0
    %v1716 = vadd.f32 %v1687, %v1715
    %1717 = vmatmul.f32.gmra.mxu0 %v81
    %v1718 = vpop.f32.mrf.mxu0
    %v1719 = vadd.f32 %v1690, %v1718
    %1720 = vmatmul.f32.gmra.mxu0 %v97
    %v1721 = vpop.f32.mrf.mxu0
    %v1722 = vadd.f32 %v1693, %v1721
    %1723 = vdwg.mxu0
    %1724 = vmatpush.msra.mxu0 %v427
    %1725 = vmatpush.msra.mxu0 %v423
    %1726 = vmatpush.msra.mxu0 %v419
    %1727 = vmatpush.msra.mxu0 %v415
    %1728 = vmatpush.msra.mxu0 %v411
    %1729 = vmatpush.msra.mxu0 %v407
    %1730 = vmatpush.msra.mxu0 %v403
    %1731 = vmatpush.msra.mxu0 %v399
    %1732 = vmatpush.msra.mxu0 %v395
    %1733 = vmatpush.msra.mxu0 %v391
    %1734 = vmatpush.msra.mxu0 %v387
    %1735 = vmatpush.msra.mxu0 %v383
    %1736 = vmatpush.msra.mxu0 %v379
    %1737 = vmatpush.msra.mxu0 %v375
    %1738 = vmatpush.msra.mxu0 %v371
    %1739 = vmatpush.msra.mxu0 %v367
    %1740 = vmatmul.f32.gmra.mxu0 %v50
    %v1741 = vpop.f32.mrf.mxu0
    %v1742 = vadd.f32 %v1713, %v1741
    %1743 = vmatmul.f32.gmra.mxu0 %v66
    %v1744 = vpop.f32.mrf.mxu0
    %v1745 = vadd.f32 %v1716, %v1744
    %1746 = vmatmul.f32.gmra.mxu0 %v82
    %v1747 = vpop.f32.mrf.mxu0
    %v1748 = vadd.f32 %v1719, %v1747
    %1749 = vmatmul.f32.gmra.mxu0 %v98
    %v1750 = vpop.f32.mrf.mxu0
    %v1751 = vadd.f32 %v1722, %v1750
    %1752 = vdwg.mxu0
    %1753 = vmatpush.msra.mxu0 %v491
    %1754 = vmatpush.msra.mxu0 %v487
    %1755 = vmatpush.msra.mxu0 %v483
    %1756 = vmatpush.msra.mxu0 %v479
    %1757 = vmatpush.msra.mxu0 %v475
    %1758 = vmatpush.msra.mxu0 %v471
    %1759 = vmatpush.msra.mxu0 %v467
    %1760 = vmatpush.msra.mxu0 %v463
    %1761 = vmatpush.msra.mxu0 %v459
    %1762 = vmatpush.msra.mxu0 %v455
    %1763 = vmatpush.msra.mxu0 %v451
    %1764 = vmatpush.msra.mxu0 %v447
    %1765 = vmatpush.msra.mxu0 %v443
    %1766 = vmatpush.msra.mxu0 %v439
    %1767 = vmatpush.msra.mxu0 %v435
    %1768 = vmatpush.msra.mxu0 %v431
    %1769 = vmatmul.f32.gmra.mxu0 %v51
    %v1770 = vpop.f32.mrf.mxu0
    %v1771 = vadd.f32 %v1742, %v1770
    %1772 = vmatmul.f32.gmra.mxu0 %v67
    %v1773 = vpop.f32.mrf.mxu0
    %v1774 = vadd.f32 %v1745, %v1773
    %1775 = vmatmul.f32.gmra.mxu0 %v83
    %v1776 = vpop.f32.mrf.mxu0
    %v1777 = vadd.f32 %v1748, %v1776
    %1778 = vmatmul.f32.gmra.mxu0 %v99
    %v1779 = vpop.f32.mrf.mxu0
    %v1780 = vadd.f32 %v1751, %v1779
    %1781 = vdwg.mxu0
    %1782 = vmatpush.msra.mxu0 %v555
    %1783 = vmatpush.msra.mxu0 %v551
    %1784 = vmatpush.msra.mxu0 %v547
    %1785 = vmatpush.msra.mxu0 %v543
    %1786 = vmatpush.msra.mxu0 %v539
    %1787 = vmatpush.msra.mxu0 %v535
    %1788 = vmatpush.msra.mxu0 %v531
    %1789 = vmatpush.msra.mxu0 %v527
    %1790 = vmatpush.msra.mxu0 %v523
    %1791 = vmatpush.msra.mxu0 %v519
    %1792 = vmatpush.msra.mxu0 %v515
    %1793 = vmatpush.msra.mxu0 %v511
    %1794 = vmatpush.msra.mxu0 %v507
    %1795 = vmatpush.msra.mxu0 %v503
    %1796 = vmatpush.msra.mxu0 %v499
    %1797 = vmatpush.msra.mxu0 %v495
    %1798 = vmatmul.f32.gmra.mxu0 %v52
    %v1799 = vpop.f32.mrf.mxu0
    %v1800 = vadd.f32 %v1771, %v1799
    %1801 = vmatmul.f32.gmra.mxu0 %v68
    %v1802 = vpop.f32.mrf.mxu0
    %v1803 = vadd.f32 %v1774, %v1802
    %1804 = vmatmul.f32.gmra.mxu0 %v84
    %v1805 = vpop.f32.mrf.mxu0
    %v1806 = vadd.f32 %v1777, %v1805
    %1807 = vmatmul.f32.gmra.mxu0 %v100
    %v1808 = vpop.f32.mrf.mxu0
    %v1809 = vadd.f32 %v1780, %v1808
    %1810 = vdwg.mxu0
    %1811 = vmatpush.msra.mxu0 %v619
    %1812 = vmatpush.msra.mxu0 %v615
    %1813 = vmatpush.msra.mxu0 %v611
    %1814 = vmatpush.msra.mxu0 %v607
    %1815 = vmatpush.msra.mxu0 %v603
    %1816 = vmatpush.msra.mxu0 %v599
    %1817 = vmatpush.msra.mxu0 %v595
    %1818 = vmatpush.msra.mxu0 %v591
    %1819 = vmatpush.msra.mxu0 %v587
    %1820 = vmatpush.msra.mxu0 %v583
    %1821 = vmatpush.msra.mxu0 %v579
    %1822 = vmatpush.msra.mxu0 %v575
    %1823 = vmatpush.msra.mxu0 %v571
    %1824 = vmatpush.msra.mxu0 %v567
    %1825 = vmatpush.msra.mxu0 %v563
    %1826 = vmatpush.msra.mxu0 %v559
    %1827 = vmatmul.f32.gmra.mxu0 %v53
    %v1828 = vpop.f32.mrf.mxu0
    %v1829 = vadd.f32 %v1800, %v1828
    %1830 = vmatmul.f32.gmra.mxu0 %v69
    %v1831 = vpop.f32.mrf.mxu0
    %v1832 = vadd.f32 %v1803, %v1831
    %1833 = vmatmul.f32.gmra.mxu0 %v85
    %v1834 = vpop.f32.mrf.mxu0
    %v1835 = vadd.f32 %v1806, %v1834
    %1836 = vmatmul.f32.gmra.mxu0 %v101
    %v1837 = vpop.f32.mrf.mxu0
    %v1838 = vadd.f32 %v1809, %v1837
    %1839 = vdwg.mxu0
    %1840 = vmatpush.msra.mxu0 %v683
    %1841 = vmatpush.msra.mxu0 %v679
    %1842 = vmatpush.msra.mxu0 %v675
    %1843 = vmatpush.msra.mxu0 %v671
    %1844 = vmatpush.msra.mxu0 %v667
    %1845 = vmatpush.msra.mxu0 %v663
    %1846 = vmatpush.msra.mxu0 %v659
    %1847 = vmatpush.msra.mxu0 %v655
    %1848 = vmatpush.msra.mxu0 %v651
    %1849 = vmatpush.msra.mxu0 %v647
    %1850 = vmatpush.msra.mxu0 %v643
    %1851 = vmatpush.msra.mxu0 %v639
    %1852 = vmatpush.msra.mxu0 %v635
    %1853 = vmatpush.msra.mxu0 %v631
    %1854 = vmatpush.msra.mxu0 %v627
    %1855 = vmatpush.msra.mxu0 %v623
    %1856 = vmatmul.f32.gmra.mxu0 %v54
    %v1857 = vpop.f32.mrf.mxu0
    %v1858 = vadd.f32 %v1829, %v1857
    %1859 = vmatmul.f32.gmra.mxu0 %v70
    %v1860 = vpop.f32.mrf.mxu0
    %v1861 = vadd.f32 %v1832, %v1860
    %1862 = vmatmul.f32.gmra.mxu0 %v86
    %v1863 = vpop.f32.mrf.mxu0
    %v1864 = vadd.f32 %v1835, %v1863
    %1865 = vmatmul.f32.gmra.mxu0 %v102
    %v1866 = vpop.f32.mrf.mxu0
    %v1867 = vadd.f32 %v1838, %v1866
    %1868 = vdwg.mxu0
    %1869 = vmatpush.msra.mxu0 %v747
    %1870 = vmatpush.msra.mxu0 %v743
    %1871 = vmatpush.msra.mxu0 %v739
    %1872 = vmatpush.msra.mxu0 %v735
    %1873 = vmatpush.msra.mxu0 %v731
    %1874 = vmatpush.msra.mxu0 %v727
    %1875 = vmatpush.msra.mxu0 %v723
    %1876 = vmatpush.msra.mxu0 %v719
    %1877 = vmatpush.msra.mxu0 %v715
    %1878 = vmatpush.msra.mxu0 %v711
    %1879 = vmatpush.msra.mxu0 %v707
    %1880 = vmatpush.msra.mxu0 %v703
    %1881 = vmatpush.msra.mxu0 %v699
    %1882 = vmatpush.msra.mxu0 %v695
    %1883 = vmatpush.msra.mxu0 %v691
    %1884 = vmatpush.msra.mxu0 %v687
    %1885 = vmatmul.f32.gmra.mxu0 %v55
    %v1886 = vpop.f32.mrf.mxu0
    %v1887 = vadd.f32 %v1858, %v1886
    %1888 = vmatmul.f32.gmra.mxu0 %v71
    %v1889 = vpop.f32.mrf.mxu0
    %v1890 = vadd.f32 %v1861, %v1889
    %1891 = vmatmul.f32.gmra.mxu0 %v87
    %v1892 = vpop.f32.mrf.mxu0
    %v1893 = vadd.f32 %v1864, %v1892
    %1894 = vmatmul.f32.gmra.mxu0 %v103
    %v1895 = vpop.f32.mrf.mxu0
    %v1896 = vadd.f32 %v1867, %v1895
    %1897 = vdwg.mxu0
    %1898 = vmatpush.msra.mxu0 %v811
    %1899 = vmatpush.msra.mxu0 %v807
    %1900 = vmatpush.msra.mxu0 %v803
    %1901 = vmatpush.msra.mxu0 %v799
    %1902 = vmatpush.msra.mxu0 %v795
    %1903 = vmatpush.msra.mxu0 %v791
    %1904 = vmatpush.msra.mxu0 %v787
    %1905 = vmatpush.msra.mxu0 %v783
    %1906 = vmatpush.msra.mxu0 %v779
    %1907 = vmatpush.msra.mxu0 %v775
    %1908 = vmatpush.msra.mxu0 %v771
    %1909 = vmatpush.msra.mxu0 %v767
    %1910 = vmatpush.msra.mxu0 %v763
    %1911 = vmatpush.msra.mxu0 %v759
    %1912 = vmatpush.msra.mxu0 %v755
    %1913 = vmatpush.msra.mxu0 %v751
    %1914 = vmatmul.f32.gmra.mxu0 %v56
    %v1915 = vpop.f32.mrf.mxu0
    %v1916 = vadd.f32 %v1887, %v1915
    %1917 = vmatmul.f32.gmra.mxu0 %v72
    %v1918 = vpop.f32.mrf.mxu0
    %v1919 = vadd.f32 %v1890, %v1918
    %1920 = vmatmul.f32.gmra.mxu0 %v88
    %v1921 = vpop.f32.mrf.mxu0
    %v1922 = vadd.f32 %v1893, %v1921
    %1923 = vmatmul.f32.gmra.mxu0 %v104
    %v1924 = vpop.f32.mrf.mxu0
    %v1925 = vadd.f32 %v1896, %v1924
    %1926 = vdwg.mxu0
    %1927 = vmatpush.msra.mxu0 %v875
    %1928 = vmatpush.msra.mxu0 %v871
    %1929 = vmatpush.msra.mxu0 %v867
    %1930 = vmatpush.msra.mxu0 %v863
    %1931 = vmatpush.msra.mxu0 %v859
    %1932 = vmatpush.msra.mxu0 %v855
    %1933 = vmatpush.msra.mxu0 %v851
    %1934 = vmatpush.msra.mxu0 %v847
    %1935 = vmatpush.msra.mxu0 %v843
    %1936 = vmatpush.msra.mxu0 %v839
    %1937 = vmatpush.msra.mxu0 %v835
    %1938 = vmatpush.msra.mxu0 %v831
    %1939 = vmatpush.msra.mxu0 %v827
    %1940 = vmatpush.msra.mxu0 %v823
    %1941 = vmatpush.msra.mxu0 %v819
    %1942 = vmatpush.msra.mxu0 %v815
    %1943 = vmatmul.f32.gmra.mxu0 %v57
    %v1944 = vpop.f32.mrf.mxu0
    %v1945 = vadd.f32 %v1916, %v1944
    %1946 = vmatmul.f32.gmra.mxu0 %v73
    %v1947 = vpop.f32.mrf.mxu0
    %v1948 = vadd.f32 %v1919, %v1947
    %1949 = vmatmul.f32.gmra.mxu0 %v89
    %v1950 = vpop.f32.mrf.mxu0
    %v1951 = vadd.f32 %v1922, %v1950
    %1952 = vmatmul.f32.gmra.mxu0 %v105
    %v1953 = vpop.f32.mrf.mxu0
    %v1954 = vadd.f32 %v1925, %v1953
    %1955 = vdwg.mxu0
    %1956 = vmatpush.msra.mxu0 %v939
    %1957 = vmatpush.msra.mxu0 %v935
    %1958 = vmatpush.msra.mxu0 %v931
    %1959 = vmatpush.msra.mxu0 %v927
    %1960 = vmatpush.msra.mxu0 %v923
    %1961 = vmatpush.msra.mxu0 %v919
    %1962 = vmatpush.msra.mxu0 %v915
    %1963 = vmatpush.msra.mxu0 %v911
    %1964 = vmatpush.msra.mxu0 %v907
    %1965 = vmatpush.msra.mxu0 %v903
    %1966 = vmatpush.msra.mxu0 %v899
    %1967 = vmatpush.msra.mxu0 %v895
    %1968 = vmatpush.msra.mxu0 %v891
    %1969 = vmatpush.msra.mxu0 %v887
    %1970 = vmatpush.msra.mxu0 %v883
    %1971 = vmatpush.msra.mxu0 %v879
    %1972 = vmatmul.f32.gmra.mxu0 %v58
    %v1973 = vpop.f32.mrf.mxu0
    %v1974 = vadd.f32 %v1945, %v1973
    %1975 = vmatmul.f32.gmra.mxu0 %v74
    %v1976 = vpop.f32.mrf.mxu0
    %v1977 = vadd.f32 %v1948, %v1976
    %1978 = vmatmul.f32.gmra.mxu0 %v90
    %v1979 = vpop.f32.mrf.mxu0
    %v1980 = vadd.f32 %v1951, %v1979
    %1981 = vmatmul.f32.gmra.mxu0 %v106
    %v1982 = vpop.f32.mrf.mxu0
    %v1983 = vadd.f32 %v1954, %v1982
    %1984 = vdwg.mxu0
    %1985 = vmatpush.msra.mxu0 %v1003
    %1986 = vmatpush.msra.mxu0 %v999
    %1987 = vmatpush.msra.mxu0 %v995
    %1988 = vmatpush.msra.mxu0 %v991
    %1989 = vmatpush.msra.mxu0 %v987
    %1990 = vmatpush.msra.mxu0 %v983
    %1991 = vmatpush.msra.mxu0 %v979
    %1992 = vmatpush.msra.mxu0 %v975
    %1993 = vmatpush.msra.mxu0 %v971
    %1994 = vmatpush.msra.mxu0 %v967
    %1995 = vmatpush.msra.mxu0 %v963
    %1996 = vmatpush.msra.mxu0 %v959
    %1997 = vmatpush.msra.mxu0 %v955
    %1998 = vmatpush.msra.mxu0 %v951
    %1999 = vmatpush.msra.mxu0 %v947
    %2000 = vmatpush.msra.mxu0 %v943
    %2001 = vmatmul.f32.gmra.mxu0 %v59
    %v2002 = vpop.f32.mrf.mxu0
    %v2003 = vadd.f32 %v1974, %v2002
    %2004 = vmatmul.f32.gmra.mxu0 %v75
    %v2005 = vpop.f32.mrf.mxu0
    %v2006 = vadd.f32 %v1977, %v2005
    %2007 = vmatmul.f32.gmra.mxu0 %v91
    %v2008 = vpop.f32.mrf.mxu0
    %v2009 = vadd.f32 %v1980, %v2008
    %2010 = vmatmul.f32.gmra.mxu0 %v107
    %v2011 = vpop.f32.mrf.mxu0
    %v2012 = vadd.f32 %v1983, %v2011
    %2013 = vdwg.mxu0
    %2014 = vmatpush.msra.mxu0 %v1067
    %2015 = vmatpush.msra.mxu0 %v1063
    %2016 = vmatpush.msra.mxu0 %v1059
    %2017 = vmatpush.msra.mxu0 %v1055
    %2018 = vmatpush.msra.mxu0 %v1051
    %2019 = vmatpush.msra.mxu0 %v1047
    %2020 = vmatpush.msra.mxu0 %v1043
    %2021 = vmatpush.msra.mxu0 %v1039
    %2022 = vmatpush.msra.mxu0 %v1035
    %2023 = vmatpush.msra.mxu0 %v1031
    %2024 = vmatpush.msra.mxu0 %v1027
    %2025 = vmatpush.msra.mxu0 %v1023
    %2026 = vmatpush.msra.mxu0 %v1019
    %2027 = vmatpush.msra.mxu0 %v1015
    %2028 = vmatpush.msra.mxu0 %v1011
    %2029 = vmatpush.msra.mxu0 %v1007
    %2030 = vmatmul.f32.gmra.mxu0 %v60
    %v2031 = vpop.f32.mrf.mxu0
    %v2032 = vadd.f32 %v2003, %v2031
    %2033 = vmatmul.f32.gmra.mxu0 %v76
    %v2034 = vpop.f32.mrf.mxu0
    %v2035 = vadd.f32 %v2006, %v2034
    %2036 = vmatmul.f32.gmra.mxu0 %v92
    %v2037 = vpop.f32.mrf.mxu0
    %v2038 = vadd.f32 %v2009, %v2037
    %2039 = vmatmul.f32.gmra.mxu0 %v108
    %v2040 = vpop.f32.mrf.mxu0
    %v2041 = vadd.f32 %v2012, %v2040
    %2042 = vdwg.mxu0
    %2043 = vmatpush.msra.mxu0 %v1131
    %2044 = vmatpush.msra.mxu0 %v1127
    %2045 = vmatpush.msra.mxu0 %v1123
    %2046 = vmatpush.msra.mxu0 %v1119
    %2047 = vmatpush.msra.mxu0 %v1115
    %2048 = vmatpush.msra.mxu0 %v1111
    %2049 = vmatpush.msra.mxu0 %v1107
    %2050 = vmatpush.msra.mxu0 %v1103
    %2051 = vmatpush.msra.mxu0 %v1099
    %2052 = vmatpush.msra.mxu0 %v1095
    %2053 = vmatpush.msra.mxu0 %v1091
    %2054 = vmatpush.msra.mxu0 %v1087
    %2055 = vmatpush.msra.mxu0 %v1083
    %2056 = vmatpush.msra.mxu0 %v1079
    %2057 = vmatpush.msra.mxu0 %v1075
    %2058 = vmatpush.msra.mxu0 %v1071
    %2059 = vmatmul.f32.gmra.mxu0 %v61
    %v2060 = vpop.f32.mrf.mxu0
    %v2061 = vadd.f32 %v2032, %v2060
    %2062 = vmatmul.f32.gmra.mxu0 %v77
    %v2063 = vpop.f32.mrf.mxu0
    %v2064 = vadd.f32 %v2035, %v2063
    %2065 = vmatmul.f32.gmra.mxu0 %v93
    %v2066 = vpop.f32.mrf.mxu0
    %v2067 = vadd.f32 %v2038, %v2066
    %2068 = vmatmul.f32.gmra.mxu0 %v109
    %v2069 = vpop.f32.mrf.mxu0
    %v2070 = vadd.f32 %v2041, %v2069
    %2071 = vdwg.mxu0
    %2072 = vmatpush.msra.mxu0 %v172
    %2073 = vmatpush.msra.mxu0 %v168
    %2074 = vmatpush.msra.mxu0 %v164
    %2075 = vmatpush.msra.mxu0 %v160
    %2076 = vmatpush.msra.mxu0 %v156
    %2077 = vmatpush.msra.mxu0 %v152
    %2078 = vmatpush.msra.mxu0 %v148
    %2079 = vmatpush.msra.mxu0 %v144
    %2080 = vmatpush.msra.mxu0 %v140
    %2081 = vmatpush.msra.mxu0 %v136
    %2082 = vmatpush.msra.mxu0 %v132
    %2083 = vmatpush.msra.mxu0 %v128
    %2084 = vmatpush.msra.mxu0 %v124
    %2085 = vmatpush.msra.mxu0 %v120
    %2086 = vmatpush.msra.mxu0 %v116
    %2087 = vmatpush.msra.mxu0 %v112
    %2088 = vmatmul.f32.gmra.mxu0 %v46
    %v2089 = vpop.f32.mrf.mxu0
    %v2090 = vadd.f32 %v1138, %v2089
    %2091 = vmatmul.f32.gmra.mxu0 %v62
    %v2092 = vpop.f32.mrf.mxu0
    %v2093 = vadd.f32 %v1138, %v2092
    %2094 = vmatmul.f32.gmra.mxu0 %v78
    %v2095 = vpop.f32.mrf.mxu0
    %v2096 = vadd.f32 %v1138, %v2095
    %2097 = vmatmul.f32.gmra.mxu0 %v94
    %v2098 = vpop.f32.mrf.mxu0
    %v2099 = vadd.f32 %v1138, %v2098
    %2100 = vdwg.mxu0
    %2101 = vmatpush.msra.mxu0 %v236
    %2102 = vmatpush.msra.mxu0 %v232
    %2103 = vmatpush.msra.mxu0 %v228
    %2104 = vmatpush.msra.mxu0 %v224
    %2105 = vmatpush.msra.mxu0 %v220
    %2106 = vmatpush.msra.mxu0 %v216
    %2107 = vmatpush.msra.mxu0 %v212
    %2108 = vmatpush.msra.mxu0 %v208
    %2109 = vmatpush.msra.mxu0 %v204
    %2110 = vmatpush.msra.mxu0 %v200
    %2111 = vmatpush.msra.mxu0 %v196
    %2112 = vmatpush.msra.mxu0 %v192
    %2113 = vmatpush.msra.mxu0 %v188
    %2114 = vmatpush.msra.mxu0 %v184
    %2115 = vmatpush.msra.mxu0 %v180
    %2116 = vmatpush.msra.mxu0 %v176
    %2117 = vmatmul.f32.gmra.mxu0 %v47
    %v2118 = vpop.f32.mrf.mxu0
    %v2119 = vadd.f32 %v2090, %v2118
    %2120 = vmatmul.f32.gmra.mxu0 %v63
    %v2121 = vpop.f32.mrf.mxu0
    %v2122 = vadd.f32 %v2093, %v2121
    %2123 = vmatmul.f32.gmra.mxu0 %v79
    %v2124 = vpop.f32.mrf.mxu0
    %v2125 = vadd.f32 %v2096, %v2124
    %2126 = vmatmul.f32.gmra.mxu0 %v95
    %v2127 = vpop.f32.mrf.mxu0
    %v2128 = vadd.f32 %v2099, %v2127
    %2129 = vdwg.mxu0
    %2130 = vmatpush.msra.mxu0 %v300
    %2131 = vmatpush.msra.mxu0 %v296
    %2132 = vmatpush.msra.mxu0 %v292
    %2133 = vmatpush.msra.mxu0 %v288
    %2134 = vmatpush.msra.mxu0 %v284
    %2135 = vmatpush.msra.mxu0 %v280
    %2136 = vmatpush.msra.mxu0 %v276
    %2137 = vmatpush.msra.mxu0 %v272
    %2138 = vmatpush.msra.mxu0 %v268
    %2139 = vmatpush.msra.mxu0 %v264
    %2140 = vmatpush.msra.mxu0 %v260
    %2141 = vmatpush.msra.mxu0 %v256
    %2142 = vmatpush.msra.mxu0 %v252
    %2143 = vmatpush.msra.mxu0 %v248
    %2144 = vmatpush.msra.mxu0 %v244
    %2145 = vmatpush.msra.mxu0 %v240
    %2146 = vmatmul.f32.gmra.mxu0 %v48
    %v2147 = vpop.f32.mrf.mxu0
    %v2148 = vadd.f32 %v2119, %v2147
    %2149 = vmatmul.f32.gmra.mxu0 %v64
    %v2150 = vpop.f32.mrf.mxu0
    %v2151 = vadd.f32 %v2122, %v2150
    %2152 = vmatmul.f32.gmra.mxu0 %v80
    %v2153 = vpop.f32.mrf.mxu0
    %v2154 = vadd.f32 %v2125, %v2153
    %2155 = vmatmul.f32.gmra.mxu0 %v96
    %v2156 = vpop.f32.mrf.mxu0
    %v2157 = vadd.f32 %v2128, %v2156
    %2158 = vdwg.mxu0
    %2159 = vmatpush.msra.mxu0 %v364
    %2160 = vmatpush.msra.mxu0 %v360
    %2161 = vmatpush.msra.mxu0 %v356
    %2162 = vmatpush.msra.mxu0 %v352
    %2163 = vmatpush.msra.mxu0 %v348
    %2164 = vmatpush.msra.mxu0 %v344
    %2165 = vmatpush.msra.mxu0 %v340
    %2166 = vmatpush.msra.mxu0 %v336
    %2167 = vmatpush.msra.mxu0 %v332
    %2168 = vmatpush.msra.mxu0 %v328
    %2169 = vmatpush.msra.mxu0 %v324
    %2170 = vmatpush.msra.mxu0 %v320
    %2171 = vmatpush.msra.mxu0 %v316
    %2172 = vmatpush.msra.mxu0 %v312
    %2173 = vmatpush.msra.mxu0 %v308
    %2174 = vmatpush.msra.mxu0 %v304
    %2175 = vmatmul.f32.gmra.mxu0 %v49
    %v2176 = vpop.f32.mrf.mxu0
    %v2177 = vadd.f32 %v2148, %v2176
    %2178 = vmatmul.f32.gmra.mxu0 %v65
    %v2179 = vpop.f32.mrf.mxu0
    %v2180 = vadd.f32 %v2151, %v2179
    %2181 = vmatmul.f32.gmra.mxu0 %v81
    %v2182 = vpop.f32.mrf.mxu0
    %v2183 = vadd.f32 %v2154, %v2182
    %2184 = vmatmul.f32.gmra.mxu0 %v97
    %v2185 = vpop.f32.mrf.mxu0
    %v2186 = vadd.f32 %v2157, %v2185
    %2187 = vdwg.mxu0
    %2188 = vmatpush.msra.mxu0 %v428
    %2189 = vmatpush.msra.mxu0 %v424
    %2190 = vmatpush.msra.mxu0 %v420
    %2191 = vmatpush.msra.mxu0 %v416
    %2192 = vmatpush.msra.mxu0 %v412
    %2193 = vmatpush.msra.mxu0 %v408
    %2194 = vmatpush.msra.mxu0 %v404
    %2195 = vmatpush.msra.mxu0 %v400
    %2196 = vmatpush.msra.mxu0 %v396
    %2197 = vmatpush.msra.mxu0 %v392
    %2198 = vmatpush.msra.mxu0 %v388
    %2199 = vmatpush.msra.mxu0 %v384
    %2200 = vmatpush.msra.mxu0 %v380
    %2201 = vmatpush.msra.mxu0 %v376
    %2202 = vmatpush.msra.mxu0 %v372
    %2203 = vmatpush.msra.mxu0 %v368
    %2204 = vmatmul.f32.gmra.mxu0 %v50
    %v2205 = vpop.f32.mrf.mxu0
    %v2206 = vadd.f32 %v2177, %v2205
    %2207 = vmatmul.f32.gmra.mxu0 %v66
    %v2208 = vpop.f32.mrf.mxu0
    %v2209 = vadd.f32 %v2180, %v2208
    %2210 = vmatmul.f32.gmra.mxu0 %v82
    %v2211 = vpop.f32.mrf.mxu0
    %v2212 = vadd.f32 %v2183, %v2211
    %2213 = vmatmul.f32.gmra.mxu0 %v98
    %v2214 = vpop.f32.mrf.mxu0
    %v2215 = vadd.f32 %v2186, %v2214
    %2216 = vdwg.mxu0
    %2217 = vmatpush.msra.mxu0 %v492
    %2218 = vmatpush.msra.mxu0 %v488
    %2219 = vmatpush.msra.mxu0 %v484
    %2220 = vmatpush.msra.mxu0 %v480
    %2221 = vmatpush.msra.mxu0 %v476
    %2222 = vmatpush.msra.mxu0 %v472
    %2223 = vmatpush.msra.mxu0 %v468
    %2224 = vmatpush.msra.mxu0 %v464
    %2225 = vmatpush.msra.mxu0 %v460
    %2226 = vmatpush.msra.mxu0 %v456
    %2227 = vmatpush.msra.mxu0 %v452
    %2228 = vmatpush.msra.mxu0 %v448
    %2229 = vmatpush.msra.mxu0 %v444
    %2230 = vmatpush.msra.mxu0 %v440
    %2231 = vmatpush.msra.mxu0 %v436
    %2232 = vmatpush.msra.mxu0 %v432
    %2233 = vmatmul.f32.gmra.mxu0 %v51
    %v2234 = vpop.f32.mrf.mxu0
    %v2235 = vadd.f32 %v2206, %v2234
    %2236 = vmatmul.f32.gmra.mxu0 %v67
    %v2237 = vpop.f32.mrf.mxu0
    %v2238 = vadd.f32 %v2209, %v2237
    %2239 = vmatmul.f32.gmra.mxu0 %v83
    %v2240 = vpop.f32.mrf.mxu0
    %v2241 = vadd.f32 %v2212, %v2240
    %2242 = vmatmul.f32.gmra.mxu0 %v99
    %v2243 = vpop.f32.mrf.mxu0
    %v2244 = vadd.f32 %v2215, %v2243
    %2245 = vdwg.mxu0
    %2246 = vmatpush.msra.mxu0 %v556
    %2247 = vmatpush.msra.mxu0 %v552
    %2248 = vmatpush.msra.mxu0 %v548
    %2249 = vmatpush.msra.mxu0 %v544
    %2250 = vmatpush.msra.mxu0 %v540
    %2251 = vmatpush.msra.mxu0 %v536
    %2252 = vmatpush.msra.mxu0 %v532
    %2253 = vmatpush.msra.mxu0 %v528
    %2254 = vmatpush.msra.mxu0 %v524
    %2255 = vmatpush.msra.mxu0 %v520
    %2256 = vmatpush.msra.mxu0 %v516
    %2257 = vmatpush.msra.mxu0 %v512
    %2258 = vmatpush.msra.mxu0 %v508
    %2259 = vmatpush.msra.mxu0 %v504
    %2260 = vmatpush.msra.mxu0 %v500
    %2261 = vmatpush.msra.mxu0 %v496
    %2262 = vmatmul.f32.gmra.mxu0 %v52
    %v2263 = vpop.f32.mrf.mxu0
    %v2264 = vadd.f32 %v2235, %v2263
    %2265 = vmatmul.f32.gmra.mxu0 %v68
    %v2266 = vpop.f32.mrf.mxu0
    %v2267 = vadd.f32 %v2238, %v2266
    %2268 = vmatmul.f32.gmra.mxu0 %v84
    %v2269 = vpop.f32.mrf.mxu0
    %v2270 = vadd.f32 %v2241, %v2269
    %2271 = vmatmul.f32.gmra.mxu0 %v100
    %v2272 = vpop.f32.mrf.mxu0
    %v2273 = vadd.f32 %v2244, %v2272
    %2274 = vdwg.mxu0
    %2275 = vmatpush.msra.mxu0 %v620
    %2276 = vmatpush.msra.mxu0 %v616
    %2277 = vmatpush.msra.mxu0 %v612
    %2278 = vmatpush.msra.mxu0 %v608
    %2279 = vmatpush.msra.mxu0 %v604
    %2280 = vmatpush.msra.mxu0 %v600
    %2281 = vmatpush.msra.mxu0 %v596
    %2282 = vmatpush.msra.mxu0 %v592
    %2283 = vmatpush.msra.mxu0 %v588
    %2284 = vmatpush.msra.mxu0 %v584
    %2285 = vmatpush.msra.mxu0 %v580
    %2286 = vmatpush.msra.mxu0 %v576
    %2287 = vmatpush.msra.mxu0 %v572
    %2288 = vmatpush.msra.mxu0 %v568
    %2289 = vmatpush.msra.mxu0 %v564
    %2290 = vmatpush.msra.mxu0 %v560
    %2291 = vmatmul.f32.gmra.mxu0 %v53
    %v2292 = vpop.f32.mrf.mxu0
    %v2293 = vadd.f32 %v2264, %v2292
    %2294 = vmatmul.f32.gmra.mxu0 %v69
    %v2295 = vpop.f32.mrf.mxu0
    %v2296 = vadd.f32 %v2267, %v2295
    %2297 = vmatmul.f32.gmra.mxu0 %v85
    %v2298 = vpop.f32.mrf.mxu0
    %v2299 = vadd.f32 %v2270, %v2298
    %2300 = vmatmul.f32.gmra.mxu0 %v101
    %v2301 = vpop.f32.mrf.mxu0
    %v2302 = vadd.f32 %v2273, %v2301
    %2303 = vdwg.mxu0
    %2304 = vmatpush.msra.mxu0 %v684
    %2305 = vmatpush.msra.mxu0 %v680
    %2306 = vmatpush.msra.mxu0 %v676
    %2307 = vmatpush.msra.mxu0 %v672
    %2308 = vmatpush.msra.mxu0 %v668
    %2309 = vmatpush.msra.mxu0 %v664
    %2310 = vmatpush.msra.mxu0 %v660
    %2311 = vmatpush.msra.mxu0 %v656
    %2312 = vmatpush.msra.mxu0 %v652
    %2313 = vmatpush.msra.mxu0 %v648
    %2314 = vmatpush.msra.mxu0 %v644
    %2315 = vmatpush.msra.mxu0 %v640
    %2316 = vmatpush.msra.mxu0 %v636
    %2317 = vmatpush.msra.mxu0 %v632
    %2318 = vmatpush.msra.mxu0 %v628
    %2319 = vmatpush.msra.mxu0 %v624
    %2320 = vmatmul.f32.gmra.mxu0 %v54
    %v2321 = vpop.f32.mrf.mxu0
    %v2322 = vadd.f32 %v2293, %v2321
    %2323 = vmatmul.f32.gmra.mxu0 %v70
    %v2324 = vpop.f32.mrf.mxu0
    %v2325 = vadd.f32 %v2296, %v2324
    %2326 = vmatmul.f32.gmra.mxu0 %v86
    %v2327 = vpop.f32.mrf.mxu0
    %v2328 = vadd.f32 %v2299, %v2327
    %2329 = vmatmul.f32.gmra.mxu0 %v102
    %v2330 = vpop.f32.mrf.mxu0
    %v2331 = vadd.f32 %v2302, %v2330
    %2332 = vdwg.mxu0
    %2333 = vmatpush.msra.mxu0 %v748
    %2334 = vmatpush.msra.mxu0 %v744
    %2335 = vmatpush.msra.mxu0 %v740
    %2336 = vmatpush.msra.mxu0 %v736
    %2337 = vmatpush.msra.mxu0 %v732
    %2338 = vmatpush.msra.mxu0 %v728
    %2339 = vmatpush.msra.mxu0 %v724
    %2340 = vmatpush.msra.mxu0 %v720
    %2341 = vmatpush.msra.mxu0 %v716
    %2342 = vmatpush.msra.mxu0 %v712
    %2343 = vmatpush.msra.mxu0 %v708
    %2344 = vmatpush.msra.mxu0 %v704
    %2345 = vmatpush.msra.mxu0 %v700
    %2346 = vmatpush.msra.mxu0 %v696
    %2347 = vmatpush.msra.mxu0 %v692
    %2348 = vmatpush.msra.mxu0 %v688
    %2349 = vmatmul.f32.gmra.mxu0 %v55
    %v2350 = vpop.f32.mrf.mxu0
    %v2351 = vadd.f32 %v2322, %v2350
    %2352 = vmatmul.f32.gmra.mxu0 %v71
    %v2353 = vpop.f32.mrf.mxu0
    %v2354 = vadd.f32 %v2325, %v2353
    %2355 = vmatmul.f32.gmra.mxu0 %v87
    %v2356 = vpop.f32.mrf.mxu0
    %v2357 = vadd.f32 %v2328, %v2356
    %2358 = vmatmul.f32.gmra.mxu0 %v103
    %v2359 = vpop.f32.mrf.mxu0
    %v2360 = vadd.f32 %v2331, %v2359
    %2361 = vdwg.mxu0
    %2362 = vmatpush.msra.mxu0 %v812
    %2363 = vmatpush.msra.mxu0 %v808
    %2364 = vmatpush.msra.mxu0 %v804
    %2365 = vmatpush.msra.mxu0 %v800
    %2366 = vmatpush.msra.mxu0 %v796
    %2367 = vmatpush.msra.mxu0 %v792
    %2368 = vmatpush.msra.mxu0 %v788
    %2369 = vmatpush.msra.mxu0 %v784
    %2370 = vmatpush.msra.mxu0 %v780
    %2371 = vmatpush.msra.mxu0 %v776
    %2372 = vmatpush.msra.mxu0 %v772
    %2373 = vmatpush.msra.mxu0 %v768
    %2374 = vmatpush.msra.mxu0 %v764
    %2375 = vmatpush.msra.mxu0 %v760
    %2376 = vmatpush.msra.mxu0 %v756
    %2377 = vmatpush.msra.mxu0 %v752
    %2378 = vmatmul.f32.gmra.mxu0 %v56
    %v2379 = vpop.f32.mrf.mxu0
    %v2380 = vadd.f32 %v2351, %v2379
    %2381 = vmatmul.f32.gmra.mxu0 %v72
    %v2382 = vpop.f32.mrf.mxu0
    %v2383 = vadd.f32 %v2354, %v2382
    %2384 = vmatmul.f32.gmra.mxu0 %v88
    %v2385 = vpop.f32.mrf.mxu0
    %v2386 = vadd.f32 %v2357, %v2385
    %2387 = vmatmul.f32.gmra.mxu0 %v104
    %v2388 = vpop.f32.mrf.mxu0
    %v2389 = vadd.f32 %v2360, %v2388
    %2390 = vdwg.mxu0
    %2391 = vmatpush.msra.mxu0 %v876
    %2392 = vmatpush.msra.mxu0 %v872
    %2393 = vmatpush.msra.mxu0 %v868
    %2394 = vmatpush.msra.mxu0 %v864
    %2395 = vmatpush.msra.mxu0 %v860
    %2396 = vmatpush.msra.mxu0 %v856
    %2397 = vmatpush.msra.mxu0 %v852
    %2398 = vmatpush.msra.mxu0 %v848
    %2399 = vmatpush.msra.mxu0 %v844
    %2400 = vmatpush.msra.mxu0 %v840
    %2401 = vmatpush.msra.mxu0 %v836
    %2402 = vmatpush.msra.mxu0 %v832
    %2403 = vmatpush.msra.mxu0 %v828
    %2404 = vmatpush.msra.mxu0 %v824
    %2405 = vmatpush.msra.mxu0 %v820
    %2406 = vmatpush.msra.mxu0 %v816
    %2407 = vmatmul.f32.gmra.mxu0 %v57
    %v2408 = vpop.f32.mrf.mxu0
    %v2409 = vadd.f32 %v2380, %v2408
    %2410 = vmatmul.f32.gmra.mxu0 %v73
    %v2411 = vpop.f32.mrf.mxu0
    %v2412 = vadd.f32 %v2383, %v2411
    %2413 = vmatmul.f32.gmra.mxu0 %v89
    %v2414 = vpop.f32.mrf.mxu0
    %v2415 = vadd.f32 %v2386, %v2414
    %2416 = vmatmul.f32.gmra.mxu0 %v105
    %v2417 = vpop.f32.mrf.mxu0
    %v2418 = vadd.f32 %v2389, %v2417
    %2419 = vdwg.mxu0
    %2420 = vmatpush.msra.mxu0 %v940
    %2421 = vmatpush.msra.mxu0 %v936
    %2422 = vmatpush.msra.mxu0 %v932
    %2423 = vmatpush.msra.mxu0 %v928
    %2424 = vmatpush.msra.mxu0 %v924
    %2425 = vmatpush.msra.mxu0 %v920
    %2426 = vmatpush.msra.mxu0 %v916
    %2427 = vmatpush.msra.mxu0 %v912
    %2428 = vmatpush.msra.mxu0 %v908
    %2429 = vmatpush.msra.mxu0 %v904
    %2430 = vmatpush.msra.mxu0 %v900
    %2431 = vmatpush.msra.mxu0 %v896
    %2432 = vmatpush.msra.mxu0 %v892
    %2433 = vmatpush.msra.mxu0 %v888
    %2434 = vmatpush.msra.mxu0 %v884
    %2435 = vmatpush.msra.mxu0 %v880
    %2436 = vmatmul.f32.gmra.mxu0 %v58
    %v2437 = vpop.f32.mrf.mxu0
    %v2438 = vadd.f32 %v2409, %v2437
    %2439 = vmatmul.f32.gmra.mxu0 %v74
    %v2440 = vpop.f32.mrf.mxu0
    %v2441 = vadd.f32 %v2412, %v2440
    %2442 = vmatmul.f32.gmra.mxu0 %v90
    %v2443 = vpop.f32.mrf.mxu0
    %v2444 = vadd.f32 %v2415, %v2443
    %2445 = vmatmul.f32.gmra.mxu0 %v106
    %v2446 = vpop.f32.mrf.mxu0
    %v2447 = vadd.f32 %v2418, %v2446
    %2448 = vdwg.mxu0
    %2449 = vmatpush.msra.mxu0 %v1004
    %2450 = vmatpush.msra.mxu0 %v1000
    %2451 = vmatpush.msra.mxu0 %v996
    %2452 = vmatpush.msra.mxu0 %v992
    %2453 = vmatpush.msra.mxu0 %v988
    %2454 = vmatpush.msra.mxu0 %v984
    %2455 = vmatpush.msra.mxu0 %v980
    %2456 = vmatpush.msra.mxu0 %v976
    %2457 = vmatpush.msra.mxu0 %v972
    %2458 = vmatpush.msra.mxu0 %v968
    %2459 = vmatpush.msra.mxu0 %v964
    %2460 = vmatpush.msra.mxu0 %v960
    %2461 = vmatpush.msra.mxu0 %v956
    %2462 = vmatpush.msra.mxu0 %v952
    %2463 = vmatpush.msra.mxu0 %v948
    %2464 = vmatpush.msra.mxu0 %v944
    %2465 = vmatmul.f32.gmra.mxu0 %v59
    %v2466 = vpop.f32.mrf.mxu0
    %v2467 = vadd.f32 %v2438, %v2466
    %2468 = vmatmul.f32.gmra.mxu0 %v75
    %v2469 = vpop.f32.mrf.mxu0
    %v2470 = vadd.f32 %v2441, %v2469
    %2471 = vmatmul.f32.gmra.mxu0 %v91
    %v2472 = vpop.f32.mrf.mxu0
    %v2473 = vadd.f32 %v2444, %v2472
    %2474 = vmatmul.f32.gmra.mxu0 %v107
    %v2475 = vpop.f32.mrf.mxu0
    %v2476 = vadd.f32 %v2447, %v2475
    %2477 = vdwg.mxu0
    %2478 = vmatpush.msra.mxu0 %v1068
    %2479 = vmatpush.msra.mxu0 %v1064
    %2480 = vmatpush.msra.mxu0 %v1060
    %2481 = vmatpush.msra.mxu0 %v1056
    %2482 = vmatpush.msra.mxu0 %v1052
    %2483 = vmatpush.msra.mxu0 %v1048
    %2484 = vmatpush.msra.mxu0 %v1044
    %2485 = vmatpush.msra.mxu0 %v1040
    %2486 = vmatpush.msra.mxu0 %v1036
    %2487 = vmatpush.msra.mxu0 %v1032
    %2488 = vmatpush.msra.mxu0 %v1028
    %2489 = vmatpush.msra.mxu0 %v1024
    %2490 = vmatpush.msra.mxu0 %v1020
    %2491 = vmatpush.msra.mxu0 %v1016
    %2492 = vmatpush.msra.mxu0 %v1012
    %2493 = vmatpush.msra.mxu0 %v1008
    %2494 = vmatmul.f32.gmra.mxu0 %v60
    %v2495 = vpop.f32.mrf.mxu0
    %v2496 = vadd.f32 %v2467, %v2495
    %2497 = vmatmul.f32.gmra.mxu0 %v76
    %v2498 = vpop.f32.mrf.mxu0
    %v2499 = vadd.f32 %v2470, %v2498
    %2500 = vmatmul.f32.gmra.mxu0 %v92
    %v2501 = vpop.f32.mrf.mxu0
    %v2502 = vadd.f32 %v2473, %v2501
    %2503 = vmatmul.f32.gmra.mxu0 %v108
    %v2504 = vpop.f32.mrf.mxu0
    %v2505 = vadd.f32 %v2476, %v2504
    %2506 = vdwg.mxu0
    %2507 = vmatpush.msra.mxu0 %v1132
    %2508 = vmatpush.msra.mxu0 %v1128
    %2509 = vmatpush.msra.mxu0 %v1124
    %2510 = vmatpush.msra.mxu0 %v1120
    %2511 = vmatpush.msra.mxu0 %v1116
    %2512 = vmatpush.msra.mxu0 %v1112
    %2513 = vmatpush.msra.mxu0 %v1108
    %2514 = vmatpush.msra.mxu0 %v1104
    %2515 = vmatpush.msra.mxu0 %v1100
    %2516 = vmatpush.msra.mxu0 %v1096
    %2517 = vmatpush.msra.mxu0 %v1092
    %2518 = vmatpush.msra.mxu0 %v1088
    %2519 = vmatpush.msra.mxu0 %v1084
    %2520 = vmatpush.msra.mxu0 %v1080
    %2521 = vmatpush.msra.mxu0 %v1076
    %2522 = vmatpush.msra.mxu0 %v1072
    %2523 = vmatmul.f32.gmra.mxu0 %v61
    %v2524 = vpop.f32.mrf.mxu0
    %v2525 = vadd.f32 %v2496, %v2524
    %2526 = vmatmul.f32.gmra.mxu0 %v77
    %v2527 = vpop.f32.mrf.mxu0
    %v2528 = vadd.f32 %v2499, %v2527
    %2529 = vmatmul.f32.gmra.mxu0 %v93
    %v2530 = vpop.f32.mrf.mxu0
    %v2531 = vadd.f32 %v2502, %v2530
    %2532 = vmatmul.f32.gmra.mxu0 %v109
    %v2533 = vpop.f32.mrf.mxu0
    %v2534 = vadd.f32 %v2505, %v2533
    %2535 = vdwg.mxu0
    %2536 = vmatpush.msra.mxu0 %v173
    %2537 = vmatpush.msra.mxu0 %v169
    %2538 = vmatpush.msra.mxu0 %v165
    %2539 = vmatpush.msra.mxu0 %v161
    %2540 = vmatpush.msra.mxu0 %v157
    %2541 = vmatpush.msra.mxu0 %v153
    %2542 = vmatpush.msra.mxu0 %v149
    %2543 = vmatpush.msra.mxu0 %v145
    %2544 = vmatpush.msra.mxu0 %v141
    %2545 = vmatpush.msra.mxu0 %v137
    %2546 = vmatpush.msra.mxu0 %v133
    %2547 = vmatpush.msra.mxu0 %v129
    %2548 = vmatpush.msra.mxu0 %v125
    %2549 = vmatpush.msra.mxu0 %v121
    %2550 = vmatpush.msra.mxu0 %v117
    %2551 = vmatpush.msra.mxu0 %v113
    %2552 = vmatmul.f32.gmra.mxu0 %v46
    %v2553 = vpop.f32.mrf.mxu0
    %v2554 = vadd.f32 %v1139, %v2553
    %2555 = vmatmul.f32.gmra.mxu0 %v62
    %v2556 = vpop.f32.mrf.mxu0
    %v2557 = vadd.f32 %v1139, %v2556
    %2558 = vmatmul.f32.gmra.mxu0 %v78
    %v2559 = vpop.f32.mrf.mxu0
    %v2560 = vadd.f32 %v1139, %v2559
    %2561 = vmatmul.f32.gmra.mxu0 %v94
    %v2562 = vpop.f32.mrf.mxu0
    %v2563 = vadd.f32 %v1139, %v2562
    %2564 = vdwg.mxu0
    %2565 = vmatpush.msra.mxu0 %v237
    %2566 = vmatpush.msra.mxu0 %v233
    %2567 = vmatpush.msra.mxu0 %v229
    %2568 = vmatpush.msra.mxu0 %v225
    %2569 = vmatpush.msra.mxu0 %v221
    %2570 = vmatpush.msra.mxu0 %v217
    %2571 = vmatpush.msra.mxu0 %v213
    %2572 = vmatpush.msra.mxu0 %v209
    %2573 = vmatpush.msra.mxu0 %v205
    %2574 = vmatpush.msra.mxu0 %v201
    %2575 = vmatpush.msra.mxu0 %v197
    %2576 = vmatpush.msra.mxu0 %v193
    %2577 = vmatpush.msra.mxu0 %v189
    %2578 = vmatpush.msra.mxu0 %v185
    %2579 = vmatpush.msra.mxu0 %v181
    %2580 = vmatpush.msra.mxu0 %v177
    %2581 = vmatmul.f32.gmra.mxu0 %v47
    %v2582 = vpop.f32.mrf.mxu0
    %v2583 = vadd.f32 %v2554, %v2582
    %2584 = vmatmul.f32.gmra.mxu0 %v63
    %v2585 = vpop.f32.mrf.mxu0
    %v2586 = vadd.f32 %v2557, %v2585
    %2587 = vmatmul.f32.gmra.mxu0 %v79
    %v2588 = vpop.f32.mrf.mxu0
    %v2589 = vadd.f32 %v2560, %v2588
    %2590 = vmatmul.f32.gmra.mxu0 %v95
    %v2591 = vpop.f32.mrf.mxu0
    %v2592 = vadd.f32 %v2563, %v2591
    %2593 = vdwg.mxu0
    %2594 = vmatpush.msra.mxu0 %v301
    %2595 = vmatpush.msra.mxu0 %v297
    %2596 = vmatpush.msra.mxu0 %v293
    %2597 = vmatpush.msra.mxu0 %v289
    %2598 = vmatpush.msra.mxu0 %v285
    %2599 = vmatpush.msra.mxu0 %v281
    %2600 = vmatpush.msra.mxu0 %v277
    %2601 = vmatpush.msra.mxu0 %v273
    %2602 = vmatpush.msra.mxu0 %v269
    %2603 = vmatpush.msra.mxu0 %v265
    %2604 = vmatpush.msra.mxu0 %v261
    %2605 = vmatpush.msra.mxu0 %v257
    %2606 = vmatpush.msra.mxu0 %v253
    %2607 = vmatpush.msra.mxu0 %v249
    %2608 = vmatpush.msra.mxu0 %v245
    %2609 = vmatpush.msra.mxu0 %v241
    %2610 = vmatmul.f32.gmra.mxu0 %v48
    %v2611 = vpop.f32.mrf.mxu0
    %v2612 = vadd.f32 %v2583, %v2611
    %2613 = vmatmul.f32.gmra.mxu0 %v64
    %v2614 = vpop.f32.mrf.mxu0
    %v2615 = vadd.f32 %v2586, %v2614
    %2616 = vmatmul.f32.gmra.mxu0 %v80
    %v2617 = vpop.f32.mrf.mxu0
    %v2618 = vadd.f32 %v2589, %v2617
    %2619 = vmatmul.f32.gmra.mxu0 %v96
    %v2620 = vpop.f32.mrf.mxu0
    %v2621 = vadd.f32 %v2592, %v2620
    %2622 = vdwg.mxu0
    %2623 = vmatpush.msra.mxu0 %v365
    %2624 = vmatpush.msra.mxu0 %v361
    %2625 = vmatpush.msra.mxu0 %v357
    %2626 = vmatpush.msra.mxu0 %v353
    %2627 = vmatpush.msra.mxu0 %v349
    %2628 = vmatpush.msra.mxu0 %v345
    %2629 = vmatpush.msra.mxu0 %v341
    %2630 = vmatpush.msra.mxu0 %v337
    %2631 = vmatpush.msra.mxu0 %v333
    %2632 = vmatpush.msra.mxu0 %v329
    %2633 = vmatpush.msra.mxu0 %v325
    %2634 = vmatpush.msra.mxu0 %v321
    %2635 = vmatpush.msra.mxu0 %v317
    %2636 = vmatpush.msra.mxu0 %v313
    %2637 = vmatpush.msra.mxu0 %v309
    %2638 = vmatpush.msra.mxu0 %v305
    %2639 = vmatmul.f32.gmra.mxu0 %v49
    %v2640 = vpop.f32.mrf.mxu0
    %v2641 = vadd.f32 %v2612, %v2640
    %2642 = vmatmul.f32.gmra.mxu0 %v65
    %v2643 = vpop.f32.mrf.mxu0
    %v2644 = vadd.f32 %v2615, %v2643
    %2645 = vmatmul.f32.gmra.mxu0 %v81
    %v2646 = vpop.f32.mrf.mxu0
    %v2647 = vadd.f32 %v2618, %v2646
    %2648 = vmatmul.f32.gmra.mxu0 %v97
    %v2649 = vpop.f32.mrf.mxu0
    %v2650 = vadd.f32 %v2621, %v2649
    %2651 = vdwg.mxu0
    %2652 = vmatpush.msra.mxu0 %v429
    %2653 = vmatpush.msra.mxu0 %v425
    %2654 = vmatpush.msra.mxu0 %v421
    %2655 = vmatpush.msra.mxu0 %v417
    %2656 = vmatpush.msra.mxu0 %v413
    %2657 = vmatpush.msra.mxu0 %v409
    %2658 = vmatpush.msra.mxu0 %v405
    %2659 = vmatpush.msra.mxu0 %v401
    %2660 = vmatpush.msra.mxu0 %v397
    %2661 = vmatpush.msra.mxu0 %v393
    %2662 = vmatpush.msra.mxu0 %v389
    %2663 = vmatpush.msra.mxu0 %v385
    %2664 = vmatpush.msra.mxu0 %v381
    %2665 = vmatpush.msra.mxu0 %v377
    %2666 = vmatpush.msra.mxu0 %v373
    %2667 = vmatpush.msra.mxu0 %v369
    %2668 = vmatmul.f32.gmra.mxu0 %v50
    %v2669 = vpop.f32.mrf.mxu0
    %v2670 = vadd.f32 %v2641, %v2669
    %2671 = vmatmul.f32.gmra.mxu0 %v66
    %v2672 = vpop.f32.mrf.mxu0
    %v2673 = vadd.f32 %v2644, %v2672
    %2674 = vmatmul.f32.gmra.mxu0 %v82
    %v2675 = vpop.f32.mrf.mxu0
    %v2676 = vadd.f32 %v2647, %v2675
    %2677 = vmatmul.f32.gmra.mxu0 %v98
    %v2678 = vpop.f32.mrf.mxu0
    %v2679 = vadd.f32 %v2650, %v2678
    %2680 = vdwg.mxu0
    %2681 = vmatpush.msra.mxu0 %v493
    %2682 = vmatpush.msra.mxu0 %v489
    %2683 = vmatpush.msra.mxu0 %v485
    %2684 = vmatpush.msra.mxu0 %v481
    %2685 = vmatpush.msra.mxu0 %v477
    %2686 = vmatpush.msra.mxu0 %v473
    %2687 = vmatpush.msra.mxu0 %v469
    %2688 = vmatpush.msra.mxu0 %v465
    %2689 = vmatpush.msra.mxu0 %v461
    %2690 = vmatpush.msra.mxu0 %v457
    %2691 = vmatpush.msra.mxu0 %v453
    %2692 = vmatpush.msra.mxu0 %v449
    %2693 = vmatpush.msra.mxu0 %v445
    %2694 = vmatpush.msra.mxu0 %v441
    %2695 = vmatpush.msra.mxu0 %v437
    %2696 = vmatpush.msra.mxu0 %v433
    %2697 = vmatmul.f32.gmra.mxu0 %v51
    %v2698 = vpop.f32.mrf.mxu0
    %v2699 = vadd.f32 %v2670, %v2698
    %2700 = vmatmul.f32.gmra.mxu0 %v67
    %v2701 = vpop.f32.mrf.mxu0
    %v2702 = vadd.f32 %v2673, %v2701
    %2703 = vmatmul.f32.gmra.mxu0 %v83
    %v2704 = vpop.f32.mrf.mxu0
    %v2705 = vadd.f32 %v2676, %v2704
    %2706 = vmatmul.f32.gmra.mxu0 %v99
    %v2707 = vpop.f32.mrf.mxu0
    %v2708 = vadd.f32 %v2679, %v2707
    %2709 = vdwg.mxu0
    %2710 = vmatpush.msra.mxu0 %v557
    %2711 = vmatpush.msra.mxu0 %v553
    %2712 = vmatpush.msra.mxu0 %v549
    %2713 = vmatpush.msra.mxu0 %v545
    %2714 = vmatpush.msra.mxu0 %v541
    %2715 = vmatpush.msra.mxu0 %v537
    %2716 = vmatpush.msra.mxu0 %v533
    %2717 = vmatpush.msra.mxu0 %v529
    %2718 = vmatpush.msra.mxu0 %v525
    %2719 = vmatpush.msra.mxu0 %v521
    %2720 = vmatpush.msra.mxu0 %v517
    %2721 = vmatpush.msra.mxu0 %v513
    %2722 = vmatpush.msra.mxu0 %v509
    %2723 = vmatpush.msra.mxu0 %v505
    %2724 = vmatpush.msra.mxu0 %v501
    %2725 = vmatpush.msra.mxu0 %v497
    %2726 = vmatmul.f32.gmra.mxu0 %v52
    %v2727 = vpop.f32.mrf.mxu0
    %v2728 = vadd.f32 %v2699, %v2727
    %2729 = vmatmul.f32.gmra.mxu0 %v68
    %v2730 = vpop.f32.mrf.mxu0
    %v2731 = vadd.f32 %v2702, %v2730
    %2732 = vmatmul.f32.gmra.mxu0 %v84
    %v2733 = vpop.f32.mrf.mxu0
    %v2734 = vadd.f32 %v2705, %v2733
    %2735 = vmatmul.f32.gmra.mxu0 %v100
    %v2736 = vpop.f32.mrf.mxu0
    %v2737 = vadd.f32 %v2708, %v2736
    %2738 = vdwg.mxu0
    %2739 = vmatpush.msra.mxu0 %v621
    %2740 = vmatpush.msra.mxu0 %v617
    %2741 = vmatpush.msra.mxu0 %v613
    %2742 = vmatpush.msra.mxu0 %v609
    %2743 = vmatpush.msra.mxu0 %v605
    %2744 = vmatpush.msra.mxu0 %v601
    %2745 = vmatpush.msra.mxu0 %v597
    %2746 = vmatpush.msra.mxu0 %v593
    %2747 = vmatpush.msra.mxu0 %v589
    %2748 = vmatpush.msra.mxu0 %v585
    %2749 = vmatpush.msra.mxu0 %v581
    %2750 = vmatpush.msra.mxu0 %v577
    %2751 = vmatpush.msra.mxu0 %v573
    %2752 = vmatpush.msra.mxu0 %v569
    %2753 = vmatpush.msra.mxu0 %v565
    %2754 = vmatpush.msra.mxu0 %v561
    %2755 = vmatmul.f32.gmra.mxu0 %v53
    %v2756 = vpop.f32.mrf.mxu0
    %v2757 = vadd.f32 %v2728, %v2756
    %2758 = vmatmul.f32.gmra.mxu0 %v69
    %v2759 = vpop.f32.mrf.mxu0
    %v2760 = vadd.f32 %v2731, %v2759
    %2761 = vmatmul.f32.gmra.mxu0 %v85
    %v2762 = vpop.f32.mrf.mxu0
    %v2763 = vadd.f32 %v2734, %v2762
    %2764 = vmatmul.f32.gmra.mxu0 %v101
    %v2765 = vpop.f32.mrf.mxu0
    %v2766 = vadd.f32 %v2737, %v2765
    %2767 = vdwg.mxu0
    %2768 = vmatpush.msra.mxu0 %v685
    %2769 = vmatpush.msra.mxu0 %v681
    %2770 = vmatpush.msra.mxu0 %v677
    %2771 = vmatpush.msra.mxu0 %v673
    %2772 = vmatpush.msra.mxu0 %v669
    %2773 = vmatpush.msra.mxu0 %v665
    %2774 = vmatpush.msra.mxu0 %v661
    %2775 = vmatpush.msra.mxu0 %v657
    %2776 = vmatpush.msra.mxu0 %v653
    %2777 = vmatpush.msra.mxu0 %v649
    %2778 = vmatpush.msra.mxu0 %v645
    %2779 = vmatpush.msra.mxu0 %v641
    %2780 = vmatpush.msra.mxu0 %v637
    %2781 = vmatpush.msra.mxu0 %v633
    %2782 = vmatpush.msra.mxu0 %v629
    %2783 = vmatpush.msra.mxu0 %v625
    %2784 = vmatmul.f32.gmra.mxu0 %v54
    %v2785 = vpop.f32.mrf.mxu0
    %v2786 = vadd.f32 %v2757, %v2785
    %2787 = vmatmul.f32.gmra.mxu0 %v70
    %v2788 = vpop.f32.mrf.mxu0
    %v2789 = vadd.f32 %v2760, %v2788
    %2790 = vmatmul.f32.gmra.mxu0 %v86
    %v2791 = vpop.f32.mrf.mxu0
    %v2792 = vadd.f32 %v2763, %v2791
    %2793 = vmatmul.f32.gmra.mxu0 %v102
    %v2794 = vpop.f32.mrf.mxu0
    %v2795 = vadd.f32 %v2766, %v2794
    %2796 = vdwg.mxu0
    %2797 = vmatpush.msra.mxu0 %v749
    %2798 = vmatpush.msra.mxu0 %v745
    %2799 = vmatpush.msra.mxu0 %v741
    %2800 = vmatpush.msra.mxu0 %v737
    %2801 = vmatpush.msra.mxu0 %v733
    %2802 = vmatpush.msra.mxu0 %v729
    %2803 = vmatpush.msra.mxu0 %v725
    %2804 = vmatpush.msra.mxu0 %v721
    %2805 = vmatpush.msra.mxu0 %v717
    %2806 = vmatpush.msra.mxu0 %v713
    %2807 = vmatpush.msra.mxu0 %v709
    %2808 = vmatpush.msra.mxu0 %v705
    %2809 = vmatpush.msra.mxu0 %v701
    %2810 = vmatpush.msra.mxu0 %v697
    %2811 = vmatpush.msra.mxu0 %v693
    %2812 = vmatpush.msra.mxu0 %v689
    %2813 = vmatmul.f32.gmra.mxu0 %v55
    %v2814 = vpop.f32.mrf.mxu0
    %v2815 = vadd.f32 %v2786, %v2814
    %2816 = vmatmul.f32.gmra.mxu0 %v71
    %v2817 = vpop.f32.mrf.mxu0
    %v2818 = vadd.f32 %v2789, %v2817
    %2819 = vmatmul.f32.gmra.mxu0 %v87
    %v2820 = vpop.f32.mrf.mxu0
    %v2821 = vadd.f32 %v2792, %v2820
    %2822 = vmatmul.f32.gmra.mxu0 %v103
    %v2823 = vpop.f32.mrf.mxu0
    %v2824 = vadd.f32 %v2795, %v2823
    %2825 = vdwg.mxu0
    %2826 = vmatpush.msra.mxu0 %v813
    %2827 = vmatpush.msra.mxu0 %v809
    %2828 = vmatpush.msra.mxu0 %v805
    %2829 = vmatpush.msra.mxu0 %v801
    %2830 = vmatpush.msra.mxu0 %v797
    %2831 = vmatpush.msra.mxu0 %v793
    %2832 = vmatpush.msra.mxu0 %v789
    %2833 = vmatpush.msra.mxu0 %v785
    %2834 = vmatpush.msra.mxu0 %v781
    %2835 = vmatpush.msra.mxu0 %v777
    %2836 = vmatpush.msra.mxu0 %v773
    %2837 = vmatpush.msra.mxu0 %v769
    %2838 = vmatpush.msra.mxu0 %v765
    %2839 = vmatpush.msra.mxu0 %v761
    %2840 = vmatpush.msra.mxu0 %v757
    %2841 = vmatpush.msra.mxu0 %v753
    %2842 = vmatmul.f32.gmra.mxu0 %v56
    %v2843 = vpop.f32.mrf.mxu0
    %v2844 = vadd.f32 %v2815, %v2843
    %2845 = vmatmul.f32.gmra.mxu0 %v72
    %v2846 = vpop.f32.mrf.mxu0
    %v2847 = vadd.f32 %v2818, %v2846
    %2848 = vmatmul.f32.gmra.mxu0 %v88
    %v2849 = vpop.f32.mrf.mxu0
    %v2850 = vadd.f32 %v2821, %v2849
    %2851 = vmatmul.f32.gmra.mxu0 %v104
    %v2852 = vpop.f32.mrf.mxu0
    %v2853 = vadd.f32 %v2824, %v2852
    %2854 = vdwg.mxu0
    %2855 = vmatpush.msra.mxu0 %v877
    %2856 = vmatpush.msra.mxu0 %v873
    %2857 = vmatpush.msra.mxu0 %v869
    %2858 = vmatpush.msra.mxu0 %v865
    %2859 = vmatpush.msra.mxu0 %v861
    %2860 = vmatpush.msra.mxu0 %v857
    %2861 = vmatpush.msra.mxu0 %v853
    %2862 = vmatpush.msra.mxu0 %v849
    %2863 = vmatpush.msra.mxu0 %v845
    %2864 = vmatpush.msra.mxu0 %v841
    %2865 = vmatpush.msra.mxu0 %v837
    %2866 = vmatpush.msra.mxu0 %v833
    %2867 = vmatpush.msra.mxu0 %v829
    %2868 = vmatpush.msra.mxu0 %v825
    %2869 = vmatpush.msra.mxu0 %v821
    %2870 = vmatpush.msra.mxu0 %v817
    %2871 = vmatmul.f32.gmra.mxu0 %v57
    %v2872 = vpop.f32.mrf.mxu0
    %v2873 = vadd.f32 %v2844, %v2872
    %2874 = vmatmul.f32.gmra.mxu0 %v73
    %v2875 = vpop.f32.mrf.mxu0
    %v2876 = vadd.f32 %v2847, %v2875
    %2877 = vmatmul.f32.gmra.mxu0 %v89
    %v2878 = vpop.f32.mrf.mxu0
    %v2879 = vadd.f32 %v2850, %v2878
    %2880 = vmatmul.f32.gmra.mxu0 %v105
    %v2881 = vpop.f32.mrf.mxu0
    %v2882 = vadd.f32 %v2853, %v2881
    %2883 = vdwg.mxu0
    %2884 = vmatpush.msra.mxu0 %v941
    %2885 = vmatpush.msra.mxu0 %v937
    %2886 = vmatpush.msra.mxu0 %v933
    %2887 = vmatpush.msra.mxu0 %v929
    %2888 = vmatpush.msra.mxu0 %v925
    %2889 = vmatpush.msra.mxu0 %v921
    %2890 = vmatpush.msra.mxu0 %v917
    %2891 = vmatpush.msra.mxu0 %v913
    %2892 = vmatpush.msra.mxu0 %v909
    %2893 = vmatpush.msra.mxu0 %v905
    %2894 = vmatpush.msra.mxu0 %v901
    %2895 = vmatpush.msra.mxu0 %v897
    %2896 = vmatpush.msra.mxu0 %v893
    %2897 = vmatpush.msra.mxu0 %v889
    %2898 = vmatpush.msra.mxu0 %v885
    %2899 = vmatpush.msra.mxu0 %v881
    %2900 = vmatmul.f32.gmra.mxu0 %v58
    %v2901 = vpop.f32.mrf.mxu0
    %v2902 = vadd.f32 %v2873, %v2901
    %2903 = vmatmul.f32.gmra.mxu0 %v74
    %v2904 = vpop.f32.mrf.mxu0
    %v2905 = vadd.f32 %v2876, %v2904
    %2906 = vmatmul.f32.gmra.mxu0 %v90
    %v2907 = vpop.f32.mrf.mxu0
    %v2908 = vadd.f32 %v2879, %v2907
    %2909 = vmatmul.f32.gmra.mxu0 %v106
    %v2910 = vpop.f32.mrf.mxu0
    %v2911 = vadd.f32 %v2882, %v2910
    %2912 = vdwg.mxu0
    %2913 = vmatpush.msra.mxu0 %v1005
    %2914 = vmatpush.msra.mxu0 %v1001
    %2915 = vmatpush.msra.mxu0 %v997
    %2916 = vmatpush.msra.mxu0 %v993
    %2917 = vmatpush.msra.mxu0 %v989
    %2918 = vmatpush.msra.mxu0 %v985
    %2919 = vmatpush.msra.mxu0 %v981
    %2920 = vmatpush.msra.mxu0 %v977
    %2921 = vmatpush.msra.mxu0 %v973
    %2922 = vmatpush.msra.mxu0 %v969
    %2923 = vmatpush.msra.mxu0 %v965
    %2924 = vmatpush.msra.mxu0 %v961
    %2925 = vmatpush.msra.mxu0 %v957
    %2926 = vmatpush.msra.mxu0 %v953
    %2927 = vmatpush.msra.mxu0 %v949
    %2928 = vmatpush.msra.mxu0 %v945
    %2929 = vmatmul.f32.gmra.mxu0 %v59
    %v2930 = vpop.f32.mrf.mxu0
    %v2931 = vadd.f32 %v2902, %v2930
    %2932 = vmatmul.f32.gmra.mxu0 %v75
    %v2933 = vpop.f32.mrf.mxu0
    %v2934 = vadd.f32 %v2905, %v2933
    %2935 = vmatmul.f32.gmra.mxu0 %v91
    %v2936 = vpop.f32.mrf.mxu0
    %v2937 = vadd.f32 %v2908, %v2936
    %2938 = vmatmul.f32.gmra.mxu0 %v107
    %v2939 = vpop.f32.mrf.mxu0
    %v2940 = vadd.f32 %v2911, %v2939
    %2941 = vdwg.mxu0
    %2942 = vmatpush.msra.mxu0 %v1069
    %2943 = vmatpush.msra.mxu0 %v1065
    %2944 = vmatpush.msra.mxu0 %v1061
    %2945 = vmatpush.msra.mxu0 %v1057
    %2946 = vmatpush.msra.mxu0 %v1053
    %2947 = vmatpush.msra.mxu0 %v1049
    %2948 = vmatpush.msra.mxu0 %v1045
    %2949 = vmatpush.msra.mxu0 %v1041
    %2950 = vmatpush.msra.mxu0 %v1037
    %2951 = vmatpush.msra.mxu0 %v1033
    %2952 = vmatpush.msra.mxu0 %v1029
    %2953 = vmatpush.msra.mxu0 %v1025
    %2954 = vmatpush.msra.mxu0 %v1021
    %2955 = vmatpush.msra.mxu0 %v1017
    %2956 = vmatpush.msra.mxu0 %v1013
    %2957 = vmatpush.msra.mxu0 %v1009
    %2958 = vmatmul.f32.gmra.mxu0 %v60
    %v2959 = vpop.f32.mrf.mxu0
    %v2960 = vadd.f32 %v2931, %v2959
    %2961 = vmatmul.f32.gmra.mxu0 %v76
    %v2962 = vpop.f32.mrf.mxu0
    %v2963 = vadd.f32 %v2934, %v2962
    %2964 = vmatmul.f32.gmra.mxu0 %v92
    %v2965 = vpop.f32.mrf.mxu0
    %v2966 = vadd.f32 %v2937, %v2965
    %2967 = vmatmul.f32.gmra.mxu0 %v108
    %v2968 = vpop.f32.mrf.mxu0
    %v2969 = vadd.f32 %v2940, %v2968
    %2970 = vdwg.mxu0
    %2971 = vmatpush.msra.mxu0 %v1133
    %2972 = vmatpush.msra.mxu0 %v1129
    %2973 = vmatpush.msra.mxu0 %v1125
    %2974 = vmatpush.msra.mxu0 %v1121
    %2975 = vmatpush.msra.mxu0 %v1117
    %2976 = vmatpush.msra.mxu0 %v1113
    %2977 = vmatpush.msra.mxu0 %v1109
    %2978 = vmatpush.msra.mxu0 %v1105
    %2979 = vmatpush.msra.mxu0 %v1101
    %2980 = vmatpush.msra.mxu0 %v1097
    %2981 = vmatpush.msra.mxu0 %v1093
    %2982 = vmatpush.msra.mxu0 %v1089
    %2983 = vmatpush.msra.mxu0 %v1085
    %2984 = vmatpush.msra.mxu0 %v1081
    %2985 = vmatpush.msra.mxu0 %v1077
    %2986 = vmatpush.msra.mxu0 %v1073
    %2987 = vmatmul.f32.gmra.mxu0 %v61
    %v2988 = vpop.f32.mrf.mxu0
    %v2989 = vadd.f32 %v2960, %v2988
    %2990 = vmatmul.f32.gmra.mxu0 %v77
    %v2991 = vpop.f32.mrf.mxu0
    %v2992 = vadd.f32 %v2963, %v2991
    %2993 = vmatmul.f32.gmra.mxu0 %v93
    %v2994 = vpop.f32.mrf.mxu0
    %v2995 = vadd.f32 %v2966, %v2994
    %2996 = vmatmul.f32.gmra.mxu0 %v109
    %v2997 = vpop.f32.mrf.mxu0
    %v2998 = vadd.f32 %v2969, %v2997
    %2999 = vdwg.mxu0
    %v3000 = vld [vmem:[%s3] sm:$0xff]
    %v3001 = vld [vmem:[%s3 + $0x8] sm:$0xff]
    %v3002 = vld [vmem:[%s3 + $0x10] sm:$0xff]
    %v3003 = vld [vmem:[%s3 + $0x18] sm:$0xff]
    %v3004 = vld [vmem:[%s3 + $0x20] sm:$0xff]
    %v3005 = vld [vmem:[%s3 + $0x28] sm:$0xff]
    %v3006 = vld [vmem:[%s3 + $0x30] sm:$0xff]
    %v3007 = vld [vmem:[%s3 + $0x38] sm:$0xff]
    %v3008 = vld [vmem:[%s3 + $0x40] sm:$0xff]
    %v3009 = vld [vmem:[%s3 + $0x48] sm:$0xff]
    %v3010 = vld [vmem:[%s3 + $0x50] sm:$0xff]
    %v3011 = vld [vmem:[%s3 + $0x58] sm:$0xff]
    %v3012 = vld [vmem:[%s3 + $0x60] sm:$0xff]
    %v3013 = vld [vmem:[%s3 + $0x68] sm:$0xff]
    %v3014 = vld [vmem:[%s3 + $0x70] sm:$0xff]
    %v3015 = vld [vmem:[%s3 + $0x78] sm:$0xff]
    %v3016 = vadd.f32 %v1597, %v3000
    %v3017 = vadd.f32 %v2061, %v3001
    %v3018 = vadd.f32 %v2525, %v3002
    %v3019 = vadd.f32 %v2989, %v3003
    %v3020 = vadd.f32 %v1600, %v3004
    %v3021 = vadd.f32 %v2064, %v3005
    %v3022 = vadd.f32 %v2528, %v3006
    %v3023 = vadd.f32 %v2992, %v3007
    %v3024 = vadd.f32 %v1603, %v3008
    %v3025 = vadd.f32 %v2067, %v3009
    %v3026 = vadd.f32 %v2531, %v3010
    %v3027 = vadd.f32 %v2995, %v3011
    %v3028 = vadd.f32 %v1606, %v3012
    %v3029 = vadd.f32 %v2070, %v3013
    %v3030 = vadd.f32 %v2534, %v3014
    %v3031 = vadd.f32 %v2998, %v3015
    %v3032 = vld [vmem:[%s4] sm:$0xf]
    %v3033 = vld [vmem:[%s5] sm:$0xf]
    %v3034 = vadd.f32 %v3016, %v3017
    %v3035 = vadd.f32 %v3034, %v3018
    %v3036 = vadd.f32 %v3035, %v3019
    %3037 = vadd.xlane.f32.xlu0 %v3036
    %v3038 = vpop.xlane.xlu0 %3037
    %v3039 = vadd.f32 %v3020, %v3021
    %v3040 = vadd.f32 %v3039, %v3022
    %v3041 = vadd.f32 %v3040, %v3023
    %3042 = vadd.xlane.f32.xlu0 %v3041
    %v3043 = vpop.xlane.xlu0 %3042
    %v3044 = vadd.f32 %v3024, %v3025
    %v3045 = vadd.f32 %v3044, %v3026
    %v3046 = vadd.f32 %v3045, %v3027
    %3047 = vadd.xlane.f32.xlu0 %v3046
    %v3048 = vpop.xlane.xlu0 %3047
    %v3049 = vadd.f32 %v3028, %v3029
    %v3050 = vadd.f32 %v3049, %v3030
    %v3051 = vadd.f32 %v3050, %v3031
    %3052 = vadd.xlane.f32.xlu0 %v3051
    %v3053 = vpop.xlane.xlu0 %3052
    %v3054 = vrcp.pop 512.0
    %v3055 = vmul.f32 512.0, %v3054
    %v3056 = vsub.f32 1.0, %v3055
    %v3057 = vmul.f32 %v3054, %v3056
    %v3058 = vadd.f32 %v3054, %v3057
    %vm3059 = vweird.f32 %v3054
    %v3060 = vsel %vm3059, %v3054, %v3058
    %v3061 = vmul.f32 %v3038, %v3060
    %v3062 = vmul.f32 %v3043, %v3060
    %v3063 = vmul.f32 %v3048, %v3060
    %v3064 = vmul.f32 %v3053, %v3060
    %v3065 = vsub.f32 %v3016, %v3061
    %v3066 = vsub.f32 %v3017, %v3061
    %v3067 = vsub.f32 %v3018, %v3061
    %v3068 = vsub.f32 %v3019, %v3061
    %v3069 = vsub.f32 %v3020, %v3062
    %v3070 = vsub.f32 %v3021, %v3062
    %v3071 = vsub.f32 %v3022, %v3062
    %v3072 = vsub.f32 %v3023, %v3062
    %v3073 = vsub.f32 %v3024, %v3063
    %v3074 = vsub.f32 %v3025, %v3063
    %v3075 = vsub.f32 %v3026, %v3063
    %v3076 = vsub.f32 %v3027, %v3063
    %v3077 = vsub.f32 %v3028, %v3064
    %v3078 = vsub.f32 %v3029, %v3064
    %v3079 = vsub.f32 %v3030, %v3064
    %v3080 = vsub.f32 %v3031, %v3064
    %v3081 = vmul.f32 %v3065, %v3065
    %v3082 = vmul.f32 %v3066, %v3066
    %v3083 = vmul.f32 %v3067, %v3067
    %v3084 = vmul.f32 %v3068, %v3068
    %v3085 = vmul.f32 %v3069, %v3069
    %v3086 = vmul.f32 %v3070, %v3070
    %v3087 = vmul.f32 %v3071, %v3071
    %v3088 = vmul.f32 %v3072, %v3072
    %v3089 = vmul.f32 %v3073, %v3073
    %v3090 = vmul.f32 %v3074, %v3074
    %v3091 = vmul.f32 %v3075, %v3075
    %v3092 = vmul.f32 %v3076, %v3076
    %v3093 = vmul.f32 %v3077, %v3077
    %v3094 = vmul.f32 %v3078, %v3078
    %v3095 = vmul.f32 %v3079, %v3079
    %v3096 = vmul.f32 %v3080, %v3080
    %v3097 = vadd.f32 %v3081, %v3082
    %v3098 = vadd.f32 %v3097, %v3083
    %v3099 = vadd.f32 %v3098, %v3084
    %3100 = vadd.xlane.f32.xlu0 %v3099
    %v3101 = vpop.xlane.xlu0 %3100
    %v3102 = vadd.f32 %v3085, %v3086
    %v3103 = vadd.f32 %v3102, %v3087
    %v3104 = vadd.f32 %v3103, %v3088
    %3105 = vadd.xlane.f32.xlu0 %v3104
    %v3106 = vpop.xlane.xlu0 %3105
    %v3107 = vadd.f32 %v3089, %v3090
    %v3108 = vadd.f32 %v3107, %v3091
    %v3109 = vadd.f32 %v3108, %v3092
    %3110 = vadd.xlane.f32.xlu0 %v3109
    %v3111 = vpop.xlane.xlu0 %3110
    %v3112 = vadd.f32 %v3093, %v3094
    %v3113 = vadd.f32 %v3112, %v3095
    %v3114 = vadd.f32 %v3113, %v3096
    %3115 = vadd.xlane.f32.xlu0 %v3114
    %v3116 = vpop.xlane.xlu0 %3115
    %v3117 = vmul.f32 %v3101, %v3060
    %v3118 = vmul.f32 %v3106, %v3060
    %v3119 = vmul.f32 %v3111, %v3060
    %v3120 = vmul.f32 %v3116, %v3060
    %v3121 = vadd.f32 %v3117, 1e-05
    %v3122 = vadd.f32 %v3118, 1e-05
    %v3123 = vadd.f32 %v3119, 1e-05
    %v3124 = vadd.f32 %v3120, 1e-05
    %v3125 = vrsqrt.pop %v3121
    %v3126 = vmul.f32 %v3125, %v3121
    %v3127 = vmul.f32 %v3126, %v3125
    %v3128 = vmul.f32 0.5, %v3127
    %v3129 = vsub.f32 1.5, %v3128
    %v3130 = vmul.f32 %v3125, %v3129
    %vm3131 = vweird.f32 %v3121
    %vm3132 = vweird.f32 %v3125
    %vm3133 = vmor %vm3131, %vm3132
    %v3134 = vsel %vm3133, %v3125, %v3130
    %v3135 = vrsqrt.pop %v3122
    %v3136 = vmul.f32 %v3135, %v3122
    %v3137 = vmul.f32 %v3136, %v3135
    %v3138 = vmul.f32 0.5, %v3137
    %v3139 = vsub.f32 1.5, %v3138
    %v3140 = vmul.f32 %v3135, %v3139
    %vm3141 = vweird.f32 %v3122
    %vm3142 = vweird.f32 %v3135
    %vm3143 = vmor %vm3141, %vm3142
    %v3144 = vsel %vm3143, %v3135, %v3140
    %v3145 = vrsqrt.pop %v3123
    %v3146 = vmul.f32 %v3145, %v3123
    %v3147 = vmul.f32 %v3146, %v3145
    %v3148 = vmul.f32 0.5, %v3147
    %v3149 = vsub.f32 1.5, %v3148
    %v3150 = vmul.f32 %v3145, %v3149
    %vm3151 = vweird.f32 %v3123
    %vm3152 = vweird.f32 %v3145
    %vm3153 = vmor %vm3151, %vm3152
    %v3154 = vsel %vm3153, %v3145, %v3150
    %v3155 = vrsqrt.pop %v3124
    %v3156 = vmul.f32 %v3155, %v3124
    %v3157 = vmul.f32 %v3156, %v3155
    %v3158 = vmul.f32 0.5, %v3157
    %v3159 = vsub.f32 1.5, %v3158
    %v3160 = vmul.f32 %v3155, %v3159
    %vm3161 = vweird.f32 %v3124
    %vm3162 = vweird.f32 %v3155
    %vm3163 = vmor %vm3161, %vm3162
    %v3164 = vsel %vm3163, %v3155, %v3160
    %v3165 = vmul.f32 %v3065, %v3134
    %v3166 = vmul.f32 %v3066, %v3134
    %v3167 = vmul.f32 %v3067, %v3134
    %v3168 = vmul.f32 %v3068, %v3134
    %v3169 = vmul.f32 %v3069, %v3144
    %v3170 = vmul.f32 %v3070, %v3144
    %v3171 = vmul.f32 %v3071, %v3144
    %v3172 = vmul.f32 %v3072, %v3144
    %v3173 = vmul.f32 %v3073, %v3154
    %v3174 = vmul.f32 %v3074, %v3154
    %v3175 = vmul.f32 %v3075, %v3154
    %v3176 = vmul.f32 %v3076, %v3154
    %v3177 = vmul.f32 %v3077, %v3164
    %v3178 = vmul.f32 %v3078, %v3164
    %v3179 = vmul.f32 %v3079, %v3164
    %v3180 = vmul.f32 %v3080, %v3164
    %v3182 = vperm.slane %v3032, 0
    %v3183 = vperm.slane %v3032, 1
    %v3184 = vperm.slane %v3032, 2
    %v3185 = vperm.slane %v3032, 3
    %v3190 = vmul.f32 %v3165, %v3182
    %v3191 = vmul.f32 %v3166, %v3183
    %v3192 = vmul.f32 %v3167, %v3184
    %v3193 = vmul.f32 %v3168, %v3185
    %v3194 = vmul.f32 %v3169, %v3182
    %v3195 = vmul.f32 %v3170, %v3183
    %v3196 = vmul.f32 %v3171, %v3184
    %v3197 = vmul.f32 %v3172, %v3185
    %v3198 = vmul.f32 %v3173, %v3182
    %v3199 = vmul.f32 %v3174, %v3183
    %v3200 = vmul.f32 %v3175, %v3184
    %v3201 = vmul.f32 %v3176, %v3185
    %v3202 = vmul.f32 %v3177, %v3182
    %v3203 = vmul.f32 %v3178, %v3183
    %v3204 = vmul.f32 %v3179, %v3184
    %v3205 = vmul.f32 %v3180, %v3185
    %v3207 = vperm.slane %v3033, 0
    %v3208 = vperm.slane %v3033, 1
    %v3209 = vperm.slane %v3033, 2
    %v3210 = vperm.slane %v3033, 3
    %v3215 = vadd.f32 %v3190, %v3207
    %v3216 = vadd.f32 %v3191, %v3208
    %v3217 = vadd.f32 %v3192, %v3209
    %v3218 = vadd.f32 %v3193, %v3210
    %v3219 = vadd.f32 %v3194, %v3207
    %v3220 = vadd.f32 %v3195, %v3208
    %v3221 = vadd.f32 %v3196, %v3209
    %v3222 = vadd.f32 %v3197, %v3210
    %v3223 = vadd.f32 %v3198, %v3207
    %v3224 = vadd.f32 %v3199, %v3208
    %v3225 = vadd.f32 %v3200, %v3209
    %v3226 = vadd.f32 %v3201, %v3210
    %v3227 = vadd.f32 %v3202, %v3207
    %v3228 = vadd.f32 %v3203, %v3208
    %v3229 = vadd.f32 %v3204, %v3209
    %v3230 = vadd.f32 %v3205, %v3210
    %v3231 = vadd.f32 %v3000, %v3215
    %v3232 = vadd.f32 %v3001, %v3216
    %v3233 = vadd.f32 %v3002, %v3217
    %v3234 = vadd.f32 %v3003, %v3218
    %v3235 = vadd.f32 %v3004, %v3219
    %v3236 = vadd.f32 %v3005, %v3220
    %v3237 = vadd.f32 %v3006, %v3221
    %v3238 = vadd.f32 %v3007, %v3222
    %v3239 = vadd.f32 %v3008, %v3223
    %v3240 = vadd.f32 %v3009, %v3224
    %v3241 = vadd.f32 %v3010, %v3225
    %v3242 = vadd.f32 %v3011, %v3226
    %v3243 = vadd.f32 %v3012, %v3227
    %v3244 = vadd.f32 %v3013, %v3228
    %v3245 = vadd.f32 %v3014, %v3229
    %v3246 = vadd.f32 %v3015, %v3230
    %v3247 = vld [vmem:[%s6] sm:$0xf]
    %v3248 = vld [vmem:[%s7] sm:$0xf]
    %v3249 = vadd.f32 %v3231, %v3232
    %v3250 = vadd.f32 %v3249, %v3233
    %v3251 = vadd.f32 %v3250, %v3234
    %3252 = vadd.xlane.f32.xlu0 %v3251
    %v3253 = vpop.xlane.xlu0 %3252
    %v3254 = vadd.f32 %v3235, %v3236
    %v3255 = vadd.f32 %v3254, %v3237
    %v3256 = vadd.f32 %v3255, %v3238
    %3257 = vadd.xlane.f32.xlu0 %v3256
    %v3258 = vpop.xlane.xlu0 %3257
    %v3259 = vadd.f32 %v3239, %v3240
    %v3260 = vadd.f32 %v3259, %v3241
    %v3261 = vadd.f32 %v3260, %v3242
    %3262 = vadd.xlane.f32.xlu0 %v3261
    %v3263 = vpop.xlane.xlu0 %3262
    %v3264 = vadd.f32 %v3243, %v3244
    %v3265 = vadd.f32 %v3264, %v3245
    %v3266 = vadd.f32 %v3265, %v3246
    %3267 = vadd.xlane.f32.xlu0 %v3266
    %v3268 = vpop.xlane.xlu0 %3267
    %v3269 = vmul.f32 %v3253, %v3060
    %v3270 = vmul.f32 %v3258, %v3060
    %v3271 = vmul.f32 %v3263, %v3060
    %v3272 = vmul.f32 %v3268, %v3060
    %v3273 = vsub.f32 %v3231, %v3269
    %v3274 = vsub.f32 %v3232, %v3269
    %v3275 = vsub.f32 %v3233, %v3269
    %v3276 = vsub.f32 %v3234, %v3269
    %v3277 = vsub.f32 %v3235, %v3270
    %v3278 = vsub.f32 %v3236, %v3270
    %v3279 = vsub.f32 %v3237, %v3270
    %v3280 = vsub.f32 %v3238, %v3270
    %v3281 = vsub.f32 %v3239, %v3271
    %v3282 = vsub.f32 %v3240, %v3271
    %v3283 = vsub.f32 %v3241, %v3271
    %v3284 = vsub.f32 %v3242, %v3271
    %v3285 = vsub.f32 %v3243, %v3272
    %v3286 = vsub.f32 %v3244, %v3272
    %v3287 = vsub.f32 %v3245, %v3272
    %v3288 = vsub.f32 %v3246, %v3272
    %v3289 = vmul.f32 %v3273, %v3273
    %v3290 = vmul.f32 %v3274, %v3274
    %v3291 = vmul.f32 %v3275, %v3275
    %v3292 = vmul.f32 %v3276, %v3276
    %v3293 = vmul.f32 %v3277, %v3277
    %v3294 = vmul.f32 %v3278, %v3278
    %v3295 = vmul.f32 %v3279, %v3279
    %v3296 = vmul.f32 %v3280, %v3280
    %v3297 = vmul.f32 %v3281, %v3281
    %v3298 = vmul.f32 %v3282, %v3282
    %v3299 = vmul.f32 %v3283, %v3283
    %v3300 = vmul.f32 %v3284, %v3284
    %v3301 = vmul.f32 %v3285, %v3285
    %v3302 = vmul.f32 %v3286, %v3286
    %v3303 = vmul.f32 %v3287, %v3287
    %v3304 = vmul.f32 %v3288, %v3288
    %v3305 = vadd.f32 %v3289, %v3290
    %v3306 = vadd.f32 %v3305, %v3291
    %v3307 = vadd.f32 %v3306, %v3292
    %3308 = vadd.xlane.f32.xlu0 %v3307
    %v3309 = vpop.xlane.xlu0 %3308
    %v3310 = vadd.f32 %v3293, %v3294
    %v3311 = vadd.f32 %v3310, %v3295
    %v3312 = vadd.f32 %v3311, %v3296
    %3313 = vadd.xlane.f32.xlu0 %v3312
    %v3314 = vpop.xlane.xlu0 %3313
    %v3315 = vadd.f32 %v3297, %v3298
    %v3316 = vadd.f32 %v3315, %v3299
    %v3317 = vadd.f32 %v3316, %v3300
    %3318 = vadd.xlane.f32.xlu0 %v3317
    %v3319 = vpop.xlane.xlu0 %3318
    %v3320 = vadd.f32 %v3301, %v3302
    %v3321 = vadd.f32 %v3320, %v3303
    %v3322 = vadd.f32 %v3321, %v3304
    %3323 = vadd.xlane.f32.xlu0 %v3322
    %v3324 = vpop.xlane.xlu0 %3323
    %v3325 = vmul.f32 %v3309, %v3060
    %v3326 = vmul.f32 %v3314, %v3060
    %v3327 = vmul.f32 %v3319, %v3060
    %v3328 = vmul.f32 %v3324, %v3060
    %v3329 = vadd.f32 %v3325, 1e-05
    %v3330 = vadd.f32 %v3326, 1e-05
    %v3331 = vadd.f32 %v3327, 1e-05
    %v3332 = vadd.f32 %v3328, 1e-05
    %v3333 = vrsqrt.pop %v3329
    %v3334 = vmul.f32 %v3333, %v3329
    %v3335 = vmul.f32 %v3334, %v3333
    %v3336 = vmul.f32 0.5, %v3335
    %v3337 = vsub.f32 1.5, %v3336
    %v3338 = vmul.f32 %v3333, %v3337
    %vm3339 = vweird.f32 %v3329
    %vm3340 = vweird.f32 %v3333
    %vm3341 = vmor %vm3339, %vm3340
    %v3342 = vsel %vm3341, %v3333, %v3338
    %v3343 = vrsqrt.pop %v3330
    %v3344 = vmul.f32 %v3343, %v3330
    %v3345 = vmul.f32 %v3344, %v3343
    %v3346 = vmul.f32 0.5, %v3345
    %v3347 = vsub.f32 1.5, %v3346
    %v3348 = vmul.f32 %v3343, %v3347
    %vm3349 = vweird.f32 %v3330
    %vm3350 = vweird.f32 %v3343
    %vm3351 = vmor %vm3349, %vm3350
    %v3352 = vsel %vm3351, %v3343, %v3348
    %v3353 = vrsqrt.pop %v3331
    %v3354 = vmul.f32 %v3353, %v3331
    %v3355 = vmul.f32 %v3354, %v3353
    %v3356 = vmul.f32 0.5, %v3355
    %v3357 = vsub.f32 1.5, %v3356
    %v3358 = vmul.f32 %v3353, %v3357
    %vm3359 = vweird.f32 %v3331
    %vm3360 = vweird.f32 %v3353
    %vm3361 = vmor %vm3359, %vm3360
    %v3362 = vsel %vm3361, %v3353, %v3358
    %v3363 = vrsqrt.pop %v3332
    %v3364 = vmul.f32 %v3363, %v3332
    %v3365 = vmul.f32 %v3364, %v3363
    %v3366 = vmul.f32 0.5, %v3365
    %v3367 = vsub.f32 1.5, %v3366
    %v3368 = vmul.f32 %v3363, %v3367
    %vm3369 = vweird.f32 %v3332
    %vm3370 = vweird.f32 %v3363
    %vm3371 = vmor %vm3369, %vm3370
    %v3372 = vsel %vm3371, %v3363, %v3368
    %v3373 = vmul.f32 %v3273, %v3342
    %v3374 = vmul.f32 %v3274, %v3342
    %v3375 = vmul.f32 %v3275, %v3342
    %v3376 = vmul.f32 %v3276, %v3342
    %v3377 = vmul.f32 %v3277, %v3352
    %v3378 = vmul.f32 %v3278, %v3352
    %v3379 = vmul.f32 %v3279, %v3352
    %v3380 = vmul.f32 %v3280, %v3352
    %v3381 = vmul.f32 %v3281, %v3362
    %v3382 = vmul.f32 %v3282, %v3362
    %v3383 = vmul.f32 %v3283, %v3362
    %v3384 = vmul.f32 %v3284, %v3362
    %v3385 = vmul.f32 %v3285, %v3372
    %v3386 = vmul.f32 %v3286, %v3372
    %v3387 = vmul.f32 %v3287, %v3372
    %v3388 = vmul.f32 %v3288, %v3372
    %v3390 = vperm.slane %v3247, 0
    %v3391 = vperm.slane %v3247, 1
    %v3392 = vperm.slane %v3247, 2
    %v3393 = vperm.slane %v3247, 3
    %v3398 = vmul.f32 %v3373, %v3390
    %v3399 = vmul.f32 %v3374, %v3391
    %v3400 = vmul.f32 %v3375, %v3392
    %v3401 = vmul.f32 %v3376, %v3393
    %v3402 = vmul.f32 %v3377, %v3390
    %v3403 = vmul.f32 %v3378, %v3391
    %v3404 = vmul.f32 %v3379, %v3392
    %v3405 = vmul.f32 %v3380, %v3393
    %v3406 = vmul.f32 %v3381, %v3390
    %v3407 = vmul.f32 %v3382, %v3391
    %v3408 = vmul.f32 %v3383, %v3392
    %v3409 = vmul.f32 %v3384, %v3393
    %v3410 = vmul.f32 %v3385, %v3390
    %v3411 = vmul.f32 %v3386, %v3391
    %v3412 = vmul.f32 %v3387, %v3392
    %v3413 = vmul.f32 %v3388, %v3393
    %v3415 = vperm.slane %v3248, 0
    %v3416 = vperm.slane %v3248, 1
    %v3417 = vperm.slane %v3248, 2
    %v3418 = vperm.slane %v3248, 3
    %v3423 = vadd.f32 %v3398, %v3415
    %v3424 = vadd.f32 %v3399, %v3416
    %v3425 = vadd.f32 %v3400, %v3417
    %v3426 = vadd.f32 %v3401, %v3418
    %v3427 = vadd.f32 %v3402, %v3415
    %v3428 = vadd.f32 %v3403, %v3416
    %v3429 = vadd.f32 %v3404, %v3417
    %v3430 = vadd.f32 %v3405, %v3418
    %v3431 = vadd.f32 %v3406, %v3415
    %v3432 = vadd.f32 %v3407, %v3416
    %v3433 = vadd.f32 %v3408, %v3417
    %v3434 = vadd.f32 %v3409, %v3418
    %v3435 = vadd.f32 %v3410, %v3415
    %v3436 = vadd.f32 %v3411, %v3416
    %v3437 = vadd.f32 %v3412, %v3417
    %v3438 = vadd.f32 %v3413, %v3418
    %3439 = vst [vmem:[#allocation5] sm:$0xff] %v3423
    %3440 = vst [vmem:[#allocation5 + $0x8] sm:$0xff] %v3424
    %3441 = vst [vmem:[#allocation5 + $0x10] sm:$0xff] %v3425
    %3442 = vst [vmem:[#allocation5 + $0x18] sm:$0xff] %v3426
    %3443 = vst [vmem:[#allocation5 + $0x20] sm:$0xff] %v3427
    %3444 = vst [vmem:[#allocation5 + $0x28] sm:$0xff] %v3428
    %3445 = vst [vmem:[#allocation5 + $0x30] sm:$0xff] %v3429
    %3446 = vst [vmem:[#allocation5 + $0x38] sm:$0xff] %v3430
    %3447 = vst [vmem:[#allocation5 + $0x40] sm:$0xff] %v3431
    %3448 = vst [vmem:[#allocation5 + $0x48] sm:$0xff] %v3432
    %3449 = vst [vmem:[#allocation5 + $0x50] sm:$0xff] %v3433
    %3450 = vst [vmem:[#allocation5 + $0x58] sm:$0xff] %v3434
    %3451 = vst [vmem:[#allocation5 + $0x60] sm:$0xff] %v3435
    %3452 = vst [vmem:[#allocation5 + $0x68] sm:$0xff] %v3436
    %3453 = vst [vmem:[#allocation5 + $0x70] sm:$0xff] %v3437
    %3454 = vst [vmem:[#allocation5 + $0x78] sm:$0xff] %v3438
    // Predicated region
    $region38: #{decoder_layer.9} parent=1 // pred_check
      _
    $region39: #{decoder_layer.9} parent=1 // pred_check_branch
      %3456 = sbr.rel (0) target = $region41
    $region40: #{decoder_layer.9} parent=1 // pred_region
      %3458 = vsyncadd [#allocation4], 0
      %s3459 = sshll.u32 [#allocation5], 4
      %s3460 = int_to_ptr.vmem [resolvable:$true] %s3459
      %s3461 = sshll.u32 %s8, 4
      %s3462 = int_to_ptr.hbm [resolvable:$true] %s3461
      %3467 = dma.vmem_to_hbm [thread:$0]  %s3460, 2048, %s3462, [#allocation4], 512, 512, 32
    $region41: #{decoder_layer.9} parent=1 // pred_fallthru
      _
    // Predicated region
    $region42: #{decoder_layer.9} parent=1 // pred_check
      _
    $region43: #{decoder_layer.9} parent=1 // pred_check_branch
      %3469 = sbr.rel (0) target = $region45
    $region44: #{decoder_layer.9} parent=1 // pred_region
      %3471 = dma.done [#allocation4], 2048
    $region45: #{decoder_layer.9} parent=1 // pred_fallthru
      _
    %3472 = vsyncpa [#allocation3], 1
    %3473 = vsyncpa [#allocation4], 1

</llo_original>
